<compile_context>
chip_gen: v5e
topology: v5e:2x2
jax: 0.10.0
libtpu: 0.0.40
codegen_flags: <defaults>
</compile_context>

<pallas_src>
import jax
import jax.numpy as jnp
from jax.experimental import pallas as pl
from jax.experimental.pallas import tpu as pltpu

D_IN = 784
D_PAD = 896      # 784 rounded up to a multiple of 128
H1 = 512
H2 = 256


def discriminator_kernel(x_ref, w1_ref, b1_ref, w2_ref, b2_ref, w3_ref, b3_ref,
                         o_ref):
    x = x_ref[...]                                               # (tb, 896) bf16

    # Linear 784(->896 zero-padded) -> 512 : bf16 MXU inputs, f32 accumulation.
    h1 = jnp.dot(x, w1_ref[...], preferred_element_type=jnp.float32) + b1_ref[...]
    h1 = jnp.where(h1 > 0, h1, 0.2 * h1)                         # LeakyReLU(0.2), f32

    # Linear 512 -> 256 : bf16 MXU inputs, f32 accumulation.
    h2 = jnp.dot(h1.astype(jnp.bfloat16), w2_ref[...],
                 preferred_element_type=jnp.float32) + b2_ref[...]
    h2 = jnp.where(h2 > 0, h2, 0.2 * h2)                         # LeakyReLU(0.2), f32

    # Linear 256 -> 1 on the VPU/XLU: broadcast-mul by the (1,256) w3 row and
    # reduce along lanes (avoids a pathological N=1 MXU matmul).
    h3 = jnp.sum(h2 * w3_ref[...], axis=-1)                      # (tb,) f32
    y = jax.nn.sigmoid(h3[None, :] + b3_ref[...])                # (1, tb) lane-dense
    o_ref[...] = y[None].astype(o_ref.dtype)                     # (1, 1, tb)


def discriminator_forward(x, params, *, tb=256):
    """x: (B, 784) f32.  params: dict of w1,b1,w2,b2,w3,b3.  Returns (B, 1) f32."""
    B, D = x.shape
    assert D == D_IN
    n_tiles = pl.cdiv(B, tb)
    B_pad = n_tiles * tb

    # Pad batch to a tile multiple and features to a lane multiple; cast the
    # MXU operands (x, w1, w2) to bf16. Zero-padding is exact in bf16.
    x_p = jnp.pad(x, ((0, B_pad - B), (0, D_PAD - D))).astype(jnp.bfloat16)
    w1 = jnp.pad(params["w1"], ((0, D_PAD - D), (0, 0))).astype(jnp.bfloat16)  # (896,512)
    b1 = params["b1"].astype(jnp.float32)                                      # (1,512)
    w2 = params["w2"].astype(jnp.bfloat16)                                     # (512,256)
    b2 = params["b2"].astype(jnp.float32)                                      # (1,256)
    w3 = params["w3"].reshape(1, H2).astype(jnp.float32)                       # (1,256)
    b3 = params["b3"].reshape(1, 1).astype(jnp.float32)                        # (1,1)

    full = lambda i: (0, 0)   # weights/biases: same whole block every grid step

    cost = pl.CostEstimate(
        flops=2 * B_pad * (D_PAD * H1 + H1 * H2 + H2),
        transcendentals=B_pad,
        bytes_accessed=(x_p.size * 2 + w1.size * 2 + w2.size * 2
                        + (b1.size + b2.size + w3.size + b3.size) * 4
                        + B_pad * 4),
    )

    out = pl.pallas_call(
        discriminator_kernel,
        out_shape=jax.ShapeDtypeStruct((n_tiles, 1, tb), jnp.float32),
        grid_spec=pltpu.PrefetchScalarGridSpec(
            num_scalar_prefetch=0,
            grid=(n_tiles,),
            in_specs=[
                pl.BlockSpec((tb, D_PAD), lambda i: (i, 0)),   # x tile
                pl.BlockSpec((D_PAD, H1), full),               # w1
                pl.BlockSpec((1, H1), full),                   # b1
                pl.BlockSpec((H1, H2), full),                  # w2
                pl.BlockSpec((1, H2), full),                   # b2
                pl.BlockSpec((1, H2), full),                   # w3 (row, lane-major)
                pl.BlockSpec((1, 1), full),                    # b3
            ],
            out_specs=pl.BlockSpec((1, 1, tb), lambda i: (i, 0, 0)),
        ),
        compiler_params=pltpu.CompilerParams(
            dimension_semantics=("parallel",)),
        cost_estimate=cost,
    )(x_p, w1, b1, w2, b2, w3, b3)

    return out.reshape(B_pad, 1)[:B]


def init_params(key):
    """Deterministic parameter init, shapes taken from the PyTorch module."""
    ks = jax.random.split(key, 6)

    def linear(kw, kb, fan_in, fan_out):
        # PyTorch nn.Linear default: U(-1/sqrt(fan_in), 1/sqrt(fan_in))
        bound = 1.0 / (fan_in ** 0.5)
        w = jax.random.uniform(kw, (fan_in, fan_out), jnp.float32, -bound, bound)
        b = jax.random.uniform(kb, (1, fan_out), jnp.float32, -bound, bound)
        return w, b

    w1, b1 = linear(ks[0], ks[1], D_IN, H1)
    w2, b2 = linear(ks[2], ks[3], H1, H2)
    w3, b3 = linear(ks[4], ks[5], H2, 1)
    return {"w1": w1, "b1": b1, "w2": w2, "b2": b2, "w3": w3, "b3": b3}


def reference_forward(x, p):
    """Pure-JAX f32 reference (matches the PyTorch forward)."""
    h1 = x @ p["w1"] + p["b1"]
    h1 = jnp.where(h1 > 0, h1, 0.2 * h1)
    h2 = h1 @ p["w2"] + p["b2"]
    h2 = jnp.where(h2 > 0, h2, 0.2 * h2)
    h3 = h2 @ p["w3"] + p["b3"]
    return jax.nn.sigmoid(h3)


if __name__ == "__main__":
    key = jax.random.PRNGKey(0)
    kx, kp = jax.random.split(key)

    B = 512                               # 2 grid steps at tb=256
    x = jax.random.normal(kx, (B, D_IN), dtype=jnp.float32)
    params = init_params(kp)

    out = jax.block_until_ready(discriminator_forward(x, params, tb=256))
    ref = reference_forward(x, params)
    assert out.shape == (B, 1)
    # bf16 MXU inputs vs f32 reference: loosened tolerance (outputs are in (0,1)).
    assert jnp.max(jnp.abs(out - ref)) < 2e-2

    # Awkward batch size exercises the pad-to-tile path.
    out13 = jax.block_until_ready(discriminator_forward(x[:13], params, tb=256))
    ref13 = reference_forward(x[:13], params)
    assert out13.shape == (13, 1)
    assert jnp.max(jnp.abs(out13 - ref13)) < 2e-2

    print("KERNEL_OK")
</pallas_src>

<mosaic_0001>
module attributes {stable_mosaic.version = 11 : i64} {
  func.func @discriminator_kernel(%arg0: i32, %arg1: memref<256x896xbf16, #tpu.memory_space<vmem>>, %arg2: memref<896x512xbf16, #tpu.memory_space<vmem>>, %arg3: memref<1x512xf32, #tpu.memory_space<vmem>>, %arg4: memref<512x256xbf16, #tpu.memory_space<vmem>>, %arg5: memref<1x256xf32, #tpu.memory_space<vmem>>, %arg6: memref<1x256xf32, #tpu.memory_space<vmem>>, %arg7: memref<1x1xf32, #tpu.memory_space<vmem>>, %arg8: memref<1x1x256xf32, #tpu.memory_space<vmem>>) attributes {dimension_semantics = [#tpu.dimension_semantics<parallel>], iteration_bounds = array<i64: 2>, scalar_prefetch = 0 : i64, scratch_operands = 0 : i64, tpu.core_type = #tpu.core_type<tc>, window_params = [{transform_indices = @transform_0, window_bounds = array<i64: 256, 896>}, {pipeline_mode = #tpu.pipeline_mode<synchronous>, transform_indices = @transform_1, window_bounds = array<i64: 896, 512>}, {pipeline_mode = #tpu.pipeline_mode<synchronous>, transform_indices = @transform_2, window_bounds = array<i64: 1, 512>}, {pipeline_mode = #tpu.pipeline_mode<synchronous>, transform_indices = @transform_3, window_bounds = array<i64: 512, 256>}, {pipeline_mode = #tpu.pipeline_mode<synchronous>, transform_indices = @transform_4, window_bounds = array<i64: 1, 256>}, {pipeline_mode = #tpu.pipeline_mode<synchronous>, transform_indices = @transform_5, window_bounds = array<i64: 1, 256>}, {pipeline_mode = #tpu.pipeline_mode<synchronous>, transform_indices = @transform_6, window_bounds = array<i64: 1, 1>}, {transform_indices = @transform_7, window_bounds = array<i64: 1, 1, 256>}]} {
    %c0 = arith.constant 0 : index
    %c0_0 = arith.constant 0 : index
    %0 = vector.load %arg1[%c0, %c0_0] : memref<256x896xbf16, #tpu.memory_space<vmem>>, vector<256x896xbf16>
    %c0_1 = arith.constant 0 : index
    %c0_2 = arith.constant 0 : index
    %1 = vector.load %arg2[%c0_1, %c0_2] : memref<896x512xbf16, #tpu.memory_space<vmem>>, vector<896x512xbf16>
    %cst = arith.constant dense<0.000000e+00> : vector<256x512xf32>
    %2 = tpu.matmul %0, %1, %cst {dimension_numbers = #tpu.dot_dimension_numbers<[1], [0], [0], [1], [0, 0, 1, 1], [], []>} : vector<256x896xbf16>, vector<896x512xbf16>, vector<256x512xf32> -> vector<256x512xf32>
    %c0_3 = arith.constant 0 : index
    %c0_4 = arith.constant 0 : index
    %3 = vector.load %arg3[%c0_3, %c0_4] : memref<1x512xf32, #tpu.memory_space<vmem>>, vector<1x512xf32>
    %4 = vector.broadcast %3 : vector<1x512xf32> to vector<256x512xf32>
    %5 = arith.addf %2, %4 : vector<256x512xf32>
    %cst_5 = arith.constant 0.000000e+00 : f32
    %6 = vector.broadcast %cst_5 : f32 to vector<256x512xf32>
    %7 = arith.cmpf ogt, %5, %6 : vector<256x512xf32>
    %cst_6 = arith.constant 2.000000e-01 : f32
    %8 = vector.broadcast %cst_6 : f32 to vector<256x512xf32>
    %9 = arith.mulf %8, %5 : vector<256x512xf32>
    %10 = arith.select %7, %5, %9 : vector<256x512xi1>, vector<256x512xf32>
    %11 = arith.truncf %10 : vector<256x512xf32> to vector<256x512xbf16>
    %c0_7 = arith.constant 0 : index
    %c0_8 = arith.constant 0 : index
    %12 = vector.load %arg4[%c0_7, %c0_8] : memref<512x256xbf16, #tpu.memory_space<vmem>>, vector<512x256xbf16>
    %cst_9 = arith.constant dense<0.000000e+00> : vector<256x256xf32>
    %13 = tpu.matmul %11, %12, %cst_9 {dimension_numbers = #tpu.dot_dimension_numbers<[1], [0], [0], [1], [0, 0, 1, 1], [], []>} : vector<256x512xbf16>, vector<512x256xbf16>, vector<256x256xf32> -> vector<256x256xf32>
    %c0_10 = arith.constant 0 : index
    %c0_11 = arith.constant 0 : index
    %14 = vector.load %arg5[%c0_10, %c0_11] : memref<1x256xf32, #tpu.memory_space<vmem>>, vector<1x256xf32>
    %15 = vector.broadcast %14 : vector<1x256xf32> to vector<256x256xf32>
    %16 = arith.addf %13, %15 : vector<256x256xf32>
    %cst_12 = arith.constant 0.000000e+00 : f32
    %17 = vector.broadcast %cst_12 : f32 to vector<256x256xf32>
    %18 = arith.cmpf ogt, %16, %17 : vector<256x256xf32>
    %cst_13 = arith.constant 2.000000e-01 : f32
    %19 = vector.broadcast %cst_13 : f32 to vector<256x256xf32>
    %20 = arith.mulf %19, %16 : vector<256x256xf32>
    %21 = arith.select %18, %16, %20 : vector<256x256xi1>, vector<256x256xf32>
    %c0_14 = arith.constant 0 : index
    %c0_15 = arith.constant 0 : index
    %22 = vector.load %arg6[%c0_14, %c0_15] : memref<1x256xf32, #tpu.memory_space<vmem>>, vector<1x256xf32>
    %23 = vector.broadcast %22 : vector<1x256xf32> to vector<256x256xf32>
    %24 = arith.mulf %21, %23 : vector<256x256xf32>
    %cst_16 = arith.constant dense<0.000000e+00> : vector<256xf32>
    %25 = vector.multi_reduction <add>, %24, %cst_16 [1] : vector<256x256xf32> to vector<256xf32>
    %26 = vector.shape_cast %25 : vector<256xf32> to vector<1x256xf32>
    %c0_17 = arith.constant 0 : index
    %c0_18 = arith.constant 0 : index
    %27 = vector.load %arg7[%c0_17, %c0_18] : memref<1x1xf32, #tpu.memory_space<vmem>>, vector<1x1xf32>
    %28 = vector.broadcast %27 : vector<1x1xf32> to vector<1x256xf32>
    %29 = arith.addf %26, %28 : vector<1x256xf32>
    %30 = arith.negf %29 : vector<1x256xf32>
    %31 = math.exp %30 : vector<1x256xf32>
    %cst_19 = arith.constant 1.000000e+00 : f32
    %32 = vector.broadcast %cst_19 : f32 to vector<1x256xf32>
    %33 = arith.addf %32, %31 : vector<1x256xf32>
    %34 = arith.divf %32, %33 : vector<1x256xf32>
    %35 = vector.shape_cast %34 : vector<1x256xf32> to vector<1x1x256xf32>
    %c0_20 = arith.constant 0 : index
    %c0_21 = arith.constant 0 : index
    %c0_22 = arith.constant 0 : index
    %36 = vector.load %arg8[%c0_20, %c0_21, %c0_22] : memref<1x1x256xf32, #tpu.memory_space<vmem>>, vector<1x1x256xf32>
    tpu.vector_store %arg8[%c0_20, %c0_21, %c0_22], %35 {strides = array<i32>} : memref<1x1x256xf32, #tpu.memory_space<vmem>>, vector<1x1x256xf32>,
    return
  }
  func.func @transform_0(%arg0: i32) -> (i32, i32) {
    %c0_i32 = arith.constant 0 : i32
    %c0_i32_0 = arith.constant 0 : i32
    return %arg0, %c0_i32 : i32, i32
  }
  func.func @transform_1(%arg0: i32) -> (i32, i32) {
    %c0_i32 = arith.constant 0 : i32
    %c0_i32_0 = arith.constant 0 : i32
    %c0_i32_1 = arith.constant 0 : i32
    return %c0_i32, %c0_i32_0 : i32, i32
  }
  func.func @transform_2(%arg0: i32) -> (i32, i32) {
    %c0_i32 = arith.constant 0 : i32
    %c0_i32_0 = arith.constant 0 : i32
    %c0_i32_1 = arith.constant 0 : i32
    return %c0_i32, %c0_i32_0 : i32, i32
  }
  func.func @transform_3(%arg0: i32) -> (i32, i32) {
    %c0_i32 = arith.constant 0 : i32
    %c0_i32_0 = arith.constant 0 : i32
    %c0_i32_1 = arith.constant 0 : i32
    return %c0_i32, %c0_i32_0 : i32, i32
  }
  func.func @transform_4(%arg0: i32) -> (i32, i32) {
    %c0_i32 = arith.constant 0 : i32
    %c0_i32_0 = arith.constant 0 : i32
    %c0_i32_1 = arith.constant 0 : i32
    return %c0_i32, %c0_i32_0 : i32, i32
  }
  func.func @transform_5(%arg0: i32) -> (i32, i32) {
    %c0_i32 = arith.constant 0 : i32
    %c0_i32_0 = arith.constant 0 : i32
    %c0_i32_1 = arith.constant 0 : i32
    return %c0_i32, %c0_i32_0 : i32, i32
  }
  func.func @transform_6(%arg0: i32) -> (i32, i32) {
    %c0_i32 = arith.constant 0 : i32
    %c0_i32_0 = arith.constant 0 : i32
    %c0_i32_1 = arith.constant 0 : i32
    return %c0_i32, %c0_i32_0 : i32, i32
  }
  func.func @transform_7(%arg0: i32) -> (i32, i32, i32) {
    %c0_i32 = arith.constant 0 : i32
    %c0_i32_0 = arith.constant 0 : i32
    %c0_i32_1 = arith.constant 0 : i32
    return %arg0, %c0_i32, %c0_i32_0 : i32, i32, i32
  }
}

</mosaic_0001>

<llo_original>
// kernel: tpu_custom_call.1
$region0: #{tpu_custom_call.1}
  #allocation0 [shape = 'u32[]', space=smem, size = 0x4, offset = 0x4, fixed_abs, tag = 'smem constant byte address 0x4 - core index']
  #allocation1 [shape = 'u32[72,128]{1,0:T(1,128)}', space=vmem, size = 0x9000, scoped, tag = 'internal scratch']
  #allocation2 [shape = 'f32[1,1]{1,0:T(1,128)S(1)}', space=vmem, size = 0x200, scoped, tag = 'scoped memory for tpu_custom_call.1']
  %s0 = inlined_call_operand.hbm [shape: bf16[512,896], index: 0, kind: input, shape index: {}]
  %s1 = inlined_call_operand.hbm [shape: bf16[896,512], index: 1, kind: input, shape index: {}]
  %s2 = inlined_call_operand.hbm [shape: f32[1,512], index: 2, kind: input, shape index: {}]
  %s3 = inlined_call_operand.hbm [shape: bf16[512,256], index: 3, kind: input, shape index: {}]
  %s4 = inlined_call_operand.vmem [shape: f32[1,256], index: 4, kind: input, shape index: {}]
  %s5 = inlined_call_operand.vmem [shape: f32[1,256], index: 5, kind: input, shape index: {}]
  %s6 = inlined_call_operand.<no memory space> [shape: f32[1,1], index: 6, kind: input, shape index: {}]
  %s7 = inlined_call_operand.hbm [shape: f32[2,1,256], index: 7, kind: output, shape index: {}]
  %s8 = sld [smem:[#allocation0]]
  $region77: #{tpu_custom_call.1} parent=0
    _
  %s10 = ssub.s32 1, %s8
  %s11 = scalar_select 0, %s10, %s8
  %v12 = vstv %s6
  %13 = vst [vmem:[#allocation2] sm:$0x1] %v12
  $region1: #{tpu_custom_call.1} parent=0
    #allocation3 [shape = 'u8[917504]{0}', space=vmem, size = 0xe0000, scoped, tag = 'input window, operand 0']
    #allocation4 [shape = 's32[2]{0}', space=sflag, size = 0x8, scoped, tag = 'scoped memory for tpu_custom_call.1']
    #allocation5 [shape = 's32[2]{0}', space=sflag, size = 0x8, scoped, tag = 'scoped memory for tpu_custom_call.1']
    #allocation6 [shape = 'u8[917504]{0}', space=vmem, size = 0xe0000, scoped, tag = 'input window, operand 1, single buffered']
    #allocation7 [shape = 's32[1]{0}', space=sflag, size = 0x4, scoped, tag = 'scoped memory for tpu_custom_call.1']
    #allocation8 [shape = 'u8[2048]{0}', space=vmem, size = 0x800, scoped, tag = 'input window, operand 2, single buffered']
    #allocation9 [shape = 'u8[262144]{0}', space=vmem, size = 0x40000, scoped, tag = 'input window, operand 3, single buffered']
    #allocation10 [shape = 's32[1]{0}', space=sflag, size = 0x4, scoped, tag = 'scoped memory for tpu_custom_call.1']
    #allocation11 [shape = 'u8[2048]{0}', space=vmem, size = 0x800, scoped, tag = 'output window, operand 0']
    %14 = vsyncpa [#allocation4], 0
    %s15 = scalar_lea.sflag [#allocation4], 1
    %16 = vsyncpa %s15, 0
    %17 = vsyncpa [#allocation7], 0
    %18 = vsyncpa [#allocation10], 0
    %19 = vsyncpa [#allocation5], 0
    %s20 = scalar_lea.sflag [#allocation5], 1
    %21 = vsyncpa %s20, 0
    loop: start=0, step=1, limit=4
    $region2: #{tpu_custom_call.1} parent=1 // loop_pre_header
      _
    $region3: #{tpu_custom_call.1} parent=1 // loop_header
      %s23 = sphi 0, %s27
      %p24 = scmp.ge.s32.totalorder %s23, 4
      %s33 = sphi 0, %s35
      %s36 = sphi 0, %s33
      %s37 = sphi 0, %s36
      %s53 = sphi 0, %s37
      %s57 = sphi 0, %s57
      %s59 = sphi 0, %s57
      %s60 = sphi 0, %s59
      %s74 = sphi 0, %s60
      %s78 = sphi 0, %s78
      %s80 = sphi 0, %s78
      %s81 = sphi 0, %s80
      %s95 = sphi 0, %s81
      %s99 = sphi 0, %s99
      %s101 = sphi 0, %s99
      %s102 = sphi 0, %s101
      %s116 = sphi 0, %s102
      %s120 = sphi 0, %s120
      %s122 = sphi 0, %s120
      %s123 = sphi 0, %s122
      %s137 = sphi 0, %s123
      %s141 = sphi 0, %s141
      %s143 = sphi 0, %s141
      %s144 = sphi 0, %s143
      %s158 = sphi 0, %s144
      %s162 = sphi 0, %s162
      %s164 = sphi 0, %s162
      %s165 = sphi 0, %s164
      %s179 = sphi 0, %s165
      %s185 = sphi 0, %s187
      %s188 = sphi 0, %s185
      %s189 = sphi 0, %s188
      %s205 = sphi 0, %s189
    $region4: #{tpu_custom_call.1} parent=1 // loop_header_branch
      %26 = sbr.rel (%p24) target = $region8
    $region5: #{tpu_custom_call.1} parent=1 // loop_body
      %s28 = ssub.s32 %s23, 1
      %s29 = ssub.s32 %s23, 2
      %s30 = sadd.s32 %s23, 1
      %s31 = ssub.s32 %s23, %s30
      %p32 = scmp.eq.s32.totalorder %s31, 0
      %s34 = sadd.s32 %s33, 1
      %s35 = scalar_select %p32, %s33, %s34
      %p38 = pneg %p32
      %p39 = scmp.eq.s32.totalorder %s23, 1
      %p40 = por %p38, %p39
      %p41 = scmp.ne.s32.totalorder %s33, %s36
      %p42 = scmp.eq.s32.totalorder %s23, 0
      %p43 = por %p41, %p42
      %p44 = scmp.ne.s32.totalorder %s33, %s36
      %p45 = scmp.eq.s32.totalorder %s28, 1
      %p46 = por %p44, %p45
      %p47 = scmp.ne.s32.totalorder %s36, %s37
      %p48 = scmp.eq.s32.totalorder %s28, 0
      %p49 = por %p47, %p48
      %p50 = scmp.ne.s32.totalorder %s36, %s37
      %p51 = scmp.eq.s32.totalorder %s29, 1
      %p52 = por %p50, %p51
      %p54 = scmp.ne.s32.totalorder %s37, %s53
      %p55 = scmp.eq.s32.totalorder %s29, 0
      %p56 = por %p54, %p55
      %s58 = sadd.s32 %s57, 1
      %p61 = scmp.eq.s32.totalorder %s23, 1
      %p62 = scmp.ne.s32.totalorder %s57, %s59
      %p63 = scmp.eq.s32.totalorder %s23, 0
      %p64 = por %p62, %p63
      %p65 = scmp.ne.s32.totalorder %s57, %s59
      %p66 = scmp.eq.s32.totalorder %s28, 1
      %p67 = por %p65, %p66
      %p68 = scmp.ne.s32.totalorder %s59, %s60
      %p69 = scmp.eq.s32.totalorder %s28, 0
      %p70 = por %p68, %p69
      %p71 = scmp.ne.s32.totalorder %s59, %s60
      %p72 = scmp.eq.s32.totalorder %s29, 1
      %p73 = por %p71, %p72
      %p75 = scmp.ne.s32.totalorder %s60, %s74
      %p76 = scmp.eq.s32.totalorder %s29, 0
      %p77 = por %p75, %p76
      %s79 = sadd.s32 %s78, 1
      %p82 = scmp.eq.s32.totalorder %s23, 1
      %p83 = scmp.ne.s32.totalorder %s78, %s80
      %p84 = scmp.eq.s32.totalorder %s23, 0
      %p85 = por %p83, %p84
      %p86 = scmp.ne.s32.totalorder %s78, %s80
      %p87 = scmp.eq.s32.totalorder %s28, 1
      %p88 = por %p86, %p87
      %p89 = scmp.ne.s32.totalorder %s80, %s81
      %p90 = scmp.eq.s32.totalorder %s28, 0
      %p91 = por %p89, %p90
      %p92 = scmp.ne.s32.totalorder %s80, %s81
      %p93 = scmp.eq.s32.totalorder %s29, 1
      %p94 = por %p92, %p93
      %p96 = scmp.ne.s32.totalorder %s81, %s95
      %p97 = scmp.eq.s32.totalorder %s29, 0
      %p98 = por %p96, %p97
      %s100 = sadd.s32 %s99, 1
      %p103 = scmp.eq.s32.totalorder %s23, 1
      %p104 = scmp.ne.s32.totalorder %s99, %s101
      %p105 = scmp.eq.s32.totalorder %s23, 0
      %p106 = por %p104, %p105
      %p107 = scmp.ne.s32.totalorder %s99, %s101
      %p108 = scmp.eq.s32.totalorder %s28, 1
      %p109 = por %p107, %p108
      %p110 = scmp.ne.s32.totalorder %s101, %s102
      %p111 = scmp.eq.s32.totalorder %s28, 0
      %p112 = por %p110, %p111
      %p113 = scmp.ne.s32.totalorder %s101, %s102
      %p114 = scmp.eq.s32.totalorder %s29, 1
      %p115 = por %p113, %p114
      %p117 = scmp.ne.s32.totalorder %s102, %s116
      %p118 = scmp.eq.s32.totalorder %s29, 0
      %p119 = por %p117, %p118
      %s121 = sadd.s32 %s120, 1
      %p124 = scmp.eq.s32.totalorder %s23, 1
      %p125 = scmp.ne.s32.totalorder %s120, %s122
      %p126 = scmp.eq.s32.totalorder %s23, 0
      %p127 = por %p125, %p126
      %p128 = scmp.ne.s32.totalorder %s120, %s122
      %p129 = scmp.eq.s32.totalorder %s28, 1
      %p130 = por %p128, %p129
      %p131 = scmp.ne.s32.totalorder %s122, %s123
      %p132 = scmp.eq.s32.totalorder %s28, 0
      %p133 = por %p131, %p132
      %p134 = scmp.ne.s32.totalorder %s122, %s123
      %p135 = scmp.eq.s32.totalorder %s29, 1
      %p136 = por %p134, %p135
      %p138 = scmp.ne.s32.totalorder %s123, %s137
      %p139 = scmp.eq.s32.totalorder %s29, 0
      %p140 = por %p138, %p139
      %s142 = sadd.s32 %s141, 1
      %p145 = scmp.eq.s32.totalorder %s23, 1
      %p146 = scmp.ne.s32.totalorder %s141, %s143
      %p147 = scmp.eq.s32.totalorder %s23, 0
      %p148 = por %p146, %p147
      %p149 = scmp.ne.s32.totalorder %s141, %s143
      %p150 = scmp.eq.s32.totalorder %s28, 1
      %p151 = por %p149, %p150
      %p152 = scmp.ne.s32.totalorder %s143, %s144
      %p153 = scmp.eq.s32.totalorder %s28, 0
      %p154 = por %p152, %p153
      %p155 = scmp.ne.s32.totalorder %s143, %s144
      %p156 = scmp.eq.s32.totalorder %s29, 1
      %p157 = por %p155, %p156
      %p159 = scmp.ne.s32.totalorder %s144, %s158
      %p160 = scmp.eq.s32.totalorder %s29, 0
      %p161 = por %p159, %p160
      %s163 = sadd.s32 %s162, 1
      %p166 = scmp.eq.s32.totalorder %s23, 1
      %p167 = scmp.ne.s32.totalorder %s162, %s164
      %p168 = scmp.eq.s32.totalorder %s23, 0
      %p169 = por %p167, %p168
      %p170 = scmp.ne.s32.totalorder %s162, %s164
      %p171 = scmp.eq.s32.totalorder %s28, 1
      %p172 = por %p170, %p171
      %p173 = scmp.ne.s32.totalorder %s164, %s165
      %p174 = scmp.eq.s32.totalorder %s28, 0
      %p175 = por %p173, %p174
      %p176 = scmp.ne.s32.totalorder %s164, %s165
      %p177 = scmp.eq.s32.totalorder %s29, 1
      %p178 = por %p176, %p177
      %p180 = scmp.ne.s32.totalorder %s165, %s179
      %p181 = scmp.eq.s32.totalorder %s29, 0
      %p182 = por %p180, %p181
      %s183 = ssub.s32 %s23, %s30
      %p184 = scmp.eq.s32.totalorder %s183, 0
      %s186 = sadd.s32 %s185, 1
      %s187 = scalar_select %p184, %s185, %s186
      %p190 = pneg %p184
      %p191 = scmp.eq.s32.totalorder %s23, 1
      %p192 = por %p190, %p191
      %p193 = scmp.ne.s32.totalorder %s185, %s188
      %p194 = scmp.eq.s32.totalorder %s23, 0
      %p195 = por %p193, %p194
      %p196 = scmp.ne.s32.totalorder %s185, %s188
      %p197 = scmp.eq.s32.totalorder %s28, 1
      %p198 = por %p196, %p197
      %p199 = scmp.ne.s32.totalorder %s188, %s189
      %p200 = scmp.eq.s32.totalorder %s28, 0
      %p201 = por %p199, %p200
      %p202 = scmp.ne.s32.totalorder %s188, %s189
      %p203 = scmp.eq.s32.totalorder %s29, 1
      %p204 = por %p202, %p203
      %p206 = scmp.ne.s32.totalorder %s189, %s205
      %p207 = scmp.eq.s32.totalorder %s29, 0
      %p208 = por %p206, %p207
      %p209 = scmp.le.s32.totalorder 1, %s23
      %p210 = scmp.lt.s32.totalorder %s23, 3
      %p211 = pnand %p209, %p210
      %p212 = pneg %p211
      // Predicated region
      $region9: #{tpu_custom_call.1} parent=5 // pred_check
        _
      $region10: #{tpu_custom_call.1} parent=5 // pred_check_branch
        %214 = sbr.rel (%p211) target = $region12
      $region11: #{tpu_custom_call.1} parent=5 // pred_region
        %s215 = ssub.s32 %s23, 1
        // Predicated region
        $region13: #{tpu_custom_call.1} parent=11 // pred_check
          %p216 = pneg %p70
        $region14: #{tpu_custom_call.1} parent=11 // pred_check_branch
          %218 = sbr.rel (%p216) target = $region16
        $region15: #{tpu_custom_call.1} parent=11 // pred_region
          %220 = vsyncadd [#allocation7], 0
          %s221 = sshll.u32 %s1, 4
          %s222 = int_to_ptr.hbm [resolvable:$true] %s221
          %s223 = sshll.u32 [#allocation6], 4
          %s224 = int_to_ptr.vmem [resolvable:$true] %s223
          %229 = dma.hbm_to_vmem [thread:$0]  %s222, 28672, %s224, [#allocation7], 256, 256, 16
        $region16: #{tpu_custom_call.1} parent=11 // pred_fallthru
          _
        // Predicated region
        $region17: #{tpu_custom_call.1} parent=11 // pred_check
          %p230 = pneg %p91
        $region18: #{tpu_custom_call.1} parent=11 // pred_check_branch
          %232 = sbr.rel (%p230) target = $region20
        $region19: #{tpu_custom_call.1} parent=11 // pred_region
          %234 = vsyncadd [#allocation7], 0
          %s236 = sshll.u32 %s2, 4
          %s237 = int_to_ptr.hbm [resolvable:$true] %s236
          %s238 = sshll.u32 [#allocation8], 4
          %s239 = int_to_ptr.vmem [resolvable:$true] %s238
          %241 = dma.hbm_to_vmem [thread:$0]  %s237, 64, %s239, [#allocation7]
        $region20: #{tpu_custom_call.1} parent=11 // pred_fallthru
          _
        // Predicated region
        $region21: #{tpu_custom_call.1} parent=11 // pred_check
          %p242 = pneg %p112
        $region22: #{tpu_custom_call.1} parent=11 // pred_check_branch
          %244 = sbr.rel (%p242) target = $region24
        $region23: #{tpu_custom_call.1} parent=11 // pred_region
          %246 = vsyncadd [#allocation10], 0
          %s247 = sshll.u32 %s3, 4
          %s248 = int_to_ptr.hbm [resolvable:$true] %s247
          %s249 = sshll.u32 [#allocation9], 4
          %s250 = int_to_ptr.vmem [resolvable:$true] %s249
          %255 = dma.hbm_to_vmem [thread:$0]  %s248, 8192, %s250, [#allocation10], 128, 128, 8
        $region24: #{tpu_custom_call.1} parent=11 // pred_fallthru
          _
        // Predicated region
        $region25: #{tpu_custom_call.1} parent=11 // pred_check
          %p256 = pneg %p133
        $region26: #{tpu_custom_call.1} parent=11 // pred_check_branch
          %258 = sbr.rel (%p256) target = $region28
        $region27: #{tpu_custom_call.1} parent=11 // pred_region
          _
        $region28: #{tpu_custom_call.1} parent=11 // pred_fallthru
          _
        // Predicated region
        $region29: #{tpu_custom_call.1} parent=11 // pred_check
          %p259 = pneg %p154
        $region30: #{tpu_custom_call.1} parent=11 // pred_check_branch
          %261 = sbr.rel (%p259) target = $region32
        $region31: #{tpu_custom_call.1} parent=11 // pred_region
          _
        $region32: #{tpu_custom_call.1} parent=11 // pred_fallthru
          _
        // Predicated region
        $region33: #{tpu_custom_call.1} parent=11 // pred_check
          %p262 = pneg %p175
        $region34: #{tpu_custom_call.1} parent=11 // pred_check_branch
          %264 = sbr.rel (%p262) target = $region36
        $region35: #{tpu_custom_call.1} parent=11 // pred_region
          _
        $region36: #{tpu_custom_call.1} parent=11 // pred_fallthru
          _
      $region12: #{tpu_custom_call.1} parent=5 // pred_fallthru
        _
      %p265 = scmp.lt.s32.totalorder %s23, 2
      // Predicated region
      $region37: #{tpu_custom_call.1} parent=5 // pred_check
        %p266 = pneg %p265
      $region38: #{tpu_custom_call.1} parent=5 // pred_check_branch
        %268 = sbr.rel (%p266) target = $region40
      $region39: #{tpu_custom_call.1} parent=5 // pred_region
        // Predicated region
        $region41: #{tpu_custom_call.1} parent=39 // pred_check
          %p269 = pneg %p43
        $region42: #{tpu_custom_call.1} parent=39 // pred_check_branch
          %271 = sbr.rel (%p269) target = $region44
        $region43: #{tpu_custom_call.1} parent=39 // pred_region
          %s272 = sand.u32 %s33, 1
          %s273 = scalar_lea.sflag [#allocation4], %s272
          %s274 = sand.u32 %s33, 1
          %s275 = smul.addr %s274, 896
          %s276 = scalar_lea.vmem [#allocation3], %s275
          %s277 = smul.u32 32, %s23
          %279 = vsyncadd %s273, 0
          %s280 = smul.addr %s277, 7
          %s281 = smul.addr %s280, 4
          %s282 = scalar_lea.hbm %s0, %s281
          %s283 = sshll.u32 %s282, 4
          %s284 = int_to_ptr.hbm [resolvable:$true] %s283
          %s285 = sshll.u32 %s276, 4
          %s286 = int_to_ptr.vmem [resolvable:$true] %s285
          %291 = dma.hbm_to_vmem [thread:$0]  %s284, 14336, %s286, %s273, 448, 448, 28
        $region44: #{tpu_custom_call.1} parent=39 // pred_fallthru
          _
      $region40: #{tpu_custom_call.1} parent=5 // pred_fallthru
        _
      %p292 = scmp.le.s32.totalorder 1, %s23
      %p293 = scmp.lt.s32.totalorder %s23, 3
      %p294 = pnand %p292, %p293
      %p295 = pneg %p294
      // Predicated region
      $region45: #{tpu_custom_call.1} parent=5 // pred_check
        _
      $region46: #{tpu_custom_call.1} parent=5 // pred_check_branch
        %297 = sbr.rel (%p294) target = $region48
      $region47: #{tpu_custom_call.1} parent=5 // pred_region
        %s298 = ssub.s32 %s23, 1
        %s299 = sand.u32 %s36, 1
        %s300 = scalar_lea.sflag [#allocation4], %s299
        %s301 = sand.u32 %s36, 1
        %s302 = smul.addr %s301, 896
        %s303 = scalar_lea.vmem [#allocation3], %s302
        // Predicated region
        $region49: #{tpu_custom_call.1} parent=47 // pred_check
          %p304 = pneg %p49
        $region50: #{tpu_custom_call.1} parent=47 // pred_check_branch
          %306 = sbr.rel (%p304) target = $region52
        $region51: #{tpu_custom_call.1} parent=47 // pred_region
          %308 = dma.done %s300, 14336
        $region52: #{tpu_custom_call.1} parent=47 // pred_fallthru
          _
        // Predicated region
        $region53: #{tpu_custom_call.1} parent=47 // pred_check
          %p309 = pneg %p70
        $region54: #{tpu_custom_call.1} parent=47 // pred_check_branch
          %311 = sbr.rel (%p309) target = $region56
        $region55: #{tpu_custom_call.1} parent=47 // pred_region
          %313 = dma.done [#allocation7], 28672
        $region56: #{tpu_custom_call.1} parent=47 // pred_fallthru
          _
        // Predicated region
        $region57: #{tpu_custom_call.1} parent=47 // pred_check
          %p314 = pneg %p91
        $region58: #{tpu_custom_call.1} parent=47 // pred_check_branch
          %316 = sbr.rel (%p314) target = $region60
        $region59: #{tpu_custom_call.1} parent=47 // pred_region
          %318 = dma.done [#allocation7], 64
        $region60: #{tpu_custom_call.1} parent=47 // pred_fallthru
          _
        // Predicated region
        $region61: #{tpu_custom_call.1} parent=47 // pred_check
          %p319 = pneg %p112
        $region62: #{tpu_custom_call.1} parent=47 // pred_check_branch
          %321 = sbr.rel (%p319) target = $region64
        $region63: #{tpu_custom_call.1} parent=47 // pred_region
          %323 = dma.done [#allocation10], 8192
        $region64: #{tpu_custom_call.1} parent=47 // pred_fallthru
          _
        %s324 = sand.u32 %s36, 1
        %s325 = scalar_lea.sflag [#allocation4], %s324
        %s326 = sand.u32 %s36, 1
        %s327 = smul.addr %s326, 896
        %s328 = scalar_lea.vmem [#allocation3], %s327
        %p329 = pneg %p49
        %p330 = pneg %p46
        %p331 = pneg %p70
        %p332 = pneg %p67
        %p333 = pneg %p91
        %p334 = pneg %p88
        %p335 = pneg %p112
        %p336 = pneg %p109
        %p337 = pneg %p133
        %p338 = pneg %p130
        %p339 = pneg %p154
        %p340 = pneg %p151
        %p341 = pneg %p175
        %p342 = pneg %p172
        %p343 = pneg %p201
        %p344 = pneg %p198
        %s345 = sand.u32 %s188, 1
        %s346 = scalar_lea.sflag [#allocation5], %s345
        %s347 = sand.u32 %s188, 1
        %s348 = smul.addr %s347, 2
        %s349 = scalar_lea.vmem [#allocation11], %s348
        %s350 = smul.u32 32, %s28
        %v351 = vld [vmem:[%s303] sm:$0xff]
        %v352 = vld [vmem:[%s303 + $0x8] sm:$0xff]
        %v353 = vld [vmem:[%s303 + $0x10] sm:$0xff]
        %v354 = vld [vmem:[%s303 + $0x18] sm:$0xf]
        %v355 = vld [vmem:[%s303 + $0x1c] sm:$0xff]
        %v356 = vld [vmem:[%s303 + $0x24] sm:$0xff]
        %v357 = vld [vmem:[%s303 + $0x2c] sm:$0xff]
        %v358 = vld [vmem:[%s303 + $0x34] sm:$0xf]
        %v359 = vld [vmem:[%s303 + $0x38] sm:$0xff]
        %v360 = vld [vmem:[%s303 + $0x40] sm:$0xff]
        %v361 = vld [vmem:[%s303 + $0x48] sm:$0xff]
        %v362 = vld [vmem:[%s303 + $0x50] sm:$0xf]
        %v363 = vld [vmem:[%s303 + $0x54] sm:$0xff]
        %v364 = vld [vmem:[%s303 + $0x5c] sm:$0xff]
        %v365 = vld [vmem:[%s303 + $0x64] sm:$0xff]
        %v366 = vld [vmem:[%s303 + $0x6c] sm:$0xf]
        %v367 = vld [vmem:[%s303 + $0x70] sm:$0xff]
        %v368 = vld [vmem:[%s303 + $0x78] sm:$0xff]
        %v369 = vld [vmem:[%s303 + $0x80] sm:$0xff]
        %v370 = vld [vmem:[%s303 + $0x88] sm:$0xf]
        %v371 = vld [vmem:[%s303 + $0x8c] sm:$0xff]
        %v372 = vld [vmem:[%s303 + $0x94] sm:$0xff]
        %v373 = vld [vmem:[%s303 + $0x9c] sm:$0xff]
        %v374 = vld [vmem:[%s303 + $0xa4] sm:$0xf]
        %v375 = vld [vmem:[%s303 + $0xa8] sm:$0xff]
        %v376 = vld [vmem:[%s303 + $0xb0] sm:$0xff]
        %v377 = vld [vmem:[%s303 + $0xb8] sm:$0xff]
        %v378 = vld [vmem:[%s303 + $0xc0] sm:$0xf]
        %v379 = vld [vmem:[%s303 + $0xc4] sm:$0xff]
        %v380 = vld [vmem:[%s303 + $0xcc] sm:$0xff]
        %v381 = vld [vmem:[%s303 + $0xd4] sm:$0xff]
        %v382 = vld [vmem:[%s303 + $0xdc] sm:$0xf]
        %v383 = vld [vmem:[%s303 + $0xe0] sm:$0xff]
        %v384 = vld [vmem:[%s303 + $0xe8] sm:$0xff]
        %v385 = vld [vmem:[%s303 + $0xf0] sm:$0xff]
        %v386 = vld [vmem:[%s303 + $0xf8] sm:$0xf]
        %v387 = vld [vmem:[%s303 + $0xfc] sm:$0xff]
        %v388 = vld [vmem:[%s303 + $0x104] sm:$0xff]
        %v389 = vld [vmem:[%s303 + $0x10c] sm:$0xff]
        %v390 = vld [vmem:[%s303 + $0x114] sm:$0xf]
        %v391 = vld [vmem:[%s303 + $0x118] sm:$0xff]
        %v392 = vld [vmem:[%s303 + $0x120] sm:$0xff]
        %v393 = vld [vmem:[%s303 + $0x128] sm:$0xff]
        %v394 = vld [vmem:[%s303 + $0x130] sm:$0xf]
        %v395 = vld [vmem:[%s303 + $0x134] sm:$0xff]
        %v396 = vld [vmem:[%s303 + $0x13c] sm:$0xff]
        %v397 = vld [vmem:[%s303 + $0x144] sm:$0xff]
        %v398 = vld [vmem:[%s303 + $0x14c] sm:$0xf]
        %v399 = vld [vmem:[%s303 + $0x150] sm:$0xff]
        %v400 = vld [vmem:[%s303 + $0x158] sm:$0xff]
        %v401 = vld [vmem:[%s303 + $0x160] sm:$0xff]
        %v402 = vld [vmem:[%s303 + $0x168] sm:$0xf]
        %v403 = vld [vmem:[%s303 + $0x16c] sm:$0xff]
        %v404 = vld [vmem:[%s303 + $0x174] sm:$0xff]
        %v405 = vld [vmem:[%s303 + $0x17c] sm:$0xff]
        %v406 = vld [vmem:[%s303 + $0x184] sm:$0xf]
        %v407 = vld [vmem:[%s303 + $0x188] sm:$0xff]
        %v408 = vld [vmem:[%s303 + $0x190] sm:$0xff]
        %v409 = vld [vmem:[%s303 + $0x198] sm:$0xff]
        %v410 = vld [vmem:[%s303 + $0x1a0] sm:$0xf]
        %v411 = vld [vmem:[%s303 + $0x1a4] sm:$0xff]
        %v412 = vld [vmem:[%s303 + $0x1ac] sm:$0xff]
        %v413 = vld [vmem:[%s303 + $0x1b4] sm:$0xff]
        %v414 = vld [vmem:[%s303 + $0x1bc] sm:$0xf]
        %v415 = vld [vmem:[%s303 + $0x1c0] sm:$0xff]
        %v416 = vld [vmem:[%s303 + $0x1c8] sm:$0xff]
        %v417 = vld [vmem:[%s303 + $0x1d0] sm:$0xff]
        %v418 = vld [vmem:[%s303 + $0x1d8] sm:$0xf]
        %v419 = vld [vmem:[%s303 + $0x1dc] sm:$0xff]
        %v420 = vld [vmem:[%s303 + $0x1e4] sm:$0xff]
        %v421 = vld [vmem:[%s303 + $0x1ec] sm:$0xff]
        %v422 = vld [vmem:[%s303 + $0x1f4] sm:$0xf]
        %v423 = vld [vmem:[%s303 + $0x1f8] sm:$0xff]
        %v424 = vld [vmem:[%s303 + $0x200] sm:$0xff]
        %v425 = vld [vmem:[%s303 + $0x208] sm:$0xff]
        %v426 = vld [vmem:[%s303 + $0x210] sm:$0xf]
        %v427 = vld [vmem:[%s303 + $0x214] sm:$0xff]
        %v428 = vld [vmem:[%s303 + $0x21c] sm:$0xff]
        %v429 = vld [vmem:[%s303 + $0x224] sm:$0xff]
        %v430 = vld [vmem:[%s303 + $0x22c] sm:$0xf]
        %v431 = vld [vmem:[%s303 + $0x230] sm:$0xff]
        %v432 = vld [vmem:[%s303 + $0x238] sm:$0xff]
        %v433 = vld [vmem:[%s303 + $0x240] sm:$0xff]
        %v434 = vld [vmem:[%s303 + $0x248] sm:$0xf]
        %v435 = vld [vmem:[%s303 + $0x24c] sm:$0xff]
        %v436 = vld [vmem:[%s303 + $0x254] sm:$0xff]
        %v437 = vld [vmem:[%s303 + $0x25c] sm:$0xff]
        %v438 = vld [vmem:[%s303 + $0x264] sm:$0xf]
        %v439 = vld [vmem:[%s303 + $0x268] sm:$0xff]
        %v440 = vld [vmem:[%s303 + $0x270] sm:$0xff]
        %v441 = vld [vmem:[%s303 + $0x278] sm:$0xff]
        %v442 = vld [vmem:[%s303 + $0x280] sm:$0xf]
        %v443 = vld [vmem:[%s303 + $0x284] sm:$0xff]
        %v444 = vld [vmem:[%s303 + $0x28c] sm:$0xff]
        %v445 = vld [vmem:[%s303 + $0x294] sm:$0xff]
        %v446 = vld [vmem:[%s303 + $0x29c] sm:$0xf]
        %v447 = vld [vmem:[%s303 + $0x2a0] sm:$0xff]
        %v448 = vld [vmem:[%s303 + $0x2a8] sm:$0xff]
        %v449 = vld [vmem:[%s303 + $0x2b0] sm:$0xff]
        %v450 = vld [vmem:[%s303 + $0x2b8] sm:$0xf]
        %v451 = vld [vmem:[%s303 + $0x2bc] sm:$0xff]
        %v452 = vld [vmem:[%s303 + $0x2c4] sm:$0xff]
        %v453 = vld [vmem:[%s303 + $0x2cc] sm:$0xff]
        %v454 = vld [vmem:[%s303 + $0x2d4] sm:$0xf]
        %v455 = vld [vmem:[%s303 + $0x2d8] sm:$0xff]
        %v456 = vld [vmem:[%s303 + $0x2e0] sm:$0xff]
        %v457 = vld [vmem:[%s303 + $0x2e8] sm:$0xff]
        %v458 = vld [vmem:[%s303 + $0x2f0] sm:$0xf]
        %v459 = vld [vmem:[%s303 + $0x2f4] sm:$0xff]
        %v460 = vld [vmem:[%s303 + $0x2fc] sm:$0xff]
        %v461 = vld [vmem:[%s303 + $0x304] sm:$0xff]
        %v462 = vld [vmem:[%s303 + $0x30c] sm:$0xf]
        %v463 = vld [vmem:[%s303 + $0x310] sm:$0xff]
        %v464 = vld [vmem:[%s303 + $0x318] sm:$0xff]
        %v465 = vld [vmem:[%s303 + $0x320] sm:$0xff]
        %v466 = vld [vmem:[%s303 + $0x328] sm:$0xf]
        %v467 = vld [vmem:[%s303 + $0x32c] sm:$0xff]
        %v468 = vld [vmem:[%s303 + $0x334] sm:$0xff]
        %v469 = vld [vmem:[%s303 + $0x33c] sm:$0xff]
        %v470 = vld [vmem:[%s303 + $0x344] sm:$0xf]
        %v471 = vld [vmem:[%s303 + $0x348] sm:$0xff]
        %v472 = vld [vmem:[%s303 + $0x350] sm:$0xff]
        %v473 = vld [vmem:[%s303 + $0x358] sm:$0xff]
        %v474 = vld [vmem:[%s303 + $0x360] sm:$0xf]
        %v475 = vld [vmem:[%s303 + $0x364] sm:$0xff]
        %v476 = vld [vmem:[%s303 + $0x36c] sm:$0xff]
        %v477 = vld [vmem:[%s303 + $0x374] sm:$0xff]
        %v478 = vld [vmem:[%s303 + $0x37c] sm:$0xf]
        %v479 = vld [vmem:[#allocation6] sm:$0xff]
        %v480 = vld [vmem:[#allocation6 + $0x8] sm:$0xff]
        %v481 = vld [vmem:[#allocation6 + $0x10] sm:$0xff]
        %v482 = vld [vmem:[#allocation6 + $0x18] sm:$0xff]
        %v483 = vld [vmem:[#allocation6 + $0x20] sm:$0xff]
        %v484 = vld [vmem:[#allocation6 + $0x28] sm:$0xff]
        %v485 = vld [vmem:[#allocation6 + $0x30] sm:$0xff]
        %v486 = vld [vmem:[#allocation6 + $0x38] sm:$0xff]
        %v487 = vld [vmem:[#allocation6 + $0x40] sm:$0xff]
        %v488 = vld [vmem:[#allocation6 + $0x48] sm:$0xff]
        %v489 = vld [vmem:[#allocation6 + $0x50] sm:$0xff]
        %v490 = vld [vmem:[#allocation6 + $0x58] sm:$0xff]
        %v491 = vld [vmem:[#allocation6 + $0x60] sm:$0xff]
        %v492 = vld [vmem:[#allocation6 + $0x68] sm:$0xff]
        %v493 = vld [vmem:[#allocation6 + $0x70] sm:$0xff]
        %v494 = vld [vmem:[#allocation6 + $0x78] sm:$0xff]
        %v495 = vld [vmem:[#allocation6 + $0x80] sm:$0xff]
        %v496 = vld [vmem:[#allocation6 + $0x88] sm:$0xff]
        %v497 = vld [vmem:[#allocation6 + $0x90] sm:$0xff]
        %v498 = vld [vmem:[#allocation6 + $0x98] sm:$0xff]
        %v499 = vld [vmem:[#allocation6 + $0xa0] sm:$0xff]
        %v500 = vld [vmem:[#allocation6 + $0xa8] sm:$0xff]
        %v501 = vld [vmem:[#allocation6 + $0xb0] sm:$0xff]
        %v502 = vld [vmem:[#allocation6 + $0xb8] sm:$0xff]
        %v503 = vld [vmem:[#allocation6 + $0xc0] sm:$0xff]
        %v504 = vld [vmem:[#allocation6 + $0xc8] sm:$0xff]
        %v505 = vld [vmem:[#allocation6 + $0xd0] sm:$0xff]
        %v506 = vld [vmem:[#allocation6 + $0xd8] sm:$0xff]
        %v507 = vld [vmem:[#allocation6 + $0xe0] sm:$0xff]
        %v508 = vld [vmem:[#allocation6 + $0xe8] sm:$0xff]
        %v509 = vld [vmem:[#allocation6 + $0xf0] sm:$0xff]
        %v510 = vld [vmem:[#allocation6 + $0xf8] sm:$0xff]
        %v511 = vld [vmem:[#allocation6 + $0x100] sm:$0xff]
        %v512 = vld [vmem:[#allocation6 + $0x108] sm:$0xff]
        %v513 = vld [vmem:[#allocation6 + $0x110] sm:$0xff]
        %v514 = vld [vmem:[#allocation6 + $0x118] sm:$0xff]
        %v515 = vld [vmem:[#allocation6 + $0x120] sm:$0xff]
        %v516 = vld [vmem:[#allocation6 + $0x128] sm:$0xff]
        %v517 = vld [vmem:[#allocation6 + $0x130] sm:$0xff]
        %v518 = vld [vmem:[#allocation6 + $0x138] sm:$0xff]
        %v519 = vld [vmem:[#allocation6 + $0x140] sm:$0xff]
        %v520 = vld [vmem:[#allocation6 + $0x148] sm:$0xff]
        %v521 = vld [vmem:[#allocation6 + $0x150] sm:$0xff]
        %v522 = vld [vmem:[#allocation6 + $0x158] sm:$0xff]
        %v523 = vld [vmem:[#allocation6 + $0x160] sm:$0xff]
        %v524 = vld [vmem:[#allocation6 + $0x168] sm:$0xff]
        %v525 = vld [vmem:[#allocation6 + $0x170] sm:$0xff]
        %v526 = vld [vmem:[#allocation6 + $0x178] sm:$0xff]
        %v527 = vld [vmem:[#allocation6 + $0x180] sm:$0xff]
        %v528 = vld [vmem:[#allocation6 + $0x188] sm:$0xff]
        %v529 = vld [vmem:[#allocation6 + $0x190] sm:$0xff]
        %v530 = vld [vmem:[#allocation6 + $0x198] sm:$0xff]
        %v531 = vld [vmem:[#allocation6 + $0x1a0] sm:$0xff]
        %v532 = vld [vmem:[#allocation6 + $0x1a8] sm:$0xff]
        %v533 = vld [vmem:[#allocation6 + $0x1b0] sm:$0xff]
        %v534 = vld [vmem:[#allocation6 + $0x1b8] sm:$0xff]
        %v535 = vld [vmem:[#allocation6 + $0x1c0] sm:$0xff]
        %v536 = vld [vmem:[#allocation6 + $0x1c8] sm:$0xff]
        %v537 = vld [vmem:[#allocation6 + $0x1d0] sm:$0xff]
        %v538 = vld [vmem:[#allocation6 + $0x1d8] sm:$0xff]
        %v539 = vld [vmem:[#allocation6 + $0x1e0] sm:$0xff]
        %v540 = vld [vmem:[#allocation6 + $0x1e8] sm:$0xff]
        %v541 = vld [vmem:[#allocation6 + $0x1f0] sm:$0xff]
        %v542 = vld [vmem:[#allocation6 + $0x1f8] sm:$0xff]
        %v543 = vld [vmem:[#allocation6 + $0x200] sm:$0xff]
        %v544 = vld [vmem:[#allocation6 + $0x208] sm:$0xff]
        %v545 = vld [vmem:[#allocation6 + $0x210] sm:$0xff]
        %v546 = vld [vmem:[#allocation6 + $0x218] sm:$0xff]
        %v547 = vld [vmem:[#allocation6 + $0x220] sm:$0xff]
        %v548 = vld [vmem:[#allocation6 + $0x228] sm:$0xff]
        %v549 = vld [vmem:[#allocation6 + $0x230] sm:$0xff]
        %v550 = vld [vmem:[#allocation6 + $0x238] sm:$0xff]
        %v551 = vld [vmem:[#allocation6 + $0x240] sm:$0xff]
        %v552 = vld [vmem:[#allocation6 + $0x248] sm:$0xff]
        %v553 = vld [vmem:[#allocation6 + $0x250] sm:$0xff]
        %v554 = vld [vmem:[#allocation6 + $0x258] sm:$0xff]
        %v555 = vld [vmem:[#allocation6 + $0x260] sm:$0xff]
        %v556 = vld [vmem:[#allocation6 + $0x268] sm:$0xff]
        %v557 = vld [vmem:[#allocation6 + $0x270] sm:$0xff]
        %v558 = vld [vmem:[#allocation6 + $0x278] sm:$0xff]
        %v559 = vld [vmem:[#allocation6 + $0x280] sm:$0xff]
        %v560 = vld [vmem:[#allocation6 + $0x288] sm:$0xff]
        %v561 = vld [vmem:[#allocation6 + $0x290] sm:$0xff]
        %v562 = vld [vmem:[#allocation6 + $0x298] sm:$0xff]
        %v563 = vld [vmem:[#allocation6 + $0x2a0] sm:$0xff]
        %v564 = vld [vmem:[#allocation6 + $0x2a8] sm:$0xff]
        %v565 = vld [vmem:[#allocation6 + $0x2b0] sm:$0xff]
        %v566 = vld [vmem:[#allocation6 + $0x2b8] sm:$0xff]
        %v567 = vld [vmem:[#allocation6 + $0x2c0] sm:$0xff]
        %v568 = vld [vmem:[#allocation6 + $0x2c8] sm:$0xff]
        %v569 = vld [vmem:[#allocation6 + $0x2d0] sm:$0xff]
        %v570 = vld [vmem:[#allocation6 + $0x2d8] sm:$0xff]
        %v571 = vld [vmem:[#allocation6 + $0x2e0] sm:$0xff]
        %v572 = vld [vmem:[#allocation6 + $0x2e8] sm:$0xff]
        %v573 = vld [vmem:[#allocation6 + $0x2f0] sm:$0xff]
        %v574 = vld [vmem:[#allocation6 + $0x2f8] sm:$0xff]
        %v575 = vld [vmem:[#allocation6 + $0x300] sm:$0xff]
        %v576 = vld [vmem:[#allocation6 + $0x308] sm:$0xff]
        %v577 = vld [vmem:[#allocation6 + $0x310] sm:$0xff]
        %v578 = vld [vmem:[#allocation6 + $0x318] sm:$0xff]
        %v579 = vld [vmem:[#allocation6 + $0x320] sm:$0xff]
        %v580 = vld [vmem:[#allocation6 + $0x328] sm:$0xff]
        %v581 = vld [vmem:[#allocation6 + $0x330] sm:$0xff]
        %v582 = vld [vmem:[#allocation6 + $0x338] sm:$0xff]
        %v583 = vld [vmem:[#allocation6 + $0x340] sm:$0xff]
        %v584 = vld [vmem:[#allocation6 + $0x348] sm:$0xff]
        %v585 = vld [vmem:[#allocation6 + $0x350] sm:$0xff]
        %v586 = vld [vmem:[#allocation6 + $0x358] sm:$0xff]
        %v587 = vld [vmem:[#allocation6 + $0x360] sm:$0xff]
        %v588 = vld [vmem:[#allocation6 + $0x368] sm:$0xff]
        %v589 = vld [vmem:[#allocation6 + $0x370] sm:$0xff]
        %v590 = vld [vmem:[#allocation6 + $0x378] sm:$0xff]
        %v591 = vld [vmem:[#allocation6 + $0x380] sm:$0xff]
        %v592 = vld [vmem:[#allocation6 + $0x388] sm:$0xff]
        %v593 = vld [vmem:[#allocation6 + $0x390] sm:$0xff]
        %v594 = vld [vmem:[#allocation6 + $0x398] sm:$0xff]
        %v595 = vld [vmem:[#allocation6 + $0x3a0] sm:$0xff]
        %v596 = vld [vmem:[#allocation6 + $0x3a8] sm:$0xff]
        %v597 = vld [vmem:[#allocation6 + $0x3b0] sm:$0xff]
        %v598 = vld [vmem:[#allocation6 + $0x3b8] sm:$0xff]
        %v599 = vld [vmem:[#allocation6 + $0x3c0] sm:$0xff]
        %v600 = vld [vmem:[#allocation6 + $0x3c8] sm:$0xff]
        %v601 = vld [vmem:[#allocation6 + $0x3d0] sm:$0xff]
        %v602 = vld [vmem:[#allocation6 + $0x3d8] sm:$0xff]
        %v603 = vld [vmem:[#allocation6 + $0x3e0] sm:$0xff]
        %v604 = vld [vmem:[#allocation6 + $0x3e8] sm:$0xff]
        %v605 = vld [vmem:[#allocation6 + $0x3f0] sm:$0xff]
        %v606 = vld [vmem:[#allocation6 + $0x3f8] sm:$0xff]
        %v607 = vld [vmem:[#allocation6 + $0x400] sm:$0xff]
        %v608 = vld [vmem:[#allocation6 + $0x408] sm:$0xff]
        %v609 = vld [vmem:[#allocation6 + $0x410] sm:$0xff]
        %v610 = vld [vmem:[#allocation6 + $0x418] sm:$0xff]
        %v611 = vld [vmem:[#allocation6 + $0x420] sm:$0xff]
        %v612 = vld [vmem:[#allocation6 + $0x428] sm:$0xff]
        %v613 = vld [vmem:[#allocation6 + $0x430] sm:$0xff]
        %v614 = vld [vmem:[#allocation6 + $0x438] sm:$0xff]
        %v615 = vld [vmem:[#allocation6 + $0x440] sm:$0xff]
        %v616 = vld [vmem:[#allocation6 + $0x448] sm:$0xff]
        %v617 = vld [vmem:[#allocation6 + $0x450] sm:$0xff]
        %v618 = vld [vmem:[#allocation6 + $0x458] sm:$0xff]
        %v619 = vld [vmem:[#allocation6 + $0x460] sm:$0xff]
        %v620 = vld [vmem:[#allocation6 + $0x468] sm:$0xff]
        %v621 = vld [vmem:[#allocation6 + $0x470] sm:$0xff]
        %v622 = vld [vmem:[#allocation6 + $0x478] sm:$0xff]
        %v623 = vld [vmem:[#allocation6 + $0x480] sm:$0xff]
        %v624 = vld [vmem:[#allocation6 + $0x488] sm:$0xff]
        %v625 = vld [vmem:[#allocation6 + $0x490] sm:$0xff]
        %v626 = vld [vmem:[#allocation6 + $0x498] sm:$0xff]
        %v627 = vld [vmem:[#allocation6 + $0x4a0] sm:$0xff]
        %v628 = vld [vmem:[#allocation6 + $0x4a8] sm:$0xff]
        %v629 = vld [vmem:[#allocation6 + $0x4b0] sm:$0xff]
        %v630 = vld [vmem:[#allocation6 + $0x4b8] sm:$0xff]
        %v631 = vld [vmem:[#allocation6 + $0x4c0] sm:$0xff]
        %v632 = vld [vmem:[#allocation6 + $0x4c8] sm:$0xff]
        %v633 = vld [vmem:[#allocation6 + $0x4d0] sm:$0xff]
        %v634 = vld [vmem:[#allocation6 + $0x4d8] sm:$0xff]
        %v635 = vld [vmem:[#allocation6 + $0x4e0] sm:$0xff]
        %v636 = vld [vmem:[#allocation6 + $0x4e8] sm:$0xff]
        %v637 = vld [vmem:[#allocation6 + $0x4f0] sm:$0xff]
        %v638 = vld [vmem:[#allocation6 + $0x4f8] sm:$0xff]
        %v639 = vld [vmem:[#allocation6 + $0x500] sm:$0xff]
        %v640 = vld [vmem:[#allocation6 + $0x508] sm:$0xff]
        %v641 = vld [vmem:[#allocation6 + $0x510] sm:$0xff]
        %v642 = vld [vmem:[#allocation6 + $0x518] sm:$0xff]
        %v643 = vld [vmem:[#allocation6 + $0x520] sm:$0xff]
        %v644 = vld [vmem:[#allocation6 + $0x528] sm:$0xff]
        %v645 = vld [vmem:[#allocation6 + $0x530] sm:$0xff]
        %v646 = vld [vmem:[#allocation6 + $0x538] sm:$0xff]
        %v647 = vld [vmem:[#allocation6 + $0x540] sm:$0xff]
        %v648 = vld [vmem:[#allocation6 + $0x548] sm:$0xff]
        %v649 = vld [vmem:[#allocation6 + $0x550] sm:$0xff]
        %v650 = vld [vmem:[#allocation6 + $0x558] sm:$0xff]
        %v651 = vld [vmem:[#allocation6 + $0x560] sm:$0xff]
        %v652 = vld [vmem:[#allocation6 + $0x568] sm:$0xff]
        %v653 = vld [vmem:[#allocation6 + $0x570] sm:$0xff]
        %v654 = vld [vmem:[#allocation6 + $0x578] sm:$0xff]
        %v655 = vld [vmem:[#allocation6 + $0x580] sm:$0xff]
        %v656 = vld [vmem:[#allocation6 + $0x588] sm:$0xff]
        %v657 = vld [vmem:[#allocation6 + $0x590] sm:$0xff]
        %v658 = vld [vmem:[#allocation6 + $0x598] sm:$0xff]
        %v659 = vld [vmem:[#allocation6 + $0x5a0] sm:$0xff]
        %v660 = vld [vmem:[#allocation6 + $0x5a8] sm:$0xff]
        %v661 = vld [vmem:[#allocation6 + $0x5b0] sm:$0xff]
        %v662 = vld [vmem:[#allocation6 + $0x5b8] sm:$0xff]
        %v663 = vld [vmem:[#allocation6 + $0x5c0] sm:$0xff]
        %v664 = vld [vmem:[#allocation6 + $0x5c8] sm:$0xff]
        %v665 = vld [vmem:[#allocation6 + $0x5d0] sm:$0xff]
        %v666 = vld [vmem:[#allocation6 + $0x5d8] sm:$0xff]
        %v667 = vld [vmem:[#allocation6 + $0x5e0] sm:$0xff]
        %v668 = vld [vmem:[#allocation6 + $0x5e8] sm:$0xff]
        %v669 = vld [vmem:[#allocation6 + $0x5f0] sm:$0xff]
        %v670 = vld [vmem:[#allocation6 + $0x5f8] sm:$0xff]
        %v671 = vld [vmem:[#allocation6 + $0x600] sm:$0xff]
        %v672 = vld [vmem:[#allocation6 + $0x608] sm:$0xff]
        %v673 = vld [vmem:[#allocation6 + $0x610] sm:$0xff]
        %v674 = vld [vmem:[#allocation6 + $0x618] sm:$0xff]
        %v675 = vld [vmem:[#allocation6 + $0x620] sm:$0xff]
        %v676 = vld [vmem:[#allocation6 + $0x628] sm:$0xff]
        %v677 = vld [vmem:[#allocation6 + $0x630] sm:$0xff]
        %v678 = vld [vmem:[#allocation6 + $0x638] sm:$0xff]
        %v679 = vld [vmem:[#allocation6 + $0x640] sm:$0xff]
        %v680 = vld [vmem:[#allocation6 + $0x648] sm:$0xff]
        %v681 = vld [vmem:[#allocation6 + $0x650] sm:$0xff]
        %v682 = vld [vmem:[#allocation6 + $0x658] sm:$0xff]
        %v683 = vld [vmem:[#allocation6 + $0x660] sm:$0xff]
        %v684 = vld [vmem:[#allocation6 + $0x668] sm:$0xff]
        %v685 = vld [vmem:[#allocation6 + $0x670] sm:$0xff]
        %v686 = vld [vmem:[#allocation6 + $0x678] sm:$0xff]
        %v687 = vld [vmem:[#allocation6 + $0x680] sm:$0xff]
        %v688 = vld [vmem:[#allocation6 + $0x688] sm:$0xff]
        %v689 = vld [vmem:[#allocation6 + $0x690] sm:$0xff]
        %v690 = vld [vmem:[#allocation6 + $0x698] sm:$0xff]
        %v691 = vld [vmem:[#allocation6 + $0x6a0] sm:$0xff]
        %v692 = vld [vmem:[#allocation6 + $0x6a8] sm:$0xff]
        %v693 = vld [vmem:[#allocation6 + $0x6b0] sm:$0xff]
        %v694 = vld [vmem:[#allocation6 + $0x6b8] sm:$0xff]
        %v695 = vld [vmem:[#allocation6 + $0x6c0] sm:$0xff]
        %v696 = vld [vmem:[#allocation6 + $0x6c8] sm:$0xff]
        %v697 = vld [vmem:[#allocation6 + $0x6d0] sm:$0xff]
        %v698 = vld [vmem:[#allocation6 + $0x6d8] sm:$0xff]
        %v699 = vld [vmem:[#allocation6 + $0x6e0] sm:$0xff]
        %v700 = vld [vmem:[#allocation6 + $0x6e8] sm:$0xff]
        %v701 = vld [vmem:[#allocation6 + $0x6f0] sm:$0xff]
        %v702 = vld [vmem:[#allocation6 + $0x6f8] sm:$0xff]
        %v703 = vld [vmem:[#allocation8] sm:$0xf]
        %v705 = vperm.slane %v703, 0
        %v706 = vperm.slane %v703, 1
        %v707 = vperm.slane %v703, 2
        %v708 = vperm.slane %v703, 3
        %v841 = vunpack.c.l.b16 %v351
        %v842 = vunpack.c.h.b16 %v351
        %v843 = vunpack.c.l.b16 %v352
        %v844 = vunpack.c.h.b16 %v352
        %v845 = vunpack.c.l.b16 %v353
        %v846 = vunpack.c.h.b16 %v353
        %v847 = vunpack.c.l.b16 %v354
        %v848 = vunpack.c.l.b16 %v355
        %v849 = vunpack.c.h.b16 %v355
        %v850 = vunpack.c.l.b16 %v356
        %v851 = vunpack.c.h.b16 %v356
        %v852 = vunpack.c.l.b16 %v357
        %v853 = vunpack.c.h.b16 %v357
        %v854 = vunpack.c.l.b16 %v358
        %v855 = vunpack.c.l.b16 %v359
        %v856 = vunpack.c.h.b16 %v359
        %v857 = vunpack.c.l.b16 %v360
        %v858 = vunpack.c.h.b16 %v360
        %v859 = vunpack.c.l.b16 %v361
        %v860 = vunpack.c.h.b16 %v361
        %v861 = vunpack.c.l.b16 %v362
        %v862 = vunpack.c.l.b16 %v363
        %v863 = vunpack.c.h.b16 %v363
        %v864 = vunpack.c.l.b16 %v364
        %v865 = vunpack.c.h.b16 %v364
        %v866 = vunpack.c.l.b16 %v365
        %v867 = vunpack.c.h.b16 %v365
        %v868 = vunpack.c.l.b16 %v366
        %v869 = vunpack.c.l.b16 %v367
        %v870 = vunpack.c.h.b16 %v367
        %v871 = vunpack.c.l.b16 %v368
        %v872 = vunpack.c.h.b16 %v368
        %v873 = vunpack.c.l.b16 %v369
        %v874 = vunpack.c.h.b16 %v369
        %v875 = vunpack.c.l.b16 %v370
        %v876 = vunpack.c.l.b16 %v371
        %v877 = vunpack.c.h.b16 %v371
        %v878 = vunpack.c.l.b16 %v372
        %v879 = vunpack.c.h.b16 %v372
        %v880 = vunpack.c.l.b16 %v373
        %v881 = vunpack.c.h.b16 %v373
        %v882 = vunpack.c.l.b16 %v374
        %v883 = vunpack.c.l.b16 %v375
        %v884 = vunpack.c.h.b16 %v375
        %v885 = vunpack.c.l.b16 %v376
        %v886 = vunpack.c.h.b16 %v376
        %v887 = vunpack.c.l.b16 %v377
        %v888 = vunpack.c.h.b16 %v377
        %v889 = vunpack.c.l.b16 %v378
        %v890 = vunpack.c.l.b16 %v379
        %v891 = vunpack.c.h.b16 %v379
        %v892 = vunpack.c.l.b16 %v380
        %v893 = vunpack.c.h.b16 %v380
        %v894 = vunpack.c.l.b16 %v381
        %v895 = vunpack.c.h.b16 %v381
        %v896 = vunpack.c.l.b16 %v382
        %v897 = vunpack.c.l.b16 %v383
        %v898 = vunpack.c.h.b16 %v383
        %v899 = vunpack.c.l.b16 %v384
        %v900 = vunpack.c.h.b16 %v384
        %v901 = vunpack.c.l.b16 %v385
        %v902 = vunpack.c.h.b16 %v385
        %v903 = vunpack.c.l.b16 %v386
        %v904 = vunpack.c.l.b16 %v387
        %v905 = vunpack.c.h.b16 %v387
        %v906 = vunpack.c.l.b16 %v388
        %v907 = vunpack.c.h.b16 %v388
        %v908 = vunpack.c.l.b16 %v389
        %v909 = vunpack.c.h.b16 %v389
        %v910 = vunpack.c.l.b16 %v390
        %v911 = vunpack.c.l.b16 %v391
        %v912 = vunpack.c.h.b16 %v391
        %v913 = vunpack.c.l.b16 %v392
        %v914 = vunpack.c.h.b16 %v392
        %v915 = vunpack.c.l.b16 %v393
        %v916 = vunpack.c.h.b16 %v393
        %v917 = vunpack.c.l.b16 %v394
        %v918 = vunpack.c.l.b16 %v395
        %v919 = vunpack.c.h.b16 %v395
        %v920 = vunpack.c.l.b16 %v396
        %v921 = vunpack.c.h.b16 %v396
        %v922 = vunpack.c.l.b16 %v397
        %v923 = vunpack.c.h.b16 %v397
        %v924 = vunpack.c.l.b16 %v398
        %v925 = vunpack.c.l.b16 %v399
        %v926 = vunpack.c.h.b16 %v399
        %v927 = vunpack.c.l.b16 %v400
        %v928 = vunpack.c.h.b16 %v400
        %v929 = vunpack.c.l.b16 %v401
        %v930 = vunpack.c.h.b16 %v401
        %v931 = vunpack.c.l.b16 %v402
        %v932 = vunpack.c.l.b16 %v403
        %v933 = vunpack.c.h.b16 %v403
        %v934 = vunpack.c.l.b16 %v404
        %v935 = vunpack.c.h.b16 %v404
        %v936 = vunpack.c.l.b16 %v405
        %v937 = vunpack.c.h.b16 %v405
        %v938 = vunpack.c.l.b16 %v406
        %v939 = vunpack.c.l.b16 %v407
        %v940 = vunpack.c.h.b16 %v407
        %v941 = vunpack.c.l.b16 %v408
        %v942 = vunpack.c.h.b16 %v408
        %v943 = vunpack.c.l.b16 %v409
        %v944 = vunpack.c.h.b16 %v409
        %v945 = vunpack.c.l.b16 %v410
        %v946 = vunpack.c.l.b16 %v411
        %v947 = vunpack.c.h.b16 %v411
        %v948 = vunpack.c.l.b16 %v412
        %v949 = vunpack.c.h.b16 %v412
        %v950 = vunpack.c.l.b16 %v413
        %v951 = vunpack.c.h.b16 %v413
        %v952 = vunpack.c.l.b16 %v414
        %v953 = vunpack.c.l.b16 %v415
        %v954 = vunpack.c.h.b16 %v415
        %v955 = vunpack.c.l.b16 %v416
        %v956 = vunpack.c.h.b16 %v416
        %v957 = vunpack.c.l.b16 %v417
        %v958 = vunpack.c.h.b16 %v417
        %v959 = vunpack.c.l.b16 %v418
        %v960 = vunpack.c.l.b16 %v419
        %v961 = vunpack.c.h.b16 %v419
        %v962 = vunpack.c.l.b16 %v420
        %v963 = vunpack.c.h.b16 %v420
        %v964 = vunpack.c.l.b16 %v421
        %v965 = vunpack.c.h.b16 %v421
        %v966 = vunpack.c.l.b16 %v422
        %v967 = vunpack.c.l.b16 %v423
        %v968 = vunpack.c.h.b16 %v423
        %v969 = vunpack.c.l.b16 %v424
        %v970 = vunpack.c.h.b16 %v424
        %v971 = vunpack.c.l.b16 %v425
        %v972 = vunpack.c.h.b16 %v425
        %v973 = vunpack.c.l.b16 %v426
        %v974 = vunpack.c.l.b16 %v427
        %v975 = vunpack.c.h.b16 %v427
        %v976 = vunpack.c.l.b16 %v428
        %v977 = vunpack.c.h.b16 %v428
        %v978 = vunpack.c.l.b16 %v429
        %v979 = vunpack.c.h.b16 %v429
        %v980 = vunpack.c.l.b16 %v430
        %v981 = vunpack.c.l.b16 %v431
        %v982 = vunpack.c.h.b16 %v431
        %v983 = vunpack.c.l.b16 %v432
        %v984 = vunpack.c.h.b16 %v432
        %v985 = vunpack.c.l.b16 %v433
        %v986 = vunpack.c.h.b16 %v433
        %v987 = vunpack.c.l.b16 %v434
        %v988 = vunpack.c.l.b16 %v435
        %v989 = vunpack.c.h.b16 %v435
        %v990 = vunpack.c.l.b16 %v436
        %v991 = vunpack.c.h.b16 %v436
        %v992 = vunpack.c.l.b16 %v437
        %v993 = vunpack.c.h.b16 %v437
        %v994 = vunpack.c.l.b16 %v438
        %v995 = vunpack.c.l.b16 %v439
        %v996 = vunpack.c.h.b16 %v439
        %v997 = vunpack.c.l.b16 %v440
        %v998 = vunpack.c.h.b16 %v440
        %v999 = vunpack.c.l.b16 %v441
        %v1000 = vunpack.c.h.b16 %v441
        %v1001 = vunpack.c.l.b16 %v442
        %v1002 = vunpack.c.l.b16 %v443
        %v1003 = vunpack.c.h.b16 %v443
        %v1004 = vunpack.c.l.b16 %v444
        %v1005 = vunpack.c.h.b16 %v444
        %v1006 = vunpack.c.l.b16 %v445
        %v1007 = vunpack.c.h.b16 %v445
        %v1008 = vunpack.c.l.b16 %v446
        %v1009 = vunpack.c.l.b16 %v447
        %v1010 = vunpack.c.h.b16 %v447
        %v1011 = vunpack.c.l.b16 %v448
        %v1012 = vunpack.c.h.b16 %v448
        %v1013 = vunpack.c.l.b16 %v449
        %v1014 = vunpack.c.h.b16 %v449
        %v1015 = vunpack.c.l.b16 %v450
        %v1016 = vunpack.c.l.b16 %v451
        %v1017 = vunpack.c.h.b16 %v451
        %v1018 = vunpack.c.l.b16 %v452
        %v1019 = vunpack.c.h.b16 %v452
        %v1020 = vunpack.c.l.b16 %v453
        %v1021 = vunpack.c.h.b16 %v453
        %v1022 = vunpack.c.l.b16 %v454
        %v1023 = vunpack.c.l.b16 %v455
        %v1024 = vunpack.c.h.b16 %v455
        %v1025 = vunpack.c.l.b16 %v456
        %v1026 = vunpack.c.h.b16 %v456
        %v1027 = vunpack.c.l.b16 %v457
        %v1028 = vunpack.c.h.b16 %v457
        %v1029 = vunpack.c.l.b16 %v458
        %v1030 = vunpack.c.l.b16 %v459
        %v1031 = vunpack.c.h.b16 %v459
        %v1032 = vunpack.c.l.b16 %v460
        %v1033 = vunpack.c.h.b16 %v460
        %v1034 = vunpack.c.l.b16 %v461
        %v1035 = vunpack.c.h.b16 %v461
        %v1036 = vunpack.c.l.b16 %v462
        %v1037 = vunpack.c.l.b16 %v463
        %v1038 = vunpack.c.h.b16 %v463
        %v1039 = vunpack.c.l.b16 %v464
        %v1040 = vunpack.c.h.b16 %v464
        %v1041 = vunpack.c.l.b16 %v465
        %v1042 = vunpack.c.h.b16 %v465
        %v1043 = vunpack.c.l.b16 %v466
        %v1044 = vunpack.c.l.b16 %v467
        %v1045 = vunpack.c.h.b16 %v467
        %v1046 = vunpack.c.l.b16 %v468
        %v1047 = vunpack.c.h.b16 %v468
        %v1048 = vunpack.c.l.b16 %v469
        %v1049 = vunpack.c.h.b16 %v469
        %v1050 = vunpack.c.l.b16 %v470
        %v1051 = vunpack.c.l.b16 %v471
        %v1052 = vunpack.c.h.b16 %v471
        %v1053 = vunpack.c.l.b16 %v472
        %v1054 = vunpack.c.h.b16 %v472
        %v1055 = vunpack.c.l.b16 %v473
        %v1056 = vunpack.c.h.b16 %v473
        %v1057 = vunpack.c.l.b16 %v474
        %v1058 = vunpack.c.l.b16 %v475
        %v1059 = vunpack.c.h.b16 %v475
        %v1060 = vunpack.c.l.b16 %v476
        %v1061 = vunpack.c.h.b16 %v476
        %v1062 = vunpack.c.l.b16 %v477
        %v1063 = vunpack.c.h.b16 %v477
        %v1064 = vunpack.c.l.b16 %v478
        %v1065 = vpack.c.b16 %v848, %v841
        %v1066 = vpack.c.b16 %v849, %v842
        %v1067 = vpack.c.b16 %v850, %v843
        %v1068 = vpack.c.b16 %v851, %v844
        %v1069 = vpack.c.b16 %v852, %v845
        %v1070 = vpack.c.b16 %v853, %v846
        %v1071 = vpack.c.b16 %v854, %v847
        %v1072 = vpack.c.b16 %v862, %v855
        %v1073 = vpack.c.b16 %v863, %v856
        %v1074 = vpack.c.b16 %v864, %v857
        %v1075 = vpack.c.b16 %v865, %v858
        %v1076 = vpack.c.b16 %v866, %v859
        %v1077 = vpack.c.b16 %v867, %v860
        %v1078 = vpack.c.b16 %v868, %v861
        %v1079 = vpack.c.b16 %v876, %v869
        %v1080 = vpack.c.b16 %v877, %v870
        %v1081 = vpack.c.b16 %v878, %v871
        %v1082 = vpack.c.b16 %v879, %v872
        %v1083 = vpack.c.b16 %v880, %v873
        %v1084 = vpack.c.b16 %v881, %v874
        %v1085 = vpack.c.b16 %v882, %v875
        %v1086 = vpack.c.b16 %v890, %v883
        %v1087 = vpack.c.b16 %v891, %v884
        %v1088 = vpack.c.b16 %v892, %v885
        %v1089 = vpack.c.b16 %v893, %v886
        %v1090 = vpack.c.b16 %v894, %v887
        %v1091 = vpack.c.b16 %v895, %v888
        %v1092 = vpack.c.b16 %v896, %v889
        %v1093 = vpack.c.b16 %v904, %v897
        %v1094 = vpack.c.b16 %v905, %v898
        %v1095 = vpack.c.b16 %v906, %v899
        %v1096 = vpack.c.b16 %v907, %v900
        %v1097 = vpack.c.b16 %v908, %v901
        %v1098 = vpack.c.b16 %v909, %v902
        %v1099 = vpack.c.b16 %v910, %v903
        %v1100 = vpack.c.b16 %v918, %v911
        %v1101 = vpack.c.b16 %v919, %v912
        %v1102 = vpack.c.b16 %v920, %v913
        %v1103 = vpack.c.b16 %v921, %v914
        %v1104 = vpack.c.b16 %v922, %v915
        %v1105 = vpack.c.b16 %v923, %v916
        %v1106 = vpack.c.b16 %v924, %v917
        %v1107 = vpack.c.b16 %v932, %v925
        %v1108 = vpack.c.b16 %v933, %v926
        %v1109 = vpack.c.b16 %v934, %v927
        %v1110 = vpack.c.b16 %v935, %v928
        %v1111 = vpack.c.b16 %v936, %v929
        %v1112 = vpack.c.b16 %v937, %v930
        %v1113 = vpack.c.b16 %v938, %v931
        %v1114 = vpack.c.b16 %v946, %v939
        %v1115 = vpack.c.b16 %v947, %v940
        %v1116 = vpack.c.b16 %v948, %v941
        %v1117 = vpack.c.b16 %v949, %v942
        %v1118 = vpack.c.b16 %v950, %v943
        %v1119 = vpack.c.b16 %v951, %v944
        %v1120 = vpack.c.b16 %v952, %v945
        %v1121 = vpack.c.b16 %v960, %v953
        %v1122 = vpack.c.b16 %v961, %v954
        %v1123 = vpack.c.b16 %v962, %v955
        %v1124 = vpack.c.b16 %v963, %v956
        %v1125 = vpack.c.b16 %v964, %v957
        %v1126 = vpack.c.b16 %v965, %v958
        %v1127 = vpack.c.b16 %v966, %v959
        %v1128 = vpack.c.b16 %v974, %v967
        %v1129 = vpack.c.b16 %v975, %v968
        %v1130 = vpack.c.b16 %v976, %v969
        %v1131 = vpack.c.b16 %v977, %v970
        %v1132 = vpack.c.b16 %v978, %v971
        %v1133 = vpack.c.b16 %v979, %v972
        %v1134 = vpack.c.b16 %v980, %v973
        %v1135 = vpack.c.b16 %v988, %v981
        %v1136 = vpack.c.b16 %v989, %v982
        %v1137 = vpack.c.b16 %v990, %v983
        %v1138 = vpack.c.b16 %v991, %v984
        %v1139 = vpack.c.b16 %v992, %v985
        %v1140 = vpack.c.b16 %v993, %v986
        %v1141 = vpack.c.b16 %v994, %v987
        %v1142 = vpack.c.b16 %v1002, %v995
        %v1143 = vpack.c.b16 %v1003, %v996
        %v1144 = vpack.c.b16 %v1004, %v997
        %v1145 = vpack.c.b16 %v1005, %v998
        %v1146 = vpack.c.b16 %v1006, %v999
        %v1147 = vpack.c.b16 %v1007, %v1000
        %v1148 = vpack.c.b16 %v1008, %v1001
        %v1149 = vpack.c.b16 %v1016, %v1009
        %v1150 = vpack.c.b16 %v1017, %v1010
        %v1151 = vpack.c.b16 %v1018, %v1011
        %v1152 = vpack.c.b16 %v1019, %v1012
        %v1153 = vpack.c.b16 %v1020, %v1013
        %v1154 = vpack.c.b16 %v1021, %v1014
        %v1155 = vpack.c.b16 %v1022, %v1015
        %v1156 = vpack.c.b16 %v1030, %v1023
        %v1157 = vpack.c.b16 %v1031, %v1024
        %v1158 = vpack.c.b16 %v1032, %v1025
        %v1159 = vpack.c.b16 %v1033, %v1026
        %v1160 = vpack.c.b16 %v1034, %v1027
        %v1161 = vpack.c.b16 %v1035, %v1028
        %v1162 = vpack.c.b16 %v1036, %v1029
        %v1163 = vpack.c.b16 %v1044, %v1037
        %v1164 = vpack.c.b16 %v1045, %v1038
        %v1165 = vpack.c.b16 %v1046, %v1039
        %v1166 = vpack.c.b16 %v1047, %v1040
        %v1167 = vpack.c.b16 %v1048, %v1041
        %v1168 = vpack.c.b16 %v1049, %v1042
        %v1169 = vpack.c.b16 %v1050, %v1043
        %v1170 = vpack.c.b16 %v1058, %v1051
        %v1171 = vpack.c.b16 %v1059, %v1052
        %v1172 = vpack.c.b16 %v1060, %v1053
        %v1173 = vpack.c.b16 %v1061, %v1054
        %v1174 = vpack.c.b16 %v1062, %v1055
        %v1175 = vpack.c.b16 %v1063, %v1056
        %v1176 = vpack.c.b16 %v1064, %v1057
        %v1513 = vunpack.c.l.b16 %v479
        %v1514 = vunpack.c.h.b16 %v479
        %v1515 = vunpack.c.l.b16 %v480
        %v1516 = vunpack.c.h.b16 %v480
        %v1517 = vunpack.c.l.b16 %v481
        %v1518 = vunpack.c.h.b16 %v481
        %v1519 = vunpack.c.l.b16 %v482
        %v1520 = vunpack.c.h.b16 %v482
        %v1521 = vunpack.c.l.b16 %v483
        %v1522 = vunpack.c.h.b16 %v483
        %v1523 = vunpack.c.l.b16 %v484
        %v1524 = vunpack.c.h.b16 %v484
        %v1525 = vunpack.c.l.b16 %v485
        %v1526 = vunpack.c.h.b16 %v485
        %v1527 = vunpack.c.l.b16 %v486
        %v1528 = vunpack.c.h.b16 %v486
        %v1529 = vunpack.c.l.b16 %v487
        %v1530 = vunpack.c.h.b16 %v487
        %v1531 = vunpack.c.l.b16 %v488
        %v1532 = vunpack.c.h.b16 %v488
        %v1533 = vunpack.c.l.b16 %v489
        %v1534 = vunpack.c.h.b16 %v489
        %v1535 = vunpack.c.l.b16 %v490
        %v1536 = vunpack.c.h.b16 %v490
        %v1537 = vunpack.c.l.b16 %v491
        %v1538 = vunpack.c.h.b16 %v491
        %v1539 = vunpack.c.l.b16 %v492
        %v1540 = vunpack.c.h.b16 %v492
        %v1541 = vunpack.c.l.b16 %v493
        %v1542 = vunpack.c.h.b16 %v493
        %v1543 = vunpack.c.l.b16 %v494
        %v1544 = vunpack.c.h.b16 %v494
        %v1545 = vunpack.c.l.b16 %v495
        %v1546 = vunpack.c.h.b16 %v495
        %v1547 = vunpack.c.l.b16 %v496
        %v1548 = vunpack.c.h.b16 %v496
        %v1549 = vunpack.c.l.b16 %v497
        %v1550 = vunpack.c.h.b16 %v497
        %v1551 = vunpack.c.l.b16 %v498
        %v1552 = vunpack.c.h.b16 %v498
        %v1553 = vunpack.c.l.b16 %v499
        %v1554 = vunpack.c.h.b16 %v499
        %v1555 = vunpack.c.l.b16 %v500
        %v1556 = vunpack.c.h.b16 %v500
        %v1557 = vunpack.c.l.b16 %v501
        %v1558 = vunpack.c.h.b16 %v501
        %v1559 = vunpack.c.l.b16 %v502
        %v1560 = vunpack.c.h.b16 %v502
        %v1561 = vunpack.c.l.b16 %v503
        %v1562 = vunpack.c.h.b16 %v503
        %v1563 = vunpack.c.l.b16 %v504
        %v1564 = vunpack.c.h.b16 %v504
        %v1565 = vunpack.c.l.b16 %v505
        %v1566 = vunpack.c.h.b16 %v505
        %v1567 = vunpack.c.l.b16 %v506
        %v1568 = vunpack.c.h.b16 %v506
        %v1569 = vunpack.c.l.b16 %v507
        %v1570 = vunpack.c.h.b16 %v507
        %v1571 = vunpack.c.l.b16 %v508
        %v1572 = vunpack.c.h.b16 %v508
        %v1573 = vunpack.c.l.b16 %v509
        %v1574 = vunpack.c.h.b16 %v509
        %v1575 = vunpack.c.l.b16 %v510
        %v1576 = vunpack.c.h.b16 %v510
        %v1577 = vunpack.c.l.b16 %v511
        %v1578 = vunpack.c.h.b16 %v511
        %v1579 = vunpack.c.l.b16 %v512
        %v1580 = vunpack.c.h.b16 %v512
        %v1581 = vunpack.c.l.b16 %v513
        %v1582 = vunpack.c.h.b16 %v513
        %v1583 = vunpack.c.l.b16 %v514
        %v1584 = vunpack.c.h.b16 %v514
        %v1585 = vunpack.c.l.b16 %v515
        %v1586 = vunpack.c.h.b16 %v515
        %v1587 = vunpack.c.l.b16 %v516
        %v1588 = vunpack.c.h.b16 %v516
        %v1589 = vunpack.c.l.b16 %v517
        %v1590 = vunpack.c.h.b16 %v517
        %v1591 = vunpack.c.l.b16 %v518
        %v1592 = vunpack.c.h.b16 %v518
        %v1593 = vunpack.c.l.b16 %v519
        %v1594 = vunpack.c.h.b16 %v519
        %v1595 = vunpack.c.l.b16 %v520
        %v1596 = vunpack.c.h.b16 %v520
        %v1597 = vunpack.c.l.b16 %v521
        %v1598 = vunpack.c.h.b16 %v521
        %v1599 = vunpack.c.l.b16 %v522
        %v1600 = vunpack.c.h.b16 %v522
        %v1601 = vunpack.c.l.b16 %v523
        %v1602 = vunpack.c.h.b16 %v523
        %v1603 = vunpack.c.l.b16 %v524
        %v1604 = vunpack.c.h.b16 %v524
        %v1605 = vunpack.c.l.b16 %v525
        %v1606 = vunpack.c.h.b16 %v525
        %v1607 = vunpack.c.l.b16 %v526
        %v1608 = vunpack.c.h.b16 %v526
        %v1609 = vunpack.c.l.b16 %v527
        %v1610 = vunpack.c.h.b16 %v527
        %v1611 = vunpack.c.l.b16 %v528
        %v1612 = vunpack.c.h.b16 %v528
        %v1613 = vunpack.c.l.b16 %v529
        %v1614 = vunpack.c.h.b16 %v529
        %v1615 = vunpack.c.l.b16 %v530
        %v1616 = vunpack.c.h.b16 %v530
        %v1617 = vunpack.c.l.b16 %v531
        %v1618 = vunpack.c.h.b16 %v531
        %v1619 = vunpack.c.l.b16 %v532
        %v1620 = vunpack.c.h.b16 %v532
        %v1621 = vunpack.c.l.b16 %v533
        %v1622 = vunpack.c.h.b16 %v533
        %v1623 = vunpack.c.l.b16 %v534
        %v1624 = vunpack.c.h.b16 %v534
        %v1625 = vunpack.c.l.b16 %v535
        %v1626 = vunpack.c.h.b16 %v535
        %v1627 = vunpack.c.l.b16 %v536
        %v1628 = vunpack.c.h.b16 %v536
        %v1629 = vunpack.c.l.b16 %v537
        %v1630 = vunpack.c.h.b16 %v537
        %v1631 = vunpack.c.l.b16 %v538
        %v1632 = vunpack.c.h.b16 %v538
        %v1633 = vunpack.c.l.b16 %v539
        %v1634 = vunpack.c.h.b16 %v539
        %v1635 = vunpack.c.l.b16 %v540
        %v1636 = vunpack.c.h.b16 %v540
        %v1637 = vunpack.c.l.b16 %v541
        %v1638 = vunpack.c.h.b16 %v541
        %v1639 = vunpack.c.l.b16 %v542
        %v1640 = vunpack.c.h.b16 %v542
        %v1641 = vunpack.c.l.b16 %v543
        %v1642 = vunpack.c.h.b16 %v543
        %v1643 = vunpack.c.l.b16 %v544
        %v1644 = vunpack.c.h.b16 %v544
        %v1645 = vunpack.c.l.b16 %v545
        %v1646 = vunpack.c.h.b16 %v545
        %v1647 = vunpack.c.l.b16 %v546
        %v1648 = vunpack.c.h.b16 %v546
        %v1649 = vunpack.c.l.b16 %v547
        %v1650 = vunpack.c.h.b16 %v547
        %v1651 = vunpack.c.l.b16 %v548
        %v1652 = vunpack.c.h.b16 %v548
        %v1653 = vunpack.c.l.b16 %v549
        %v1654 = vunpack.c.h.b16 %v549
        %v1655 = vunpack.c.l.b16 %v550
        %v1656 = vunpack.c.h.b16 %v550
        %v1657 = vunpack.c.l.b16 %v551
        %v1658 = vunpack.c.h.b16 %v551
        %v1659 = vunpack.c.l.b16 %v552
        %v1660 = vunpack.c.h.b16 %v552
        %v1661 = vunpack.c.l.b16 %v553
        %v1662 = vunpack.c.h.b16 %v553
        %v1663 = vunpack.c.l.b16 %v554
        %v1664 = vunpack.c.h.b16 %v554
        %v1665 = vunpack.c.l.b16 %v555
        %v1666 = vunpack.c.h.b16 %v555
        %v1667 = vunpack.c.l.b16 %v556
        %v1668 = vunpack.c.h.b16 %v556
        %v1669 = vunpack.c.l.b16 %v557
        %v1670 = vunpack.c.h.b16 %v557
        %v1671 = vunpack.c.l.b16 %v558
        %v1672 = vunpack.c.h.b16 %v558
        %v1673 = vunpack.c.l.b16 %v559
        %v1674 = vunpack.c.h.b16 %v559
        %v1675 = vunpack.c.l.b16 %v560
        %v1676 = vunpack.c.h.b16 %v560
        %v1677 = vunpack.c.l.b16 %v561
        %v1678 = vunpack.c.h.b16 %v561
        %v1679 = vunpack.c.l.b16 %v562
        %v1680 = vunpack.c.h.b16 %v562
        %v1681 = vunpack.c.l.b16 %v563
        %v1682 = vunpack.c.h.b16 %v563
        %v1683 = vunpack.c.l.b16 %v564
        %v1684 = vunpack.c.h.b16 %v564
        %v1685 = vunpack.c.l.b16 %v565
        %v1686 = vunpack.c.h.b16 %v565
        %v1687 = vunpack.c.l.b16 %v566
        %v1688 = vunpack.c.h.b16 %v566
        %v1689 = vunpack.c.l.b16 %v567
        %v1690 = vunpack.c.h.b16 %v567
        %v1691 = vunpack.c.l.b16 %v568
        %v1692 = vunpack.c.h.b16 %v568
        %v1693 = vunpack.c.l.b16 %v569
        %v1694 = vunpack.c.h.b16 %v569
        %v1695 = vunpack.c.l.b16 %v570
        %v1696 = vunpack.c.h.b16 %v570
        %v1697 = vunpack.c.l.b16 %v571
        %v1698 = vunpack.c.h.b16 %v571
        %v1699 = vunpack.c.l.b16 %v572
        %v1700 = vunpack.c.h.b16 %v572
        %v1701 = vunpack.c.l.b16 %v573
        %v1702 = vunpack.c.h.b16 %v573
        %v1703 = vunpack.c.l.b16 %v574
        %v1704 = vunpack.c.h.b16 %v574
        %v1705 = vunpack.c.l.b16 %v575
        %v1706 = vunpack.c.h.b16 %v575
        %v1707 = vunpack.c.l.b16 %v576
        %v1708 = vunpack.c.h.b16 %v576
        %v1709 = vunpack.c.l.b16 %v577
        %v1710 = vunpack.c.h.b16 %v577
        %v1711 = vunpack.c.l.b16 %v578
        %v1712 = vunpack.c.h.b16 %v578
        %v1713 = vunpack.c.l.b16 %v579
        %v1714 = vunpack.c.h.b16 %v579
        %v1715 = vunpack.c.l.b16 %v580
        %v1716 = vunpack.c.h.b16 %v580
        %v1717 = vunpack.c.l.b16 %v581
        %v1718 = vunpack.c.h.b16 %v581
        %v1719 = vunpack.c.l.b16 %v582
        %v1720 = vunpack.c.h.b16 %v582
        %v1721 = vunpack.c.l.b16 %v583
        %v1722 = vunpack.c.h.b16 %v583
        %v1723 = vunpack.c.l.b16 %v584
        %v1724 = vunpack.c.h.b16 %v584
        %v1725 = vunpack.c.l.b16 %v585
        %v1726 = vunpack.c.h.b16 %v585
        %v1727 = vunpack.c.l.b16 %v586
        %v1728 = vunpack.c.h.b16 %v586
        %v1729 = vunpack.c.l.b16 %v587
        %v1730 = vunpack.c.h.b16 %v587
        %v1731 = vunpack.c.l.b16 %v588
        %v1732 = vunpack.c.h.b16 %v588
        %v1733 = vunpack.c.l.b16 %v589
        %v1734 = vunpack.c.h.b16 %v589
        %v1735 = vunpack.c.l.b16 %v590
        %v1736 = vunpack.c.h.b16 %v590
        %v1737 = vunpack.c.l.b16 %v591
        %v1738 = vunpack.c.h.b16 %v591
        %v1739 = vunpack.c.l.b16 %v592
        %v1740 = vunpack.c.h.b16 %v592
        %v1741 = vunpack.c.l.b16 %v593
        %v1742 = vunpack.c.h.b16 %v593
        %v1743 = vunpack.c.l.b16 %v594
        %v1744 = vunpack.c.h.b16 %v594
        %v1745 = vunpack.c.l.b16 %v595
        %v1746 = vunpack.c.h.b16 %v595
        %v1747 = vunpack.c.l.b16 %v596
        %v1748 = vunpack.c.h.b16 %v596
        %v1749 = vunpack.c.l.b16 %v597
        %v1750 = vunpack.c.h.b16 %v597
        %v1751 = vunpack.c.l.b16 %v598
        %v1752 = vunpack.c.h.b16 %v598
        %v1753 = vunpack.c.l.b16 %v599
        %v1754 = vunpack.c.h.b16 %v599
        %v1755 = vunpack.c.l.b16 %v600
        %v1756 = vunpack.c.h.b16 %v600
        %v1757 = vunpack.c.l.b16 %v601
        %v1758 = vunpack.c.h.b16 %v601
        %v1759 = vunpack.c.l.b16 %v602
        %v1760 = vunpack.c.h.b16 %v602
        %v1761 = vunpack.c.l.b16 %v603
        %v1762 = vunpack.c.h.b16 %v603
        %v1763 = vunpack.c.l.b16 %v604
        %v1764 = vunpack.c.h.b16 %v604
        %v1765 = vunpack.c.l.b16 %v605
        %v1766 = vunpack.c.h.b16 %v605
        %v1767 = vunpack.c.l.b16 %v606
        %v1768 = vunpack.c.h.b16 %v606
        %v1769 = vunpack.c.l.b16 %v607
        %v1770 = vunpack.c.h.b16 %v607
        %v1771 = vunpack.c.l.b16 %v608
        %v1772 = vunpack.c.h.b16 %v608
        %v1773 = vunpack.c.l.b16 %v609
        %v1774 = vunpack.c.h.b16 %v609
        %v1775 = vunpack.c.l.b16 %v610
        %v1776 = vunpack.c.h.b16 %v610
        %v1777 = vunpack.c.l.b16 %v611
        %v1778 = vunpack.c.h.b16 %v611
        %v1779 = vunpack.c.l.b16 %v612
        %v1780 = vunpack.c.h.b16 %v612
        %v1781 = vunpack.c.l.b16 %v613
        %v1782 = vunpack.c.h.b16 %v613
        %v1783 = vunpack.c.l.b16 %v614
        %v1784 = vunpack.c.h.b16 %v614
        %v1785 = vunpack.c.l.b16 %v615
        %v1786 = vunpack.c.h.b16 %v615
        %v1787 = vunpack.c.l.b16 %v616
        %v1788 = vunpack.c.h.b16 %v616
        %v1789 = vunpack.c.l.b16 %v617
        %v1790 = vunpack.c.h.b16 %v617
        %v1791 = vunpack.c.l.b16 %v618
        %v1792 = vunpack.c.h.b16 %v618
        %v1793 = vunpack.c.l.b16 %v619
        %v1794 = vunpack.c.h.b16 %v619
        %v1795 = vunpack.c.l.b16 %v620
        %v1796 = vunpack.c.h.b16 %v620
        %v1797 = vunpack.c.l.b16 %v621
        %v1798 = vunpack.c.h.b16 %v621
        %v1799 = vunpack.c.l.b16 %v622
        %v1800 = vunpack.c.h.b16 %v622
        %v1801 = vunpack.c.l.b16 %v623
        %v1802 = vunpack.c.h.b16 %v623
        %v1803 = vunpack.c.l.b16 %v624
        %v1804 = vunpack.c.h.b16 %v624
        %v1805 = vunpack.c.l.b16 %v625
        %v1806 = vunpack.c.h.b16 %v625
        %v1807 = vunpack.c.l.b16 %v626
        %v1808 = vunpack.c.h.b16 %v626
        %v1809 = vunpack.c.l.b16 %v627
        %v1810 = vunpack.c.h.b16 %v627
        %v1811 = vunpack.c.l.b16 %v628
        %v1812 = vunpack.c.h.b16 %v628
        %v1813 = vunpack.c.l.b16 %v629
        %v1814 = vunpack.c.h.b16 %v629
        %v1815 = vunpack.c.l.b16 %v630
        %v1816 = vunpack.c.h.b16 %v630
        %v1817 = vunpack.c.l.b16 %v631
        %v1818 = vunpack.c.h.b16 %v631
        %v1819 = vunpack.c.l.b16 %v632
        %v1820 = vunpack.c.h.b16 %v632
        %v1821 = vunpack.c.l.b16 %v633
        %v1822 = vunpack.c.h.b16 %v633
        %v1823 = vunpack.c.l.b16 %v634
        %v1824 = vunpack.c.h.b16 %v634
        %v1825 = vunpack.c.l.b16 %v635
        %v1826 = vunpack.c.h.b16 %v635
        %v1827 = vunpack.c.l.b16 %v636
        %v1828 = vunpack.c.h.b16 %v636
        %v1829 = vunpack.c.l.b16 %v637
        %v1830 = vunpack.c.h.b16 %v637
        %v1831 = vunpack.c.l.b16 %v638
        %v1832 = vunpack.c.h.b16 %v638
        %v1833 = vunpack.c.l.b16 %v639
        %v1834 = vunpack.c.h.b16 %v639
        %v1835 = vunpack.c.l.b16 %v640
        %v1836 = vunpack.c.h.b16 %v640
        %v1837 = vunpack.c.l.b16 %v641
        %v1838 = vunpack.c.h.b16 %v641
        %v1839 = vunpack.c.l.b16 %v642
        %v1840 = vunpack.c.h.b16 %v642
        %v1841 = vunpack.c.l.b16 %v643
        %v1842 = vunpack.c.h.b16 %v643
        %v1843 = vunpack.c.l.b16 %v644
        %v1844 = vunpack.c.h.b16 %v644
        %v1845 = vunpack.c.l.b16 %v645
        %v1846 = vunpack.c.h.b16 %v645
        %v1847 = vunpack.c.l.b16 %v646
        %v1848 = vunpack.c.h.b16 %v646
        %v1849 = vunpack.c.l.b16 %v647
        %v1850 = vunpack.c.h.b16 %v647
        %v1851 = vunpack.c.l.b16 %v648
        %v1852 = vunpack.c.h.b16 %v648
        %v1853 = vunpack.c.l.b16 %v649
        %v1854 = vunpack.c.h.b16 %v649
        %v1855 = vunpack.c.l.b16 %v650
        %v1856 = vunpack.c.h.b16 %v650
        %v1857 = vunpack.c.l.b16 %v651
        %v1858 = vunpack.c.h.b16 %v651
        %v1859 = vunpack.c.l.b16 %v652
        %v1860 = vunpack.c.h.b16 %v652
        %v1861 = vunpack.c.l.b16 %v653
        %v1862 = vunpack.c.h.b16 %v653
        %v1863 = vunpack.c.l.b16 %v654
        %v1864 = vunpack.c.h.b16 %v654
        %v1865 = vunpack.c.l.b16 %v655
        %v1866 = vunpack.c.h.b16 %v655
        %v1867 = vunpack.c.l.b16 %v656
        %v1868 = vunpack.c.h.b16 %v656
        %v1869 = vunpack.c.l.b16 %v657
        %v1870 = vunpack.c.h.b16 %v657
        %v1871 = vunpack.c.l.b16 %v658
        %v1872 = vunpack.c.h.b16 %v658
        %v1873 = vunpack.c.l.b16 %v659
        %v1874 = vunpack.c.h.b16 %v659
        %v1875 = vunpack.c.l.b16 %v660
        %v1876 = vunpack.c.h.b16 %v660
        %v1877 = vunpack.c.l.b16 %v661
        %v1878 = vunpack.c.h.b16 %v661
        %v1879 = vunpack.c.l.b16 %v662
        %v1880 = vunpack.c.h.b16 %v662
        %v1881 = vunpack.c.l.b16 %v663
        %v1882 = vunpack.c.h.b16 %v663
        %v1883 = vunpack.c.l.b16 %v664
        %v1884 = vunpack.c.h.b16 %v664
        %v1885 = vunpack.c.l.b16 %v665
        %v1886 = vunpack.c.h.b16 %v665
        %v1887 = vunpack.c.l.b16 %v666
        %v1888 = vunpack.c.h.b16 %v666
        %v1889 = vunpack.c.l.b16 %v667
        %v1890 = vunpack.c.h.b16 %v667
        %v1891 = vunpack.c.l.b16 %v668
        %v1892 = vunpack.c.h.b16 %v668
        %v1893 = vunpack.c.l.b16 %v669
        %v1894 = vunpack.c.h.b16 %v669
        %v1895 = vunpack.c.l.b16 %v670
        %v1896 = vunpack.c.h.b16 %v670
        %v1897 = vunpack.c.l.b16 %v671
        %v1898 = vunpack.c.h.b16 %v671
        %v1899 = vunpack.c.l.b16 %v672
        %v1900 = vunpack.c.h.b16 %v672
        %v1901 = vunpack.c.l.b16 %v673
        %v1902 = vunpack.c.h.b16 %v673
        %v1903 = vunpack.c.l.b16 %v674
        %v1904 = vunpack.c.h.b16 %v674
        %v1905 = vunpack.c.l.b16 %v675
        %v1906 = vunpack.c.h.b16 %v675
        %v1907 = vunpack.c.l.b16 %v676
        %v1908 = vunpack.c.h.b16 %v676
        %v1909 = vunpack.c.l.b16 %v677
        %v1910 = vunpack.c.h.b16 %v677
        %v1911 = vunpack.c.l.b16 %v678
        %v1912 = vunpack.c.h.b16 %v678
        %v1913 = vunpack.c.l.b16 %v679
        %v1914 = vunpack.c.h.b16 %v679
        %v1915 = vunpack.c.l.b16 %v680
        %v1916 = vunpack.c.h.b16 %v680
        %v1917 = vunpack.c.l.b16 %v681
        %v1918 = vunpack.c.h.b16 %v681
        %v1919 = vunpack.c.l.b16 %v682
        %v1920 = vunpack.c.h.b16 %v682
        %v1921 = vunpack.c.l.b16 %v683
        %v1922 = vunpack.c.h.b16 %v683
        %v1923 = vunpack.c.l.b16 %v684
        %v1924 = vunpack.c.h.b16 %v684
        %v1925 = vunpack.c.l.b16 %v685
        %v1926 = vunpack.c.h.b16 %v685
        %v1927 = vunpack.c.l.b16 %v686
        %v1928 = vunpack.c.h.b16 %v686
        %v1929 = vunpack.c.l.b16 %v687
        %v1930 = vunpack.c.h.b16 %v687
        %v1931 = vunpack.c.l.b16 %v688
        %v1932 = vunpack.c.h.b16 %v688
        %v1933 = vunpack.c.l.b16 %v689
        %v1934 = vunpack.c.h.b16 %v689
        %v1935 = vunpack.c.l.b16 %v690
        %v1936 = vunpack.c.h.b16 %v690
        %v1937 = vunpack.c.l.b16 %v691
        %v1938 = vunpack.c.h.b16 %v691
        %v1939 = vunpack.c.l.b16 %v692
        %v1940 = vunpack.c.h.b16 %v692
        %v1941 = vunpack.c.l.b16 %v693
        %v1942 = vunpack.c.h.b16 %v693
        %v1943 = vunpack.c.l.b16 %v694
        %v1944 = vunpack.c.h.b16 %v694
        %v1945 = vunpack.c.l.b16 %v695
        %v1946 = vunpack.c.h.b16 %v695
        %v1947 = vunpack.c.l.b16 %v696
        %v1948 = vunpack.c.h.b16 %v696
        %v1949 = vunpack.c.l.b16 %v697
        %v1950 = vunpack.c.h.b16 %v697
        %v1951 = vunpack.c.l.b16 %v698
        %v1952 = vunpack.c.h.b16 %v698
        %v1953 = vunpack.c.l.b16 %v699
        %v1954 = vunpack.c.h.b16 %v699
        %v1955 = vunpack.c.l.b16 %v700
        %v1956 = vunpack.c.h.b16 %v700
        %v1957 = vunpack.c.l.b16 %v701
        %v1958 = vunpack.c.h.b16 %v701
        %v1959 = vunpack.c.l.b16 %v702
        %v1960 = vunpack.c.h.b16 %v702
        %v1961 = vpack.c.b16 %v1517, %v1513
        %v1962 = vpack.c.b16 %v1518, %v1514
        %v1963 = vpack.c.b16 %v1519, %v1515
        %v1964 = vpack.c.b16 %v1520, %v1516
        %v1965 = vpack.c.b16 %v1525, %v1521
        %v1966 = vpack.c.b16 %v1526, %v1522
        %v1967 = vpack.c.b16 %v1527, %v1523
        %v1968 = vpack.c.b16 %v1528, %v1524
        %v1969 = vpack.c.b16 %v1533, %v1529
        %v1970 = vpack.c.b16 %v1534, %v1530
        %v1971 = vpack.c.b16 %v1535, %v1531
        %v1972 = vpack.c.b16 %v1536, %v1532
        %v1973 = vpack.c.b16 %v1541, %v1537
        %v1974 = vpack.c.b16 %v1542, %v1538
        %v1975 = vpack.c.b16 %v1543, %v1539
        %v1976 = vpack.c.b16 %v1544, %v1540
        %v1977 = vpack.c.b16 %v1549, %v1545
        %v1978 = vpack.c.b16 %v1550, %v1546
        %v1979 = vpack.c.b16 %v1551, %v1547
        %v1980 = vpack.c.b16 %v1552, %v1548
        %v1981 = vpack.c.b16 %v1557, %v1553
        %v1982 = vpack.c.b16 %v1558, %v1554
        %v1983 = vpack.c.b16 %v1559, %v1555
        %v1984 = vpack.c.b16 %v1560, %v1556
        %v1985 = vpack.c.b16 %v1565, %v1561
        %v1986 = vpack.c.b16 %v1566, %v1562
        %v1987 = vpack.c.b16 %v1567, %v1563
        %v1988 = vpack.c.b16 %v1568, %v1564
        %v1989 = vpack.c.b16 %v1573, %v1569
        %v1990 = vpack.c.b16 %v1574, %v1570
        %v1991 = vpack.c.b16 %v1575, %v1571
        %v1992 = vpack.c.b16 %v1576, %v1572
        %v1993 = vpack.c.b16 %v1581, %v1577
        %v1994 = vpack.c.b16 %v1582, %v1578
        %v1995 = vpack.c.b16 %v1583, %v1579
        %v1996 = vpack.c.b16 %v1584, %v1580
        %v1997 = vpack.c.b16 %v1589, %v1585
        %v1998 = vpack.c.b16 %v1590, %v1586
        %v1999 = vpack.c.b16 %v1591, %v1587
        %v2000 = vpack.c.b16 %v1592, %v1588
        %v2001 = vpack.c.b16 %v1597, %v1593
        %v2002 = vpack.c.b16 %v1598, %v1594
        %v2003 = vpack.c.b16 %v1599, %v1595
        %v2004 = vpack.c.b16 %v1600, %v1596
        %v2005 = vpack.c.b16 %v1605, %v1601
        %v2006 = vpack.c.b16 %v1606, %v1602
        %v2007 = vpack.c.b16 %v1607, %v1603
        %v2008 = vpack.c.b16 %v1608, %v1604
        %v2009 = vpack.c.b16 %v1613, %v1609
        %v2010 = vpack.c.b16 %v1614, %v1610
        %v2011 = vpack.c.b16 %v1615, %v1611
        %v2012 = vpack.c.b16 %v1616, %v1612
        %v2013 = vpack.c.b16 %v1621, %v1617
        %v2014 = vpack.c.b16 %v1622, %v1618
        %v2015 = vpack.c.b16 %v1623, %v1619
        %v2016 = vpack.c.b16 %v1624, %v1620
        %v2017 = vpack.c.b16 %v1629, %v1625
        %v2018 = vpack.c.b16 %v1630, %v1626
        %v2019 = vpack.c.b16 %v1631, %v1627
        %v2020 = vpack.c.b16 %v1632, %v1628
        %v2021 = vpack.c.b16 %v1637, %v1633
        %v2022 = vpack.c.b16 %v1638, %v1634
        %v2023 = vpack.c.b16 %v1639, %v1635
        %v2024 = vpack.c.b16 %v1640, %v1636
        %v2025 = vpack.c.b16 %v1645, %v1641
        %v2026 = vpack.c.b16 %v1646, %v1642
        %v2027 = vpack.c.b16 %v1647, %v1643
        %v2028 = vpack.c.b16 %v1648, %v1644
        %v2029 = vpack.c.b16 %v1653, %v1649
        %v2030 = vpack.c.b16 %v1654, %v1650
        %v2031 = vpack.c.b16 %v1655, %v1651
        %v2032 = vpack.c.b16 %v1656, %v1652
        %v2033 = vpack.c.b16 %v1661, %v1657
        %v2034 = vpack.c.b16 %v1662, %v1658
        %v2035 = vpack.c.b16 %v1663, %v1659
        %v2036 = vpack.c.b16 %v1664, %v1660
        %v2037 = vpack.c.b16 %v1669, %v1665
        %v2038 = vpack.c.b16 %v1670, %v1666
        %v2039 = vpack.c.b16 %v1671, %v1667
        %v2040 = vpack.c.b16 %v1672, %v1668
        %v2041 = vpack.c.b16 %v1677, %v1673
        %v2042 = vpack.c.b16 %v1678, %v1674
        %v2043 = vpack.c.b16 %v1679, %v1675
        %v2044 = vpack.c.b16 %v1680, %v1676
        %v2045 = vpack.c.b16 %v1685, %v1681
        %v2046 = vpack.c.b16 %v1686, %v1682
        %v2047 = vpack.c.b16 %v1687, %v1683
        %v2048 = vpack.c.b16 %v1688, %v1684
        %v2049 = vpack.c.b16 %v1693, %v1689
        %v2050 = vpack.c.b16 %v1694, %v1690
        %v2051 = vpack.c.b16 %v1695, %v1691
        %v2052 = vpack.c.b16 %v1696, %v1692
        %v2053 = vpack.c.b16 %v1701, %v1697
        %v2054 = vpack.c.b16 %v1702, %v1698
        %v2055 = vpack.c.b16 %v1703, %v1699
        %v2056 = vpack.c.b16 %v1704, %v1700
        %v2057 = vpack.c.b16 %v1709, %v1705
        %v2058 = vpack.c.b16 %v1710, %v1706
        %v2059 = vpack.c.b16 %v1711, %v1707
        %v2060 = vpack.c.b16 %v1712, %v1708
        %v2061 = vpack.c.b16 %v1717, %v1713
        %v2062 = vpack.c.b16 %v1718, %v1714
        %v2063 = vpack.c.b16 %v1719, %v1715
        %v2064 = vpack.c.b16 %v1720, %v1716
        %v2065 = vpack.c.b16 %v1725, %v1721
        %v2066 = vpack.c.b16 %v1726, %v1722
        %v2067 = vpack.c.b16 %v1727, %v1723
        %v2068 = vpack.c.b16 %v1728, %v1724
        %v2069 = vpack.c.b16 %v1733, %v1729
        %v2070 = vpack.c.b16 %v1734, %v1730
        %v2071 = vpack.c.b16 %v1735, %v1731
        %v2072 = vpack.c.b16 %v1736, %v1732
        %v2073 = vpack.c.b16 %v1741, %v1737
        %v2074 = vpack.c.b16 %v1742, %v1738
        %v2075 = vpack.c.b16 %v1743, %v1739
        %v2076 = vpack.c.b16 %v1744, %v1740
        %v2077 = vpack.c.b16 %v1749, %v1745
        %v2078 = vpack.c.b16 %v1750, %v1746
        %v2079 = vpack.c.b16 %v1751, %v1747
        %v2080 = vpack.c.b16 %v1752, %v1748
        %v2081 = vpack.c.b16 %v1757, %v1753
        %v2082 = vpack.c.b16 %v1758, %v1754
        %v2083 = vpack.c.b16 %v1759, %v1755
        %v2084 = vpack.c.b16 %v1760, %v1756
        %v2085 = vpack.c.b16 %v1765, %v1761
        %v2086 = vpack.c.b16 %v1766, %v1762
        %v2087 = vpack.c.b16 %v1767, %v1763
        %v2088 = vpack.c.b16 %v1768, %v1764
        %v2089 = vpack.c.b16 %v1773, %v1769
        %v2090 = vpack.c.b16 %v1774, %v1770
        %v2091 = vpack.c.b16 %v1775, %v1771
        %v2092 = vpack.c.b16 %v1776, %v1772
        %v2093 = vpack.c.b16 %v1781, %v1777
        %v2094 = vpack.c.b16 %v1782, %v1778
        %v2095 = vpack.c.b16 %v1783, %v1779
        %v2096 = vpack.c.b16 %v1784, %v1780
        %v2097 = vpack.c.b16 %v1789, %v1785
        %v2098 = vpack.c.b16 %v1790, %v1786
        %v2099 = vpack.c.b16 %v1791, %v1787
        %v2100 = vpack.c.b16 %v1792, %v1788
        %v2101 = vpack.c.b16 %v1797, %v1793
        %v2102 = vpack.c.b16 %v1798, %v1794
        %v2103 = vpack.c.b16 %v1799, %v1795
        %v2104 = vpack.c.b16 %v1800, %v1796
        %v2105 = vpack.c.b16 %v1805, %v1801
        %v2106 = vpack.c.b16 %v1806, %v1802
        %v2107 = vpack.c.b16 %v1807, %v1803
        %v2108 = vpack.c.b16 %v1808, %v1804
        %v2109 = vpack.c.b16 %v1813, %v1809
        %v2110 = vpack.c.b16 %v1814, %v1810
        %v2111 = vpack.c.b16 %v1815, %v1811
        %v2112 = vpack.c.b16 %v1816, %v1812
        %v2113 = vpack.c.b16 %v1821, %v1817
        %v2114 = vpack.c.b16 %v1822, %v1818
        %v2115 = vpack.c.b16 %v1823, %v1819
        %v2116 = vpack.c.b16 %v1824, %v1820
        %v2117 = vpack.c.b16 %v1829, %v1825
        %v2118 = vpack.c.b16 %v1830, %v1826
        %v2119 = vpack.c.b16 %v1831, %v1827
        %v2120 = vpack.c.b16 %v1832, %v1828
        %v2121 = vpack.c.b16 %v1837, %v1833
        %v2122 = vpack.c.b16 %v1838, %v1834
        %v2123 = vpack.c.b16 %v1839, %v1835
        %v2124 = vpack.c.b16 %v1840, %v1836
        %v2125 = vpack.c.b16 %v1845, %v1841
        %v2126 = vpack.c.b16 %v1846, %v1842
        %v2127 = vpack.c.b16 %v1847, %v1843
        %v2128 = vpack.c.b16 %v1848, %v1844
        %v2129 = vpack.c.b16 %v1853, %v1849
        %v2130 = vpack.c.b16 %v1854, %v1850
        %v2131 = vpack.c.b16 %v1855, %v1851
        %v2132 = vpack.c.b16 %v1856, %v1852
        %v2133 = vpack.c.b16 %v1861, %v1857
        %v2134 = vpack.c.b16 %v1862, %v1858
        %v2135 = vpack.c.b16 %v1863, %v1859
        %v2136 = vpack.c.b16 %v1864, %v1860
        %v2137 = vpack.c.b16 %v1869, %v1865
        %v2138 = vpack.c.b16 %v1870, %v1866
        %v2139 = vpack.c.b16 %v1871, %v1867
        %v2140 = vpack.c.b16 %v1872, %v1868
        %v2141 = vpack.c.b16 %v1877, %v1873
        %v2142 = vpack.c.b16 %v1878, %v1874
        %v2143 = vpack.c.b16 %v1879, %v1875
        %v2144 = vpack.c.b16 %v1880, %v1876
        %v2145 = vpack.c.b16 %v1885, %v1881
        %v2146 = vpack.c.b16 %v1886, %v1882
        %v2147 = vpack.c.b16 %v1887, %v1883
        %v2148 = vpack.c.b16 %v1888, %v1884
        %v2149 = vpack.c.b16 %v1893, %v1889
        %v2150 = vpack.c.b16 %v1894, %v1890
        %v2151 = vpack.c.b16 %v1895, %v1891
        %v2152 = vpack.c.b16 %v1896, %v1892
        %v2153 = vpack.c.b16 %v1901, %v1897
        %v2154 = vpack.c.b16 %v1902, %v1898
        %v2155 = vpack.c.b16 %v1903, %v1899
        %v2156 = vpack.c.b16 %v1904, %v1900
        %v2157 = vpack.c.b16 %v1909, %v1905
        %v2158 = vpack.c.b16 %v1910, %v1906
        %v2159 = vpack.c.b16 %v1911, %v1907
        %v2160 = vpack.c.b16 %v1912, %v1908
        %v2161 = vpack.c.b16 %v1917, %v1913
        %v2162 = vpack.c.b16 %v1918, %v1914
        %v2163 = vpack.c.b16 %v1919, %v1915
        %v2164 = vpack.c.b16 %v1920, %v1916
        %v2165 = vpack.c.b16 %v1925, %v1921
        %v2166 = vpack.c.b16 %v1926, %v1922
        %v2167 = vpack.c.b16 %v1927, %v1923
        %v2168 = vpack.c.b16 %v1928, %v1924
        %v2169 = vpack.c.b16 %v1933, %v1929
        %v2170 = vpack.c.b16 %v1934, %v1930
        %v2171 = vpack.c.b16 %v1935, %v1931
        %v2172 = vpack.c.b16 %v1936, %v1932
        %v2173 = vpack.c.b16 %v1941, %v1937
        %v2174 = vpack.c.b16 %v1942, %v1938
        %v2175 = vpack.c.b16 %v1943, %v1939
        %v2176 = vpack.c.b16 %v1944, %v1940
        %v2177 = vpack.c.b16 %v1949, %v1945
        %v2178 = vpack.c.b16 %v1950, %v1946
        %v2179 = vpack.c.b16 %v1951, %v1947
        %v2180 = vpack.c.b16 %v1952, %v1948
        %v2181 = vpack.c.b16 %v1957, %v1953
        %v2182 = vpack.c.b16 %v1958, %v1954
        %v2183 = vpack.c.b16 %v1959, %v1955
        %v2184 = vpack.c.b16 %v1960, %v1956
        %2409 = vmatpush.bf16.msra.mxu0 %v1989
        %2410 = vmatpush.bf16.msra.mxu0 %v1985
        %2411 = vmatpush.bf16.msra.mxu0 %v1981
        %2412 = vmatpush.bf16.msra.mxu0 %v1977
        %2413 = vmatpush.bf16.msra.mxu0 %v1973
        %2414 = vmatpush.bf16.msra.mxu0 %v1969
        %2415 = vmatpush.bf16.msra.mxu0 %v1965
        %2416 = vmatpush.bf16.msra.mxu0 %v1961
        %2417 = vmatmul.bf16.gmra.mxu0 %v1065
        %v2418 = vpop.f32.mrf.mxu0
        %v2419 = vadd.f32 %v705, %v2418
        %v2420 = vpop.f32.mrf.mxu0
        %v2421 = vadd.f32 %v705, %v2420
        %2422 = vmatmul.bf16.gmra.mxu0 %v1072
        %v2423 = vpop.f32.mrf.mxu0
        %v2424 = vadd.f32 %v705, %v2423
        %v2425 = vpop.f32.mrf.mxu0
        %v2426 = vadd.f32 %v705, %v2425
        %2427 = vmatmul.bf16.gmra.mxu0 %v1079
        %v2428 = vpop.f32.mrf.mxu0
        %v2429 = vadd.f32 %v705, %v2428
        %v2430 = vpop.f32.mrf.mxu0
        %v2431 = vadd.f32 %v705, %v2430
        %2432 = vmatmul.bf16.gmra.mxu0 %v1086
        %v2433 = vpop.f32.mrf.mxu0
        %v2434 = vadd.f32 %v705, %v2433
        %v2435 = vpop.f32.mrf.mxu0
        %v2436 = vadd.f32 %v705, %v2435
        %2437 = vmatmul.bf16.gmra.mxu0 %v1093
        %v2438 = vpop.f32.mrf.mxu0
        %v2439 = vadd.f32 %v705, %v2438
        %v2440 = vpop.f32.mrf.mxu0
        %v2441 = vadd.f32 %v705, %v2440
        %2442 = vmatmul.bf16.gmra.mxu0 %v1100
        %v2443 = vpop.f32.mrf.mxu0
        %v2444 = vadd.f32 %v705, %v2443
        %v2445 = vpop.f32.mrf.mxu0
        %v2446 = vadd.f32 %v705, %v2445
        %2447 = vmatmul.bf16.gmra.mxu0 %v1107
        %v2448 = vpop.f32.mrf.mxu0
        %v2449 = vadd.f32 %v705, %v2448
        %v2450 = vpop.f32.mrf.mxu0
        %v2451 = vadd.f32 %v705, %v2450
        %2452 = vmatmul.bf16.gmra.mxu0 %v1114
        %v2453 = vpop.f32.mrf.mxu0
        %v2454 = vadd.f32 %v705, %v2453
        %v2455 = vpop.f32.mrf.mxu0
        %v2456 = vadd.f32 %v705, %v2455
        %2457 = vmatmul.bf16.gmra.mxu0 %v1121
        %v2458 = vpop.f32.mrf.mxu0
        %v2459 = vadd.f32 %v705, %v2458
        %v2460 = vpop.f32.mrf.mxu0
        %v2461 = vadd.f32 %v705, %v2460
        %2462 = vmatmul.bf16.gmra.mxu0 %v1128
        %v2463 = vpop.f32.mrf.mxu0
        %v2464 = vadd.f32 %v705, %v2463
        %v2465 = vpop.f32.mrf.mxu0
        %v2466 = vadd.f32 %v705, %v2465
        %2467 = vmatmul.bf16.gmra.mxu0 %v1135
        %v2468 = vpop.f32.mrf.mxu0
        %v2469 = vadd.f32 %v705, %v2468
        %v2470 = vpop.f32.mrf.mxu0
        %v2471 = vadd.f32 %v705, %v2470
        %2472 = vmatmul.bf16.gmra.mxu0 %v1142
        %v2473 = vpop.f32.mrf.mxu0
        %v2474 = vadd.f32 %v705, %v2473
        %v2475 = vpop.f32.mrf.mxu0
        %v2476 = vadd.f32 %v705, %v2475
        %2477 = vmatmul.bf16.gmra.mxu0 %v1149
        %v2478 = vpop.f32.mrf.mxu0
        %v2479 = vadd.f32 %v705, %v2478
        %v2480 = vpop.f32.mrf.mxu0
        %v2481 = vadd.f32 %v705, %v2480
        %2482 = vmatmul.bf16.gmra.mxu0 %v1156
        %v2483 = vpop.f32.mrf.mxu0
        %v2484 = vadd.f32 %v705, %v2483
        %v2485 = vpop.f32.mrf.mxu0
        %v2486 = vadd.f32 %v705, %v2485
        %2487 = vmatmul.bf16.gmra.mxu0 %v1163
        %v2488 = vpop.f32.mrf.mxu0
        %v2489 = vadd.f32 %v705, %v2488
        %v2490 = vpop.f32.mrf.mxu0
        %v2491 = vadd.f32 %v705, %v2490
        %2492 = vmatmul.bf16.gmra.mxu0 %v1170
        %v2493 = vpop.f32.mrf.mxu0
        %v2494 = vadd.f32 %v705, %v2493
        %v2495 = vpop.f32.mrf.mxu0
        %v2496 = vadd.f32 %v705, %v2495
        %2497 = vdwg.mxu0
        %2498 = vmatpush.bf16.msra.mxu0 %v2021
        %2499 = vmatpush.bf16.msra.mxu0 %v2017
        %2500 = vmatpush.bf16.msra.mxu0 %v2013
        %2501 = vmatpush.bf16.msra.mxu0 %v2009
        %2502 = vmatpush.bf16.msra.mxu0 %v2005
        %2503 = vmatpush.bf16.msra.mxu0 %v2001
        %2504 = vmatpush.bf16.msra.mxu0 %v1997
        %2505 = vmatpush.bf16.msra.mxu0 %v1993
        %2506 = vmatmul.bf16.gmra.mxu0 %v1066
        %v2507 = vpop.f32.mrf.mxu0
        %v2508 = vadd.f32 %v2419, %v2507
        %v2509 = vpop.f32.mrf.mxu0
        %v2510 = vadd.f32 %v2421, %v2509
        %2511 = vmatmul.bf16.gmra.mxu0 %v1073
        %v2512 = vpop.f32.mrf.mxu0
        %v2513 = vadd.f32 %v2424, %v2512
        %v2514 = vpop.f32.mrf.mxu0
        %v2515 = vadd.f32 %v2426, %v2514
        %2516 = vmatmul.bf16.gmra.mxu0 %v1080
        %v2517 = vpop.f32.mrf.mxu0
        %v2518 = vadd.f32 %v2429, %v2517
        %v2519 = vpop.f32.mrf.mxu0
        %v2520 = vadd.f32 %v2431, %v2519
        %2521 = vmatmul.bf16.gmra.mxu0 %v1087
        %v2522 = vpop.f32.mrf.mxu0
        %v2523 = vadd.f32 %v2434, %v2522
        %v2524 = vpop.f32.mrf.mxu0
        %v2525 = vadd.f32 %v2436, %v2524
        %2526 = vmatmul.bf16.gmra.mxu0 %v1094
        %v2527 = vpop.f32.mrf.mxu0
        %v2528 = vadd.f32 %v2439, %v2527
        %v2529 = vpop.f32.mrf.mxu0
        %v2530 = vadd.f32 %v2441, %v2529
        %2531 = vmatmul.bf16.gmra.mxu0 %v1101
        %v2532 = vpop.f32.mrf.mxu0
        %v2533 = vadd.f32 %v2444, %v2532
        %v2534 = vpop.f32.mrf.mxu0
        %v2535 = vadd.f32 %v2446, %v2534
        %2536 = vmatmul.bf16.gmra.mxu0 %v1108
        %v2537 = vpop.f32.mrf.mxu0
        %v2538 = vadd.f32 %v2449, %v2537
        %v2539 = vpop.f32.mrf.mxu0
        %v2540 = vadd.f32 %v2451, %v2539
        %2541 = vmatmul.bf16.gmra.mxu0 %v1115
        %v2542 = vpop.f32.mrf.mxu0
        %v2543 = vadd.f32 %v2454, %v2542
        %v2544 = vpop.f32.mrf.mxu0
        %v2545 = vadd.f32 %v2456, %v2544
        %2546 = vmatmul.bf16.gmra.mxu0 %v1122
        %v2547 = vpop.f32.mrf.mxu0
        %v2548 = vadd.f32 %v2459, %v2547
        %v2549 = vpop.f32.mrf.mxu0
        %v2550 = vadd.f32 %v2461, %v2549
        %2551 = vmatmul.bf16.gmra.mxu0 %v1129
        %v2552 = vpop.f32.mrf.mxu0
        %v2553 = vadd.f32 %v2464, %v2552
        %v2554 = vpop.f32.mrf.mxu0
        %v2555 = vadd.f32 %v2466, %v2554
        %2556 = vmatmul.bf16.gmra.mxu0 %v1136
        %v2557 = vpop.f32.mrf.mxu0
        %v2558 = vadd.f32 %v2469, %v2557
        %v2559 = vpop.f32.mrf.mxu0
        %v2560 = vadd.f32 %v2471, %v2559
        %2561 = vmatmul.bf16.gmra.mxu0 %v1143
        %v2562 = vpop.f32.mrf.mxu0
        %v2563 = vadd.f32 %v2474, %v2562
        %v2564 = vpop.f32.mrf.mxu0
        %v2565 = vadd.f32 %v2476, %v2564
        %2566 = vmatmul.bf16.gmra.mxu0 %v1150
        %v2567 = vpop.f32.mrf.mxu0
        %v2568 = vadd.f32 %v2479, %v2567
        %v2569 = vpop.f32.mrf.mxu0
        %v2570 = vadd.f32 %v2481, %v2569
        %2571 = vmatmul.bf16.gmra.mxu0 %v1157
        %v2572 = vpop.f32.mrf.mxu0
        %v2573 = vadd.f32 %v2484, %v2572
        %v2574 = vpop.f32.mrf.mxu0
        %v2575 = vadd.f32 %v2486, %v2574
        %2576 = vmatmul.bf16.gmra.mxu0 %v1164
        %v2577 = vpop.f32.mrf.mxu0
        %v2578 = vadd.f32 %v2489, %v2577
        %v2579 = vpop.f32.mrf.mxu0
        %v2580 = vadd.f32 %v2491, %v2579
        %2581 = vmatmul.bf16.gmra.mxu0 %v1171
        %v2582 = vpop.f32.mrf.mxu0
        %v2583 = vadd.f32 %v2494, %v2582
        %v2584 = vpop.f32.mrf.mxu0
        %v2585 = vadd.f32 %v2496, %v2584
        %2586 = vdwg.mxu0
        %2587 = vmatpush.bf16.msra.mxu0 %v2053
        %2588 = vmatpush.bf16.msra.mxu0 %v2049
        %2589 = vmatpush.bf16.msra.mxu0 %v2045
        %2590 = vmatpush.bf16.msra.mxu0 %v2041
        %2591 = vmatpush.bf16.msra.mxu0 %v2037
        %2592 = vmatpush.bf16.msra.mxu0 %v2033
        %2593 = vmatpush.bf16.msra.mxu0 %v2029
        %2594 = vmatpush.bf16.msra.mxu0 %v2025
        %2595 = vmatmul.bf16.gmra.mxu0 %v1067
        %v2596 = vpop.f32.mrf.mxu0
        %v2597 = vadd.f32 %v2508, %v2596
        %v2598 = vpop.f32.mrf.mxu0
        %v2599 = vadd.f32 %v2510, %v2598
        %2600 = vmatmul.bf16.gmra.mxu0 %v1074
        %v2601 = vpop.f32.mrf.mxu0
        %v2602 = vadd.f32 %v2513, %v2601
        %v2603 = vpop.f32.mrf.mxu0
        %v2604 = vadd.f32 %v2515, %v2603
        %2605 = vmatmul.bf16.gmra.mxu0 %v1081
        %v2606 = vpop.f32.mrf.mxu0
        %v2607 = vadd.f32 %v2518, %v2606
        %v2608 = vpop.f32.mrf.mxu0
        %v2609 = vadd.f32 %v2520, %v2608
        %2610 = vmatmul.bf16.gmra.mxu0 %v1088
        %v2611 = vpop.f32.mrf.mxu0
        %v2612 = vadd.f32 %v2523, %v2611
        %v2613 = vpop.f32.mrf.mxu0
        %v2614 = vadd.f32 %v2525, %v2613
        %2615 = vmatmul.bf16.gmra.mxu0 %v1095
        %v2616 = vpop.f32.mrf.mxu0
        %v2617 = vadd.f32 %v2528, %v2616
        %v2618 = vpop.f32.mrf.mxu0
        %v2619 = vadd.f32 %v2530, %v2618
        %2620 = vmatmul.bf16.gmra.mxu0 %v1102
        %v2621 = vpop.f32.mrf.mxu0
        %v2622 = vadd.f32 %v2533, %v2621
        %v2623 = vpop.f32.mrf.mxu0
        %v2624 = vadd.f32 %v2535, %v2623
        %2625 = vmatmul.bf16.gmra.mxu0 %v1109
        %v2626 = vpop.f32.mrf.mxu0
        %v2627 = vadd.f32 %v2538, %v2626
        %v2628 = vpop.f32.mrf.mxu0
        %v2629 = vadd.f32 %v2540, %v2628
        %2630 = vmatmul.bf16.gmra.mxu0 %v1116
        %v2631 = vpop.f32.mrf.mxu0
        %v2632 = vadd.f32 %v2543, %v2631
        %v2633 = vpop.f32.mrf.mxu0
        %v2634 = vadd.f32 %v2545, %v2633
        %2635 = vmatmul.bf16.gmra.mxu0 %v1123
        %v2636 = vpop.f32.mrf.mxu0
        %v2637 = vadd.f32 %v2548, %v2636
        %v2638 = vpop.f32.mrf.mxu0
        %v2639 = vadd.f32 %v2550, %v2638
        %2640 = vmatmul.bf16.gmra.mxu0 %v1130
        %v2641 = vpop.f32.mrf.mxu0
        %v2642 = vadd.f32 %v2553, %v2641
        %v2643 = vpop.f32.mrf.mxu0
        %v2644 = vadd.f32 %v2555, %v2643
        %2645 = vmatmul.bf16.gmra.mxu0 %v1137
        %v2646 = vpop.f32.mrf.mxu0
        %v2647 = vadd.f32 %v2558, %v2646
        %v2648 = vpop.f32.mrf.mxu0
        %v2649 = vadd.f32 %v2560, %v2648
        %2650 = vmatmul.bf16.gmra.mxu0 %v1144
        %v2651 = vpop.f32.mrf.mxu0
        %v2652 = vadd.f32 %v2563, %v2651
        %v2653 = vpop.f32.mrf.mxu0
        %v2654 = vadd.f32 %v2565, %v2653
        %2655 = vmatmul.bf16.gmra.mxu0 %v1151
        %v2656 = vpop.f32.mrf.mxu0
        %v2657 = vadd.f32 %v2568, %v2656
        %v2658 = vpop.f32.mrf.mxu0
        %v2659 = vadd.f32 %v2570, %v2658
        %2660 = vmatmul.bf16.gmra.mxu0 %v1158
        %v2661 = vpop.f32.mrf.mxu0
        %v2662 = vadd.f32 %v2573, %v2661
        %v2663 = vpop.f32.mrf.mxu0
        %v2664 = vadd.f32 %v2575, %v2663
        %2665 = vmatmul.bf16.gmra.mxu0 %v1165
        %v2666 = vpop.f32.mrf.mxu0
        %v2667 = vadd.f32 %v2578, %v2666
        %v2668 = vpop.f32.mrf.mxu0
        %v2669 = vadd.f32 %v2580, %v2668
        %2670 = vmatmul.bf16.gmra.mxu0 %v1172
        %v2671 = vpop.f32.mrf.mxu0
        %v2672 = vadd.f32 %v2583, %v2671
        %v2673 = vpop.f32.mrf.mxu0
        %v2674 = vadd.f32 %v2585, %v2673
        %2675 = vdwg.mxu0
        %2676 = vmatpush.bf16.msra.mxu0 %v2085
        %2677 = vmatpush.bf16.msra.mxu0 %v2081
        %2678 = vmatpush.bf16.msra.mxu0 %v2077
        %2679 = vmatpush.bf16.msra.mxu0 %v2073
        %2680 = vmatpush.bf16.msra.mxu0 %v2069
        %2681 = vmatpush.bf16.msra.mxu0 %v2065
        %2682 = vmatpush.bf16.msra.mxu0 %v2061
        %2683 = vmatpush.bf16.msra.mxu0 %v2057
        %2684 = vmatmul.bf16.gmra.mxu0 %v1068
        %v2685 = vpop.f32.mrf.mxu0
        %v2686 = vadd.f32 %v2597, %v2685
        %v2687 = vpop.f32.mrf.mxu0
        %v2688 = vadd.f32 %v2599, %v2687
        %2689 = vmatmul.bf16.gmra.mxu0 %v1075
        %v2690 = vpop.f32.mrf.mxu0
        %v2691 = vadd.f32 %v2602, %v2690
        %v2692 = vpop.f32.mrf.mxu0
        %v2693 = vadd.f32 %v2604, %v2692
        %2694 = vmatmul.bf16.gmra.mxu0 %v1082
        %v2695 = vpop.f32.mrf.mxu0
        %v2696 = vadd.f32 %v2607, %v2695
        %v2697 = vpop.f32.mrf.mxu0
        %v2698 = vadd.f32 %v2609, %v2697
        %2699 = vmatmul.bf16.gmra.mxu0 %v1089
        %v2700 = vpop.f32.mrf.mxu0
        %v2701 = vadd.f32 %v2612, %v2700
        %v2702 = vpop.f32.mrf.mxu0
        %v2703 = vadd.f32 %v2614, %v2702
        %2704 = vmatmul.bf16.gmra.mxu0 %v1096
        %v2705 = vpop.f32.mrf.mxu0
        %v2706 = vadd.f32 %v2617, %v2705
        %v2707 = vpop.f32.mrf.mxu0
        %v2708 = vadd.f32 %v2619, %v2707
        %2709 = vmatmul.bf16.gmra.mxu0 %v1103
        %v2710 = vpop.f32.mrf.mxu0
        %v2711 = vadd.f32 %v2622, %v2710
        %v2712 = vpop.f32.mrf.mxu0
        %v2713 = vadd.f32 %v2624, %v2712
        %2714 = vmatmul.bf16.gmra.mxu0 %v1110
        %v2715 = vpop.f32.mrf.mxu0
        %v2716 = vadd.f32 %v2627, %v2715
        %v2717 = vpop.f32.mrf.mxu0
        %v2718 = vadd.f32 %v2629, %v2717
        %2719 = vmatmul.bf16.gmra.mxu0 %v1117
        %v2720 = vpop.f32.mrf.mxu0
        %v2721 = vadd.f32 %v2632, %v2720
        %v2722 = vpop.f32.mrf.mxu0
        %v2723 = vadd.f32 %v2634, %v2722
        %2724 = vmatmul.bf16.gmra.mxu0 %v1124
        %v2725 = vpop.f32.mrf.mxu0
        %v2726 = vadd.f32 %v2637, %v2725
        %v2727 = vpop.f32.mrf.mxu0
        %v2728 = vadd.f32 %v2639, %v2727
        %2729 = vmatmul.bf16.gmra.mxu0 %v1131
        %v2730 = vpop.f32.mrf.mxu0
        %v2731 = vadd.f32 %v2642, %v2730
        %v2732 = vpop.f32.mrf.mxu0
        %v2733 = vadd.f32 %v2644, %v2732
        %2734 = vmatmul.bf16.gmra.mxu0 %v1138
        %v2735 = vpop.f32.mrf.mxu0
        %v2736 = vadd.f32 %v2647, %v2735
        %v2737 = vpop.f32.mrf.mxu0
        %v2738 = vadd.f32 %v2649, %v2737
        %2739 = vmatmul.bf16.gmra.mxu0 %v1145
        %v2740 = vpop.f32.mrf.mxu0
        %v2741 = vadd.f32 %v2652, %v2740
        %v2742 = vpop.f32.mrf.mxu0
        %v2743 = vadd.f32 %v2654, %v2742
        %2744 = vmatmul.bf16.gmra.mxu0 %v1152
        %v2745 = vpop.f32.mrf.mxu0
        %v2746 = vadd.f32 %v2657, %v2745
        %v2747 = vpop.f32.mrf.mxu0
        %v2748 = vadd.f32 %v2659, %v2747
        %2749 = vmatmul.bf16.gmra.mxu0 %v1159
        %v2750 = vpop.f32.mrf.mxu0
        %v2751 = vadd.f32 %v2662, %v2750
        %v2752 = vpop.f32.mrf.mxu0
        %v2753 = vadd.f32 %v2664, %v2752
        %2754 = vmatmul.bf16.gmra.mxu0 %v1166
        %v2755 = vpop.f32.mrf.mxu0
        %v2756 = vadd.f32 %v2667, %v2755
        %v2757 = vpop.f32.mrf.mxu0
        %v2758 = vadd.f32 %v2669, %v2757
        %2759 = vmatmul.bf16.gmra.mxu0 %v1173
        %v2760 = vpop.f32.mrf.mxu0
        %v2761 = vadd.f32 %v2672, %v2760
        %v2762 = vpop.f32.mrf.mxu0
        %v2763 = vadd.f32 %v2674, %v2762
        %2764 = vdwg.mxu0
        %2765 = vmatpush.bf16.msra.mxu0 %v2117
        %2766 = vmatpush.bf16.msra.mxu0 %v2113
        %2767 = vmatpush.bf16.msra.mxu0 %v2109
        %2768 = vmatpush.bf16.msra.mxu0 %v2105
        %2769 = vmatpush.bf16.msra.mxu0 %v2101
        %2770 = vmatpush.bf16.msra.mxu0 %v2097
        %2771 = vmatpush.bf16.msra.mxu0 %v2093
        %2772 = vmatpush.bf16.msra.mxu0 %v2089
        %2773 = vmatmul.bf16.gmra.mxu0 %v1069
        %v2774 = vpop.f32.mrf.mxu0
        %v2775 = vadd.f32 %v2686, %v2774
        %v2776 = vpop.f32.mrf.mxu0
        %v2777 = vadd.f32 %v2688, %v2776
        %2778 = vmatmul.bf16.gmra.mxu0 %v1076
        %v2779 = vpop.f32.mrf.mxu0
        %v2780 = vadd.f32 %v2691, %v2779
        %v2781 = vpop.f32.mrf.mxu0
        %v2782 = vadd.f32 %v2693, %v2781
        %2783 = vmatmul.bf16.gmra.mxu0 %v1083
        %v2784 = vpop.f32.mrf.mxu0
        %v2785 = vadd.f32 %v2696, %v2784
        %v2786 = vpop.f32.mrf.mxu0
        %v2787 = vadd.f32 %v2698, %v2786
        %2788 = vmatmul.bf16.gmra.mxu0 %v1090
        %v2789 = vpop.f32.mrf.mxu0
        %v2790 = vadd.f32 %v2701, %v2789
        %v2791 = vpop.f32.mrf.mxu0
        %v2792 = vadd.f32 %v2703, %v2791
        %2793 = vmatmul.bf16.gmra.mxu0 %v1097
        %v2794 = vpop.f32.mrf.mxu0
        %v2795 = vadd.f32 %v2706, %v2794
        %v2796 = vpop.f32.mrf.mxu0
        %v2797 = vadd.f32 %v2708, %v2796
        %2798 = vmatmul.bf16.gmra.mxu0 %v1104
        %v2799 = vpop.f32.mrf.mxu0
        %v2800 = vadd.f32 %v2711, %v2799
        %v2801 = vpop.f32.mrf.mxu0
        %v2802 = vadd.f32 %v2713, %v2801
        %2803 = vmatmul.bf16.gmra.mxu0 %v1111
        %v2804 = vpop.f32.mrf.mxu0
        %v2805 = vadd.f32 %v2716, %v2804
        %v2806 = vpop.f32.mrf.mxu0
        %v2807 = vadd.f32 %v2718, %v2806
        %2808 = vmatmul.bf16.gmra.mxu0 %v1118
        %v2809 = vpop.f32.mrf.mxu0
        %v2810 = vadd.f32 %v2721, %v2809
        %v2811 = vpop.f32.mrf.mxu0
        %v2812 = vadd.f32 %v2723, %v2811
        %2813 = vmatmul.bf16.gmra.mxu0 %v1125
        %v2814 = vpop.f32.mrf.mxu0
        %v2815 = vadd.f32 %v2726, %v2814
        %v2816 = vpop.f32.mrf.mxu0
        %v2817 = vadd.f32 %v2728, %v2816
        %2818 = vmatmul.bf16.gmra.mxu0 %v1132
        %v2819 = vpop.f32.mrf.mxu0
        %v2820 = vadd.f32 %v2731, %v2819
        %v2821 = vpop.f32.mrf.mxu0
        %v2822 = vadd.f32 %v2733, %v2821
        %2823 = vmatmul.bf16.gmra.mxu0 %v1139
        %v2824 = vpop.f32.mrf.mxu0
        %v2825 = vadd.f32 %v2736, %v2824
        %v2826 = vpop.f32.mrf.mxu0
        %v2827 = vadd.f32 %v2738, %v2826
        %2828 = vmatmul.bf16.gmra.mxu0 %v1146
        %v2829 = vpop.f32.mrf.mxu0
        %v2830 = vadd.f32 %v2741, %v2829
        %v2831 = vpop.f32.mrf.mxu0
        %v2832 = vadd.f32 %v2743, %v2831
        %2833 = vmatmul.bf16.gmra.mxu0 %v1153
        %v2834 = vpop.f32.mrf.mxu0
        %v2835 = vadd.f32 %v2746, %v2834
        %v2836 = vpop.f32.mrf.mxu0
        %v2837 = vadd.f32 %v2748, %v2836
        %2838 = vmatmul.bf16.gmra.mxu0 %v1160
        %v2839 = vpop.f32.mrf.mxu0
        %v2840 = vadd.f32 %v2751, %v2839
        %v2841 = vpop.f32.mrf.mxu0
        %v2842 = vadd.f32 %v2753, %v2841
        %2843 = vmatmul.bf16.gmra.mxu0 %v1167
        %v2844 = vpop.f32.mrf.mxu0
        %v2845 = vadd.f32 %v2756, %v2844
        %v2846 = vpop.f32.mrf.mxu0
        %v2847 = vadd.f32 %v2758, %v2846
        %2848 = vmatmul.bf16.gmra.mxu0 %v1174
        %v2849 = vpop.f32.mrf.mxu0
        %v2850 = vadd.f32 %v2761, %v2849
        %v2851 = vpop.f32.mrf.mxu0
        %v2852 = vadd.f32 %v2763, %v2851
        %2853 = vdwg.mxu0
        %2854 = vmatpush.bf16.msra.mxu0 %v2149
        %2855 = vmatpush.bf16.msra.mxu0 %v2145
        %2856 = vmatpush.bf16.msra.mxu0 %v2141
        %2857 = vmatpush.bf16.msra.mxu0 %v2137
        %2858 = vmatpush.bf16.msra.mxu0 %v2133
        %2859 = vmatpush.bf16.msra.mxu0 %v2129
        %2860 = vmatpush.bf16.msra.mxu0 %v2125
        %2861 = vmatpush.bf16.msra.mxu0 %v2121
        %2862 = vmatmul.bf16.gmra.mxu0 %v1070
        %v2863 = vpop.f32.mrf.mxu0
        %v2864 = vadd.f32 %v2775, %v2863
        %v2865 = vpop.f32.mrf.mxu0
        %v2866 = vadd.f32 %v2777, %v2865
        %2867 = vmatmul.bf16.gmra.mxu0 %v1077
        %v2868 = vpop.f32.mrf.mxu0
        %v2869 = vadd.f32 %v2780, %v2868
        %v2870 = vpop.f32.mrf.mxu0
        %v2871 = vadd.f32 %v2782, %v2870
        %2872 = vmatmul.bf16.gmra.mxu0 %v1084
        %v2873 = vpop.f32.mrf.mxu0
        %v2874 = vadd.f32 %v2785, %v2873
        %v2875 = vpop.f32.mrf.mxu0
        %v2876 = vadd.f32 %v2787, %v2875
        %2877 = vmatmul.bf16.gmra.mxu0 %v1091
        %v2878 = vpop.f32.mrf.mxu0
        %v2879 = vadd.f32 %v2790, %v2878
        %v2880 = vpop.f32.mrf.mxu0
        %v2881 = vadd.f32 %v2792, %v2880
        %2882 = vmatmul.bf16.gmra.mxu0 %v1098
        %v2883 = vpop.f32.mrf.mxu0
        %v2884 = vadd.f32 %v2795, %v2883
        %v2885 = vpop.f32.mrf.mxu0
        %v2886 = vadd.f32 %v2797, %v2885
        %2887 = vmatmul.bf16.gmra.mxu0 %v1105
        %v2888 = vpop.f32.mrf.mxu0
        %v2889 = vadd.f32 %v2800, %v2888
        %v2890 = vpop.f32.mrf.mxu0
        %v2891 = vadd.f32 %v2802, %v2890
        %2892 = vmatmul.bf16.gmra.mxu0 %v1112
        %v2893 = vpop.f32.mrf.mxu0
        %v2894 = vadd.f32 %v2805, %v2893
        %v2895 = vpop.f32.mrf.mxu0
        %v2896 = vadd.f32 %v2807, %v2895
        %2897 = vmatmul.bf16.gmra.mxu0 %v1119
        %v2898 = vpop.f32.mrf.mxu0
        %v2899 = vadd.f32 %v2810, %v2898
        %v2900 = vpop.f32.mrf.mxu0
        %v2901 = vadd.f32 %v2812, %v2900
        %2902 = vmatmul.bf16.gmra.mxu0 %v1126
        %v2903 = vpop.f32.mrf.mxu0
        %v2904 = vadd.f32 %v2815, %v2903
        %v2905 = vpop.f32.mrf.mxu0
        %v2906 = vadd.f32 %v2817, %v2905
        %2907 = vmatmul.bf16.gmra.mxu0 %v1133
        %v2908 = vpop.f32.mrf.mxu0
        %v2909 = vadd.f32 %v2820, %v2908
        %v2910 = vpop.f32.mrf.mxu0
        %v2911 = vadd.f32 %v2822, %v2910
        %2912 = vmatmul.bf16.gmra.mxu0 %v1140
        %v2913 = vpop.f32.mrf.mxu0
        %v2914 = vadd.f32 %v2825, %v2913
        %v2915 = vpop.f32.mrf.mxu0
        %v2916 = vadd.f32 %v2827, %v2915
        %2917 = vmatmul.bf16.gmra.mxu0 %v1147
        %v2918 = vpop.f32.mrf.mxu0
        %v2919 = vadd.f32 %v2830, %v2918
        %v2920 = vpop.f32.mrf.mxu0
        %v2921 = vadd.f32 %v2832, %v2920
        %2922 = vmatmul.bf16.gmra.mxu0 %v1154
        %v2923 = vpop.f32.mrf.mxu0
        %v2924 = vadd.f32 %v2835, %v2923
        %v2925 = vpop.f32.mrf.mxu0
        %v2926 = vadd.f32 %v2837, %v2925
        %2927 = vmatmul.bf16.gmra.mxu0 %v1161
        %v2928 = vpop.f32.mrf.mxu0
        %v2929 = vadd.f32 %v2840, %v2928
        %v2930 = vpop.f32.mrf.mxu0
        %v2931 = vadd.f32 %v2842, %v2930
        %2932 = vmatmul.bf16.gmra.mxu0 %v1168
        %v2933 = vpop.f32.mrf.mxu0
        %v2934 = vadd.f32 %v2845, %v2933
        %v2935 = vpop.f32.mrf.mxu0
        %v2936 = vadd.f32 %v2847, %v2935
        %2937 = vmatmul.bf16.gmra.mxu0 %v1175
        %v2938 = vpop.f32.mrf.mxu0
        %v2939 = vadd.f32 %v2850, %v2938
        %v2940 = vpop.f32.mrf.mxu0
        %v2941 = vadd.f32 %v2852, %v2940
        %2942 = vdwg.mxu0
        %2943 = vmatpush.bf16.msra.mxu0 %v2181
        %2944 = vmatpush.bf16.msra.mxu0 %v2177
        %2945 = vmatpush.bf16.msra.mxu0 %v2173
        %2946 = vmatpush.bf16.msra.mxu0 %v2169
        %2947 = vmatpush.bf16.msra.mxu0 %v2165
        %2948 = vmatpush.bf16.msra.mxu0 %v2161
        %2949 = vmatpush.bf16.msra.mxu0 %v2157
        %2950 = vmatpush.bf16.msra.mxu0 %v2153
        %2951 = vmatmul.bf16.gmra.mxu0 %v1071
        %v2952 = vpop.f32.mrf.mxu0
        %v2953 = vadd.f32 %v2864, %v2952
        %v2954 = vpop.f32.mrf.mxu0
        %v2955 = vadd.f32 %v2866, %v2954
        %2956 = vmatmul.bf16.gmra.mxu0 %v1078
        %v2957 = vpop.f32.mrf.mxu0
        %v2958 = vadd.f32 %v2869, %v2957
        %v2959 = vpop.f32.mrf.mxu0
        %v2960 = vadd.f32 %v2871, %v2959
        %2961 = vmatmul.bf16.gmra.mxu0 %v1085
        %v2962 = vpop.f32.mrf.mxu0
        %v2963 = vadd.f32 %v2874, %v2962
        %v2964 = vpop.f32.mrf.mxu0
        %v2965 = vadd.f32 %v2876, %v2964
        %2966 = vmatmul.bf16.gmra.mxu0 %v1092
        %v2967 = vpop.f32.mrf.mxu0
        %v2968 = vadd.f32 %v2879, %v2967
        %v2969 = vpop.f32.mrf.mxu0
        %v2970 = vadd.f32 %v2881, %v2969
        %2971 = vmatmul.bf16.gmra.mxu0 %v1099
        %v2972 = vpop.f32.mrf.mxu0
        %v2973 = vadd.f32 %v2884, %v2972
        %v2974 = vpop.f32.mrf.mxu0
        %v2975 = vadd.f32 %v2886, %v2974
        %2976 = vmatmul.bf16.gmra.mxu0 %v1106
        %v2977 = vpop.f32.mrf.mxu0
        %v2978 = vadd.f32 %v2889, %v2977
        %v2979 = vpop.f32.mrf.mxu0
        %v2980 = vadd.f32 %v2891, %v2979
        %2981 = vmatmul.bf16.gmra.mxu0 %v1113
        %v2982 = vpop.f32.mrf.mxu0
        %v2983 = vadd.f32 %v2894, %v2982
        %v2984 = vpop.f32.mrf.mxu0
        %v2985 = vadd.f32 %v2896, %v2984
        %2986 = vmatmul.bf16.gmra.mxu0 %v1120
        %v2987 = vpop.f32.mrf.mxu0
        %v2988 = vadd.f32 %v2899, %v2987
        %v2989 = vpop.f32.mrf.mxu0
        %v2990 = vadd.f32 %v2901, %v2989
        %2991 = vmatmul.bf16.gmra.mxu0 %v1127
        %v2992 = vpop.f32.mrf.mxu0
        %v2993 = vadd.f32 %v2904, %v2992
        %v2994 = vpop.f32.mrf.mxu0
        %v2995 = vadd.f32 %v2906, %v2994
        %2996 = vmatmul.bf16.gmra.mxu0 %v1134
        %v2997 = vpop.f32.mrf.mxu0
        %v2998 = vadd.f32 %v2909, %v2997
        %v2999 = vpop.f32.mrf.mxu0
        %v3000 = vadd.f32 %v2911, %v2999
        %3001 = vmatmul.bf16.gmra.mxu0 %v1141
        %v3002 = vpop.f32.mrf.mxu0
        %v3003 = vadd.f32 %v2914, %v3002
        %v3004 = vpop.f32.mrf.mxu0
        %v3005 = vadd.f32 %v2916, %v3004
        %3006 = vmatmul.bf16.gmra.mxu0 %v1148
        %v3007 = vpop.f32.mrf.mxu0
        %v3008 = vadd.f32 %v2919, %v3007
        %v3009 = vpop.f32.mrf.mxu0
        %v3010 = vadd.f32 %v2921, %v3009
        %3011 = vmatmul.bf16.gmra.mxu0 %v1155
        %v3012 = vpop.f32.mrf.mxu0
        %v3013 = vadd.f32 %v2924, %v3012
        %v3014 = vpop.f32.mrf.mxu0
        %v3015 = vadd.f32 %v2926, %v3014
        %3016 = vmatmul.bf16.gmra.mxu0 %v1162
        %v3017 = vpop.f32.mrf.mxu0
        %v3018 = vadd.f32 %v2929, %v3017
        %v3019 = vpop.f32.mrf.mxu0
        %v3020 = vadd.f32 %v2931, %v3019
        %3021 = vmatmul.bf16.gmra.mxu0 %v1169
        %v3022 = vpop.f32.mrf.mxu0
        %v3023 = vadd.f32 %v2934, %v3022
        %v3024 = vpop.f32.mrf.mxu0
        %v3025 = vadd.f32 %v2936, %v3024
        %3026 = vmatmul.bf16.gmra.mxu0 %v1176
        %v3027 = vpop.f32.mrf.mxu0
        %v3028 = vadd.f32 %v2939, %v3027
        %v3029 = vpop.f32.mrf.mxu0
        %v3030 = vadd.f32 %v2941, %v3029
        %3031 = vdwg.mxu0
        %3032 = vmatpush.bf16.msra.mxu0 %v1990
        %3033 = vmatpush.bf16.msra.mxu0 %v1986
        %3034 = vmatpush.bf16.msra.mxu0 %v1982
        %3035 = vmatpush.bf16.msra.mxu0 %v1978
        %3036 = vmatpush.bf16.msra.mxu0 %v1974
        %3037 = vmatpush.bf16.msra.mxu0 %v1970
        %3038 = vmatpush.bf16.msra.mxu0 %v1966
        %3039 = vmatpush.bf16.msra.mxu0 %v1962
        %3040 = vmatmul.bf16.gmra.mxu0 %v1065
        %v3041 = vpop.f32.mrf.mxu0
        %v3042 = vadd.f32 %v706, %v3041
        %v3043 = vpop.f32.mrf.mxu0
        %v3044 = vadd.f32 %v706, %v3043
        %3045 = vmatmul.bf16.gmra.mxu0 %v1072
        %v3046 = vpop.f32.mrf.mxu0
        %v3047 = vadd.f32 %v706, %v3046
        %v3048 = vpop.f32.mrf.mxu0
        %v3049 = vadd.f32 %v706, %v3048
        %3050 = vmatmul.bf16.gmra.mxu0 %v1079
        %v3051 = vpop.f32.mrf.mxu0
        %v3052 = vadd.f32 %v706, %v3051
        %v3053 = vpop.f32.mrf.mxu0
        %v3054 = vadd.f32 %v706, %v3053
        %3055 = vmatmul.bf16.gmra.mxu0 %v1086
        %v3056 = vpop.f32.mrf.mxu0
        %v3057 = vadd.f32 %v706, %v3056
        %v3058 = vpop.f32.mrf.mxu0
        %v3059 = vadd.f32 %v706, %v3058
        %3060 = vmatmul.bf16.gmra.mxu0 %v1093
        %v3061 = vpop.f32.mrf.mxu0
        %v3062 = vadd.f32 %v706, %v3061
        %v3063 = vpop.f32.mrf.mxu0
        %v3064 = vadd.f32 %v706, %v3063
        %3065 = vmatmul.bf16.gmra.mxu0 %v1100
        %v3066 = vpop.f32.mrf.mxu0
        %v3067 = vadd.f32 %v706, %v3066
        %v3068 = vpop.f32.mrf.mxu0
        %v3069 = vadd.f32 %v706, %v3068
        %3070 = vmatmul.bf16.gmra.mxu0 %v1107
        %v3071 = vpop.f32.mrf.mxu0
        %v3072 = vadd.f32 %v706, %v3071
        %v3073 = vpop.f32.mrf.mxu0
        %v3074 = vadd.f32 %v706, %v3073
        %3075 = vmatmul.bf16.gmra.mxu0 %v1114
        %v3076 = vpop.f32.mrf.mxu0
        %v3077 = vadd.f32 %v706, %v3076
        %v3078 = vpop.f32.mrf.mxu0
        %v3079 = vadd.f32 %v706, %v3078
        %3080 = vmatmul.bf16.gmra.mxu0 %v1121
        %v3081 = vpop.f32.mrf.mxu0
        %v3082 = vadd.f32 %v706, %v3081
        %v3083 = vpop.f32.mrf.mxu0
        %v3084 = vadd.f32 %v706, %v3083
        %3085 = vmatmul.bf16.gmra.mxu0 %v1128
        %v3086 = vpop.f32.mrf.mxu0
        %v3087 = vadd.f32 %v706, %v3086
        %v3088 = vpop.f32.mrf.mxu0
        %v3089 = vadd.f32 %v706, %v3088
        %3090 = vmatmul.bf16.gmra.mxu0 %v1135
        %v3091 = vpop.f32.mrf.mxu0
        %v3092 = vadd.f32 %v706, %v3091
        %v3093 = vpop.f32.mrf.mxu0
        %v3094 = vadd.f32 %v706, %v3093
        %3095 = vmatmul.bf16.gmra.mxu0 %v1142
        %v3096 = vpop.f32.mrf.mxu0
        %v3097 = vadd.f32 %v706, %v3096
        %v3098 = vpop.f32.mrf.mxu0
        %v3099 = vadd.f32 %v706, %v3098
        %3100 = vmatmul.bf16.gmra.mxu0 %v1149
        %v3101 = vpop.f32.mrf.mxu0
        %v3102 = vadd.f32 %v706, %v3101
        %v3103 = vpop.f32.mrf.mxu0
        %v3104 = vadd.f32 %v706, %v3103
        %3105 = vmatmul.bf16.gmra.mxu0 %v1156
        %v3106 = vpop.f32.mrf.mxu0
        %v3107 = vadd.f32 %v706, %v3106
        %v3108 = vpop.f32.mrf.mxu0
        %v3109 = vadd.f32 %v706, %v3108
        %3110 = vmatmul.bf16.gmra.mxu0 %v1163
        %v3111 = vpop.f32.mrf.mxu0
        %v3112 = vadd.f32 %v706, %v3111
        %v3113 = vpop.f32.mrf.mxu0
        %v3114 = vadd.f32 %v706, %v3113
        %3115 = vmatmul.bf16.gmra.mxu0 %v1170
        %v3116 = vpop.f32.mrf.mxu0
        %v3117 = vadd.f32 %v706, %v3116
        %v3118 = vpop.f32.mrf.mxu0
        %v3119 = vadd.f32 %v706, %v3118
        %3120 = vdwg.mxu0
        %3121 = vmatpush.bf16.msra.mxu0 %v2022
        %3122 = vmatpush.bf16.msra.mxu0 %v2018
        %3123 = vmatpush.bf16.msra.mxu0 %v2014
        %3124 = vmatpush.bf16.msra.mxu0 %v2010
        %3125 = vmatpush.bf16.msra.mxu0 %v2006
        %3126 = vmatpush.bf16.msra.mxu0 %v2002
        %3127 = vmatpush.bf16.msra.mxu0 %v1998
        %3128 = vmatpush.bf16.msra.mxu0 %v1994
        %3129 = vmatmul.bf16.gmra.mxu0 %v1066
        %v3130 = vpop.f32.mrf.mxu0
        %v3131 = vadd.f32 %v3042, %v3130
        %v3132 = vpop.f32.mrf.mxu0
        %v3133 = vadd.f32 %v3044, %v3132
        %3134 = vmatmul.bf16.gmra.mxu0 %v1073
        %v3135 = vpop.f32.mrf.mxu0
        %v3136 = vadd.f32 %v3047, %v3135
        %v3137 = vpop.f32.mrf.mxu0
        %v3138 = vadd.f32 %v3049, %v3137
        %3139 = vmatmul.bf16.gmra.mxu0 %v1080
        %v3140 = vpop.f32.mrf.mxu0
        %v3141 = vadd.f32 %v3052, %v3140
        %v3142 = vpop.f32.mrf.mxu0
        %v3143 = vadd.f32 %v3054, %v3142
        %3144 = vmatmul.bf16.gmra.mxu0 %v1087
        %v3145 = vpop.f32.mrf.mxu0
        %v3146 = vadd.f32 %v3057, %v3145
        %v3147 = vpop.f32.mrf.mxu0
        %v3148 = vadd.f32 %v3059, %v3147
        %3149 = vmatmul.bf16.gmra.mxu0 %v1094
        %v3150 = vpop.f32.mrf.mxu0
        %v3151 = vadd.f32 %v3062, %v3150
        %v3152 = vpop.f32.mrf.mxu0
        %v3153 = vadd.f32 %v3064, %v3152
        %3154 = vmatmul.bf16.gmra.mxu0 %v1101
        %v3155 = vpop.f32.mrf.mxu0
        %v3156 = vadd.f32 %v3067, %v3155
        %v3157 = vpop.f32.mrf.mxu0
        %v3158 = vadd.f32 %v3069, %v3157
        %3159 = vmatmul.bf16.gmra.mxu0 %v1108
        %v3160 = vpop.f32.mrf.mxu0
        %v3161 = vadd.f32 %v3072, %v3160
        %v3162 = vpop.f32.mrf.mxu0
        %v3163 = vadd.f32 %v3074, %v3162
        %3164 = vmatmul.bf16.gmra.mxu0 %v1115
        %v3165 = vpop.f32.mrf.mxu0
        %v3166 = vadd.f32 %v3077, %v3165
        %v3167 = vpop.f32.mrf.mxu0
        %v3168 = vadd.f32 %v3079, %v3167
        %3169 = vmatmul.bf16.gmra.mxu0 %v1122
        %v3170 = vpop.f32.mrf.mxu0
        %v3171 = vadd.f32 %v3082, %v3170
        %v3172 = vpop.f32.mrf.mxu0
        %v3173 = vadd.f32 %v3084, %v3172
        %3174 = vmatmul.bf16.gmra.mxu0 %v1129
        %v3175 = vpop.f32.mrf.mxu0
        %v3176 = vadd.f32 %v3087, %v3175
        %v3177 = vpop.f32.mrf.mxu0
        %v3178 = vadd.f32 %v3089, %v3177
        %3179 = vmatmul.bf16.gmra.mxu0 %v1136
        %v3180 = vpop.f32.mrf.mxu0
        %v3181 = vadd.f32 %v3092, %v3180
        %v3182 = vpop.f32.mrf.mxu0
        %v3183 = vadd.f32 %v3094, %v3182
        %3184 = vmatmul.bf16.gmra.mxu0 %v1143
        %v3185 = vpop.f32.mrf.mxu0
        %v3186 = vadd.f32 %v3097, %v3185
        %v3187 = vpop.f32.mrf.mxu0
        %v3188 = vadd.f32 %v3099, %v3187
        %3189 = vmatmul.bf16.gmra.mxu0 %v1150
        %v3190 = vpop.f32.mrf.mxu0
        %v3191 = vadd.f32 %v3102, %v3190
        %v3192 = vpop.f32.mrf.mxu0
        %v3193 = vadd.f32 %v3104, %v3192
        %3194 = vmatmul.bf16.gmra.mxu0 %v1157
        %v3195 = vpop.f32.mrf.mxu0
        %v3196 = vadd.f32 %v3107, %v3195
        %v3197 = vpop.f32.mrf.mxu0
        %v3198 = vadd.f32 %v3109, %v3197
        %3199 = vmatmul.bf16.gmra.mxu0 %v1164
        %v3200 = vpop.f32.mrf.mxu0
        %v3201 = vadd.f32 %v3112, %v3200
        %v3202 = vpop.f32.mrf.mxu0
        %v3203 = vadd.f32 %v3114, %v3202
        %3204 = vmatmul.bf16.gmra.mxu0 %v1171
        %v3205 = vpop.f32.mrf.mxu0
        %v3206 = vadd.f32 %v3117, %v3205
        %v3207 = vpop.f32.mrf.mxu0
        %v3208 = vadd.f32 %v3119, %v3207
        %3209 = vdwg.mxu0
        %3210 = vmatpush.bf16.msra.mxu0 %v2054
        %3211 = vmatpush.bf16.msra.mxu0 %v2050
        %3212 = vmatpush.bf16.msra.mxu0 %v2046
        %3213 = vmatpush.bf16.msra.mxu0 %v2042
        %3214 = vmatpush.bf16.msra.mxu0 %v2038
        %3215 = vmatpush.bf16.msra.mxu0 %v2034
        %3216 = vmatpush.bf16.msra.mxu0 %v2030
        %3217 = vmatpush.bf16.msra.mxu0 %v2026
        %3218 = vmatmul.bf16.gmra.mxu0 %v1067
        %v3219 = vpop.f32.mrf.mxu0
        %v3220 = vadd.f32 %v3131, %v3219
        %v3221 = vpop.f32.mrf.mxu0
        %v3222 = vadd.f32 %v3133, %v3221
        %3223 = vmatmul.bf16.gmra.mxu0 %v1074
        %v3224 = vpop.f32.mrf.mxu0
        %v3225 = vadd.f32 %v3136, %v3224
        %v3226 = vpop.f32.mrf.mxu0
        %v3227 = vadd.f32 %v3138, %v3226
        %3228 = vmatmul.bf16.gmra.mxu0 %v1081
        %v3229 = vpop.f32.mrf.mxu0
        %v3230 = vadd.f32 %v3141, %v3229
        %v3231 = vpop.f32.mrf.mxu0
        %v3232 = vadd.f32 %v3143, %v3231
        %3233 = vmatmul.bf16.gmra.mxu0 %v1088
        %v3234 = vpop.f32.mrf.mxu0
        %v3235 = vadd.f32 %v3146, %v3234
        %v3236 = vpop.f32.mrf.mxu0
        %v3237 = vadd.f32 %v3148, %v3236
        %3238 = vmatmul.bf16.gmra.mxu0 %v1095
        %v3239 = vpop.f32.mrf.mxu0
        %v3240 = vadd.f32 %v3151, %v3239
        %v3241 = vpop.f32.mrf.mxu0
        %v3242 = vadd.f32 %v3153, %v3241
        %3243 = vmatmul.bf16.gmra.mxu0 %v1102
        %v3244 = vpop.f32.mrf.mxu0
        %v3245 = vadd.f32 %v3156, %v3244
        %v3246 = vpop.f32.mrf.mxu0
        %v3247 = vadd.f32 %v3158, %v3246
        %3248 = vmatmul.bf16.gmra.mxu0 %v1109
        %v3249 = vpop.f32.mrf.mxu0
        %v3250 = vadd.f32 %v3161, %v3249
        %v3251 = vpop.f32.mrf.mxu0
        %v3252 = vadd.f32 %v3163, %v3251
        %3253 = vmatmul.bf16.gmra.mxu0 %v1116
        %v3254 = vpop.f32.mrf.mxu0
        %v3255 = vadd.f32 %v3166, %v3254
        %v3256 = vpop.f32.mrf.mxu0
        %v3257 = vadd.f32 %v3168, %v3256
        %3258 = vmatmul.bf16.gmra.mxu0 %v1123
        %v3259 = vpop.f32.mrf.mxu0
        %v3260 = vadd.f32 %v3171, %v3259
        %v3261 = vpop.f32.mrf.mxu0
        %v3262 = vadd.f32 %v3173, %v3261
        %3263 = vmatmul.bf16.gmra.mxu0 %v1130
        %v3264 = vpop.f32.mrf.mxu0
        %v3265 = vadd.f32 %v3176, %v3264
        %v3266 = vpop.f32.mrf.mxu0
        %v3267 = vadd.f32 %v3178, %v3266
        %3268 = vmatmul.bf16.gmra.mxu0 %v1137
        %v3269 = vpop.f32.mrf.mxu0
        %v3270 = vadd.f32 %v3181, %v3269
        %v3271 = vpop.f32.mrf.mxu0
        %v3272 = vadd.f32 %v3183, %v3271
        %3273 = vmatmul.bf16.gmra.mxu0 %v1144
        %v3274 = vpop.f32.mrf.mxu0
        %v3275 = vadd.f32 %v3186, %v3274
        %v3276 = vpop.f32.mrf.mxu0
        %v3277 = vadd.f32 %v3188, %v3276
        %3278 = vmatmul.bf16.gmra.mxu0 %v1151
        %v3279 = vpop.f32.mrf.mxu0
        %v3280 = vadd.f32 %v3191, %v3279
        %v3281 = vpop.f32.mrf.mxu0
        %v3282 = vadd.f32 %v3193, %v3281
        %3283 = vmatmul.bf16.gmra.mxu0 %v1158
        %v3284 = vpop.f32.mrf.mxu0
        %v3285 = vadd.f32 %v3196, %v3284
        %v3286 = vpop.f32.mrf.mxu0
        %v3287 = vadd.f32 %v3198, %v3286
        %3288 = vmatmul.bf16.gmra.mxu0 %v1165
        %v3289 = vpop.f32.mrf.mxu0
        %v3290 = vadd.f32 %v3201, %v3289
        %v3291 = vpop.f32.mrf.mxu0
        %v3292 = vadd.f32 %v3203, %v3291
        %3293 = vmatmul.bf16.gmra.mxu0 %v1172
        %v3294 = vpop.f32.mrf.mxu0
        %v3295 = vadd.f32 %v3206, %v3294
        %v3296 = vpop.f32.mrf.mxu0
        %v3297 = vadd.f32 %v3208, %v3296
        %3298 = vdwg.mxu0
        %3299 = vmatpush.bf16.msra.mxu0 %v2086
        %3300 = vmatpush.bf16.msra.mxu0 %v2082
        %3301 = vmatpush.bf16.msra.mxu0 %v2078
        %3302 = vmatpush.bf16.msra.mxu0 %v2074
        %3303 = vmatpush.bf16.msra.mxu0 %v2070
        %3304 = vmatpush.bf16.msra.mxu0 %v2066
        %3305 = vmatpush.bf16.msra.mxu0 %v2062
        %3306 = vmatpush.bf16.msra.mxu0 %v2058
        %3307 = vmatmul.bf16.gmra.mxu0 %v1068
        %v3308 = vpop.f32.mrf.mxu0
        %v3309 = vadd.f32 %v3220, %v3308
        %v3310 = vpop.f32.mrf.mxu0
        %v3311 = vadd.f32 %v3222, %v3310
        %3312 = vmatmul.bf16.gmra.mxu0 %v1075
        %v3313 = vpop.f32.mrf.mxu0
        %v3314 = vadd.f32 %v3225, %v3313
        %v3315 = vpop.f32.mrf.mxu0
        %v3316 = vadd.f32 %v3227, %v3315
        %3317 = vmatmul.bf16.gmra.mxu0 %v1082
        %v3318 = vpop.f32.mrf.mxu0
        %v3319 = vadd.f32 %v3230, %v3318
        %v3320 = vpop.f32.mrf.mxu0
        %v3321 = vadd.f32 %v3232, %v3320
        %3322 = vmatmul.bf16.gmra.mxu0 %v1089
        %v3323 = vpop.f32.mrf.mxu0
        %v3324 = vadd.f32 %v3235, %v3323
        %v3325 = vpop.f32.mrf.mxu0
        %v3326 = vadd.f32 %v3237, %v3325
        %3327 = vmatmul.bf16.gmra.mxu0 %v1096
        %v3328 = vpop.f32.mrf.mxu0
        %v3329 = vadd.f32 %v3240, %v3328
        %v3330 = vpop.f32.mrf.mxu0
        %v3331 = vadd.f32 %v3242, %v3330
        %3332 = vmatmul.bf16.gmra.mxu0 %v1103
        %v3333 = vpop.f32.mrf.mxu0
        %v3334 = vadd.f32 %v3245, %v3333
        %v3335 = vpop.f32.mrf.mxu0
        %v3336 = vadd.f32 %v3247, %v3335
        %3337 = vmatmul.bf16.gmra.mxu0 %v1110
        %v3338 = vpop.f32.mrf.mxu0
        %v3339 = vadd.f32 %v3250, %v3338
        %v3340 = vpop.f32.mrf.mxu0
        %v3341 = vadd.f32 %v3252, %v3340
        %3342 = vmatmul.bf16.gmra.mxu0 %v1117
        %v3343 = vpop.f32.mrf.mxu0
        %v3344 = vadd.f32 %v3255, %v3343
        %v3345 = vpop.f32.mrf.mxu0
        %v3346 = vadd.f32 %v3257, %v3345
        %3347 = vmatmul.bf16.gmra.mxu0 %v1124
        %v3348 = vpop.f32.mrf.mxu0
        %v3349 = vadd.f32 %v3260, %v3348
        %v3350 = vpop.f32.mrf.mxu0
        %v3351 = vadd.f32 %v3262, %v3350
        %3352 = vmatmul.bf16.gmra.mxu0 %v1131
        %v3353 = vpop.f32.mrf.mxu0
        %v3354 = vadd.f32 %v3265, %v3353
        %v3355 = vpop.f32.mrf.mxu0
        %v3356 = vadd.f32 %v3267, %v3355
        %3357 = vmatmul.bf16.gmra.mxu0 %v1138
        %v3358 = vpop.f32.mrf.mxu0
        %v3359 = vadd.f32 %v3270, %v3358
        %v3360 = vpop.f32.mrf.mxu0
        %v3361 = vadd.f32 %v3272, %v3360
        %3362 = vmatmul.bf16.gmra.mxu0 %v1145
        %v3363 = vpop.f32.mrf.mxu0
        %v3364 = vadd.f32 %v3275, %v3363
        %v3365 = vpop.f32.mrf.mxu0
        %v3366 = vadd.f32 %v3277, %v3365
        %3367 = vmatmul.bf16.gmra.mxu0 %v1152
        %v3368 = vpop.f32.mrf.mxu0
        %v3369 = vadd.f32 %v3280, %v3368
        %v3370 = vpop.f32.mrf.mxu0
        %v3371 = vadd.f32 %v3282, %v3370
        %3372 = vmatmul.bf16.gmra.mxu0 %v1159
        %v3373 = vpop.f32.mrf.mxu0
        %v3374 = vadd.f32 %v3285, %v3373
        %v3375 = vpop.f32.mrf.mxu0
        %v3376 = vadd.f32 %v3287, %v3375
        %3377 = vmatmul.bf16.gmra.mxu0 %v1166
        %v3378 = vpop.f32.mrf.mxu0
        %v3379 = vadd.f32 %v3290, %v3378
        %v3380 = vpop.f32.mrf.mxu0
        %v3381 = vadd.f32 %v3292, %v3380
        %3382 = vmatmul.bf16.gmra.mxu0 %v1173
        %v3383 = vpop.f32.mrf.mxu0
        %v3384 = vadd.f32 %v3295, %v3383
        %v3385 = vpop.f32.mrf.mxu0
        %v3386 = vadd.f32 %v3297, %v3385
        %3387 = vdwg.mxu0
        %3388 = vmatpush.bf16.msra.mxu0 %v2118
        %3389 = vmatpush.bf16.msra.mxu0 %v2114
        %3390 = vmatpush.bf16.msra.mxu0 %v2110
        %3391 = vmatpush.bf16.msra.mxu0 %v2106
        %3392 = vmatpush.bf16.msra.mxu0 %v2102
        %3393 = vmatpush.bf16.msra.mxu0 %v2098
        %3394 = vmatpush.bf16.msra.mxu0 %v2094
        %3395 = vmatpush.bf16.msra.mxu0 %v2090
        %3396 = vmatmul.bf16.gmra.mxu0 %v1069
        %v3397 = vpop.f32.mrf.mxu0
        %v3398 = vadd.f32 %v3309, %v3397
        %v3399 = vpop.f32.mrf.mxu0
        %v3400 = vadd.f32 %v3311, %v3399
        %3401 = vmatmul.bf16.gmra.mxu0 %v1076
        %v3402 = vpop.f32.mrf.mxu0
        %v3403 = vadd.f32 %v3314, %v3402
        %v3404 = vpop.f32.mrf.mxu0
        %v3405 = vadd.f32 %v3316, %v3404
        %3406 = vmatmul.bf16.gmra.mxu0 %v1083
        %v3407 = vpop.f32.mrf.mxu0
        %v3408 = vadd.f32 %v3319, %v3407
        %v3409 = vpop.f32.mrf.mxu0
        %v3410 = vadd.f32 %v3321, %v3409
        %3411 = vmatmul.bf16.gmra.mxu0 %v1090
        %v3412 = vpop.f32.mrf.mxu0
        %v3413 = vadd.f32 %v3324, %v3412
        %v3414 = vpop.f32.mrf.mxu0
        %v3415 = vadd.f32 %v3326, %v3414
        %3416 = vmatmul.bf16.gmra.mxu0 %v1097
        %v3417 = vpop.f32.mrf.mxu0
        %v3418 = vadd.f32 %v3329, %v3417
        %v3419 = vpop.f32.mrf.mxu0
        %v3420 = vadd.f32 %v3331, %v3419
        %3421 = vmatmul.bf16.gmra.mxu0 %v1104
        %v3422 = vpop.f32.mrf.mxu0
        %v3423 = vadd.f32 %v3334, %v3422
        %v3424 = vpop.f32.mrf.mxu0
        %v3425 = vadd.f32 %v3336, %v3424
        %3426 = vmatmul.bf16.gmra.mxu0 %v1111
        %v3427 = vpop.f32.mrf.mxu0
        %v3428 = vadd.f32 %v3339, %v3427
        %v3429 = vpop.f32.mrf.mxu0
        %v3430 = vadd.f32 %v3341, %v3429
        %3431 = vmatmul.bf16.gmra.mxu0 %v1118
        %v3432 = vpop.f32.mrf.mxu0
        %v3433 = vadd.f32 %v3344, %v3432
        %v3434 = vpop.f32.mrf.mxu0
        %v3435 = vadd.f32 %v3346, %v3434
        %3436 = vmatmul.bf16.gmra.mxu0 %v1125
        %v3437 = vpop.f32.mrf.mxu0
        %v3438 = vadd.f32 %v3349, %v3437
        %v3439 = vpop.f32.mrf.mxu0
        %v3440 = vadd.f32 %v3351, %v3439
        %3441 = vmatmul.bf16.gmra.mxu0 %v1132
        %v3442 = vpop.f32.mrf.mxu0
        %v3443 = vadd.f32 %v3354, %v3442
        %v3444 = vpop.f32.mrf.mxu0
        %v3445 = vadd.f32 %v3356, %v3444
        %3446 = vmatmul.bf16.gmra.mxu0 %v1139
        %v3447 = vpop.f32.mrf.mxu0
        %v3448 = vadd.f32 %v3359, %v3447
        %v3449 = vpop.f32.mrf.mxu0
        %v3450 = vadd.f32 %v3361, %v3449
        %3451 = vmatmul.bf16.gmra.mxu0 %v1146
        %v3452 = vpop.f32.mrf.mxu0
        %v3453 = vadd.f32 %v3364, %v3452
        %v3454 = vpop.f32.mrf.mxu0
        %v3455 = vadd.f32 %v3366, %v3454
        %3456 = vmatmul.bf16.gmra.mxu0 %v1153
        %v3457 = vpop.f32.mrf.mxu0
        %v3458 = vadd.f32 %v3369, %v3457
        %v3459 = vpop.f32.mrf.mxu0
        %v3460 = vadd.f32 %v3371, %v3459
        %3461 = vmatmul.bf16.gmra.mxu0 %v1160
        %v3462 = vpop.f32.mrf.mxu0
        %v3463 = vadd.f32 %v3374, %v3462
        %v3464 = vpop.f32.mrf.mxu0
        %v3465 = vadd.f32 %v3376, %v3464
        %3466 = vmatmul.bf16.gmra.mxu0 %v1167
        %v3467 = vpop.f32.mrf.mxu0
        %v3468 = vadd.f32 %v3379, %v3467
        %v3469 = vpop.f32.mrf.mxu0
        %v3470 = vadd.f32 %v3381, %v3469
        %3471 = vmatmul.bf16.gmra.mxu0 %v1174
        %v3472 = vpop.f32.mrf.mxu0
        %v3473 = vadd.f32 %v3384, %v3472
        %v3474 = vpop.f32.mrf.mxu0
        %v3475 = vadd.f32 %v3386, %v3474
        %3476 = vdwg.mxu0
        %3477 = vmatpush.bf16.msra.mxu0 %v2150
        %3478 = vmatpush.bf16.msra.mxu0 %v2146
        %3479 = vmatpush.bf16.msra.mxu0 %v2142
        %3480 = vmatpush.bf16.msra.mxu0 %v2138
        %3481 = vmatpush.bf16.msra.mxu0 %v2134
        %3482 = vmatpush.bf16.msra.mxu0 %v2130
        %3483 = vmatpush.bf16.msra.mxu0 %v2126
        %3484 = vmatpush.bf16.msra.mxu0 %v2122
        %3485 = vmatmul.bf16.gmra.mxu0 %v1070
        %v3486 = vpop.f32.mrf.mxu0
        %v3487 = vadd.f32 %v3398, %v3486
        %v3488 = vpop.f32.mrf.mxu0
        %v3489 = vadd.f32 %v3400, %v3488
        %3490 = vmatmul.bf16.gmra.mxu0 %v1077
        %v3491 = vpop.f32.mrf.mxu0
        %v3492 = vadd.f32 %v3403, %v3491
        %v3493 = vpop.f32.mrf.mxu0
        %v3494 = vadd.f32 %v3405, %v3493
        %3495 = vmatmul.bf16.gmra.mxu0 %v1084
        %v3496 = vpop.f32.mrf.mxu0
        %v3497 = vadd.f32 %v3408, %v3496
        %v3498 = vpop.f32.mrf.mxu0
        %v3499 = vadd.f32 %v3410, %v3498
        %3500 = vmatmul.bf16.gmra.mxu0 %v1091
        %v3501 = vpop.f32.mrf.mxu0
        %v3502 = vadd.f32 %v3413, %v3501
        %v3503 = vpop.f32.mrf.mxu0
        %v3504 = vadd.f32 %v3415, %v3503
        %3505 = vmatmul.bf16.gmra.mxu0 %v1098
        %v3506 = vpop.f32.mrf.mxu0
        %v3507 = vadd.f32 %v3418, %v3506
        %v3508 = vpop.f32.mrf.mxu0
        %v3509 = vadd.f32 %v3420, %v3508
        %3510 = vmatmul.bf16.gmra.mxu0 %v1105
        %v3511 = vpop.f32.mrf.mxu0
        %v3512 = vadd.f32 %v3423, %v3511
        %v3513 = vpop.f32.mrf.mxu0
        %v3514 = vadd.f32 %v3425, %v3513
        %3515 = vmatmul.bf16.gmra.mxu0 %v1112
        %v3516 = vpop.f32.mrf.mxu0
        %v3517 = vadd.f32 %v3428, %v3516
        %v3518 = vpop.f32.mrf.mxu0
        %v3519 = vadd.f32 %v3430, %v3518
        %3520 = vmatmul.bf16.gmra.mxu0 %v1119
        %v3521 = vpop.f32.mrf.mxu0
        %v3522 = vadd.f32 %v3433, %v3521
        %v3523 = vpop.f32.mrf.mxu0
        %v3524 = vadd.f32 %v3435, %v3523
        %3525 = vmatmul.bf16.gmra.mxu0 %v1126
        %v3526 = vpop.f32.mrf.mxu0
        %v3527 = vadd.f32 %v3438, %v3526
        %v3528 = vpop.f32.mrf.mxu0
        %v3529 = vadd.f32 %v3440, %v3528
        %3530 = vmatmul.bf16.gmra.mxu0 %v1133
        %v3531 = vpop.f32.mrf.mxu0
        %v3532 = vadd.f32 %v3443, %v3531
        %v3533 = vpop.f32.mrf.mxu0
        %v3534 = vadd.f32 %v3445, %v3533
        %3535 = vmatmul.bf16.gmra.mxu0 %v1140
        %v3536 = vpop.f32.mrf.mxu0
        %v3537 = vadd.f32 %v3448, %v3536
        %v3538 = vpop.f32.mrf.mxu0
        %v3539 = vadd.f32 %v3450, %v3538
        %3540 = vmatmul.bf16.gmra.mxu0 %v1147
        %v3541 = vpop.f32.mrf.mxu0
        %v3542 = vadd.f32 %v3453, %v3541
        %v3543 = vpop.f32.mrf.mxu0
        %v3544 = vadd.f32 %v3455, %v3543
        %3545 = vmatmul.bf16.gmra.mxu0 %v1154
        %v3546 = vpop.f32.mrf.mxu0
        %v3547 = vadd.f32 %v3458, %v3546
        %v3548 = vpop.f32.mrf.mxu0
        %v3549 = vadd.f32 %v3460, %v3548
        %3550 = vmatmul.bf16.gmra.mxu0 %v1161
        %v3551 = vpop.f32.mrf.mxu0
        %v3552 = vadd.f32 %v3463, %v3551
        %v3553 = vpop.f32.mrf.mxu0
        %v3554 = vadd.f32 %v3465, %v3553
        %3555 = vmatmul.bf16.gmra.mxu0 %v1168
        %v3556 = vpop.f32.mrf.mxu0
        %v3557 = vadd.f32 %v3468, %v3556
        %v3558 = vpop.f32.mrf.mxu0
        %v3559 = vadd.f32 %v3470, %v3558
        %3560 = vmatmul.bf16.gmra.mxu0 %v1175
        %v3561 = vpop.f32.mrf.mxu0
        %v3562 = vadd.f32 %v3473, %v3561
        %v3563 = vpop.f32.mrf.mxu0
        %v3564 = vadd.f32 %v3475, %v3563
        %3565 = vdwg.mxu0
        %3566 = vmatpush.bf16.msra.mxu0 %v2182
        %3567 = vmatpush.bf16.msra.mxu0 %v2178
        %3568 = vmatpush.bf16.msra.mxu0 %v2174
        %3569 = vmatpush.bf16.msra.mxu0 %v2170
        %3570 = vmatpush.bf16.msra.mxu0 %v2166
        %3571 = vmatpush.bf16.msra.mxu0 %v2162
        %3572 = vmatpush.bf16.msra.mxu0 %v2158
        %3573 = vmatpush.bf16.msra.mxu0 %v2154
        %3574 = vmatmul.bf16.gmra.mxu0 %v1071
        %v3575 = vpop.f32.mrf.mxu0
        %v3576 = vadd.f32 %v3487, %v3575
        %v3577 = vpop.f32.mrf.mxu0
        %v3578 = vadd.f32 %v3489, %v3577
        %3579 = vmatmul.bf16.gmra.mxu0 %v1078
        %v3580 = vpop.f32.mrf.mxu0
        %v3581 = vadd.f32 %v3492, %v3580
        %v3582 = vpop.f32.mrf.mxu0
        %v3583 = vadd.f32 %v3494, %v3582
        %3584 = vmatmul.bf16.gmra.mxu0 %v1085
        %v3585 = vpop.f32.mrf.mxu0
        %v3586 = vadd.f32 %v3497, %v3585
        %v3587 = vpop.f32.mrf.mxu0
        %v3588 = vadd.f32 %v3499, %v3587
        %3589 = vmatmul.bf16.gmra.mxu0 %v1092
        %v3590 = vpop.f32.mrf.mxu0
        %v3591 = vadd.f32 %v3502, %v3590
        %v3592 = vpop.f32.mrf.mxu0
        %v3593 = vadd.f32 %v3504, %v3592
        %3594 = vmatmul.bf16.gmra.mxu0 %v1099
        %v3595 = vpop.f32.mrf.mxu0
        %v3596 = vadd.f32 %v3507, %v3595
        %v3597 = vpop.f32.mrf.mxu0
        %v3598 = vadd.f32 %v3509, %v3597
        %3599 = vmatmul.bf16.gmra.mxu0 %v1106
        %v3600 = vpop.f32.mrf.mxu0
        %v3601 = vadd.f32 %v3512, %v3600
        %v3602 = vpop.f32.mrf.mxu0
        %v3603 = vadd.f32 %v3514, %v3602
        %3604 = vmatmul.bf16.gmra.mxu0 %v1113
        %v3605 = vpop.f32.mrf.mxu0
        %v3606 = vadd.f32 %v3517, %v3605
        %v3607 = vpop.f32.mrf.mxu0
        %v3608 = vadd.f32 %v3519, %v3607
        %3609 = vmatmul.bf16.gmra.mxu0 %v1120
        %v3610 = vpop.f32.mrf.mxu0
        %v3611 = vadd.f32 %v3522, %v3610
        %v3612 = vpop.f32.mrf.mxu0
        %v3613 = vadd.f32 %v3524, %v3612
        %3614 = vmatmul.bf16.gmra.mxu0 %v1127
        %v3615 = vpop.f32.mrf.mxu0
        %v3616 = vadd.f32 %v3527, %v3615
        %v3617 = vpop.f32.mrf.mxu0
        %v3618 = vadd.f32 %v3529, %v3617
        %3619 = vmatmul.bf16.gmra.mxu0 %v1134
        %v3620 = vpop.f32.mrf.mxu0
        %v3621 = vadd.f32 %v3532, %v3620
        %v3622 = vpop.f32.mrf.mxu0
        %v3623 = vadd.f32 %v3534, %v3622
        %3624 = vmatmul.bf16.gmra.mxu0 %v1141
        %v3625 = vpop.f32.mrf.mxu0
        %v3626 = vadd.f32 %v3537, %v3625
        %v3627 = vpop.f32.mrf.mxu0
        %v3628 = vadd.f32 %v3539, %v3627
        %3629 = vmatmul.bf16.gmra.mxu0 %v1148
        %v3630 = vpop.f32.mrf.mxu0
        %v3631 = vadd.f32 %v3542, %v3630
        %v3632 = vpop.f32.mrf.mxu0
        %v3633 = vadd.f32 %v3544, %v3632
        %3634 = vmatmul.bf16.gmra.mxu0 %v1155
        %v3635 = vpop.f32.mrf.mxu0
        %v3636 = vadd.f32 %v3547, %v3635
        %v3637 = vpop.f32.mrf.mxu0
        %v3638 = vadd.f32 %v3549, %v3637
        %3639 = vmatmul.bf16.gmra.mxu0 %v1162
        %v3640 = vpop.f32.mrf.mxu0
        %v3641 = vadd.f32 %v3552, %v3640
        %v3642 = vpop.f32.mrf.mxu0
        %v3643 = vadd.f32 %v3554, %v3642
        %3644 = vmatmul.bf16.gmra.mxu0 %v1169
        %v3645 = vpop.f32.mrf.mxu0
        %v3646 = vadd.f32 %v3557, %v3645
        %v3647 = vpop.f32.mrf.mxu0
        %v3648 = vadd.f32 %v3559, %v3647
        %3649 = vmatmul.bf16.gmra.mxu0 %v1176
        %v3650 = vpop.f32.mrf.mxu0
        %v3651 = vadd.f32 %v3562, %v3650
        %v3652 = vpop.f32.mrf.mxu0
        %v3653 = vadd.f32 %v3564, %v3652
        %3654 = vdwg.mxu0
        %3655 = vmatpush.bf16.msra.mxu0 %v1991
        %3656 = vmatpush.bf16.msra.mxu0 %v1987
        %3657 = vmatpush.bf16.msra.mxu0 %v1983
        %3658 = vmatpush.bf16.msra.mxu0 %v1979
        %3659 = vmatpush.bf16.msra.mxu0 %v1975
        %3660 = vmatpush.bf16.msra.mxu0 %v1971
        %3661 = vmatpush.bf16.msra.mxu0 %v1967
        %3662 = vmatpush.bf16.msra.mxu0 %v1963
        %3663 = vmatmul.bf16.gmra.mxu0 %v1065
        %v3664 = vpop.f32.mrf.mxu0
        %v3665 = vadd.f32 %v707, %v3664
        %v3666 = vpop.f32.mrf.mxu0
        %v3667 = vadd.f32 %v707, %v3666
        %3668 = vmatmul.bf16.gmra.mxu0 %v1072
        %v3669 = vpop.f32.mrf.mxu0
        %v3670 = vadd.f32 %v707, %v3669
        %v3671 = vpop.f32.mrf.mxu0
        %v3672 = vadd.f32 %v707, %v3671
        %3673 = vmatmul.bf16.gmra.mxu0 %v1079
        %v3674 = vpop.f32.mrf.mxu0
        %v3675 = vadd.f32 %v707, %v3674
        %v3676 = vpop.f32.mrf.mxu0
        %v3677 = vadd.f32 %v707, %v3676
        %3678 = vmatmul.bf16.gmra.mxu0 %v1086
        %v3679 = vpop.f32.mrf.mxu0
        %v3680 = vadd.f32 %v707, %v3679
        %v3681 = vpop.f32.mrf.mxu0
        %v3682 = vadd.f32 %v707, %v3681
        %3683 = vmatmul.bf16.gmra.mxu0 %v1093
        %v3684 = vpop.f32.mrf.mxu0
        %v3685 = vadd.f32 %v707, %v3684
        %v3686 = vpop.f32.mrf.mxu0
        %v3687 = vadd.f32 %v707, %v3686
        %3688 = vmatmul.bf16.gmra.mxu0 %v1100
        %v3689 = vpop.f32.mrf.mxu0
        %v3690 = vadd.f32 %v707, %v3689
        %v3691 = vpop.f32.mrf.mxu0
        %v3692 = vadd.f32 %v707, %v3691
        %3693 = vmatmul.bf16.gmra.mxu0 %v1107
        %v3694 = vpop.f32.mrf.mxu0
        %v3695 = vadd.f32 %v707, %v3694
        %v3696 = vpop.f32.mrf.mxu0
        %v3697 = vadd.f32 %v707, %v3696
        %3698 = vmatmul.bf16.gmra.mxu0 %v1114
        %v3699 = vpop.f32.mrf.mxu0
        %v3700 = vadd.f32 %v707, %v3699
        %v3701 = vpop.f32.mrf.mxu0
        %v3702 = vadd.f32 %v707, %v3701
        %3703 = vmatmul.bf16.gmra.mxu0 %v1121
        %v3704 = vpop.f32.mrf.mxu0
        %v3705 = vadd.f32 %v707, %v3704
        %v3706 = vpop.f32.mrf.mxu0
        %v3707 = vadd.f32 %v707, %v3706
        %3708 = vmatmul.bf16.gmra.mxu0 %v1128
        %v3709 = vpop.f32.mrf.mxu0
        %v3710 = vadd.f32 %v707, %v3709
        %v3711 = vpop.f32.mrf.mxu0
        %v3712 = vadd.f32 %v707, %v3711
        %3713 = vmatmul.bf16.gmra.mxu0 %v1135
        %v3714 = vpop.f32.mrf.mxu0
        %v3715 = vadd.f32 %v707, %v3714
        %v3716 = vpop.f32.mrf.mxu0
        %v3717 = vadd.f32 %v707, %v3716
        %3718 = vmatmul.bf16.gmra.mxu0 %v1142
        %v3719 = vpop.f32.mrf.mxu0
        %v3720 = vadd.f32 %v707, %v3719
        %v3721 = vpop.f32.mrf.mxu0
        %v3722 = vadd.f32 %v707, %v3721
        %3723 = vmatmul.bf16.gmra.mxu0 %v1149
        %v3724 = vpop.f32.mrf.mxu0
        %v3725 = vadd.f32 %v707, %v3724
        %v3726 = vpop.f32.mrf.mxu0
        %v3727 = vadd.f32 %v707, %v3726
        %3728 = vmatmul.bf16.gmra.mxu0 %v1156
        %v3729 = vpop.f32.mrf.mxu0
        %v3730 = vadd.f32 %v707, %v3729
        %v3731 = vpop.f32.mrf.mxu0
        %v3732 = vadd.f32 %v707, %v3731
        %3733 = vmatmul.bf16.gmra.mxu0 %v1163
        %v3734 = vpop.f32.mrf.mxu0
        %v3735 = vadd.f32 %v707, %v3734
        %v3736 = vpop.f32.mrf.mxu0
        %v3737 = vadd.f32 %v707, %v3736
        %3738 = vmatmul.bf16.gmra.mxu0 %v1170
        %v3739 = vpop.f32.mrf.mxu0
        %v3740 = vadd.f32 %v707, %v3739
        %v3741 = vpop.f32.mrf.mxu0
        %v3742 = vadd.f32 %v707, %v3741
        %3743 = vdwg.mxu0
        %3744 = vmatpush.bf16.msra.mxu0 %v2023
        %3745 = vmatpush.bf16.msra.mxu0 %v2019
        %3746 = vmatpush.bf16.msra.mxu0 %v2015
        %3747 = vmatpush.bf16.msra.mxu0 %v2011
        %3748 = vmatpush.bf16.msra.mxu0 %v2007
        %3749 = vmatpush.bf16.msra.mxu0 %v2003
        %3750 = vmatpush.bf16.msra.mxu0 %v1999
        %3751 = vmatpush.bf16.msra.mxu0 %v1995
        %3752 = vmatmul.bf16.gmra.mxu0 %v1066
        %v3753 = vpop.f32.mrf.mxu0
        %v3754 = vadd.f32 %v3665, %v3753
        %v3755 = vpop.f32.mrf.mxu0
        %v3756 = vadd.f32 %v3667, %v3755
        %3757 = vmatmul.bf16.gmra.mxu0 %v1073
        %v3758 = vpop.f32.mrf.mxu0
        %v3759 = vadd.f32 %v3670, %v3758
        %v3760 = vpop.f32.mrf.mxu0
        %v3761 = vadd.f32 %v3672, %v3760
        %3762 = vmatmul.bf16.gmra.mxu0 %v1080
        %v3763 = vpop.f32.mrf.mxu0
        %v3764 = vadd.f32 %v3675, %v3763
        %v3765 = vpop.f32.mrf.mxu0
        %v3766 = vadd.f32 %v3677, %v3765
        %3767 = vmatmul.bf16.gmra.mxu0 %v1087
        %v3768 = vpop.f32.mrf.mxu0
        %v3769 = vadd.f32 %v3680, %v3768
        %v3770 = vpop.f32.mrf.mxu0
        %v3771 = vadd.f32 %v3682, %v3770
        %3772 = vmatmul.bf16.gmra.mxu0 %v1094
        %v3773 = vpop.f32.mrf.mxu0
        %v3774 = vadd.f32 %v3685, %v3773
        %v3775 = vpop.f32.mrf.mxu0
        %v3776 = vadd.f32 %v3687, %v3775
        %3777 = vmatmul.bf16.gmra.mxu0 %v1101
        %v3778 = vpop.f32.mrf.mxu0
        %v3779 = vadd.f32 %v3690, %v3778
        %v3780 = vpop.f32.mrf.mxu0
        %v3781 = vadd.f32 %v3692, %v3780
        %3782 = vmatmul.bf16.gmra.mxu0 %v1108
        %v3783 = vpop.f32.mrf.mxu0
        %v3784 = vadd.f32 %v3695, %v3783
        %v3785 = vpop.f32.mrf.mxu0
        %v3786 = vadd.f32 %v3697, %v3785
        %3787 = vmatmul.bf16.gmra.mxu0 %v1115
        %v3788 = vpop.f32.mrf.mxu0
        %v3789 = vadd.f32 %v3700, %v3788
        %v3790 = vpop.f32.mrf.mxu0
        %v3791 = vadd.f32 %v3702, %v3790
        %3792 = vmatmul.bf16.gmra.mxu0 %v1122
        %v3793 = vpop.f32.mrf.mxu0
        %v3794 = vadd.f32 %v3705, %v3793
        %v3795 = vpop.f32.mrf.mxu0
        %v3796 = vadd.f32 %v3707, %v3795
        %3797 = vmatmul.bf16.gmra.mxu0 %v1129
        %v3798 = vpop.f32.mrf.mxu0
        %v3799 = vadd.f32 %v3710, %v3798
        %v3800 = vpop.f32.mrf.mxu0
        %v3801 = vadd.f32 %v3712, %v3800
        %3802 = vmatmul.bf16.gmra.mxu0 %v1136
        %v3803 = vpop.f32.mrf.mxu0
        %v3804 = vadd.f32 %v3715, %v3803
        %v3805 = vpop.f32.mrf.mxu0
        %v3806 = vadd.f32 %v3717, %v3805
        %3807 = vmatmul.bf16.gmra.mxu0 %v1143
        %v3808 = vpop.f32.mrf.mxu0
        %v3809 = vadd.f32 %v3720, %v3808
        %v3810 = vpop.f32.mrf.mxu0
        %v3811 = vadd.f32 %v3722, %v3810
        %3812 = vmatmul.bf16.gmra.mxu0 %v1150
        %v3813 = vpop.f32.mrf.mxu0
        %v3814 = vadd.f32 %v3725, %v3813
        %v3815 = vpop.f32.mrf.mxu0
        %v3816 = vadd.f32 %v3727, %v3815
        %3817 = vmatmul.bf16.gmra.mxu0 %v1157
        %v3818 = vpop.f32.mrf.mxu0
        %v3819 = vadd.f32 %v3730, %v3818
        %v3820 = vpop.f32.mrf.mxu0
        %v3821 = vadd.f32 %v3732, %v3820
        %3822 = vmatmul.bf16.gmra.mxu0 %v1164
        %v3823 = vpop.f32.mrf.mxu0
        %v3824 = vadd.f32 %v3735, %v3823
        %v3825 = vpop.f32.mrf.mxu0
        %v3826 = vadd.f32 %v3737, %v3825
        %3827 = vmatmul.bf16.gmra.mxu0 %v1171
        %v3828 = vpop.f32.mrf.mxu0
        %v3829 = vadd.f32 %v3740, %v3828
        %v3830 = vpop.f32.mrf.mxu0
        %v3831 = vadd.f32 %v3742, %v3830
        %3832 = vdwg.mxu0
        %3833 = vmatpush.bf16.msra.mxu0 %v2055
        %3834 = vmatpush.bf16.msra.mxu0 %v2051
        %3835 = vmatpush.bf16.msra.mxu0 %v2047
        %3836 = vmatpush.bf16.msra.mxu0 %v2043
        %3837 = vmatpush.bf16.msra.mxu0 %v2039
        %3838 = vmatpush.bf16.msra.mxu0 %v2035
        %3839 = vmatpush.bf16.msra.mxu0 %v2031
        %3840 = vmatpush.bf16.msra.mxu0 %v2027
        %3841 = vmatmul.bf16.gmra.mxu0 %v1067
        %v3842 = vpop.f32.mrf.mxu0
        %v3843 = vadd.f32 %v3754, %v3842
        %v3844 = vpop.f32.mrf.mxu0
        %v3845 = vadd.f32 %v3756, %v3844
        %3846 = vmatmul.bf16.gmra.mxu0 %v1074
        %v3847 = vpop.f32.mrf.mxu0
        %v3848 = vadd.f32 %v3759, %v3847
        %v3849 = vpop.f32.mrf.mxu0
        %v3850 = vadd.f32 %v3761, %v3849
        %3851 = vmatmul.bf16.gmra.mxu0 %v1081
        %v3852 = vpop.f32.mrf.mxu0
        %v3853 = vadd.f32 %v3764, %v3852
        %v3854 = vpop.f32.mrf.mxu0
        %v3855 = vadd.f32 %v3766, %v3854
        %3856 = vmatmul.bf16.gmra.mxu0 %v1088
        %v3857 = vpop.f32.mrf.mxu0
        %v3858 = vadd.f32 %v3769, %v3857
        %v3859 = vpop.f32.mrf.mxu0
        %v3860 = vadd.f32 %v3771, %v3859
        %3861 = vmatmul.bf16.gmra.mxu0 %v1095
        %v3862 = vpop.f32.mrf.mxu0
        %v3863 = vadd.f32 %v3774, %v3862
        %v3864 = vpop.f32.mrf.mxu0
        %v3865 = vadd.f32 %v3776, %v3864
        %3866 = vmatmul.bf16.gmra.mxu0 %v1102
        %v3867 = vpop.f32.mrf.mxu0
        %v3868 = vadd.f32 %v3779, %v3867
        %v3869 = vpop.f32.mrf.mxu0
        %v3870 = vadd.f32 %v3781, %v3869
        %3871 = vmatmul.bf16.gmra.mxu0 %v1109
        %v3872 = vpop.f32.mrf.mxu0
        %v3873 = vadd.f32 %v3784, %v3872
        %v3874 = vpop.f32.mrf.mxu0
        %v3875 = vadd.f32 %v3786, %v3874
        %3876 = vmatmul.bf16.gmra.mxu0 %v1116
        %v3877 = vpop.f32.mrf.mxu0
        %v3878 = vadd.f32 %v3789, %v3877
        %v3879 = vpop.f32.mrf.mxu0
        %v3880 = vadd.f32 %v3791, %v3879
        %3881 = vmatmul.bf16.gmra.mxu0 %v1123
        %v3882 = vpop.f32.mrf.mxu0
        %v3883 = vadd.f32 %v3794, %v3882
        %v3884 = vpop.f32.mrf.mxu0
        %v3885 = vadd.f32 %v3796, %v3884
        %3886 = vmatmul.bf16.gmra.mxu0 %v1130
        %v3887 = vpop.f32.mrf.mxu0
        %v3888 = vadd.f32 %v3799, %v3887
        %v3889 = vpop.f32.mrf.mxu0
        %v3890 = vadd.f32 %v3801, %v3889
        %3891 = vmatmul.bf16.gmra.mxu0 %v1137
        %v3892 = vpop.f32.mrf.mxu0
        %v3893 = vadd.f32 %v3804, %v3892
        %v3894 = vpop.f32.mrf.mxu0
        %v3895 = vadd.f32 %v3806, %v3894
        %3896 = vmatmul.bf16.gmra.mxu0 %v1144
        %v3897 = vpop.f32.mrf.mxu0
        %v3898 = vadd.f32 %v3809, %v3897
        %v3899 = vpop.f32.mrf.mxu0
        %v3900 = vadd.f32 %v3811, %v3899
        %3901 = vmatmul.bf16.gmra.mxu0 %v1151
        %v3902 = vpop.f32.mrf.mxu0
        %v3903 = vadd.f32 %v3814, %v3902
        %v3904 = vpop.f32.mrf.mxu0
        %v3905 = vadd.f32 %v3816, %v3904
        %3906 = vmatmul.bf16.gmra.mxu0 %v1158
        %v3907 = vpop.f32.mrf.mxu0
        %v3908 = vadd.f32 %v3819, %v3907
        %v3909 = vpop.f32.mrf.mxu0
        %v3910 = vadd.f32 %v3821, %v3909
        %3911 = vmatmul.bf16.gmra.mxu0 %v1165
        %v3912 = vpop.f32.mrf.mxu0
        %v3913 = vadd.f32 %v3824, %v3912
        %v3914 = vpop.f32.mrf.mxu0
        %v3915 = vadd.f32 %v3826, %v3914
        %3916 = vmatmul.bf16.gmra.mxu0 %v1172
        %v3917 = vpop.f32.mrf.mxu0
        %v3918 = vadd.f32 %v3829, %v3917
        %v3919 = vpop.f32.mrf.mxu0
        %v3920 = vadd.f32 %v3831, %v3919
        %3921 = vdwg.mxu0
        %3922 = vmatpush.bf16.msra.mxu0 %v2087
        %3923 = vmatpush.bf16.msra.mxu0 %v2083
        %3924 = vmatpush.bf16.msra.mxu0 %v2079
        %3925 = vmatpush.bf16.msra.mxu0 %v2075
        %3926 = vmatpush.bf16.msra.mxu0 %v2071
        %3927 = vmatpush.bf16.msra.mxu0 %v2067
        %3928 = vmatpush.bf16.msra.mxu0 %v2063
        %3929 = vmatpush.bf16.msra.mxu0 %v2059
        %3930 = vmatmul.bf16.gmra.mxu0 %v1068
        %v3931 = vpop.f32.mrf.mxu0
        %v3932 = vadd.f32 %v3843, %v3931
        %v3933 = vpop.f32.mrf.mxu0
        %v3934 = vadd.f32 %v3845, %v3933
        %3935 = vmatmul.bf16.gmra.mxu0 %v1075
        %v3936 = vpop.f32.mrf.mxu0
        %v3937 = vadd.f32 %v3848, %v3936
        %v3938 = vpop.f32.mrf.mxu0
        %v3939 = vadd.f32 %v3850, %v3938
        %3940 = vmatmul.bf16.gmra.mxu0 %v1082
        %v3941 = vpop.f32.mrf.mxu0
        %v3942 = vadd.f32 %v3853, %v3941
        %v3943 = vpop.f32.mrf.mxu0
        %v3944 = vadd.f32 %v3855, %v3943
        %3945 = vmatmul.bf16.gmra.mxu0 %v1089
        %v3946 = vpop.f32.mrf.mxu0
        %v3947 = vadd.f32 %v3858, %v3946
        %v3948 = vpop.f32.mrf.mxu0
        %v3949 = vadd.f32 %v3860, %v3948
        %3950 = vmatmul.bf16.gmra.mxu0 %v1096
        %v3951 = vpop.f32.mrf.mxu0
        %v3952 = vadd.f32 %v3863, %v3951
        %v3953 = vpop.f32.mrf.mxu0
        %v3954 = vadd.f32 %v3865, %v3953
        %3955 = vmatmul.bf16.gmra.mxu0 %v1103
        %v3956 = vpop.f32.mrf.mxu0
        %v3957 = vadd.f32 %v3868, %v3956
        %v3958 = vpop.f32.mrf.mxu0
        %v3959 = vadd.f32 %v3870, %v3958
        %3960 = vmatmul.bf16.gmra.mxu0 %v1110
        %v3961 = vpop.f32.mrf.mxu0
        %v3962 = vadd.f32 %v3873, %v3961
        %v3963 = vpop.f32.mrf.mxu0
        %v3964 = vadd.f32 %v3875, %v3963
        %3965 = vmatmul.bf16.gmra.mxu0 %v1117
        %v3966 = vpop.f32.mrf.mxu0
        %v3967 = vadd.f32 %v3878, %v3966
        %v3968 = vpop.f32.mrf.mxu0
        %v3969 = vadd.f32 %v3880, %v3968
        %3970 = vmatmul.bf16.gmra.mxu0 %v1124
        %v3971 = vpop.f32.mrf.mxu0
        %v3972 = vadd.f32 %v3883, %v3971
        %v3973 = vpop.f32.mrf.mxu0
        %v3974 = vadd.f32 %v3885, %v3973
        %3975 = vmatmul.bf16.gmra.mxu0 %v1131
        %v3976 = vpop.f32.mrf.mxu0
        %v3977 = vadd.f32 %v3888, %v3976
        %v3978 = vpop.f32.mrf.mxu0
        %v3979 = vadd.f32 %v3890, %v3978
        %3980 = vmatmul.bf16.gmra.mxu0 %v1138
        %v3981 = vpop.f32.mrf.mxu0
        %v3982 = vadd.f32 %v3893, %v3981
        %v3983 = vpop.f32.mrf.mxu0
        %v3984 = vadd.f32 %v3895, %v3983
        %3985 = vmatmul.bf16.gmra.mxu0 %v1145
        %v3986 = vpop.f32.mrf.mxu0
        %v3987 = vadd.f32 %v3898, %v3986
        %v3988 = vpop.f32.mrf.mxu0
        %v3989 = vadd.f32 %v3900, %v3988
        %3990 = vmatmul.bf16.gmra.mxu0 %v1152
        %v3991 = vpop.f32.mrf.mxu0
        %v3992 = vadd.f32 %v3903, %v3991
        %v3993 = vpop.f32.mrf.mxu0
        %v3994 = vadd.f32 %v3905, %v3993
        %3995 = vmatmul.bf16.gmra.mxu0 %v1159
        %v3996 = vpop.f32.mrf.mxu0
        %v3997 = vadd.f32 %v3908, %v3996
        %v3998 = vpop.f32.mrf.mxu0
        %v3999 = vadd.f32 %v3910, %v3998
        %4000 = vmatmul.bf16.gmra.mxu0 %v1166
        %v4001 = vpop.f32.mrf.mxu0
        %v4002 = vadd.f32 %v3913, %v4001
        %v4003 = vpop.f32.mrf.mxu0
        %v4004 = vadd.f32 %v3915, %v4003
        %4005 = vmatmul.bf16.gmra.mxu0 %v1173
        %v4006 = vpop.f32.mrf.mxu0
        %v4007 = vadd.f32 %v3918, %v4006
        %v4008 = vpop.f32.mrf.mxu0
        %v4009 = vadd.f32 %v3920, %v4008
        %4010 = vdwg.mxu0
        %4011 = vmatpush.bf16.msra.mxu0 %v2119
        %4012 = vmatpush.bf16.msra.mxu0 %v2115
        %4013 = vmatpush.bf16.msra.mxu0 %v2111
        %4014 = vmatpush.bf16.msra.mxu0 %v2107
        %4015 = vmatpush.bf16.msra.mxu0 %v2103
        %4016 = vmatpush.bf16.msra.mxu0 %v2099
        %4017 = vmatpush.bf16.msra.mxu0 %v2095
        %4018 = vmatpush.bf16.msra.mxu0 %v2091
        %4019 = vmatmul.bf16.gmra.mxu0 %v1069
        %v4020 = vpop.f32.mrf.mxu0
        %v4021 = vadd.f32 %v3932, %v4020
        %v4022 = vpop.f32.mrf.mxu0
        %v4023 = vadd.f32 %v3934, %v4022
        %4024 = vmatmul.bf16.gmra.mxu0 %v1076
        %v4025 = vpop.f32.mrf.mxu0
        %v4026 = vadd.f32 %v3937, %v4025
        %v4027 = vpop.f32.mrf.mxu0
        %v4028 = vadd.f32 %v3939, %v4027
        %4029 = vmatmul.bf16.gmra.mxu0 %v1083
        %v4030 = vpop.f32.mrf.mxu0
        %v4031 = vadd.f32 %v3942, %v4030
        %v4032 = vpop.f32.mrf.mxu0
        %v4033 = vadd.f32 %v3944, %v4032
        %4034 = vmatmul.bf16.gmra.mxu0 %v1090
        %v4035 = vpop.f32.mrf.mxu0
        %v4036 = vadd.f32 %v3947, %v4035
        %v4037 = vpop.f32.mrf.mxu0
        %v4038 = vadd.f32 %v3949, %v4037
        %4039 = vmatmul.bf16.gmra.mxu0 %v1097
        %v4040 = vpop.f32.mrf.mxu0
        %v4041 = vadd.f32 %v3952, %v4040
        %v4042 = vpop.f32.mrf.mxu0
        %v4043 = vadd.f32 %v3954, %v4042
        %4044 = vmatmul.bf16.gmra.mxu0 %v1104
        %v4045 = vpop.f32.mrf.mxu0
        %v4046 = vadd.f32 %v3957, %v4045
        %v4047 = vpop.f32.mrf.mxu0
        %v4048 = vadd.f32 %v3959, %v4047
        %4049 = vmatmul.bf16.gmra.mxu0 %v1111
        %v4050 = vpop.f32.mrf.mxu0
        %v4051 = vadd.f32 %v3962, %v4050
        %v4052 = vpop.f32.mrf.mxu0
        %v4053 = vadd.f32 %v3964, %v4052
        %4054 = vmatmul.bf16.gmra.mxu0 %v1118
        %v4055 = vpop.f32.mrf.mxu0
        %v4056 = vadd.f32 %v3967, %v4055
        %v4057 = vpop.f32.mrf.mxu0
        %v4058 = vadd.f32 %v3969, %v4057
        %4059 = vmatmul.bf16.gmra.mxu0 %v1125
        %v4060 = vpop.f32.mrf.mxu0
        %v4061 = vadd.f32 %v3972, %v4060
        %v4062 = vpop.f32.mrf.mxu0
        %v4063 = vadd.f32 %v3974, %v4062
        %4064 = vmatmul.bf16.gmra.mxu0 %v1132
        %v4065 = vpop.f32.mrf.mxu0
        %v4066 = vadd.f32 %v3977, %v4065
        %v4067 = vpop.f32.mrf.mxu0
        %v4068 = vadd.f32 %v3979, %v4067
        %4069 = vmatmul.bf16.gmra.mxu0 %v1139
        %v4070 = vpop.f32.mrf.mxu0
        %v4071 = vadd.f32 %v3982, %v4070
        %v4072 = vpop.f32.mrf.mxu0
        %v4073 = vadd.f32 %v3984, %v4072
        %4074 = vmatmul.bf16.gmra.mxu0 %v1146
        %v4075 = vpop.f32.mrf.mxu0
        %v4076 = vadd.f32 %v3987, %v4075
        %v4077 = vpop.f32.mrf.mxu0
        %v4078 = vadd.f32 %v3989, %v4077
        %4079 = vmatmul.bf16.gmra.mxu0 %v1153
        %v4080 = vpop.f32.mrf.mxu0
        %v4081 = vadd.f32 %v3992, %v4080
        %v4082 = vpop.f32.mrf.mxu0
        %v4083 = vadd.f32 %v3994, %v4082
        %4084 = vmatmul.bf16.gmra.mxu0 %v1160
        %v4085 = vpop.f32.mrf.mxu0
        %v4086 = vadd.f32 %v3997, %v4085
        %v4087 = vpop.f32.mrf.mxu0
        %v4088 = vadd.f32 %v3999, %v4087
        %4089 = vmatmul.bf16.gmra.mxu0 %v1167
        %v4090 = vpop.f32.mrf.mxu0
        %v4091 = vadd.f32 %v4002, %v4090
        %v4092 = vpop.f32.mrf.mxu0
        %v4093 = vadd.f32 %v4004, %v4092
        %4094 = vmatmul.bf16.gmra.mxu0 %v1174
        %v4095 = vpop.f32.mrf.mxu0
        %v4096 = vadd.f32 %v4007, %v4095
        %v4097 = vpop.f32.mrf.mxu0
        %v4098 = vadd.f32 %v4009, %v4097
        %4099 = vdwg.mxu0
        %4100 = vmatpush.bf16.msra.mxu0 %v2151
        %4101 = vmatpush.bf16.msra.mxu0 %v2147
        %4102 = vmatpush.bf16.msra.mxu0 %v2143
        %4103 = vmatpush.bf16.msra.mxu0 %v2139
        %4104 = vmatpush.bf16.msra.mxu0 %v2135
        %4105 = vmatpush.bf16.msra.mxu0 %v2131
        %4106 = vmatpush.bf16.msra.mxu0 %v2127
        %4107 = vmatpush.bf16.msra.mxu0 %v2123
        %4108 = vmatmul.bf16.gmra.mxu0 %v1070
        %v4109 = vpop.f32.mrf.mxu0
        %v4110 = vadd.f32 %v4021, %v4109
        %v4111 = vpop.f32.mrf.mxu0
        %v4112 = vadd.f32 %v4023, %v4111
        %4113 = vmatmul.bf16.gmra.mxu0 %v1077
        %v4114 = vpop.f32.mrf.mxu0
        %v4115 = vadd.f32 %v4026, %v4114
        %v4116 = vpop.f32.mrf.mxu0
        %v4117 = vadd.f32 %v4028, %v4116
        %4118 = vmatmul.bf16.gmra.mxu0 %v1084
        %v4119 = vpop.f32.mrf.mxu0
        %v4120 = vadd.f32 %v4031, %v4119
        %v4121 = vpop.f32.mrf.mxu0
        %v4122 = vadd.f32 %v4033, %v4121
        %4123 = vmatmul.bf16.gmra.mxu0 %v1091
        %v4124 = vpop.f32.mrf.mxu0
        %v4125 = vadd.f32 %v4036, %v4124
        %v4126 = vpop.f32.mrf.mxu0
        %v4127 = vadd.f32 %v4038, %v4126
        %4128 = vmatmul.bf16.gmra.mxu0 %v1098
        %v4129 = vpop.f32.mrf.mxu0
        %v4130 = vadd.f32 %v4041, %v4129
        %v4131 = vpop.f32.mrf.mxu0
        %v4132 = vadd.f32 %v4043, %v4131
        %4133 = vmatmul.bf16.gmra.mxu0 %v1105
        %v4134 = vpop.f32.mrf.mxu0
        %v4135 = vadd.f32 %v4046, %v4134
        %v4136 = vpop.f32.mrf.mxu0
        %v4137 = vadd.f32 %v4048, %v4136
        %4138 = vmatmul.bf16.gmra.mxu0 %v1112
        %v4139 = vpop.f32.mrf.mxu0
        %v4140 = vadd.f32 %v4051, %v4139
        %v4141 = vpop.f32.mrf.mxu0
        %v4142 = vadd.f32 %v4053, %v4141
        %4143 = vmatmul.bf16.gmra.mxu0 %v1119
        %v4144 = vpop.f32.mrf.mxu0
        %v4145 = vadd.f32 %v4056, %v4144
        %v4146 = vpop.f32.mrf.mxu0
        %v4147 = vadd.f32 %v4058, %v4146
        %4148 = vmatmul.bf16.gmra.mxu0 %v1126
        %v4149 = vpop.f32.mrf.mxu0
        %v4150 = vadd.f32 %v4061, %v4149
        %v4151 = vpop.f32.mrf.mxu0
        %v4152 = vadd.f32 %v4063, %v4151
        %4153 = vmatmul.bf16.gmra.mxu0 %v1133
        %v4154 = vpop.f32.mrf.mxu0
        %v4155 = vadd.f32 %v4066, %v4154
        %v4156 = vpop.f32.mrf.mxu0
        %v4157 = vadd.f32 %v4068, %v4156
        %4158 = vmatmul.bf16.gmra.mxu0 %v1140
        %v4159 = vpop.f32.mrf.mxu0
        %v4160 = vadd.f32 %v4071, %v4159
        %v4161 = vpop.f32.mrf.mxu0
        %v4162 = vadd.f32 %v4073, %v4161
        %4163 = vmatmul.bf16.gmra.mxu0 %v1147
        %v4164 = vpop.f32.mrf.mxu0
        %v4165 = vadd.f32 %v4076, %v4164
        %v4166 = vpop.f32.mrf.mxu0
        %v4167 = vadd.f32 %v4078, %v4166
        %4168 = vmatmul.bf16.gmra.mxu0 %v1154
        %v4169 = vpop.f32.mrf.mxu0
        %v4170 = vadd.f32 %v4081, %v4169
        %v4171 = vpop.f32.mrf.mxu0
        %v4172 = vadd.f32 %v4083, %v4171
        %4173 = vmatmul.bf16.gmra.mxu0 %v1161
        %v4174 = vpop.f32.mrf.mxu0
        %v4175 = vadd.f32 %v4086, %v4174
        %v4176 = vpop.f32.mrf.mxu0
        %v4177 = vadd.f32 %v4088, %v4176
        %4178 = vmatmul.bf16.gmra.mxu0 %v1168
        %v4179 = vpop.f32.mrf.mxu0
        %v4180 = vadd.f32 %v4091, %v4179
        %v4181 = vpop.f32.mrf.mxu0
        %v4182 = vadd.f32 %v4093, %v4181
        %4183 = vmatmul.bf16.gmra.mxu0 %v1175
        %v4184 = vpop.f32.mrf.mxu0
        %v4185 = vadd.f32 %v4096, %v4184
        %v4186 = vpop.f32.mrf.mxu0
        %v4187 = vadd.f32 %v4098, %v4186
        %4188 = vdwg.mxu0
        %4189 = vmatpush.bf16.msra.mxu0 %v2183
        %4190 = vmatpush.bf16.msra.mxu0 %v2179
        %4191 = vmatpush.bf16.msra.mxu0 %v2175
        %4192 = vmatpush.bf16.msra.mxu0 %v2171
        %4193 = vmatpush.bf16.msra.mxu0 %v2167
        %4194 = vmatpush.bf16.msra.mxu0 %v2163
        %4195 = vmatpush.bf16.msra.mxu0 %v2159
        %4196 = vmatpush.bf16.msra.mxu0 %v2155
        %4197 = vmatmul.bf16.gmra.mxu0 %v1071
        %v4198 = vpop.f32.mrf.mxu0
        %v4199 = vadd.f32 %v4110, %v4198
        %v4200 = vpop.f32.mrf.mxu0
        %v4201 = vadd.f32 %v4112, %v4200
        %4202 = vmatmul.bf16.gmra.mxu0 %v1078
        %v4203 = vpop.f32.mrf.mxu0
        %v4204 = vadd.f32 %v4115, %v4203
        %v4205 = vpop.f32.mrf.mxu0
        %v4206 = vadd.f32 %v4117, %v4205
        %4207 = vmatmul.bf16.gmra.mxu0 %v1085
        %v4208 = vpop.f32.mrf.mxu0
        %v4209 = vadd.f32 %v4120, %v4208
        %v4210 = vpop.f32.mrf.mxu0
        %v4211 = vadd.f32 %v4122, %v4210
        %4212 = vmatmul.bf16.gmra.mxu0 %v1092
        %v4213 = vpop.f32.mrf.mxu0
        %v4214 = vadd.f32 %v4125, %v4213
        %v4215 = vpop.f32.mrf.mxu0
        %v4216 = vadd.f32 %v4127, %v4215
        %4217 = vmatmul.bf16.gmra.mxu0 %v1099
        %v4218 = vpop.f32.mrf.mxu0
        %v4219 = vadd.f32 %v4130, %v4218
        %v4220 = vpop.f32.mrf.mxu0
        %v4221 = vadd.f32 %v4132, %v4220
        %4222 = vmatmul.bf16.gmra.mxu0 %v1106
        %v4223 = vpop.f32.mrf.mxu0
        %v4224 = vadd.f32 %v4135, %v4223
        %v4225 = vpop.f32.mrf.mxu0
        %v4226 = vadd.f32 %v4137, %v4225
        %4227 = vmatmul.bf16.gmra.mxu0 %v1113
        %v4228 = vpop.f32.mrf.mxu0
        %v4229 = vadd.f32 %v4140, %v4228
        %v4230 = vpop.f32.mrf.mxu0
        %v4231 = vadd.f32 %v4142, %v4230
        %4232 = vmatmul.bf16.gmra.mxu0 %v1120
        %v4233 = vpop.f32.mrf.mxu0
        %v4234 = vadd.f32 %v4145, %v4233
        %v4235 = vpop.f32.mrf.mxu0
        %v4236 = vadd.f32 %v4147, %v4235
        %4237 = vmatmul.bf16.gmra.mxu0 %v1127
        %v4238 = vpop.f32.mrf.mxu0
        %v4239 = vadd.f32 %v4150, %v4238
        %v4240 = vpop.f32.mrf.mxu0
        %v4241 = vadd.f32 %v4152, %v4240
        %4242 = vmatmul.bf16.gmra.mxu0 %v1134
        %v4243 = vpop.f32.mrf.mxu0
        %v4244 = vadd.f32 %v4155, %v4243
        %v4245 = vpop.f32.mrf.mxu0
        %v4246 = vadd.f32 %v4157, %v4245
        %4247 = vmatmul.bf16.gmra.mxu0 %v1141
        %v4248 = vpop.f32.mrf.mxu0
        %v4249 = vadd.f32 %v4160, %v4248
        %v4250 = vpop.f32.mrf.mxu0
        %v4251 = vadd.f32 %v4162, %v4250
        %4252 = vmatmul.bf16.gmra.mxu0 %v1148
        %v4253 = vpop.f32.mrf.mxu0
        %v4254 = vadd.f32 %v4165, %v4253
        %v4255 = vpop.f32.mrf.mxu0
        %v4256 = vadd.f32 %v4167, %v4255
        %4257 = vmatmul.bf16.gmra.mxu0 %v1155
        %v4258 = vpop.f32.mrf.mxu0
        %v4259 = vadd.f32 %v4170, %v4258
        %v4260 = vpop.f32.mrf.mxu0
        %v4261 = vadd.f32 %v4172, %v4260
        %4262 = vmatmul.bf16.gmra.mxu0 %v1162
        %v4263 = vpop.f32.mrf.mxu0
        %v4264 = vadd.f32 %v4175, %v4263
        %v4265 = vpop.f32.mrf.mxu0
        %v4266 = vadd.f32 %v4177, %v4265
        %4267 = vmatmul.bf16.gmra.mxu0 %v1169
        %v4268 = vpop.f32.mrf.mxu0
        %v4269 = vadd.f32 %v4180, %v4268
        %v4270 = vpop.f32.mrf.mxu0
        %v4271 = vadd.f32 %v4182, %v4270
        %4272 = vmatmul.bf16.gmra.mxu0 %v1176
        %v4273 = vpop.f32.mrf.mxu0
        %v4274 = vadd.f32 %v4185, %v4273
        %v4275 = vpop.f32.mrf.mxu0
        %v4276 = vadd.f32 %v4187, %v4275
        %4277 = vdwg.mxu0
        %4278 = vmatpush.bf16.msra.mxu0 %v1992
        %4279 = vmatpush.bf16.msra.mxu0 %v1988
        %4280 = vmatpush.bf16.msra.mxu0 %v1984
        %4281 = vmatpush.bf16.msra.mxu0 %v1980
        %4282 = vmatpush.bf16.msra.mxu0 %v1976
        %4283 = vmatpush.bf16.msra.mxu0 %v1972
        %4284 = vmatpush.bf16.msra.mxu0 %v1968
        %4285 = vmatpush.bf16.msra.mxu0 %v1964
        %4286 = vmatmul.bf16.gmra.mxu0 %v1065
        %v4287 = vpop.f32.mrf.mxu0
        %v4288 = vadd.f32 %v708, %v4287
        %v4289 = vpop.f32.mrf.mxu0
        %v4290 = vadd.f32 %v708, %v4289
        %4291 = vmatmul.bf16.gmra.mxu0 %v1072
        %v4292 = vpop.f32.mrf.mxu0
        %v4293 = vadd.f32 %v708, %v4292
        %v4294 = vpop.f32.mrf.mxu0
        %v4295 = vadd.f32 %v708, %v4294
        %4296 = vmatmul.bf16.gmra.mxu0 %v1079
        %v4297 = vpop.f32.mrf.mxu0
        %v4298 = vadd.f32 %v708, %v4297
        %v4299 = vpop.f32.mrf.mxu0
        %v4300 = vadd.f32 %v708, %v4299
        %4301 = vmatmul.bf16.gmra.mxu0 %v1086
        %v4302 = vpop.f32.mrf.mxu0
        %v4303 = vadd.f32 %v708, %v4302
        %v4304 = vpop.f32.mrf.mxu0
        %v4305 = vadd.f32 %v708, %v4304
        %4306 = vmatmul.bf16.gmra.mxu0 %v1093
        %v4307 = vpop.f32.mrf.mxu0
        %v4308 = vadd.f32 %v708, %v4307
        %v4309 = vpop.f32.mrf.mxu0
        %v4310 = vadd.f32 %v708, %v4309
        %4311 = vmatmul.bf16.gmra.mxu0 %v1100
        %v4312 = vpop.f32.mrf.mxu0
        %v4313 = vadd.f32 %v708, %v4312
        %v4314 = vpop.f32.mrf.mxu0
        %v4315 = vadd.f32 %v708, %v4314
        %4316 = vmatmul.bf16.gmra.mxu0 %v1107
        %v4317 = vpop.f32.mrf.mxu0
        %v4318 = vadd.f32 %v708, %v4317
        %v4319 = vpop.f32.mrf.mxu0
        %v4320 = vadd.f32 %v708, %v4319
        %4321 = vmatmul.bf16.gmra.mxu0 %v1114
        %v4322 = vpop.f32.mrf.mxu0
        %v4323 = vadd.f32 %v708, %v4322
        %v4324 = vpop.f32.mrf.mxu0
        %v4325 = vadd.f32 %v708, %v4324
        %4326 = vmatmul.bf16.gmra.mxu0 %v1121
        %v4327 = vpop.f32.mrf.mxu0
        %v4328 = vadd.f32 %v708, %v4327
        %v4329 = vpop.f32.mrf.mxu0
        %v4330 = vadd.f32 %v708, %v4329
        %4331 = vmatmul.bf16.gmra.mxu0 %v1128
        %v4332 = vpop.f32.mrf.mxu0
        %v4333 = vadd.f32 %v708, %v4332
        %v4334 = vpop.f32.mrf.mxu0
        %v4335 = vadd.f32 %v708, %v4334
        %4336 = vmatmul.bf16.gmra.mxu0 %v1135
        %v4337 = vpop.f32.mrf.mxu0
        %v4338 = vadd.f32 %v708, %v4337
        %v4339 = vpop.f32.mrf.mxu0
        %v4340 = vadd.f32 %v708, %v4339
        %4341 = vmatmul.bf16.gmra.mxu0 %v1142
        %v4342 = vpop.f32.mrf.mxu0
        %v4343 = vadd.f32 %v708, %v4342
        %v4344 = vpop.f32.mrf.mxu0
        %v4345 = vadd.f32 %v708, %v4344
        %4346 = vmatmul.bf16.gmra.mxu0 %v1149
        %v4347 = vpop.f32.mrf.mxu0
        %v4348 = vadd.f32 %v708, %v4347
        %v4349 = vpop.f32.mrf.mxu0
        %v4350 = vadd.f32 %v708, %v4349
        %4351 = vmatmul.bf16.gmra.mxu0 %v1156
        %v4352 = vpop.f32.mrf.mxu0
        %v4353 = vadd.f32 %v708, %v4352
        %v4354 = vpop.f32.mrf.mxu0
        %v4355 = vadd.f32 %v708, %v4354
        %4356 = vmatmul.bf16.gmra.mxu0 %v1163
        %v4357 = vpop.f32.mrf.mxu0
        %v4358 = vadd.f32 %v708, %v4357
        %v4359 = vpop.f32.mrf.mxu0
        %v4360 = vadd.f32 %v708, %v4359
        %4361 = vmatmul.bf16.gmra.mxu0 %v1170
        %v4362 = vpop.f32.mrf.mxu0
        %v4363 = vadd.f32 %v708, %v4362
        %v4364 = vpop.f32.mrf.mxu0
        %v4365 = vadd.f32 %v708, %v4364
        %4366 = vdwg.mxu0
        %4367 = vmatpush.bf16.msra.mxu0 %v2024
        %4368 = vmatpush.bf16.msra.mxu0 %v2020
        %4369 = vmatpush.bf16.msra.mxu0 %v2016
        %4370 = vmatpush.bf16.msra.mxu0 %v2012
        %4371 = vmatpush.bf16.msra.mxu0 %v2008
        %4372 = vmatpush.bf16.msra.mxu0 %v2004
        %4373 = vmatpush.bf16.msra.mxu0 %v2000
        %4374 = vmatpush.bf16.msra.mxu0 %v1996
        %4375 = vmatmul.bf16.gmra.mxu0 %v1066
        %v4376 = vpop.f32.mrf.mxu0
        %v4377 = vadd.f32 %v4288, %v4376
        %v4378 = vpop.f32.mrf.mxu0
        %v4379 = vadd.f32 %v4290, %v4378
        %4380 = vmatmul.bf16.gmra.mxu0 %v1073
        %v4381 = vpop.f32.mrf.mxu0
        %v4382 = vadd.f32 %v4293, %v4381
        %v4383 = vpop.f32.mrf.mxu0
        %v4384 = vadd.f32 %v4295, %v4383
        %4385 = vmatmul.bf16.gmra.mxu0 %v1080
        %v4386 = vpop.f32.mrf.mxu0
        %v4387 = vadd.f32 %v4298, %v4386
        %v4388 = vpop.f32.mrf.mxu0
        %v4389 = vadd.f32 %v4300, %v4388
        %4390 = vmatmul.bf16.gmra.mxu0 %v1087
        %v4391 = vpop.f32.mrf.mxu0
        %v4392 = vadd.f32 %v4303, %v4391
        %v4393 = vpop.f32.mrf.mxu0
        %v4394 = vadd.f32 %v4305, %v4393
        %4395 = vmatmul.bf16.gmra.mxu0 %v1094
        %v4396 = vpop.f32.mrf.mxu0
        %v4397 = vadd.f32 %v4308, %v4396
        %v4398 = vpop.f32.mrf.mxu0
        %v4399 = vadd.f32 %v4310, %v4398
        %4400 = vmatmul.bf16.gmra.mxu0 %v1101
        %v4401 = vpop.f32.mrf.mxu0
        %v4402 = vadd.f32 %v4313, %v4401
        %v4403 = vpop.f32.mrf.mxu0
        %v4404 = vadd.f32 %v4315, %v4403
        %4405 = vmatmul.bf16.gmra.mxu0 %v1108
        %v4406 = vpop.f32.mrf.mxu0
        %v4407 = vadd.f32 %v4318, %v4406
        %v4408 = vpop.f32.mrf.mxu0
        %v4409 = vadd.f32 %v4320, %v4408
        %4410 = vmatmul.bf16.gmra.mxu0 %v1115
        %v4411 = vpop.f32.mrf.mxu0
        %v4412 = vadd.f32 %v4323, %v4411
        %v4413 = vpop.f32.mrf.mxu0
        %v4414 = vadd.f32 %v4325, %v4413
        %4415 = vmatmul.bf16.gmra.mxu0 %v1122
        %v4416 = vpop.f32.mrf.mxu0
        %v4417 = vadd.f32 %v4328, %v4416
        %v4418 = vpop.f32.mrf.mxu0
        %v4419 = vadd.f32 %v4330, %v4418
        %4420 = vmatmul.bf16.gmra.mxu0 %v1129
        %v4421 = vpop.f32.mrf.mxu0
        %v4422 = vadd.f32 %v4333, %v4421
        %v4423 = vpop.f32.mrf.mxu0
        %v4424 = vadd.f32 %v4335, %v4423
        %4425 = vmatmul.bf16.gmra.mxu0 %v1136
        %v4426 = vpop.f32.mrf.mxu0
        %v4427 = vadd.f32 %v4338, %v4426
        %v4428 = vpop.f32.mrf.mxu0
        %v4429 = vadd.f32 %v4340, %v4428
        %4430 = vmatmul.bf16.gmra.mxu0 %v1143
        %v4431 = vpop.f32.mrf.mxu0
        %v4432 = vadd.f32 %v4343, %v4431
        %v4433 = vpop.f32.mrf.mxu0
        %v4434 = vadd.f32 %v4345, %v4433
        %4435 = vmatmul.bf16.gmra.mxu0 %v1150
        %v4436 = vpop.f32.mrf.mxu0
        %v4437 = vadd.f32 %v4348, %v4436
        %v4438 = vpop.f32.mrf.mxu0
        %v4439 = vadd.f32 %v4350, %v4438
        %4440 = vmatmul.bf16.gmra.mxu0 %v1157
        %v4441 = vpop.f32.mrf.mxu0
        %v4442 = vadd.f32 %v4353, %v4441
        %v4443 = vpop.f32.mrf.mxu0
        %v4444 = vadd.f32 %v4355, %v4443
        %4445 = vmatmul.bf16.gmra.mxu0 %v1164
        %v4446 = vpop.f32.mrf.mxu0
        %v4447 = vadd.f32 %v4358, %v4446
        %v4448 = vpop.f32.mrf.mxu0
        %v4449 = vadd.f32 %v4360, %v4448
        %4450 = vmatmul.bf16.gmra.mxu0 %v1171
        %v4451 = vpop.f32.mrf.mxu0
        %v4452 = vadd.f32 %v4363, %v4451
        %v4453 = vpop.f32.mrf.mxu0
        %v4454 = vadd.f32 %v4365, %v4453
        %4455 = vdwg.mxu0
        %4456 = vmatpush.bf16.msra.mxu0 %v2056
        %4457 = vmatpush.bf16.msra.mxu0 %v2052
        %4458 = vmatpush.bf16.msra.mxu0 %v2048
        %4459 = vmatpush.bf16.msra.mxu0 %v2044
        %4460 = vmatpush.bf16.msra.mxu0 %v2040
        %4461 = vmatpush.bf16.msra.mxu0 %v2036
        %4462 = vmatpush.bf16.msra.mxu0 %v2032
        %4463 = vmatpush.bf16.msra.mxu0 %v2028
        %4464 = vmatmul.bf16.gmra.mxu0 %v1067
        %v4465 = vpop.f32.mrf.mxu0
        %v4466 = vadd.f32 %v4377, %v4465
        %v4467 = vpop.f32.mrf.mxu0
        %v4468 = vadd.f32 %v4379, %v4467
        %4469 = vmatmul.bf16.gmra.mxu0 %v1074
        %v4470 = vpop.f32.mrf.mxu0
        %v4471 = vadd.f32 %v4382, %v4470
        %v4472 = vpop.f32.mrf.mxu0
        %v4473 = vadd.f32 %v4384, %v4472
        %4474 = vmatmul.bf16.gmra.mxu0 %v1081
        %v4475 = vpop.f32.mrf.mxu0
        %v4476 = vadd.f32 %v4387, %v4475
        %v4477 = vpop.f32.mrf.mxu0
        %v4478 = vadd.f32 %v4389, %v4477
        %4479 = vmatmul.bf16.gmra.mxu0 %v1088
        %v4480 = vpop.f32.mrf.mxu0
        %v4481 = vadd.f32 %v4392, %v4480
        %v4482 = vpop.f32.mrf.mxu0
        %v4483 = vadd.f32 %v4394, %v4482
        %4484 = vmatmul.bf16.gmra.mxu0 %v1095
        %v4485 = vpop.f32.mrf.mxu0
        %v4486 = vadd.f32 %v4397, %v4485
        %v4487 = vpop.f32.mrf.mxu0
        %v4488 = vadd.f32 %v4399, %v4487
        %4489 = vmatmul.bf16.gmra.mxu0 %v1102
        %v4490 = vpop.f32.mrf.mxu0
        %v4491 = vadd.f32 %v4402, %v4490
        %v4492 = vpop.f32.mrf.mxu0
        %v4493 = vadd.f32 %v4404, %v4492
        %4494 = vmatmul.bf16.gmra.mxu0 %v1109
        %v4495 = vpop.f32.mrf.mxu0
        %v4496 = vadd.f32 %v4407, %v4495
        %v4497 = vpop.f32.mrf.mxu0
        %v4498 = vadd.f32 %v4409, %v4497
        %4499 = vmatmul.bf16.gmra.mxu0 %v1116
        %v4500 = vpop.f32.mrf.mxu0
        %v4501 = vadd.f32 %v4412, %v4500
        %v4502 = vpop.f32.mrf.mxu0
        %v4503 = vadd.f32 %v4414, %v4502
        %4504 = vmatmul.bf16.gmra.mxu0 %v1123
        %v4505 = vpop.f32.mrf.mxu0
        %v4506 = vadd.f32 %v4417, %v4505
        %v4507 = vpop.f32.mrf.mxu0
        %v4508 = vadd.f32 %v4419, %v4507
        %4509 = vmatmul.bf16.gmra.mxu0 %v1130
        %v4510 = vpop.f32.mrf.mxu0
        %v4511 = vadd.f32 %v4422, %v4510
        %v4512 = vpop.f32.mrf.mxu0
        %v4513 = vadd.f32 %v4424, %v4512
        %4514 = vmatmul.bf16.gmra.mxu0 %v1137
        %v4515 = vpop.f32.mrf.mxu0
        %v4516 = vadd.f32 %v4427, %v4515
        %v4517 = vpop.f32.mrf.mxu0
        %v4518 = vadd.f32 %v4429, %v4517
        %4519 = vmatmul.bf16.gmra.mxu0 %v1144
        %v4520 = vpop.f32.mrf.mxu0
        %v4521 = vadd.f32 %v4432, %v4520
        %v4522 = vpop.f32.mrf.mxu0
        %v4523 = vadd.f32 %v4434, %v4522
        %4524 = vmatmul.bf16.gmra.mxu0 %v1151
        %v4525 = vpop.f32.mrf.mxu0
        %v4526 = vadd.f32 %v4437, %v4525
        %v4527 = vpop.f32.mrf.mxu0
        %v4528 = vadd.f32 %v4439, %v4527
        %4529 = vmatmul.bf16.gmra.mxu0 %v1158
        %v4530 = vpop.f32.mrf.mxu0
        %v4531 = vadd.f32 %v4442, %v4530
        %v4532 = vpop.f32.mrf.mxu0
        %v4533 = vadd.f32 %v4444, %v4532
        %4534 = vmatmul.bf16.gmra.mxu0 %v1165
        %v4535 = vpop.f32.mrf.mxu0
        %v4536 = vadd.f32 %v4447, %v4535
        %v4537 = vpop.f32.mrf.mxu0
        %v4538 = vadd.f32 %v4449, %v4537
        %4539 = vmatmul.bf16.gmra.mxu0 %v1172
        %v4540 = vpop.f32.mrf.mxu0
        %v4541 = vadd.f32 %v4452, %v4540
        %v4542 = vpop.f32.mrf.mxu0
        %v4543 = vadd.f32 %v4454, %v4542
        %4544 = vdwg.mxu0
        %4545 = vmatpush.bf16.msra.mxu0 %v2088
        %4546 = vmatpush.bf16.msra.mxu0 %v2084
        %4547 = vmatpush.bf16.msra.mxu0 %v2080
        %4548 = vmatpush.bf16.msra.mxu0 %v2076
        %4549 = vmatpush.bf16.msra.mxu0 %v2072
        %4550 = vmatpush.bf16.msra.mxu0 %v2068
        %4551 = vmatpush.bf16.msra.mxu0 %v2064
        %4552 = vmatpush.bf16.msra.mxu0 %v2060
        %4553 = vmatmul.bf16.gmra.mxu0 %v1068
        %v4554 = vpop.f32.mrf.mxu0
        %v4555 = vadd.f32 %v4466, %v4554
        %v4556 = vpop.f32.mrf.mxu0
        %v4557 = vadd.f32 %v4468, %v4556
        %4558 = vmatmul.bf16.gmra.mxu0 %v1075
        %v4559 = vpop.f32.mrf.mxu0
        %v4560 = vadd.f32 %v4471, %v4559
        %v4561 = vpop.f32.mrf.mxu0
        %v4562 = vadd.f32 %v4473, %v4561
        %4563 = vmatmul.bf16.gmra.mxu0 %v1082
        %v4564 = vpop.f32.mrf.mxu0
        %v4565 = vadd.f32 %v4476, %v4564
        %v4566 = vpop.f32.mrf.mxu0
        %v4567 = vadd.f32 %v4478, %v4566
        %4568 = vmatmul.bf16.gmra.mxu0 %v1089
        %v4569 = vpop.f32.mrf.mxu0
        %v4570 = vadd.f32 %v4481, %v4569
        %v4571 = vpop.f32.mrf.mxu0
        %v4572 = vadd.f32 %v4483, %v4571
        %4573 = vmatmul.bf16.gmra.mxu0 %v1096
        %v4574 = vpop.f32.mrf.mxu0
        %v4575 = vadd.f32 %v4486, %v4574
        %v4576 = vpop.f32.mrf.mxu0
        %v4577 = vadd.f32 %v4488, %v4576
        %4578 = vmatmul.bf16.gmra.mxu0 %v1103
        %v4579 = vpop.f32.mrf.mxu0
        %v4580 = vadd.f32 %v4491, %v4579
        %v4581 = vpop.f32.mrf.mxu0
        %v4582 = vadd.f32 %v4493, %v4581
        %4583 = vmatmul.bf16.gmra.mxu0 %v1110
        %v4584 = vpop.f32.mrf.mxu0
        %v4585 = vadd.f32 %v4496, %v4584
        %v4586 = vpop.f32.mrf.mxu0
        %v4587 = vadd.f32 %v4498, %v4586
        %4588 = vmatmul.bf16.gmra.mxu0 %v1117
        %v4589 = vpop.f32.mrf.mxu0
        %v4590 = vadd.f32 %v4501, %v4589
        %v4591 = vpop.f32.mrf.mxu0
        %v4592 = vadd.f32 %v4503, %v4591
        %4593 = vmatmul.bf16.gmra.mxu0 %v1124
        %v4594 = vpop.f32.mrf.mxu0
        %v4595 = vadd.f32 %v4506, %v4594
        %v4596 = vpop.f32.mrf.mxu0
        %v4597 = vadd.f32 %v4508, %v4596
        %4598 = vmatmul.bf16.gmra.mxu0 %v1131
        %v4599 = vpop.f32.mrf.mxu0
        %v4600 = vadd.f32 %v4511, %v4599
        %v4601 = vpop.f32.mrf.mxu0
        %v4602 = vadd.f32 %v4513, %v4601
        %4603 = vmatmul.bf16.gmra.mxu0 %v1138
        %v4604 = vpop.f32.mrf.mxu0
        %v4605 = vadd.f32 %v4516, %v4604
        %v4606 = vpop.f32.mrf.mxu0
        %v4607 = vadd.f32 %v4518, %v4606
        %4608 = vmatmul.bf16.gmra.mxu0 %v1145
        %v4609 = vpop.f32.mrf.mxu0
        %v4610 = vadd.f32 %v4521, %v4609
        %v4611 = vpop.f32.mrf.mxu0
        %v4612 = vadd.f32 %v4523, %v4611
        %4613 = vmatmul.bf16.gmra.mxu0 %v1152
        %v4614 = vpop.f32.mrf.mxu0
        %v4615 = vadd.f32 %v4526, %v4614
        %v4616 = vpop.f32.mrf.mxu0
        %v4617 = vadd.f32 %v4528, %v4616
        %4618 = vmatmul.bf16.gmra.mxu0 %v1159
        %v4619 = vpop.f32.mrf.mxu0
        %v4620 = vadd.f32 %v4531, %v4619
        %v4621 = vpop.f32.mrf.mxu0
        %v4622 = vadd.f32 %v4533, %v4621
        %4623 = vmatmul.bf16.gmra.mxu0 %v1166
        %v4624 = vpop.f32.mrf.mxu0
        %v4625 = vadd.f32 %v4536, %v4624
        %v4626 = vpop.f32.mrf.mxu0
        %v4627 = vadd.f32 %v4538, %v4626
        %4628 = vmatmul.bf16.gmra.mxu0 %v1173
        %v4629 = vpop.f32.mrf.mxu0
        %v4630 = vadd.f32 %v4541, %v4629
        %v4631 = vpop.f32.mrf.mxu0
        %v4632 = vadd.f32 %v4543, %v4631
        %4633 = vdwg.mxu0
        %4634 = vmatpush.bf16.msra.mxu0 %v2120
        %4635 = vmatpush.bf16.msra.mxu0 %v2116
        %4636 = vmatpush.bf16.msra.mxu0 %v2112
        %4637 = vmatpush.bf16.msra.mxu0 %v2108
        %4638 = vmatpush.bf16.msra.mxu0 %v2104
        %4639 = vmatpush.bf16.msra.mxu0 %v2100
        %4640 = vmatpush.bf16.msra.mxu0 %v2096
        %4641 = vmatpush.bf16.msra.mxu0 %v2092
        %4642 = vmatmul.bf16.gmra.mxu0 %v1069
        %v4643 = vpop.f32.mrf.mxu0
        %v4644 = vadd.f32 %v4555, %v4643
        %v4645 = vpop.f32.mrf.mxu0
        %v4646 = vadd.f32 %v4557, %v4645
        %4647 = vmatmul.bf16.gmra.mxu0 %v1076
        %v4648 = vpop.f32.mrf.mxu0
        %v4649 = vadd.f32 %v4560, %v4648
        %v4650 = vpop.f32.mrf.mxu0
        %v4651 = vadd.f32 %v4562, %v4650
        %4652 = vmatmul.bf16.gmra.mxu0 %v1083
        %v4653 = vpop.f32.mrf.mxu0
        %v4654 = vadd.f32 %v4565, %v4653
        %v4655 = vpop.f32.mrf.mxu0
        %v4656 = vadd.f32 %v4567, %v4655
        %4657 = vmatmul.bf16.gmra.mxu0 %v1090
        %v4658 = vpop.f32.mrf.mxu0
        %v4659 = vadd.f32 %v4570, %v4658
        %v4660 = vpop.f32.mrf.mxu0
        %v4661 = vadd.f32 %v4572, %v4660
        %4662 = vmatmul.bf16.gmra.mxu0 %v1097
        %v4663 = vpop.f32.mrf.mxu0
        %v4664 = vadd.f32 %v4575, %v4663
        %v4665 = vpop.f32.mrf.mxu0
        %v4666 = vadd.f32 %v4577, %v4665
        %4667 = vmatmul.bf16.gmra.mxu0 %v1104
        %v4668 = vpop.f32.mrf.mxu0
        %v4669 = vadd.f32 %v4580, %v4668
        %v4670 = vpop.f32.mrf.mxu0
        %v4671 = vadd.f32 %v4582, %v4670
        %4672 = vmatmul.bf16.gmra.mxu0 %v1111
        %v4673 = vpop.f32.mrf.mxu0
        %v4674 = vadd.f32 %v4585, %v4673
        %v4675 = vpop.f32.mrf.mxu0
        %v4676 = vadd.f32 %v4587, %v4675
        %4677 = vmatmul.bf16.gmra.mxu0 %v1118
        %v4678 = vpop.f32.mrf.mxu0
        %v4679 = vadd.f32 %v4590, %v4678
        %v4680 = vpop.f32.mrf.mxu0
        %v4681 = vadd.f32 %v4592, %v4680
        %4682 = vmatmul.bf16.gmra.mxu0 %v1125
        %v4683 = vpop.f32.mrf.mxu0
        %v4684 = vadd.f32 %v4595, %v4683
        %v4685 = vpop.f32.mrf.mxu0
        %v4686 = vadd.f32 %v4597, %v4685
        %4687 = vmatmul.bf16.gmra.mxu0 %v1132
        %v4688 = vpop.f32.mrf.mxu0
        %v4689 = vadd.f32 %v4600, %v4688
        %v4690 = vpop.f32.mrf.mxu0
        %v4691 = vadd.f32 %v4602, %v4690
        %4692 = vmatmul.bf16.gmra.mxu0 %v1139
        %v4693 = vpop.f32.mrf.mxu0
        %v4694 = vadd.f32 %v4605, %v4693
        %v4695 = vpop.f32.mrf.mxu0
        %v4696 = vadd.f32 %v4607, %v4695
        %4697 = vmatmul.bf16.gmra.mxu0 %v1146
        %v4698 = vpop.f32.mrf.mxu0
        %v4699 = vadd.f32 %v4610, %v4698
        %v4700 = vpop.f32.mrf.mxu0
        %v4701 = vadd.f32 %v4612, %v4700
        %4702 = vmatmul.bf16.gmra.mxu0 %v1153
        %v4703 = vpop.f32.mrf.mxu0
        %v4704 = vadd.f32 %v4615, %v4703
        %v4705 = vpop.f32.mrf.mxu0
        %v4706 = vadd.f32 %v4617, %v4705
        %4707 = vmatmul.bf16.gmra.mxu0 %v1160
        %v4708 = vpop.f32.mrf.mxu0
        %v4709 = vadd.f32 %v4620, %v4708
        %v4710 = vpop.f32.mrf.mxu0
        %v4711 = vadd.f32 %v4622, %v4710
        %4712 = vmatmul.bf16.gmra.mxu0 %v1167
        %v4713 = vpop.f32.mrf.mxu0
        %v4714 = vadd.f32 %v4625, %v4713
        %v4715 = vpop.f32.mrf.mxu0
        %v4716 = vadd.f32 %v4627, %v4715
        %4717 = vmatmul.bf16.gmra.mxu0 %v1174
        %v4718 = vpop.f32.mrf.mxu0
        %v4719 = vadd.f32 %v4630, %v4718
        %v4720 = vpop.f32.mrf.mxu0
        %v4721 = vadd.f32 %v4632, %v4720
        %4722 = vdwg.mxu0
        %4723 = vmatpush.bf16.msra.mxu0 %v2152
        %4724 = vmatpush.bf16.msra.mxu0 %v2148
        %4725 = vmatpush.bf16.msra.mxu0 %v2144
        %4726 = vmatpush.bf16.msra.mxu0 %v2140
        %4727 = vmatpush.bf16.msra.mxu0 %v2136
        %4728 = vmatpush.bf16.msra.mxu0 %v2132
        %4729 = vmatpush.bf16.msra.mxu0 %v2128
        %4730 = vmatpush.bf16.msra.mxu0 %v2124
        %4731 = vmatmul.bf16.gmra.mxu0 %v1070
        %v4732 = vpop.f32.mrf.mxu0
        %v4733 = vadd.f32 %v4644, %v4732
        %v4734 = vpop.f32.mrf.mxu0
        %v4735 = vadd.f32 %v4646, %v4734
        %4736 = vmatmul.bf16.gmra.mxu0 %v1077
        %v4737 = vpop.f32.mrf.mxu0
        %v4738 = vadd.f32 %v4649, %v4737
        %v4739 = vpop.f32.mrf.mxu0
        %v4740 = vadd.f32 %v4651, %v4739
        %4741 = vmatmul.bf16.gmra.mxu0 %v1084
        %v4742 = vpop.f32.mrf.mxu0
        %v4743 = vadd.f32 %v4654, %v4742
        %v4744 = vpop.f32.mrf.mxu0
        %v4745 = vadd.f32 %v4656, %v4744
        %4746 = vmatmul.bf16.gmra.mxu0 %v1091
        %v4747 = vpop.f32.mrf.mxu0
        %v4748 = vadd.f32 %v4659, %v4747
        %v4749 = vpop.f32.mrf.mxu0
        %v4750 = vadd.f32 %v4661, %v4749
        %4751 = vmatmul.bf16.gmra.mxu0 %v1098
        %v4752 = vpop.f32.mrf.mxu0
        %v4753 = vadd.f32 %v4664, %v4752
        %v4754 = vpop.f32.mrf.mxu0
        %v4755 = vadd.f32 %v4666, %v4754
        %4756 = vmatmul.bf16.gmra.mxu0 %v1105
        %v4757 = vpop.f32.mrf.mxu0
        %v4758 = vadd.f32 %v4669, %v4757
        %v4759 = vpop.f32.mrf.mxu0
        %v4760 = vadd.f32 %v4671, %v4759
        %4761 = vmatmul.bf16.gmra.mxu0 %v1112
        %v4762 = vpop.f32.mrf.mxu0
        %v4763 = vadd.f32 %v4674, %v4762
        %v4764 = vpop.f32.mrf.mxu0
        %v4765 = vadd.f32 %v4676, %v4764
        %4766 = vmatmul.bf16.gmra.mxu0 %v1119
        %v4767 = vpop.f32.mrf.mxu0
        %v4768 = vadd.f32 %v4679, %v4767
        %v4769 = vpop.f32.mrf.mxu0
        %v4770 = vadd.f32 %v4681, %v4769
        %4771 = vmatmul.bf16.gmra.mxu0 %v1126
        %v4772 = vpop.f32.mrf.mxu0
        %v4773 = vadd.f32 %v4684, %v4772
        %v4774 = vpop.f32.mrf.mxu0
        %v4775 = vadd.f32 %v4686, %v4774
        %4776 = vmatmul.bf16.gmra.mxu0 %v1133
        %v4777 = vpop.f32.mrf.mxu0
        %v4778 = vadd.f32 %v4689, %v4777
        %v4779 = vpop.f32.mrf.mxu0
        %v4780 = vadd.f32 %v4691, %v4779
        %4781 = vmatmul.bf16.gmra.mxu0 %v1140
        %v4782 = vpop.f32.mrf.mxu0
        %v4783 = vadd.f32 %v4694, %v4782
        %v4784 = vpop.f32.mrf.mxu0
        %v4785 = vadd.f32 %v4696, %v4784
        %4786 = vmatmul.bf16.gmra.mxu0 %v1147
        %v4787 = vpop.f32.mrf.mxu0
        %v4788 = vadd.f32 %v4699, %v4787
        %v4789 = vpop.f32.mrf.mxu0
        %v4790 = vadd.f32 %v4701, %v4789
        %4791 = vmatmul.bf16.gmra.mxu0 %v1154
        %v4792 = vpop.f32.mrf.mxu0
        %v4793 = vadd.f32 %v4704, %v4792
        %v4794 = vpop.f32.mrf.mxu0
        %v4795 = vadd.f32 %v4706, %v4794
        %4796 = vmatmul.bf16.gmra.mxu0 %v1161
        %v4797 = vpop.f32.mrf.mxu0
        %v4798 = vadd.f32 %v4709, %v4797
        %v4799 = vpop.f32.mrf.mxu0
        %v4800 = vadd.f32 %v4711, %v4799
        %4801 = vmatmul.bf16.gmra.mxu0 %v1168
        %v4802 = vpop.f32.mrf.mxu0
        %v4803 = vadd.f32 %v4714, %v4802
        %v4804 = vpop.f32.mrf.mxu0
        %v4805 = vadd.f32 %v4716, %v4804
        %4806 = vmatmul.bf16.gmra.mxu0 %v1175
        %v4807 = vpop.f32.mrf.mxu0
        %v4808 = vadd.f32 %v4719, %v4807
        %v4809 = vpop.f32.mrf.mxu0
        %v4810 = vadd.f32 %v4721, %v4809
        %4811 = vdwg.mxu0
        %4812 = vmatpush.bf16.msra.mxu0 %v2184
        %4813 = vmatpush.bf16.msra.mxu0 %v2180
        %4814 = vmatpush.bf16.msra.mxu0 %v2176
        %4815 = vmatpush.bf16.msra.mxu0 %v2172
        %4816 = vmatpush.bf16.msra.mxu0 %v2168
        %4817 = vmatpush.bf16.msra.mxu0 %v2164
        %4818 = vmatpush.bf16.msra.mxu0 %v2160
        %4819 = vmatpush.bf16.msra.mxu0 %v2156
        %4820 = vmatmul.bf16.gmra.mxu0 %v1071
        %v4821 = vpop.f32.mrf.mxu0
        %v4822 = vadd.f32 %v4733, %v4821
        %v4823 = vpop.f32.mrf.mxu0
        %v4824 = vadd.f32 %v4735, %v4823
        %4825 = vmatmul.bf16.gmra.mxu0 %v1078
        %v4826 = vpop.f32.mrf.mxu0
        %v4827 = vadd.f32 %v4738, %v4826
        %v4828 = vpop.f32.mrf.mxu0
        %v4829 = vadd.f32 %v4740, %v4828
        %4830 = vmatmul.bf16.gmra.mxu0 %v1085
        %v4831 = vpop.f32.mrf.mxu0
        %v4832 = vadd.f32 %v4743, %v4831
        %v4833 = vpop.f32.mrf.mxu0
        %v4834 = vadd.f32 %v4745, %v4833
        %4835 = vmatmul.bf16.gmra.mxu0 %v1092
        %v4836 = vpop.f32.mrf.mxu0
        %v4837 = vadd.f32 %v4748, %v4836
        %v4838 = vpop.f32.mrf.mxu0
        %v4839 = vadd.f32 %v4750, %v4838
        %4840 = vmatmul.bf16.gmra.mxu0 %v1099
        %v4841 = vpop.f32.mrf.mxu0
        %v4842 = vadd.f32 %v4753, %v4841
        %v4843 = vpop.f32.mrf.mxu0
        %v4844 = vadd.f32 %v4755, %v4843
        %4845 = vmatmul.bf16.gmra.mxu0 %v1106
        %v4846 = vpop.f32.mrf.mxu0
        %v4847 = vadd.f32 %v4758, %v4846
        %v4848 = vpop.f32.mrf.mxu0
        %v4849 = vadd.f32 %v4760, %v4848
        %4850 = vmatmul.bf16.gmra.mxu0 %v1113
        %v4851 = vpop.f32.mrf.mxu0
        %v4852 = vadd.f32 %v4763, %v4851
        %v4853 = vpop.f32.mrf.mxu0
        %v4854 = vadd.f32 %v4765, %v4853
        %4855 = vmatmul.bf16.gmra.mxu0 %v1120
        %v4856 = vpop.f32.mrf.mxu0
        %v4857 = vadd.f32 %v4768, %v4856
        %v4858 = vpop.f32.mrf.mxu0
        %v4859 = vadd.f32 %v4770, %v4858
        %4860 = vmatmul.bf16.gmra.mxu0 %v1127
        %v4861 = vpop.f32.mrf.mxu0
        %v4862 = vadd.f32 %v4773, %v4861
        %v4863 = vpop.f32.mrf.mxu0
        %v4864 = vadd.f32 %v4775, %v4863
        %4865 = vmatmul.bf16.gmra.mxu0 %v1134
        %v4866 = vpop.f32.mrf.mxu0
        %v4867 = vadd.f32 %v4778, %v4866
        %v4868 = vpop.f32.mrf.mxu0
        %v4869 = vadd.f32 %v4780, %v4868
        %4870 = vmatmul.bf16.gmra.mxu0 %v1141
        %v4871 = vpop.f32.mrf.mxu0
        %v4872 = vadd.f32 %v4783, %v4871
        %v4873 = vpop.f32.mrf.mxu0
        %v4874 = vadd.f32 %v4785, %v4873
        %4875 = vmatmul.bf16.gmra.mxu0 %v1148
        %v4876 = vpop.f32.mrf.mxu0
        %v4877 = vadd.f32 %v4788, %v4876
        %v4878 = vpop.f32.mrf.mxu0
        %v4879 = vadd.f32 %v4790, %v4878
        %4880 = vmatmul.bf16.gmra.mxu0 %v1155
        %v4881 = vpop.f32.mrf.mxu0
        %v4882 = vadd.f32 %v4793, %v4881
        %v4883 = vpop.f32.mrf.mxu0
        %v4884 = vadd.f32 %v4795, %v4883
        %4885 = vmatmul.bf16.gmra.mxu0 %v1162
        %v4886 = vpop.f32.mrf.mxu0
        %v4887 = vadd.f32 %v4798, %v4886
        %v4888 = vpop.f32.mrf.mxu0
        %v4889 = vadd.f32 %v4800, %v4888
        %4890 = vmatmul.bf16.gmra.mxu0 %v1169
        %v4891 = vpop.f32.mrf.mxu0
        %v4892 = vadd.f32 %v4803, %v4891
        %v4893 = vpop.f32.mrf.mxu0
        %v4894 = vadd.f32 %v4805, %v4893
        %4895 = vmatmul.bf16.gmra.mxu0 %v1176
        %v4896 = vpop.f32.mrf.mxu0
        %v4897 = vadd.f32 %v4808, %v4896
        %v4898 = vpop.f32.mrf.mxu0
        %v4899 = vadd.f32 %v4810, %v4898
        %4900 = vdwg.mxu0
        %vm4901 = vcmp.gt.f32.partialorder %v2953, 0.0
        %vm4902 = vcmp.gt.f32.partialorder %v3576, 0.0
        %vm4903 = vcmp.gt.f32.partialorder %v4199, 0.0
        %vm4904 = vcmp.gt.f32.partialorder %v4822, 0.0
        %vm4905 = vcmp.gt.f32.partialorder %v2955, 0.0
        %vm4906 = vcmp.gt.f32.partialorder %v3578, 0.0
        %vm4907 = vcmp.gt.f32.partialorder %v4201, 0.0
        %vm4908 = vcmp.gt.f32.partialorder %v4824, 0.0
        %vm4909 = vcmp.gt.f32.partialorder %v2958, 0.0
        %vm4910 = vcmp.gt.f32.partialorder %v3581, 0.0
        %vm4911 = vcmp.gt.f32.partialorder %v4204, 0.0
        %vm4912 = vcmp.gt.f32.partialorder %v4827, 0.0
        %vm4913 = vcmp.gt.f32.partialorder %v2960, 0.0
        %vm4914 = vcmp.gt.f32.partialorder %v3583, 0.0
        %vm4915 = vcmp.gt.f32.partialorder %v4206, 0.0
        %vm4916 = vcmp.gt.f32.partialorder %v4829, 0.0
        %vm4917 = vcmp.gt.f32.partialorder %v2963, 0.0
        %vm4918 = vcmp.gt.f32.partialorder %v3586, 0.0
        %vm4919 = vcmp.gt.f32.partialorder %v4209, 0.0
        %vm4920 = vcmp.gt.f32.partialorder %v4832, 0.0
        %vm4921 = vcmp.gt.f32.partialorder %v2965, 0.0
        %vm4922 = vcmp.gt.f32.partialorder %v3588, 0.0
        %vm4923 = vcmp.gt.f32.partialorder %v4211, 0.0
        %vm4924 = vcmp.gt.f32.partialorder %v4834, 0.0
        %vm4925 = vcmp.gt.f32.partialorder %v2968, 0.0
        %vm4926 = vcmp.gt.f32.partialorder %v3591, 0.0
        %vm4927 = vcmp.gt.f32.partialorder %v4214, 0.0
        %vm4928 = vcmp.gt.f32.partialorder %v4837, 0.0
        %vm4929 = vcmp.gt.f32.partialorder %v2970, 0.0
        %vm4930 = vcmp.gt.f32.partialorder %v3593, 0.0
        %vm4931 = vcmp.gt.f32.partialorder %v4216, 0.0
        %vm4932 = vcmp.gt.f32.partialorder %v4839, 0.0
        %vm4933 = vcmp.gt.f32.partialorder %v2973, 0.0
        %vm4934 = vcmp.gt.f32.partialorder %v3596, 0.0
        %vm4935 = vcmp.gt.f32.partialorder %v4219, 0.0
        %vm4936 = vcmp.gt.f32.partialorder %v4842, 0.0
        %vm4937 = vcmp.gt.f32.partialorder %v2975, 0.0
        %vm4938 = vcmp.gt.f32.partialorder %v3598, 0.0
        %vm4939 = vcmp.gt.f32.partialorder %v4221, 0.0
        %vm4940 = vcmp.gt.f32.partialorder %v4844, 0.0
        %vm4941 = vcmp.gt.f32.partialorder %v2978, 0.0
        %vm4942 = vcmp.gt.f32.partialorder %v3601, 0.0
        %vm4943 = vcmp.gt.f32.partialorder %v4224, 0.0
        %vm4944 = vcmp.gt.f32.partialorder %v4847, 0.0
        %vm4945 = vcmp.gt.f32.partialorder %v2980, 0.0
        %vm4946 = vcmp.gt.f32.partialorder %v3603, 0.0
        %vm4947 = vcmp.gt.f32.partialorder %v4226, 0.0
        %vm4948 = vcmp.gt.f32.partialorder %v4849, 0.0
        %vm4949 = vcmp.gt.f32.partialorder %v2983, 0.0
        %vm4950 = vcmp.gt.f32.partialorder %v3606, 0.0
        %vm4951 = vcmp.gt.f32.partialorder %v4229, 0.0
        %vm4952 = vcmp.gt.f32.partialorder %v4852, 0.0
        %vm4953 = vcmp.gt.f32.partialorder %v2985, 0.0
        %vm4954 = vcmp.gt.f32.partialorder %v3608, 0.0
        %vm4955 = vcmp.gt.f32.partialorder %v4231, 0.0
        %vm4956 = vcmp.gt.f32.partialorder %v4854, 0.0
        %vm4957 = vcmp.gt.f32.partialorder %v2988, 0.0
        %vm4958 = vcmp.gt.f32.partialorder %v3611, 0.0
        %vm4959 = vcmp.gt.f32.partialorder %v4234, 0.0
        %vm4960 = vcmp.gt.f32.partialorder %v4857, 0.0
        %vm4961 = vcmp.gt.f32.partialorder %v2990, 0.0
        %vm4962 = vcmp.gt.f32.partialorder %v3613, 0.0
        %vm4963 = vcmp.gt.f32.partialorder %v4236, 0.0
        %vm4964 = vcmp.gt.f32.partialorder %v4859, 0.0
        %vm4965 = vcmp.gt.f32.partialorder %v2993, 0.0
        %vm4966 = vcmp.gt.f32.partialorder %v3616, 0.0
        %vm4967 = vcmp.gt.f32.partialorder %v4239, 0.0
        %vm4968 = vcmp.gt.f32.partialorder %v4862, 0.0
        %vm4969 = vcmp.gt.f32.partialorder %v2995, 0.0
        %vm4970 = vcmp.gt.f32.partialorder %v3618, 0.0
        %vm4971 = vcmp.gt.f32.partialorder %v4241, 0.0
        %vm4972 = vcmp.gt.f32.partialorder %v4864, 0.0
        %vm4973 = vcmp.gt.f32.partialorder %v2998, 0.0
        %vm4974 = vcmp.gt.f32.partialorder %v3621, 0.0
        %vm4975 = vcmp.gt.f32.partialorder %v4244, 0.0
        %vm4976 = vcmp.gt.f32.partialorder %v4867, 0.0
        %vm4977 = vcmp.gt.f32.partialorder %v3000, 0.0
        %vm4978 = vcmp.gt.f32.partialorder %v3623, 0.0
        %vm4979 = vcmp.gt.f32.partialorder %v4246, 0.0
        %vm4980 = vcmp.gt.f32.partialorder %v4869, 0.0
        %vm4981 = vcmp.gt.f32.partialorder %v3003, 0.0
        %vm4982 = vcmp.gt.f32.partialorder %v3626, 0.0
        %vm4983 = vcmp.gt.f32.partialorder %v4249, 0.0
        %vm4984 = vcmp.gt.f32.partialorder %v4872, 0.0
        %vm4985 = vcmp.gt.f32.partialorder %v3005, 0.0
        %vm4986 = vcmp.gt.f32.partialorder %v3628, 0.0
        %vm4987 = vcmp.gt.f32.partialorder %v4251, 0.0
        %vm4988 = vcmp.gt.f32.partialorder %v4874, 0.0
        %vm4989 = vcmp.gt.f32.partialorder %v3008, 0.0
        %vm4990 = vcmp.gt.f32.partialorder %v3631, 0.0
        %vm4991 = vcmp.gt.f32.partialorder %v4254, 0.0
        %vm4992 = vcmp.gt.f32.partialorder %v4877, 0.0
        %vm4993 = vcmp.gt.f32.partialorder %v3010, 0.0
        %vm4994 = vcmp.gt.f32.partialorder %v3633, 0.0
        %vm4995 = vcmp.gt.f32.partialorder %v4256, 0.0
        %vm4996 = vcmp.gt.f32.partialorder %v4879, 0.0
        %vm4997 = vcmp.gt.f32.partialorder %v3013, 0.0
        %vm4998 = vcmp.gt.f32.partialorder %v3636, 0.0
        %vm4999 = vcmp.gt.f32.partialorder %v4259, 0.0
        %vm5000 = vcmp.gt.f32.partialorder %v4882, 0.0
        %vm5001 = vcmp.gt.f32.partialorder %v3015, 0.0
        %vm5002 = vcmp.gt.f32.partialorder %v3638, 0.0
        %vm5003 = vcmp.gt.f32.partialorder %v4261, 0.0
        %vm5004 = vcmp.gt.f32.partialorder %v4884, 0.0
        %vm5005 = vcmp.gt.f32.partialorder %v3018, 0.0
        %vm5006 = vcmp.gt.f32.partialorder %v3641, 0.0
        %vm5007 = vcmp.gt.f32.partialorder %v4264, 0.0
        %vm5008 = vcmp.gt.f32.partialorder %v4887, 0.0
        %vm5009 = vcmp.gt.f32.partialorder %v3020, 0.0
        %vm5010 = vcmp.gt.f32.partialorder %v3643, 0.0
        %vm5011 = vcmp.gt.f32.partialorder %v4266, 0.0
        %vm5012 = vcmp.gt.f32.partialorder %v4889, 0.0
        %vm5013 = vcmp.gt.f32.partialorder %v3023, 0.0
        %vm5014 = vcmp.gt.f32.partialorder %v3646, 0.0
        %vm5015 = vcmp.gt.f32.partialorder %v4269, 0.0
        %vm5016 = vcmp.gt.f32.partialorder %v4892, 0.0
        %vm5017 = vcmp.gt.f32.partialorder %v3025, 0.0
        %vm5018 = vcmp.gt.f32.partialorder %v3648, 0.0
        %vm5019 = vcmp.gt.f32.partialorder %v4271, 0.0
        %vm5020 = vcmp.gt.f32.partialorder %v4894, 0.0
        %vm5021 = vcmp.gt.f32.partialorder %v3028, 0.0
        %vm5022 = vcmp.gt.f32.partialorder %v3651, 0.0
        %vm5023 = vcmp.gt.f32.partialorder %v4274, 0.0
        %vm5024 = vcmp.gt.f32.partialorder %v4897, 0.0
        %vm5025 = vcmp.gt.f32.partialorder %v3030, 0.0
        %vm5026 = vcmp.gt.f32.partialorder %v3653, 0.0
        %vm5027 = vcmp.gt.f32.partialorder %v4276, 0.0
        %vm5028 = vcmp.gt.f32.partialorder %v4899, 0.0
        %v5029 = vmul.f32 %v2953, 0.2
        %v5030 = vmul.f32 %v3576, 0.2
        %v5031 = vmul.f32 %v4199, 0.2
        %v5032 = vmul.f32 %v4822, 0.2
        %v5033 = vmul.f32 %v2955, 0.2
        %v5034 = vmul.f32 %v3578, 0.2
        %v5035 = vmul.f32 %v4201, 0.2
        %v5036 = vmul.f32 %v4824, 0.2
        %v5037 = vmul.f32 %v2958, 0.2
        %v5038 = vmul.f32 %v3581, 0.2
        %v5039 = vmul.f32 %v4204, 0.2
        %v5040 = vmul.f32 %v4827, 0.2
        %v5041 = vmul.f32 %v2960, 0.2
        %v5042 = vmul.f32 %v3583, 0.2
        %v5043 = vmul.f32 %v4206, 0.2
        %v5044 = vmul.f32 %v4829, 0.2
        %v5045 = vmul.f32 %v2963, 0.2
        %v5046 = vmul.f32 %v3586, 0.2
        %v5047 = vmul.f32 %v4209, 0.2
        %v5048 = vmul.f32 %v4832, 0.2
        %v5049 = vmul.f32 %v2965, 0.2
        %v5050 = vmul.f32 %v3588, 0.2
        %v5051 = vmul.f32 %v4211, 0.2
        %v5052 = vmul.f32 %v4834, 0.2
        %v5053 = vmul.f32 %v2968, 0.2
        %v5054 = vmul.f32 %v3591, 0.2
        %v5055 = vmul.f32 %v4214, 0.2
        %v5056 = vmul.f32 %v4837, 0.2
        %v5057 = vmul.f32 %v2970, 0.2
        %v5058 = vmul.f32 %v3593, 0.2
        %v5059 = vmul.f32 %v4216, 0.2
        %v5060 = vmul.f32 %v4839, 0.2
        %v5061 = vmul.f32 %v2973, 0.2
        %v5062 = vmul.f32 %v3596, 0.2
        %v5063 = vmul.f32 %v4219, 0.2
        %v5064 = vmul.f32 %v4842, 0.2
        %v5065 = vmul.f32 %v2975, 0.2
        %v5066 = vmul.f32 %v3598, 0.2
        %v5067 = vmul.f32 %v4221, 0.2
        %v5068 = vmul.f32 %v4844, 0.2
        %v5069 = vmul.f32 %v2978, 0.2
        %v5070 = vmul.f32 %v3601, 0.2
        %v5071 = vmul.f32 %v4224, 0.2
        %v5072 = vmul.f32 %v4847, 0.2
        %v5073 = vmul.f32 %v2980, 0.2
        %v5074 = vmul.f32 %v3603, 0.2
        %v5075 = vmul.f32 %v4226, 0.2
        %v5076 = vmul.f32 %v4849, 0.2
        %v5077 = vmul.f32 %v2983, 0.2
        %v5078 = vmul.f32 %v3606, 0.2
        %v5079 = vmul.f32 %v4229, 0.2
        %v5080 = vmul.f32 %v4852, 0.2
        %v5081 = vmul.f32 %v2985, 0.2
        %v5082 = vmul.f32 %v3608, 0.2
        %v5083 = vmul.f32 %v4231, 0.2
        %v5084 = vmul.f32 %v4854, 0.2
        %v5085 = vmul.f32 %v2988, 0.2
        %v5086 = vmul.f32 %v3611, 0.2
        %v5087 = vmul.f32 %v4234, 0.2
        %v5088 = vmul.f32 %v4857, 0.2
        %v5089 = vmul.f32 %v2990, 0.2
        %v5090 = vmul.f32 %v3613, 0.2
        %v5091 = vmul.f32 %v4236, 0.2
        %v5092 = vmul.f32 %v4859, 0.2
        %v5093 = vmul.f32 %v2993, 0.2
        %v5094 = vmul.f32 %v3616, 0.2
        %v5095 = vmul.f32 %v4239, 0.2
        %v5096 = vmul.f32 %v4862, 0.2
        %v5097 = vmul.f32 %v2995, 0.2
        %v5098 = vmul.f32 %v3618, 0.2
        %v5099 = vmul.f32 %v4241, 0.2
        %v5100 = vmul.f32 %v4864, 0.2
        %v5101 = vmul.f32 %v2998, 0.2
        %v5102 = vmul.f32 %v3621, 0.2
        %v5103 = vmul.f32 %v4244, 0.2
        %v5104 = vmul.f32 %v4867, 0.2
        %v5105 = vmul.f32 %v3000, 0.2
        %v5106 = vmul.f32 %v3623, 0.2
        %v5107 = vmul.f32 %v4246, 0.2
        %v5108 = vmul.f32 %v4869, 0.2
        %v5109 = vmul.f32 %v3003, 0.2
        %v5110 = vmul.f32 %v3626, 0.2
        %v5111 = vmul.f32 %v4249, 0.2
        %v5112 = vmul.f32 %v4872, 0.2
        %v5113 = vmul.f32 %v3005, 0.2
        %v5114 = vmul.f32 %v3628, 0.2
        %v5115 = vmul.f32 %v4251, 0.2
        %v5116 = vmul.f32 %v4874, 0.2
        %v5117 = vmul.f32 %v3008, 0.2
        %v5118 = vmul.f32 %v3631, 0.2
        %v5119 = vmul.f32 %v4254, 0.2
        %v5120 = vmul.f32 %v4877, 0.2
        %v5121 = vmul.f32 %v3010, 0.2
        %v5122 = vmul.f32 %v3633, 0.2
        %v5123 = vmul.f32 %v4256, 0.2
        %v5124 = vmul.f32 %v4879, 0.2
        %v5125 = vmul.f32 %v3013, 0.2
        %v5126 = vmul.f32 %v3636, 0.2
        %v5127 = vmul.f32 %v4259, 0.2
        %v5128 = vmul.f32 %v4882, 0.2
        %v5129 = vmul.f32 %v3015, 0.2
        %v5130 = vmul.f32 %v3638, 0.2
        %v5131 = vmul.f32 %v4261, 0.2
        %v5132 = vmul.f32 %v4884, 0.2
        %v5133 = vmul.f32 %v3018, 0.2
        %v5134 = vmul.f32 %v3641, 0.2
        %v5135 = vmul.f32 %v4264, 0.2
        %v5136 = vmul.f32 %v4887, 0.2
        %v5137 = vmul.f32 %v3020, 0.2
        %v5138 = vmul.f32 %v3643, 0.2
        %v5139 = vmul.f32 %v4266, 0.2
        %v5140 = vmul.f32 %v4889, 0.2
        %v5141 = vmul.f32 %v3023, 0.2
        %v5142 = vmul.f32 %v3646, 0.2
        %v5143 = vmul.f32 %v4269, 0.2
        %v5144 = vmul.f32 %v4892, 0.2
        %v5145 = vmul.f32 %v3025, 0.2
        %v5146 = vmul.f32 %v3648, 0.2
        %v5147 = vmul.f32 %v4271, 0.2
        %v5148 = vmul.f32 %v4894, 0.2
        %v5149 = vmul.f32 %v3028, 0.2
        %v5150 = vmul.f32 %v3651, 0.2
        %v5151 = vmul.f32 %v4274, 0.2
        %v5152 = vmul.f32 %v4897, 0.2
        %v5153 = vmul.f32 %v3030, 0.2
        %v5154 = vmul.f32 %v3653, 0.2
        %v5155 = vmul.f32 %v4276, 0.2
        %v5156 = vmul.f32 %v4899, 0.2
        %v5157 = vsel %vm4901, %v2953, %v5029
        %v5158 = vsel %vm4902, %v3576, %v5030
        %v5159 = vsel %vm4903, %v4199, %v5031
        %v5160 = vsel %vm4904, %v4822, %v5032
        %v5161 = vsel %vm4905, %v2955, %v5033
        %v5162 = vsel %vm4906, %v3578, %v5034
        %v5163 = vsel %vm4907, %v4201, %v5035
        %v5164 = vsel %vm4908, %v4824, %v5036
        %v5165 = vsel %vm4909, %v2958, %v5037
        %v5166 = vsel %vm4910, %v3581, %v5038
        %v5167 = vsel %vm4911, %v4204, %v5039
        %v5168 = vsel %vm4912, %v4827, %v5040
        %v5169 = vsel %vm4913, %v2960, %v5041
        %v5170 = vsel %vm4914, %v3583, %v5042
        %v5171 = vsel %vm4915, %v4206, %v5043
        %v5172 = vsel %vm4916, %v4829, %v5044
        %v5173 = vsel %vm4917, %v2963, %v5045
        %v5174 = vsel %vm4918, %v3586, %v5046
        %v5175 = vsel %vm4919, %v4209, %v5047
        %v5176 = vsel %vm4920, %v4832, %v5048
        %v5177 = vsel %vm4921, %v2965, %v5049
        %v5178 = vsel %vm4922, %v3588, %v5050
        %v5179 = vsel %vm4923, %v4211, %v5051
        %v5180 = vsel %vm4924, %v4834, %v5052
        %v5181 = vsel %vm4925, %v2968, %v5053
        %v5182 = vsel %vm4926, %v3591, %v5054
        %v5183 = vsel %vm4927, %v4214, %v5055
        %v5184 = vsel %vm4928, %v4837, %v5056
        %v5185 = vsel %vm4929, %v2970, %v5057
        %v5186 = vsel %vm4930, %v3593, %v5058
        %v5187 = vsel %vm4931, %v4216, %v5059
        %v5188 = vsel %vm4932, %v4839, %v5060
        %v5189 = vsel %vm4933, %v2973, %v5061
        %v5190 = vsel %vm4934, %v3596, %v5062
        %v5191 = vsel %vm4935, %v4219, %v5063
        %v5192 = vsel %vm4936, %v4842, %v5064
        %v5193 = vsel %vm4937, %v2975, %v5065
        %v5194 = vsel %vm4938, %v3598, %v5066
        %v5195 = vsel %vm4939, %v4221, %v5067
        %v5196 = vsel %vm4940, %v4844, %v5068
        %v5197 = vsel %vm4941, %v2978, %v5069
        %v5198 = vsel %vm4942, %v3601, %v5070
        %v5199 = vsel %vm4943, %v4224, %v5071
        %v5200 = vsel %vm4944, %v4847, %v5072
        %v5201 = vsel %vm4945, %v2980, %v5073
        %v5202 = vsel %vm4946, %v3603, %v5074
        %v5203 = vsel %vm4947, %v4226, %v5075
        %v5204 = vsel %vm4948, %v4849, %v5076
        %v5205 = vsel %vm4949, %v2983, %v5077
        %v5206 = vsel %vm4950, %v3606, %v5078
        %v5207 = vsel %vm4951, %v4229, %v5079
        %v5208 = vsel %vm4952, %v4852, %v5080
        %v5209 = vsel %vm4953, %v2985, %v5081
        %v5210 = vsel %vm4954, %v3608, %v5082
        %v5211 = vsel %vm4955, %v4231, %v5083
        %v5212 = vsel %vm4956, %v4854, %v5084
        %v5213 = vsel %vm4957, %v2988, %v5085
        %v5214 = vsel %vm4958, %v3611, %v5086
        %v5215 = vsel %vm4959, %v4234, %v5087
        %v5216 = vsel %vm4960, %v4857, %v5088
        %v5217 = vsel %vm4961, %v2990, %v5089
        %v5218 = vsel %vm4962, %v3613, %v5090
        %v5219 = vsel %vm4963, %v4236, %v5091
        %v5220 = vsel %vm4964, %v4859, %v5092
        %v5221 = vsel %vm4965, %v2993, %v5093
        %v5222 = vsel %vm4966, %v3616, %v5094
        %v5223 = vsel %vm4967, %v4239, %v5095
        %v5224 = vsel %vm4968, %v4862, %v5096
        %v5225 = vsel %vm4969, %v2995, %v5097
        %v5226 = vsel %vm4970, %v3618, %v5098
        %v5227 = vsel %vm4971, %v4241, %v5099
        %v5228 = vsel %vm4972, %v4864, %v5100
        %v5229 = vsel %vm4973, %v2998, %v5101
        %v5230 = vsel %vm4974, %v3621, %v5102
        %v5231 = vsel %vm4975, %v4244, %v5103
        %v5232 = vsel %vm4976, %v4867, %v5104
        %v5233 = vsel %vm4977, %v3000, %v5105
        %v5234 = vsel %vm4978, %v3623, %v5106
        %v5235 = vsel %vm4979, %v4246, %v5107
        %v5236 = vsel %vm4980, %v4869, %v5108
        %v5237 = vsel %vm4981, %v3003, %v5109
        %v5238 = vsel %vm4982, %v3626, %v5110
        %v5239 = vsel %vm4983, %v4249, %v5111
        %v5240 = vsel %vm4984, %v4872, %v5112
        %v5241 = vsel %vm4985, %v3005, %v5113
        %v5242 = vsel %vm4986, %v3628, %v5114
        %v5243 = vsel %vm4987, %v4251, %v5115
        %v5244 = vsel %vm4988, %v4874, %v5116
        %v5245 = vsel %vm4989, %v3008, %v5117
        %v5246 = vsel %vm4990, %v3631, %v5118
        %v5247 = vsel %vm4991, %v4254, %v5119
        %v5248 = vsel %vm4992, %v4877, %v5120
        %v5249 = vsel %vm4993, %v3010, %v5121
        %v5250 = vsel %vm4994, %v3633, %v5122
        %v5251 = vsel %vm4995, %v4256, %v5123
        %v5252 = vsel %vm4996, %v4879, %v5124
        %v5253 = vsel %vm4997, %v3013, %v5125
        %v5254 = vsel %vm4998, %v3636, %v5126
        %v5255 = vsel %vm4999, %v4259, %v5127
        %v5256 = vsel %vm5000, %v4882, %v5128
        %v5257 = vsel %vm5001, %v3015, %v5129
        %v5258 = vsel %vm5002, %v3638, %v5130
        %v5259 = vsel %vm5003, %v4261, %v5131
        %v5260 = vsel %vm5004, %v4884, %v5132
        %v5261 = vsel %vm5005, %v3018, %v5133
        %v5262 = vsel %vm5006, %v3641, %v5134
        %v5263 = vsel %vm5007, %v4264, %v5135
        %v5264 = vsel %vm5008, %v4887, %v5136
        %v5265 = vsel %vm5009, %v3020, %v5137
        %v5266 = vsel %vm5010, %v3643, %v5138
        %v5267 = vsel %vm5011, %v4266, %v5139
        %v5268 = vsel %vm5012, %v4889, %v5140
        %v5269 = vsel %vm5013, %v3023, %v5141
        %v5270 = vsel %vm5014, %v3646, %v5142
        %v5271 = vsel %vm5015, %v4269, %v5143
        %v5272 = vsel %vm5016, %v4892, %v5144
        %v5273 = vsel %vm5017, %v3025, %v5145
        %v5274 = vsel %vm5018, %v3648, %v5146
        %v5275 = vsel %vm5019, %v4271, %v5147
        %v5276 = vsel %vm5020, %v4894, %v5148
        %v5277 = vsel %vm5021, %v3028, %v5149
        %v5278 = vsel %vm5022, %v3651, %v5150
        %v5279 = vsel %vm5023, %v4274, %v5151
        %v5280 = vsel %vm5024, %v4897, %v5152
        %v5281 = vsel %vm5025, %v3030, %v5153
        %v5282 = vsel %vm5026, %v3653, %v5154
        %v5283 = vsel %vm5027, %v4276, %v5155
        %v5284 = vsel %vm5028, %v4899, %v5156
        %v5285 = vpack.c.bf16 %v5161, %v5157
        %v5286 = vpack.c.bf16 %v5162, %v5158
        %v5287 = vpack.c.bf16 %v5163, %v5159
        %v5288 = vpack.c.bf16 %v5164, %v5160
        %v5289 = vpack.c.bf16 %v5169, %v5165
        %v5290 = vpack.c.bf16 %v5170, %v5166
        %v5291 = vpack.c.bf16 %v5171, %v5167
        %v5292 = vpack.c.bf16 %v5172, %v5168
        %v5293 = vpack.c.bf16 %v5177, %v5173
        %v5294 = vpack.c.bf16 %v5178, %v5174
        %v5295 = vpack.c.bf16 %v5179, %v5175
        %v5296 = vpack.c.bf16 %v5180, %v5176
        %v5297 = vpack.c.bf16 %v5185, %v5181
        %v5298 = vpack.c.bf16 %v5186, %v5182
        %v5299 = vpack.c.bf16 %v5187, %v5183
        %v5300 = vpack.c.bf16 %v5188, %v5184
        %v5301 = vpack.c.bf16 %v5193, %v5189
        %v5302 = vpack.c.bf16 %v5194, %v5190
        %v5303 = vpack.c.bf16 %v5195, %v5191
        %v5304 = vpack.c.bf16 %v5196, %v5192
        %v5305 = vpack.c.bf16 %v5201, %v5197
        %v5306 = vpack.c.bf16 %v5202, %v5198
        %v5307 = vpack.c.bf16 %v5203, %v5199
        %v5308 = vpack.c.bf16 %v5204, %v5200
        %v5309 = vpack.c.bf16 %v5209, %v5205
        %v5310 = vpack.c.bf16 %v5210, %v5206
        %v5311 = vpack.c.bf16 %v5211, %v5207
        %v5312 = vpack.c.bf16 %v5212, %v5208
        %v5313 = vpack.c.bf16 %v5217, %v5213
        %v5314 = vpack.c.bf16 %v5218, %v5214
        %v5315 = vpack.c.bf16 %v5219, %v5215
        %v5316 = vpack.c.bf16 %v5220, %v5216
        %v5317 = vpack.c.bf16 %v5225, %v5221
        %v5318 = vpack.c.bf16 %v5226, %v5222
        %v5319 = vpack.c.bf16 %v5227, %v5223
        %v5320 = vpack.c.bf16 %v5228, %v5224
        %v5321 = vpack.c.bf16 %v5233, %v5229
        %v5322 = vpack.c.bf16 %v5234, %v5230
        %v5323 = vpack.c.bf16 %v5235, %v5231
        %v5324 = vpack.c.bf16 %v5236, %v5232
        %v5325 = vpack.c.bf16 %v5241, %v5237
        %v5326 = vpack.c.bf16 %v5242, %v5238
        %v5327 = vpack.c.bf16 %v5243, %v5239
        %v5328 = vpack.c.bf16 %v5244, %v5240
        %v5329 = vpack.c.bf16 %v5249, %v5245
        %v5330 = vpack.c.bf16 %v5250, %v5246
        %v5331 = vpack.c.bf16 %v5251, %v5247
        %v5332 = vpack.c.bf16 %v5252, %v5248
        %v5333 = vpack.c.bf16 %v5257, %v5253
        %v5334 = vpack.c.bf16 %v5258, %v5254
        %v5335 = vpack.c.bf16 %v5259, %v5255
        %v5336 = vpack.c.bf16 %v5260, %v5256
        %v5337 = vpack.c.bf16 %v5265, %v5261
        %v5338 = vpack.c.bf16 %v5266, %v5262
        %v5339 = vpack.c.bf16 %v5267, %v5263
        %v5340 = vpack.c.bf16 %v5268, %v5264
        %v5341 = vpack.c.bf16 %v5273, %v5269
        %v5342 = vpack.c.bf16 %v5274, %v5270
        %v5343 = vpack.c.bf16 %v5275, %v5271
        %v5344 = vpack.c.bf16 %v5276, %v5272
        %v5345 = vpack.c.bf16 %v5281, %v5277
        %v5346 = vpack.c.bf16 %v5282, %v5278
        %v5347 = vpack.c.bf16 %v5283, %v5279
        %v5348 = vpack.c.bf16 %v5284, %v5280
        %v5349 = vld [vmem:[#allocation9] sm:$0xff]
        %v5350 = vld [vmem:[#allocation9 + $0x8] sm:$0xff]
        %v5351 = vld [vmem:[#allocation9 + $0x10] sm:$0xff]
        %v5352 = vld [vmem:[#allocation9 + $0x18] sm:$0xff]
        %v5353 = vld [vmem:[#allocation9 + $0x20] sm:$0xff]
        %v5354 = vld [vmem:[#allocation9 + $0x28] sm:$0xff]
        %v5355 = vld [vmem:[#allocation9 + $0x30] sm:$0xff]
        %v5356 = vld [vmem:[#allocation9 + $0x38] sm:$0xff]
        %v5357 = vld [vmem:[#allocation9 + $0x40] sm:$0xff]
        %v5358 = vld [vmem:[#allocation9 + $0x48] sm:$0xff]
        %v5359 = vld [vmem:[#allocation9 + $0x50] sm:$0xff]
        %v5360 = vld [vmem:[#allocation9 + $0x58] sm:$0xff]
        %v5361 = vld [vmem:[#allocation9 + $0x60] sm:$0xff]
        %v5362 = vld [vmem:[#allocation9 + $0x68] sm:$0xff]
        %v5363 = vld [vmem:[#allocation9 + $0x70] sm:$0xff]
        %v5364 = vld [vmem:[#allocation9 + $0x78] sm:$0xff]
        %v5365 = vld [vmem:[#allocation9 + $0x80] sm:$0xff]
        %v5366 = vld [vmem:[#allocation9 + $0x88] sm:$0xff]
        %v5367 = vld [vmem:[#allocation9 + $0x90] sm:$0xff]
        %v5368 = vld [vmem:[#allocation9 + $0x98] sm:$0xff]
        %v5369 = vld [vmem:[#allocation9 + $0xa0] sm:$0xff]
        %v5370 = vld [vmem:[#allocation9 + $0xa8] sm:$0xff]
        %v5371 = vld [vmem:[#allocation9 + $0xb0] sm:$0xff]
        %v5372 = vld [vmem:[#allocation9 + $0xb8] sm:$0xff]
        %v5373 = vld [vmem:[#allocation9 + $0xc0] sm:$0xff]
        %v5374 = vld [vmem:[#allocation9 + $0xc8] sm:$0xff]
        %v5375 = vld [vmem:[#allocation9 + $0xd0] sm:$0xff]
        %v5376 = vld [vmem:[#allocation9 + $0xd8] sm:$0xff]
        %v5377 = vld [vmem:[#allocation9 + $0xe0] sm:$0xff]
        %v5378 = vld [vmem:[#allocation9 + $0xe8] sm:$0xff]
        %v5379 = vld [vmem:[#allocation9 + $0xf0] sm:$0xff]
        %v5380 = vld [vmem:[#allocation9 + $0xf8] sm:$0xff]
        %v5381 = vld [vmem:[#allocation9 + $0x100] sm:$0xff]
        %v5382 = vld [vmem:[#allocation9 + $0x108] sm:$0xff]
        %v5383 = vld [vmem:[#allocation9 + $0x110] sm:$0xff]
        %v5384 = vld [vmem:[#allocation9 + $0x118] sm:$0xff]
        %v5385 = vld [vmem:[#allocation9 + $0x120] sm:$0xff]
        %v5386 = vld [vmem:[#allocation9 + $0x128] sm:$0xff]
        %v5387 = vld [vmem:[#allocation9 + $0x130] sm:$0xff]
        %v5388 = vld [vmem:[#allocation9 + $0x138] sm:$0xff]
        %v5389 = vld [vmem:[#allocation9 + $0x140] sm:$0xff]
        %v5390 = vld [vmem:[#allocation9 + $0x148] sm:$0xff]
        %v5391 = vld [vmem:[#allocation9 + $0x150] sm:$0xff]
        %v5392 = vld [vmem:[#allocation9 + $0x158] sm:$0xff]
        %v5393 = vld [vmem:[#allocation9 + $0x160] sm:$0xff]
        %v5394 = vld [vmem:[#allocation9 + $0x168] sm:$0xff]
        %v5395 = vld [vmem:[#allocation9 + $0x170] sm:$0xff]
        %v5396 = vld [vmem:[#allocation9 + $0x178] sm:$0xff]
        %v5397 = vld [vmem:[#allocation9 + $0x180] sm:$0xff]
        %v5398 = vld [vmem:[#allocation9 + $0x188] sm:$0xff]
        %v5399 = vld [vmem:[#allocation9 + $0x190] sm:$0xff]
        %v5400 = vld [vmem:[#allocation9 + $0x198] sm:$0xff]
        %v5401 = vld [vmem:[#allocation9 + $0x1a0] sm:$0xff]
        %v5402 = vld [vmem:[#allocation9 + $0x1a8] sm:$0xff]
        %v5403 = vld [vmem:[#allocation9 + $0x1b0] sm:$0xff]
        %v5404 = vld [vmem:[#allocation9 + $0x1b8] sm:$0xff]
        %v5405 = vld [vmem:[#allocation9 + $0x1c0] sm:$0xff]
        %v5406 = vld [vmem:[#allocation9 + $0x1c8] sm:$0xff]
        %v5407 = vld [vmem:[#allocation9 + $0x1d0] sm:$0xff]
        %v5408 = vld [vmem:[#allocation9 + $0x1d8] sm:$0xff]
        %v5409 = vld [vmem:[#allocation9 + $0x1e0] sm:$0xff]
        %v5410 = vld [vmem:[#allocation9 + $0x1e8] sm:$0xff]
        %v5411 = vld [vmem:[#allocation9 + $0x1f0] sm:$0xff]
        %v5412 = vld [vmem:[#allocation9 + $0x1f8] sm:$0xff]
        %v5413 = vld [vmem:[%s4] sm:$0x3]
        %v5415 = vperm.slane %v5413, 0
        %v5416 = vperm.slane %v5413, 1
        %v5483 = vunpack.c.l.b16 %v5349
        %v5484 = vunpack.c.h.b16 %v5349
        %v5485 = vunpack.c.l.b16 %v5350
        %v5486 = vunpack.c.h.b16 %v5350
        %v5487 = vunpack.c.l.b16 %v5351
        %v5488 = vunpack.c.h.b16 %v5351
        %v5489 = vunpack.c.l.b16 %v5352
        %v5490 = vunpack.c.h.b16 %v5352
        %v5491 = vunpack.c.l.b16 %v5353
        %v5492 = vunpack.c.h.b16 %v5353
        %v5493 = vunpack.c.l.b16 %v5354
        %v5494 = vunpack.c.h.b16 %v5354
        %v5495 = vunpack.c.l.b16 %v5355
        %v5496 = vunpack.c.h.b16 %v5355
        %v5497 = vunpack.c.l.b16 %v5356
        %v5498 = vunpack.c.h.b16 %v5356
        %v5499 = vunpack.c.l.b16 %v5357
        %v5500 = vunpack.c.h.b16 %v5357
        %v5501 = vunpack.c.l.b16 %v5358
        %v5502 = vunpack.c.h.b16 %v5358
        %v5503 = vunpack.c.l.b16 %v5359
        %v5504 = vunpack.c.h.b16 %v5359
        %v5505 = vunpack.c.l.b16 %v5360
        %v5506 = vunpack.c.h.b16 %v5360
        %v5507 = vunpack.c.l.b16 %v5361
        %v5508 = vunpack.c.h.b16 %v5361
        %v5509 = vunpack.c.l.b16 %v5362
        %v5510 = vunpack.c.h.b16 %v5362
        %v5511 = vunpack.c.l.b16 %v5363
        %v5512 = vunpack.c.h.b16 %v5363
        %v5513 = vunpack.c.l.b16 %v5364
        %v5514 = vunpack.c.h.b16 %v5364
        %v5515 = vunpack.c.l.b16 %v5365
        %v5516 = vunpack.c.h.b16 %v5365
        %v5517 = vunpack.c.l.b16 %v5366
        %v5518 = vunpack.c.h.b16 %v5366
        %v5519 = vunpack.c.l.b16 %v5367
        %v5520 = vunpack.c.h.b16 %v5367
        %v5521 = vunpack.c.l.b16 %v5368
        %v5522 = vunpack.c.h.b16 %v5368
        %v5523 = vunpack.c.l.b16 %v5369
        %v5524 = vunpack.c.h.b16 %v5369
        %v5525 = vunpack.c.l.b16 %v5370
        %v5526 = vunpack.c.h.b16 %v5370
        %v5527 = vunpack.c.l.b16 %v5371
        %v5528 = vunpack.c.h.b16 %v5371
        %v5529 = vunpack.c.l.b16 %v5372
        %v5530 = vunpack.c.h.b16 %v5372
        %v5531 = vunpack.c.l.b16 %v5373
        %v5532 = vunpack.c.h.b16 %v5373
        %v5533 = vunpack.c.l.b16 %v5374
        %v5534 = vunpack.c.h.b16 %v5374
        %v5535 = vunpack.c.l.b16 %v5375
        %v5536 = vunpack.c.h.b16 %v5375
        %v5537 = vunpack.c.l.b16 %v5376
        %v5538 = vunpack.c.h.b16 %v5376
        %v5539 = vunpack.c.l.b16 %v5377
        %v5540 = vunpack.c.h.b16 %v5377
        %v5541 = vunpack.c.l.b16 %v5378
        %v5542 = vunpack.c.h.b16 %v5378
        %v5543 = vunpack.c.l.b16 %v5379
        %v5544 = vunpack.c.h.b16 %v5379
        %v5545 = vunpack.c.l.b16 %v5380
        %v5546 = vunpack.c.h.b16 %v5380
        %v5547 = vunpack.c.l.b16 %v5381
        %v5548 = vunpack.c.h.b16 %v5381
        %v5549 = vunpack.c.l.b16 %v5382
        %v5550 = vunpack.c.h.b16 %v5382
        %v5551 = vunpack.c.l.b16 %v5383
        %v5552 = vunpack.c.h.b16 %v5383
        %v5553 = vunpack.c.l.b16 %v5384
        %v5554 = vunpack.c.h.b16 %v5384
        %v5555 = vunpack.c.l.b16 %v5385
        %v5556 = vunpack.c.h.b16 %v5385
        %v5557 = vunpack.c.l.b16 %v5386
        %v5558 = vunpack.c.h.b16 %v5386
        %v5559 = vunpack.c.l.b16 %v5387
        %v5560 = vunpack.c.h.b16 %v5387
        %v5561 = vunpack.c.l.b16 %v5388
        %v5562 = vunpack.c.h.b16 %v5388
        %v5563 = vunpack.c.l.b16 %v5389
        %v5564 = vunpack.c.h.b16 %v5389
        %v5565 = vunpack.c.l.b16 %v5390
        %v5566 = vunpack.c.h.b16 %v5390
        %v5567 = vunpack.c.l.b16 %v5391
        %v5568 = vunpack.c.h.b16 %v5391
        %v5569 = vunpack.c.l.b16 %v5392
        %v5570 = vunpack.c.h.b16 %v5392
        %v5571 = vunpack.c.l.b16 %v5393
        %v5572 = vunpack.c.h.b16 %v5393
        %v5573 = vunpack.c.l.b16 %v5394
        %v5574 = vunpack.c.h.b16 %v5394
        %v5575 = vunpack.c.l.b16 %v5395
        %v5576 = vunpack.c.h.b16 %v5395
        %v5577 = vunpack.c.l.b16 %v5396
        %v5578 = vunpack.c.h.b16 %v5396
        %v5579 = vunpack.c.l.b16 %v5397
        %v5580 = vunpack.c.h.b16 %v5397
        %v5581 = vunpack.c.l.b16 %v5398
        %v5582 = vunpack.c.h.b16 %v5398
        %v5583 = vunpack.c.l.b16 %v5399
        %v5584 = vunpack.c.h.b16 %v5399
        %v5585 = vunpack.c.l.b16 %v5400
        %v5586 = vunpack.c.h.b16 %v5400
        %v5587 = vunpack.c.l.b16 %v5401
        %v5588 = vunpack.c.h.b16 %v5401
        %v5589 = vunpack.c.l.b16 %v5402
        %v5590 = vunpack.c.h.b16 %v5402
        %v5591 = vunpack.c.l.b16 %v5403
        %v5592 = vunpack.c.h.b16 %v5403
        %v5593 = vunpack.c.l.b16 %v5404
        %v5594 = vunpack.c.h.b16 %v5404
        %v5595 = vunpack.c.l.b16 %v5405
        %v5596 = vunpack.c.h.b16 %v5405
        %v5597 = vunpack.c.l.b16 %v5406
        %v5598 = vunpack.c.h.b16 %v5406
        %v5599 = vunpack.c.l.b16 %v5407
        %v5600 = vunpack.c.h.b16 %v5407
        %v5601 = vunpack.c.l.b16 %v5408
        %v5602 = vunpack.c.h.b16 %v5408
        %v5603 = vunpack.c.l.b16 %v5409
        %v5604 = vunpack.c.h.b16 %v5409
        %v5605 = vunpack.c.l.b16 %v5410
        %v5606 = vunpack.c.h.b16 %v5410
        %v5607 = vunpack.c.l.b16 %v5411
        %v5608 = vunpack.c.h.b16 %v5411
        %v5609 = vunpack.c.l.b16 %v5412
        %v5610 = vunpack.c.h.b16 %v5412
        %v5611 = vpack.c.b16 %v5485, %v5483
        %v5612 = vpack.c.b16 %v5486, %v5484
        %v5613 = vpack.c.b16 %v5489, %v5487
        %v5614 = vpack.c.b16 %v5490, %v5488
        %v5615 = vpack.c.b16 %v5493, %v5491
        %v5616 = vpack.c.b16 %v5494, %v5492
        %v5617 = vpack.c.b16 %v5497, %v5495
        %v5618 = vpack.c.b16 %v5498, %v5496
        %v5619 = vpack.c.b16 %v5501, %v5499
        %v5620 = vpack.c.b16 %v5502, %v5500
        %v5621 = vpack.c.b16 %v5505, %v5503
        %v5622 = vpack.c.b16 %v5506, %v5504
        %v5623 = vpack.c.b16 %v5509, %v5507
        %v5624 = vpack.c.b16 %v5510, %v5508
        %v5625 = vpack.c.b16 %v5513, %v5511
        %v5626 = vpack.c.b16 %v5514, %v5512
        %v5627 = vpack.c.b16 %v5517, %v5515
        %v5628 = vpack.c.b16 %v5518, %v5516
        %v5629 = vpack.c.b16 %v5521, %v5519
        %v5630 = vpack.c.b16 %v5522, %v5520
        %v5631 = vpack.c.b16 %v5525, %v5523
        %v5632 = vpack.c.b16 %v5526, %v5524
        %v5633 = vpack.c.b16 %v5529, %v5527
        %v5634 = vpack.c.b16 %v5530, %v5528
        %v5635 = vpack.c.b16 %v5533, %v5531
        %v5636 = vpack.c.b16 %v5534, %v5532
        %v5637 = vpack.c.b16 %v5537, %v5535
        %v5638 = vpack.c.b16 %v5538, %v5536
        %v5639 = vpack.c.b16 %v5541, %v5539
        %v5640 = vpack.c.b16 %v5542, %v5540
        %v5641 = vpack.c.b16 %v5545, %v5543
        %v5642 = vpack.c.b16 %v5546, %v5544
        %v5643 = vpack.c.b16 %v5549, %v5547
        %v5644 = vpack.c.b16 %v5550, %v5548
        %v5645 = vpack.c.b16 %v5553, %v5551
        %v5646 = vpack.c.b16 %v5554, %v5552
        %v5647 = vpack.c.b16 %v5557, %v5555
        %v5648 = vpack.c.b16 %v5558, %v5556
        %v5649 = vpack.c.b16 %v5561, %v5559
        %v5650 = vpack.c.b16 %v5562, %v5560
        %v5651 = vpack.c.b16 %v5565, %v5563
        %v5652 = vpack.c.b16 %v5566, %v5564
        %v5653 = vpack.c.b16 %v5569, %v5567
        %v5654 = vpack.c.b16 %v5570, %v5568
        %v5655 = vpack.c.b16 %v5573, %v5571
        %v5656 = vpack.c.b16 %v5574, %v5572
        %v5657 = vpack.c.b16 %v5577, %v5575
        %v5658 = vpack.c.b16 %v5578, %v5576
        %v5659 = vpack.c.b16 %v5581, %v5579
        %v5660 = vpack.c.b16 %v5582, %v5580
        %v5661 = vpack.c.b16 %v5585, %v5583
        %v5662 = vpack.c.b16 %v5586, %v5584
        %v5663 = vpack.c.b16 %v5589, %v5587
        %v5664 = vpack.c.b16 %v5590, %v5588
        %v5665 = vpack.c.b16 %v5593, %v5591
        %v5666 = vpack.c.b16 %v5594, %v5592
        %v5667 = vpack.c.b16 %v5597, %v5595
        %v5668 = vpack.c.b16 %v5598, %v5596
        %v5669 = vpack.c.b16 %v5601, %v5599
        %v5670 = vpack.c.b16 %v5602, %v5600
        %v5671 = vpack.c.b16 %v5605, %v5603
        %v5672 = vpack.c.b16 %v5606, %v5604
        %v5673 = vpack.c.b16 %v5609, %v5607
        %v5674 = vpack.c.b16 %v5610, %v5608
        %5739 = vmatpush.bf16.msra.mxu0 %v5625
        %5740 = vmatpush.bf16.msra.mxu0 %v5623
        %5741 = vmatpush.bf16.msra.mxu0 %v5621
        %5742 = vmatpush.bf16.msra.mxu0 %v5619
        %5743 = vmatpush.bf16.msra.mxu0 %v5617
        %5744 = vmatpush.bf16.msra.mxu0 %v5615
        %5745 = vmatpush.bf16.msra.mxu0 %v5613
        %5746 = vmatpush.bf16.msra.mxu0 %v5611
        %5747 = vmatmul.bf16.gmra.mxu0 %v5285
        %v5748 = vpop.f32.mrf.mxu0
        %v5749 = vadd.f32 %v5415, %v5748
        %v5750 = vpop.f32.mrf.mxu0
        %v5751 = vadd.f32 %v5415, %v5750
        %5752 = vmatmul.bf16.gmra.mxu0 %v5289
        %v5753 = vpop.f32.mrf.mxu0
        %v5754 = vadd.f32 %v5415, %v5753
        %v5755 = vpop.f32.mrf.mxu0
        %v5756 = vadd.f32 %v5415, %v5755
        %5757 = vmatmul.bf16.gmra.mxu0 %v5293
        %v5758 = vpop.f32.mrf.mxu0
        %v5759 = vadd.f32 %v5415, %v5758
        %v5760 = vpop.f32.mrf.mxu0
        %v5761 = vadd.f32 %v5415, %v5760
        %5762 = vmatmul.bf16.gmra.mxu0 %v5297
        %v5763 = vpop.f32.mrf.mxu0
        %v5764 = vadd.f32 %v5415, %v5763
        %v5765 = vpop.f32.mrf.mxu0
        %v5766 = vadd.f32 %v5415, %v5765
        %5767 = vmatmul.bf16.gmra.mxu0 %v5301
        %v5768 = vpop.f32.mrf.mxu0
        %v5769 = vadd.f32 %v5415, %v5768
        %v5770 = vpop.f32.mrf.mxu0
        %v5771 = vadd.f32 %v5415, %v5770
        %5772 = vmatmul.bf16.gmra.mxu0 %v5305
        %v5773 = vpop.f32.mrf.mxu0
        %v5774 = vadd.f32 %v5415, %v5773
        %v5775 = vpop.f32.mrf.mxu0
        %v5776 = vadd.f32 %v5415, %v5775
        %5777 = vmatmul.bf16.gmra.mxu0 %v5309
        %v5778 = vpop.f32.mrf.mxu0
        %v5779 = vadd.f32 %v5415, %v5778
        %v5780 = vpop.f32.mrf.mxu0
        %v5781 = vadd.f32 %v5415, %v5780
        %5782 = vmatmul.bf16.gmra.mxu0 %v5313
        %v5783 = vpop.f32.mrf.mxu0
        %v5784 = vadd.f32 %v5415, %v5783
        %v5785 = vpop.f32.mrf.mxu0
        %v5786 = vadd.f32 %v5415, %v5785
        %5787 = vmatmul.bf16.gmra.mxu0 %v5317
        %v5788 = vpop.f32.mrf.mxu0
        %v5789 = vadd.f32 %v5415, %v5788
        %v5790 = vpop.f32.mrf.mxu0
        %v5791 = vadd.f32 %v5415, %v5790
        %5792 = vmatmul.bf16.gmra.mxu0 %v5321
        %v5793 = vpop.f32.mrf.mxu0
        %v5794 = vadd.f32 %v5415, %v5793
        %v5795 = vpop.f32.mrf.mxu0
        %v5796 = vadd.f32 %v5415, %v5795
        %5797 = vmatmul.bf16.gmra.mxu0 %v5325
        %v5798 = vpop.f32.mrf.mxu0
        %v5799 = vadd.f32 %v5415, %v5798
        %v5800 = vpop.f32.mrf.mxu0
        %v5801 = vadd.f32 %v5415, %v5800
        %5802 = vmatmul.bf16.gmra.mxu0 %v5329
        %v5803 = vpop.f32.mrf.mxu0
        %v5804 = vadd.f32 %v5415, %v5803
        %v5805 = vpop.f32.mrf.mxu0
        %v5806 = vadd.f32 %v5415, %v5805
        %5807 = vmatmul.bf16.gmra.mxu0 %v5333
        %v5808 = vpop.f32.mrf.mxu0
        %v5809 = vadd.f32 %v5415, %v5808
        %v5810 = vpop.f32.mrf.mxu0
        %v5811 = vadd.f32 %v5415, %v5810
        %5812 = vmatmul.bf16.gmra.mxu0 %v5337
        %v5813 = vpop.f32.mrf.mxu0
        %v5814 = vadd.f32 %v5415, %v5813
        %v5815 = vpop.f32.mrf.mxu0
        %v5816 = vadd.f32 %v5415, %v5815
        %5817 = vmatmul.bf16.gmra.mxu0 %v5341
        %v5818 = vpop.f32.mrf.mxu0
        %v5819 = vadd.f32 %v5415, %v5818
        %v5820 = vpop.f32.mrf.mxu0
        %v5821 = vadd.f32 %v5415, %v5820
        %5822 = vmatmul.bf16.gmra.mxu0 %v5345
        %v5823 = vpop.f32.mrf.mxu0
        %v5824 = vadd.f32 %v5415, %v5823
        %v5825 = vpop.f32.mrf.mxu0
        %v5826 = vadd.f32 %v5415, %v5825
        %5827 = vdwg.mxu0
        %5828 = vmatpush.bf16.msra.mxu0 %v5641
        %5829 = vmatpush.bf16.msra.mxu0 %v5639
        %5830 = vmatpush.bf16.msra.mxu0 %v5637
        %5831 = vmatpush.bf16.msra.mxu0 %v5635
        %5832 = vmatpush.bf16.msra.mxu0 %v5633
        %5833 = vmatpush.bf16.msra.mxu0 %v5631
        %5834 = vmatpush.bf16.msra.mxu0 %v5629
        %5835 = vmatpush.bf16.msra.mxu0 %v5627
        %5836 = vmatmul.bf16.gmra.mxu0 %v5286
        %v5837 = vpop.f32.mrf.mxu0
        %v5838 = vadd.f32 %v5749, %v5837
        %v5839 = vpop.f32.mrf.mxu0
        %v5840 = vadd.f32 %v5751, %v5839
        %5841 = vmatmul.bf16.gmra.mxu0 %v5290
        %v5842 = vpop.f32.mrf.mxu0
        %v5843 = vadd.f32 %v5754, %v5842
        %v5844 = vpop.f32.mrf.mxu0
        %v5845 = vadd.f32 %v5756, %v5844
        %5846 = vmatmul.bf16.gmra.mxu0 %v5294
        %v5847 = vpop.f32.mrf.mxu0
        %v5848 = vadd.f32 %v5759, %v5847
        %v5849 = vpop.f32.mrf.mxu0
        %v5850 = vadd.f32 %v5761, %v5849
        %5851 = vmatmul.bf16.gmra.mxu0 %v5298
        %v5852 = vpop.f32.mrf.mxu0
        %v5853 = vadd.f32 %v5764, %v5852
        %v5854 = vpop.f32.mrf.mxu0
        %v5855 = vadd.f32 %v5766, %v5854
        %5856 = vmatmul.bf16.gmra.mxu0 %v5302
        %v5857 = vpop.f32.mrf.mxu0
        %v5858 = vadd.f32 %v5769, %v5857
        %v5859 = vpop.f32.mrf.mxu0
        %v5860 = vadd.f32 %v5771, %v5859
        %5861 = vmatmul.bf16.gmra.mxu0 %v5306
        %v5862 = vpop.f32.mrf.mxu0
        %v5863 = vadd.f32 %v5774, %v5862
        %v5864 = vpop.f32.mrf.mxu0
        %v5865 = vadd.f32 %v5776, %v5864
        %5866 = vmatmul.bf16.gmra.mxu0 %v5310
        %v5867 = vpop.f32.mrf.mxu0
        %v5868 = vadd.f32 %v5779, %v5867
        %v5869 = vpop.f32.mrf.mxu0
        %v5870 = vadd.f32 %v5781, %v5869
        %5871 = vmatmul.bf16.gmra.mxu0 %v5314
        %v5872 = vpop.f32.mrf.mxu0
        %v5873 = vadd.f32 %v5784, %v5872
        %v5874 = vpop.f32.mrf.mxu0
        %v5875 = vadd.f32 %v5786, %v5874
        %5876 = vmatmul.bf16.gmra.mxu0 %v5318
        %v5877 = vpop.f32.mrf.mxu0
        %v5878 = vadd.f32 %v5789, %v5877
        %v5879 = vpop.f32.mrf.mxu0
        %v5880 = vadd.f32 %v5791, %v5879
        %5881 = vmatmul.bf16.gmra.mxu0 %v5322
        %v5882 = vpop.f32.mrf.mxu0
        %v5883 = vadd.f32 %v5794, %v5882
        %v5884 = vpop.f32.mrf.mxu0
        %v5885 = vadd.f32 %v5796, %v5884
        %5886 = vmatmul.bf16.gmra.mxu0 %v5326
        %v5887 = vpop.f32.mrf.mxu0
        %v5888 = vadd.f32 %v5799, %v5887
        %v5889 = vpop.f32.mrf.mxu0
        %v5890 = vadd.f32 %v5801, %v5889
        %5891 = vmatmul.bf16.gmra.mxu0 %v5330
        %v5892 = vpop.f32.mrf.mxu0
        %v5893 = vadd.f32 %v5804, %v5892
        %v5894 = vpop.f32.mrf.mxu0
        %v5895 = vadd.f32 %v5806, %v5894
        %5896 = vmatmul.bf16.gmra.mxu0 %v5334
        %v5897 = vpop.f32.mrf.mxu0
        %v5898 = vadd.f32 %v5809, %v5897
        %v5899 = vpop.f32.mrf.mxu0
        %v5900 = vadd.f32 %v5811, %v5899
        %5901 = vmatmul.bf16.gmra.mxu0 %v5338
        %v5902 = vpop.f32.mrf.mxu0
        %v5903 = vadd.f32 %v5814, %v5902
        %v5904 = vpop.f32.mrf.mxu0
        %v5905 = vadd.f32 %v5816, %v5904
        %5906 = vmatmul.bf16.gmra.mxu0 %v5342
        %v5907 = vpop.f32.mrf.mxu0
        %v5908 = vadd.f32 %v5819, %v5907
        %v5909 = vpop.f32.mrf.mxu0
        %v5910 = vadd.f32 %v5821, %v5909
        %5911 = vmatmul.bf16.gmra.mxu0 %v5346
        %v5912 = vpop.f32.mrf.mxu0
        %v5913 = vadd.f32 %v5824, %v5912
        %v5914 = vpop.f32.mrf.mxu0
        %v5915 = vadd.f32 %v5826, %v5914
        %5916 = vdwg.mxu0
        %5917 = vmatpush.bf16.msra.mxu0 %v5657
        %5918 = vmatpush.bf16.msra.mxu0 %v5655
        %5919 = vmatpush.bf16.msra.mxu0 %v5653
        %5920 = vmatpush.bf16.msra.mxu0 %v5651
        %5921 = vmatpush.bf16.msra.mxu0 %v5649
        %5922 = vmatpush.bf16.msra.mxu0 %v5647
        %5923 = vmatpush.bf16.msra.mxu0 %v5645
        %5924 = vmatpush.bf16.msra.mxu0 %v5643
        %5925 = vmatmul.bf16.gmra.mxu0 %v5287
        %v5926 = vpop.f32.mrf.mxu0
        %v5927 = vadd.f32 %v5838, %v5926
        %v5928 = vpop.f32.mrf.mxu0
        %v5929 = vadd.f32 %v5840, %v5928
        %5930 = vmatmul.bf16.gmra.mxu0 %v5291
        %v5931 = vpop.f32.mrf.mxu0
        %v5932 = vadd.f32 %v5843, %v5931
        %v5933 = vpop.f32.mrf.mxu0
        %v5934 = vadd.f32 %v5845, %v5933
        %5935 = vmatmul.bf16.gmra.mxu0 %v5295
        %v5936 = vpop.f32.mrf.mxu0
        %v5937 = vadd.f32 %v5848, %v5936
        %v5938 = vpop.f32.mrf.mxu0
        %v5939 = vadd.f32 %v5850, %v5938
        %5940 = vmatmul.bf16.gmra.mxu0 %v5299
        %v5941 = vpop.f32.mrf.mxu0
        %v5942 = vadd.f32 %v5853, %v5941
        %v5943 = vpop.f32.mrf.mxu0
        %v5944 = vadd.f32 %v5855, %v5943
        %5945 = vmatmul.bf16.gmra.mxu0 %v5303
        %v5946 = vpop.f32.mrf.mxu0
        %v5947 = vadd.f32 %v5858, %v5946
        %v5948 = vpop.f32.mrf.mxu0
        %v5949 = vadd.f32 %v5860, %v5948
        %5950 = vmatmul.bf16.gmra.mxu0 %v5307
        %v5951 = vpop.f32.mrf.mxu0
        %v5952 = vadd.f32 %v5863, %v5951
        %v5953 = vpop.f32.mrf.mxu0
        %v5954 = vadd.f32 %v5865, %v5953
        %5955 = vmatmul.bf16.gmra.mxu0 %v5311
        %v5956 = vpop.f32.mrf.mxu0
        %v5957 = vadd.f32 %v5868, %v5956
        %v5958 = vpop.f32.mrf.mxu0
        %v5959 = vadd.f32 %v5870, %v5958
        %5960 = vmatmul.bf16.gmra.mxu0 %v5315
        %v5961 = vpop.f32.mrf.mxu0
        %v5962 = vadd.f32 %v5873, %v5961
        %v5963 = vpop.f32.mrf.mxu0
        %v5964 = vadd.f32 %v5875, %v5963
        %5965 = vmatmul.bf16.gmra.mxu0 %v5319
        %v5966 = vpop.f32.mrf.mxu0
        %v5967 = vadd.f32 %v5878, %v5966
        %v5968 = vpop.f32.mrf.mxu0
        %v5969 = vadd.f32 %v5880, %v5968
        %5970 = vmatmul.bf16.gmra.mxu0 %v5323
        %v5971 = vpop.f32.mrf.mxu0
        %v5972 = vadd.f32 %v5883, %v5971
        %v5973 = vpop.f32.mrf.mxu0
        %v5974 = vadd.f32 %v5885, %v5973
        %5975 = vmatmul.bf16.gmra.mxu0 %v5327
        %v5976 = vpop.f32.mrf.mxu0
        %v5977 = vadd.f32 %v5888, %v5976
        %v5978 = vpop.f32.mrf.mxu0
        %v5979 = vadd.f32 %v5890, %v5978
        %5980 = vmatmul.bf16.gmra.mxu0 %v5331
        %v5981 = vpop.f32.mrf.mxu0
        %v5982 = vadd.f32 %v5893, %v5981
        %v5983 = vpop.f32.mrf.mxu0
        %v5984 = vadd.f32 %v5895, %v5983
        %5985 = vmatmul.bf16.gmra.mxu0 %v5335
        %v5986 = vpop.f32.mrf.mxu0
        %v5987 = vadd.f32 %v5898, %v5986
        %v5988 = vpop.f32.mrf.mxu0
        %v5989 = vadd.f32 %v5900, %v5988
        %5990 = vmatmul.bf16.gmra.mxu0 %v5339
        %v5991 = vpop.f32.mrf.mxu0
        %v5992 = vadd.f32 %v5903, %v5991
        %v5993 = vpop.f32.mrf.mxu0
        %v5994 = vadd.f32 %v5905, %v5993
        %5995 = vmatmul.bf16.gmra.mxu0 %v5343
        %v5996 = vpop.f32.mrf.mxu0
        %v5997 = vadd.f32 %v5908, %v5996
        %v5998 = vpop.f32.mrf.mxu0
        %v5999 = vadd.f32 %v5910, %v5998
        %6000 = vmatmul.bf16.gmra.mxu0 %v5347
        %v6001 = vpop.f32.mrf.mxu0
        %v6002 = vadd.f32 %v5913, %v6001
        %v6003 = vpop.f32.mrf.mxu0
        %v6004 = vadd.f32 %v5915, %v6003
        %6005 = vdwg.mxu0
        %6006 = vmatpush.bf16.msra.mxu0 %v5673
        %6007 = vmatpush.bf16.msra.mxu0 %v5671
        %6008 = vmatpush.bf16.msra.mxu0 %v5669
        %6009 = vmatpush.bf16.msra.mxu0 %v5667
        %6010 = vmatpush.bf16.msra.mxu0 %v5665
        %6011 = vmatpush.bf16.msra.mxu0 %v5663
        %6012 = vmatpush.bf16.msra.mxu0 %v5661
        %6013 = vmatpush.bf16.msra.mxu0 %v5659
        %6014 = vmatmul.bf16.gmra.mxu0 %v5288
        %v6015 = vpop.f32.mrf.mxu0
        %v6016 = vadd.f32 %v5927, %v6015
        %v6017 = vpop.f32.mrf.mxu0
        %v6018 = vadd.f32 %v5929, %v6017
        %6019 = vmatmul.bf16.gmra.mxu0 %v5292
        %v6020 = vpop.f32.mrf.mxu0
        %v6021 = vadd.f32 %v5932, %v6020
        %v6022 = vpop.f32.mrf.mxu0
        %v6023 = vadd.f32 %v5934, %v6022
        %6024 = vmatmul.bf16.gmra.mxu0 %v5296
        %v6025 = vpop.f32.mrf.mxu0
        %v6026 = vadd.f32 %v5937, %v6025
        %v6027 = vpop.f32.mrf.mxu0
        %v6028 = vadd.f32 %v5939, %v6027
        %6029 = vmatmul.bf16.gmra.mxu0 %v5300
        %v6030 = vpop.f32.mrf.mxu0
        %v6031 = vadd.f32 %v5942, %v6030
        %v6032 = vpop.f32.mrf.mxu0
        %v6033 = vadd.f32 %v5944, %v6032
        %6034 = vmatmul.bf16.gmra.mxu0 %v5304
        %v6035 = vpop.f32.mrf.mxu0
        %v6036 = vadd.f32 %v5947, %v6035
        %v6037 = vpop.f32.mrf.mxu0
        %v6038 = vadd.f32 %v5949, %v6037
        %6039 = vmatmul.bf16.gmra.mxu0 %v5308
        %v6040 = vpop.f32.mrf.mxu0
        %v6041 = vadd.f32 %v5952, %v6040
        %v6042 = vpop.f32.mrf.mxu0
        %v6043 = vadd.f32 %v5954, %v6042
        %6044 = vmatmul.bf16.gmra.mxu0 %v5312
        %v6045 = vpop.f32.mrf.mxu0
        %v6046 = vadd.f32 %v5957, %v6045
        %v6047 = vpop.f32.mrf.mxu0
        %v6048 = vadd.f32 %v5959, %v6047
        %6049 = vmatmul.bf16.gmra.mxu0 %v5316
        %v6050 = vpop.f32.mrf.mxu0
        %v6051 = vadd.f32 %v5962, %v6050
        %v6052 = vpop.f32.mrf.mxu0
        %v6053 = vadd.f32 %v5964, %v6052
        %6054 = vmatmul.bf16.gmra.mxu0 %v5320
        %v6055 = vpop.f32.mrf.mxu0
        %v6056 = vadd.f32 %v5967, %v6055
        %v6057 = vpop.f32.mrf.mxu0
        %v6058 = vadd.f32 %v5969, %v6057
        %6059 = vmatmul.bf16.gmra.mxu0 %v5324
        %v6060 = vpop.f32.mrf.mxu0
        %v6061 = vadd.f32 %v5972, %v6060
        %v6062 = vpop.f32.mrf.mxu0
        %v6063 = vadd.f32 %v5974, %v6062
        %6064 = vmatmul.bf16.gmra.mxu0 %v5328
        %v6065 = vpop.f32.mrf.mxu0
        %v6066 = vadd.f32 %v5977, %v6065
        %v6067 = vpop.f32.mrf.mxu0
        %v6068 = vadd.f32 %v5979, %v6067
        %6069 = vmatmul.bf16.gmra.mxu0 %v5332
        %v6070 = vpop.f32.mrf.mxu0
        %v6071 = vadd.f32 %v5982, %v6070
        %v6072 = vpop.f32.mrf.mxu0
        %v6073 = vadd.f32 %v5984, %v6072
        %6074 = vmatmul.bf16.gmra.mxu0 %v5336
        %v6075 = vpop.f32.mrf.mxu0
        %v6076 = vadd.f32 %v5987, %v6075
        %v6077 = vpop.f32.mrf.mxu0
        %v6078 = vadd.f32 %v5989, %v6077
        %6079 = vmatmul.bf16.gmra.mxu0 %v5340
        %v6080 = vpop.f32.mrf.mxu0
        %v6081 = vadd.f32 %v5992, %v6080
        %v6082 = vpop.f32.mrf.mxu0
        %v6083 = vadd.f32 %v5994, %v6082
        %6084 = vmatmul.bf16.gmra.mxu0 %v5344
        %v6085 = vpop.f32.mrf.mxu0
        %v6086 = vadd.f32 %v5997, %v6085
        %v6087 = vpop.f32.mrf.mxu0
        %v6088 = vadd.f32 %v5999, %v6087
        %6089 = vmatmul.bf16.gmra.mxu0 %v5348
        %v6090 = vpop.f32.mrf.mxu0
        %v6091 = vadd.f32 %v6002, %v6090
        %v6092 = vpop.f32.mrf.mxu0
        %v6093 = vadd.f32 %v6004, %v6092
        %6094 = vdwg.mxu0
        %6095 = vmatpush.bf16.msra.mxu0 %v5626
        %6096 = vmatpush.bf16.msra.mxu0 %v5624
        %6097 = vmatpush.bf16.msra.mxu0 %v5622
        %6098 = vmatpush.bf16.msra.mxu0 %v5620
        %6099 = vmatpush.bf16.msra.mxu0 %v5618
        %6100 = vmatpush.bf16.msra.mxu0 %v5616
        %6101 = vmatpush.bf16.msra.mxu0 %v5614
        %6102 = vmatpush.bf16.msra.mxu0 %v5612
        %6103 = vmatmul.bf16.gmra.mxu0 %v5285
        %v6104 = vpop.f32.mrf.mxu0
        %v6105 = vadd.f32 %v5416, %v6104
        %v6106 = vpop.f32.mrf.mxu0
        %v6107 = vadd.f32 %v5416, %v6106
        %6108 = vmatmul.bf16.gmra.mxu0 %v5289
        %v6109 = vpop.f32.mrf.mxu0
        %v6110 = vadd.f32 %v5416, %v6109
        %v6111 = vpop.f32.mrf.mxu0
        %v6112 = vadd.f32 %v5416, %v6111
        %6113 = vmatmul.bf16.gmra.mxu0 %v5293
        %v6114 = vpop.f32.mrf.mxu0
        %v6115 = vadd.f32 %v5416, %v6114
        %v6116 = vpop.f32.mrf.mxu0
        %v6117 = vadd.f32 %v5416, %v6116
        %6118 = vmatmul.bf16.gmra.mxu0 %v5297
        %v6119 = vpop.f32.mrf.mxu0
        %v6120 = vadd.f32 %v5416, %v6119
        %v6121 = vpop.f32.mrf.mxu0
        %v6122 = vadd.f32 %v5416, %v6121
        %6123 = vmatmul.bf16.gmra.mxu0 %v5301
        %v6124 = vpop.f32.mrf.mxu0
        %v6125 = vadd.f32 %v5416, %v6124
        %v6126 = vpop.f32.mrf.mxu0
        %v6127 = vadd.f32 %v5416, %v6126
        %6128 = vmatmul.bf16.gmra.mxu0 %v5305
        %v6129 = vpop.f32.mrf.mxu0
        %v6130 = vadd.f32 %v5416, %v6129
        %v6131 = vpop.f32.mrf.mxu0
        %v6132 = vadd.f32 %v5416, %v6131
        %6133 = vmatmul.bf16.gmra.mxu0 %v5309
        %v6134 = vpop.f32.mrf.mxu0
        %v6135 = vadd.f32 %v5416, %v6134
        %v6136 = vpop.f32.mrf.mxu0
        %v6137 = vadd.f32 %v5416, %v6136
        %6138 = vmatmul.bf16.gmra.mxu0 %v5313
        %v6139 = vpop.f32.mrf.mxu0
        %v6140 = vadd.f32 %v5416, %v6139
        %v6141 = vpop.f32.mrf.mxu0
        %v6142 = vadd.f32 %v5416, %v6141
        %6143 = vmatmul.bf16.gmra.mxu0 %v5317
        %v6144 = vpop.f32.mrf.mxu0
        %v6145 = vadd.f32 %v5416, %v6144
        %v6146 = vpop.f32.mrf.mxu0
        %v6147 = vadd.f32 %v5416, %v6146
        %6148 = vmatmul.bf16.gmra.mxu0 %v5321
        %v6149 = vpop.f32.mrf.mxu0
        %v6150 = vadd.f32 %v5416, %v6149
        %v6151 = vpop.f32.mrf.mxu0
        %v6152 = vadd.f32 %v5416, %v6151
        %6153 = vmatmul.bf16.gmra.mxu0 %v5325
        %v6154 = vpop.f32.mrf.mxu0
        %v6155 = vadd.f32 %v5416, %v6154
        %v6156 = vpop.f32.mrf.mxu0
        %v6157 = vadd.f32 %v5416, %v6156
        %6158 = vmatmul.bf16.gmra.mxu0 %v5329
        %v6159 = vpop.f32.mrf.mxu0
        %v6160 = vadd.f32 %v5416, %v6159
        %v6161 = vpop.f32.mrf.mxu0
        %v6162 = vadd.f32 %v5416, %v6161
        %6163 = vmatmul.bf16.gmra.mxu0 %v5333
        %v6164 = vpop.f32.mrf.mxu0
        %v6165 = vadd.f32 %v5416, %v6164
        %v6166 = vpop.f32.mrf.mxu0
        %v6167 = vadd.f32 %v5416, %v6166
        %6168 = vmatmul.bf16.gmra.mxu0 %v5337
        %v6169 = vpop.f32.mrf.mxu0
        %v6170 = vadd.f32 %v5416, %v6169
        %v6171 = vpop.f32.mrf.mxu0
        %v6172 = vadd.f32 %v5416, %v6171
        %6173 = vmatmul.bf16.gmra.mxu0 %v5341
        %v6174 = vpop.f32.mrf.mxu0
        %v6175 = vadd.f32 %v5416, %v6174
        %v6176 = vpop.f32.mrf.mxu0
        %v6177 = vadd.f32 %v5416, %v6176
        %6178 = vmatmul.bf16.gmra.mxu0 %v5345
        %v6179 = vpop.f32.mrf.mxu0
        %v6180 = vadd.f32 %v5416, %v6179
        %v6181 = vpop.f32.mrf.mxu0
        %v6182 = vadd.f32 %v5416, %v6181
        %6183 = vdwg.mxu0
        %6184 = vmatpush.bf16.msra.mxu0 %v5642
        %6185 = vmatpush.bf16.msra.mxu0 %v5640
        %6186 = vmatpush.bf16.msra.mxu0 %v5638
        %6187 = vmatpush.bf16.msra.mxu0 %v5636
        %6188 = vmatpush.bf16.msra.mxu0 %v5634
        %6189 = vmatpush.bf16.msra.mxu0 %v5632
        %6190 = vmatpush.bf16.msra.mxu0 %v5630
        %6191 = vmatpush.bf16.msra.mxu0 %v5628
        %6192 = vmatmul.bf16.gmra.mxu0 %v5286
        %v6193 = vpop.f32.mrf.mxu0
        %v6194 = vadd.f32 %v6105, %v6193
        %v6195 = vpop.f32.mrf.mxu0
        %v6196 = vadd.f32 %v6107, %v6195
        %6197 = vmatmul.bf16.gmra.mxu0 %v5290
        %v6198 = vpop.f32.mrf.mxu0
        %v6199 = vadd.f32 %v6110, %v6198
        %v6200 = vpop.f32.mrf.mxu0
        %v6201 = vadd.f32 %v6112, %v6200
        %6202 = vmatmul.bf16.gmra.mxu0 %v5294
        %v6203 = vpop.f32.mrf.mxu0
        %v6204 = vadd.f32 %v6115, %v6203
        %v6205 = vpop.f32.mrf.mxu0
        %v6206 = vadd.f32 %v6117, %v6205
        %6207 = vmatmul.bf16.gmra.mxu0 %v5298
        %v6208 = vpop.f32.mrf.mxu0
        %v6209 = vadd.f32 %v6120, %v6208
        %v6210 = vpop.f32.mrf.mxu0
        %v6211 = vadd.f32 %v6122, %v6210
        %6212 = vmatmul.bf16.gmra.mxu0 %v5302
        %v6213 = vpop.f32.mrf.mxu0
        %v6214 = vadd.f32 %v6125, %v6213
        %v6215 = vpop.f32.mrf.mxu0
        %v6216 = vadd.f32 %v6127, %v6215
        %6217 = vmatmul.bf16.gmra.mxu0 %v5306
        %v6218 = vpop.f32.mrf.mxu0
        %v6219 = vadd.f32 %v6130, %v6218
        %v6220 = vpop.f32.mrf.mxu0
        %v6221 = vadd.f32 %v6132, %v6220
        %6222 = vmatmul.bf16.gmra.mxu0 %v5310
        %v6223 = vpop.f32.mrf.mxu0
        %v6224 = vadd.f32 %v6135, %v6223
        %v6225 = vpop.f32.mrf.mxu0
        %v6226 = vadd.f32 %v6137, %v6225
        %6227 = vmatmul.bf16.gmra.mxu0 %v5314
        %v6228 = vpop.f32.mrf.mxu0
        %v6229 = vadd.f32 %v6140, %v6228
        %v6230 = vpop.f32.mrf.mxu0
        %v6231 = vadd.f32 %v6142, %v6230
        %6232 = vmatmul.bf16.gmra.mxu0 %v5318
        %v6233 = vpop.f32.mrf.mxu0
        %v6234 = vadd.f32 %v6145, %v6233
        %v6235 = vpop.f32.mrf.mxu0
        %v6236 = vadd.f32 %v6147, %v6235
        %6237 = vmatmul.bf16.gmra.mxu0 %v5322
        %v6238 = vpop.f32.mrf.mxu0
        %v6239 = vadd.f32 %v6150, %v6238
        %v6240 = vpop.f32.mrf.mxu0
        %v6241 = vadd.f32 %v6152, %v6240
        %6242 = vmatmul.bf16.gmra.mxu0 %v5326
        %v6243 = vpop.f32.mrf.mxu0
        %v6244 = vadd.f32 %v6155, %v6243
        %v6245 = vpop.f32.mrf.mxu0
        %v6246 = vadd.f32 %v6157, %v6245
        %6247 = vmatmul.bf16.gmra.mxu0 %v5330
        %v6248 = vpop.f32.mrf.mxu0
        %v6249 = vadd.f32 %v6160, %v6248
        %v6250 = vpop.f32.mrf.mxu0
        %v6251 = vadd.f32 %v6162, %v6250
        %6252 = vmatmul.bf16.gmra.mxu0 %v5334
        %v6253 = vpop.f32.mrf.mxu0
        %v6254 = vadd.f32 %v6165, %v6253
        %v6255 = vpop.f32.mrf.mxu0
        %v6256 = vadd.f32 %v6167, %v6255
        %6257 = vmatmul.bf16.gmra.mxu0 %v5338
        %v6258 = vpop.f32.mrf.mxu0
        %v6259 = vadd.f32 %v6170, %v6258
        %v6260 = vpop.f32.mrf.mxu0
        %v6261 = vadd.f32 %v6172, %v6260
        %6262 = vmatmul.bf16.gmra.mxu0 %v5342
        %v6263 = vpop.f32.mrf.mxu0
        %v6264 = vadd.f32 %v6175, %v6263
        %v6265 = vpop.f32.mrf.mxu0
        %v6266 = vadd.f32 %v6177, %v6265
        %6267 = vmatmul.bf16.gmra.mxu0 %v5346
        %v6268 = vpop.f32.mrf.mxu0
        %v6269 = vadd.f32 %v6180, %v6268
        %v6270 = vpop.f32.mrf.mxu0
        %v6271 = vadd.f32 %v6182, %v6270
        %6272 = vdwg.mxu0
        %6273 = vmatpush.bf16.msra.mxu0 %v5658
        %6274 = vmatpush.bf16.msra.mxu0 %v5656
        %6275 = vmatpush.bf16.msra.mxu0 %v5654
        %6276 = vmatpush.bf16.msra.mxu0 %v5652
        %6277 = vmatpush.bf16.msra.mxu0 %v5650
        %6278 = vmatpush.bf16.msra.mxu0 %v5648
        %6279 = vmatpush.bf16.msra.mxu0 %v5646
        %6280 = vmatpush.bf16.msra.mxu0 %v5644
        %6281 = vmatmul.bf16.gmra.mxu0 %v5287
        %v6282 = vpop.f32.mrf.mxu0
        %v6283 = vadd.f32 %v6194, %v6282
        %v6284 = vpop.f32.mrf.mxu0
        %v6285 = vadd.f32 %v6196, %v6284
        %6286 = vmatmul.bf16.gmra.mxu0 %v5291
        %v6287 = vpop.f32.mrf.mxu0
        %v6288 = vadd.f32 %v6199, %v6287
        %v6289 = vpop.f32.mrf.mxu0
        %v6290 = vadd.f32 %v6201, %v6289
        %6291 = vmatmul.bf16.gmra.mxu0 %v5295
        %v6292 = vpop.f32.mrf.mxu0
        %v6293 = vadd.f32 %v6204, %v6292
        %v6294 = vpop.f32.mrf.mxu0
        %v6295 = vadd.f32 %v6206, %v6294
        %6296 = vmatmul.bf16.gmra.mxu0 %v5299
        %v6297 = vpop.f32.mrf.mxu0
        %v6298 = vadd.f32 %v6209, %v6297
        %v6299 = vpop.f32.mrf.mxu0
        %v6300 = vadd.f32 %v6211, %v6299
        %6301 = vmatmul.bf16.gmra.mxu0 %v5303
        %v6302 = vpop.f32.mrf.mxu0
        %v6303 = vadd.f32 %v6214, %v6302
        %v6304 = vpop.f32.mrf.mxu0
        %v6305 = vadd.f32 %v6216, %v6304
        %6306 = vmatmul.bf16.gmra.mxu0 %v5307
        %v6307 = vpop.f32.mrf.mxu0
        %v6308 = vadd.f32 %v6219, %v6307
        %v6309 = vpop.f32.mrf.mxu0
        %v6310 = vadd.f32 %v6221, %v6309
        %6311 = vmatmul.bf16.gmra.mxu0 %v5311
        %v6312 = vpop.f32.mrf.mxu0
        %v6313 = vadd.f32 %v6224, %v6312
        %v6314 = vpop.f32.mrf.mxu0
        %v6315 = vadd.f32 %v6226, %v6314
        %6316 = vmatmul.bf16.gmra.mxu0 %v5315
        %v6317 = vpop.f32.mrf.mxu0
        %v6318 = vadd.f32 %v6229, %v6317
        %v6319 = vpop.f32.mrf.mxu0
        %v6320 = vadd.f32 %v6231, %v6319
        %6321 = vmatmul.bf16.gmra.mxu0 %v5319
        %v6322 = vpop.f32.mrf.mxu0
        %v6323 = vadd.f32 %v6234, %v6322
        %v6324 = vpop.f32.mrf.mxu0
        %v6325 = vadd.f32 %v6236, %v6324
        %6326 = vmatmul.bf16.gmra.mxu0 %v5323
        %v6327 = vpop.f32.mrf.mxu0
        %v6328 = vadd.f32 %v6239, %v6327
        %v6329 = vpop.f32.mrf.mxu0
        %v6330 = vadd.f32 %v6241, %v6329
        %6331 = vmatmul.bf16.gmra.mxu0 %v5327
        %v6332 = vpop.f32.mrf.mxu0
        %v6333 = vadd.f32 %v6244, %v6332
        %v6334 = vpop.f32.mrf.mxu0
        %v6335 = vadd.f32 %v6246, %v6334
        %6336 = vmatmul.bf16.gmra.mxu0 %v5331
        %v6337 = vpop.f32.mrf.mxu0
        %v6338 = vadd.f32 %v6249, %v6337
        %v6339 = vpop.f32.mrf.mxu0
        %v6340 = vadd.f32 %v6251, %v6339
        %6341 = vmatmul.bf16.gmra.mxu0 %v5335
        %v6342 = vpop.f32.mrf.mxu0
        %v6343 = vadd.f32 %v6254, %v6342
        %v6344 = vpop.f32.mrf.mxu0
        %v6345 = vadd.f32 %v6256, %v6344
        %6346 = vmatmul.bf16.gmra.mxu0 %v5339
        %v6347 = vpop.f32.mrf.mxu0
        %v6348 = vadd.f32 %v6259, %v6347
        %v6349 = vpop.f32.mrf.mxu0
        %v6350 = vadd.f32 %v6261, %v6349
        %6351 = vmatmul.bf16.gmra.mxu0 %v5343
        %v6352 = vpop.f32.mrf.mxu0
        %v6353 = vadd.f32 %v6264, %v6352
        %v6354 = vpop.f32.mrf.mxu0
        %v6355 = vadd.f32 %v6266, %v6354
        %6356 = vmatmul.bf16.gmra.mxu0 %v5347
        %v6357 = vpop.f32.mrf.mxu0
        %v6358 = vadd.f32 %v6269, %v6357
        %v6359 = vpop.f32.mrf.mxu0
        %v6360 = vadd.f32 %v6271, %v6359
        %6361 = vdwg.mxu0
        %6362 = vmatpush.bf16.msra.mxu0 %v5674
        %6363 = vmatpush.bf16.msra.mxu0 %v5672
        %6364 = vmatpush.bf16.msra.mxu0 %v5670
        %6365 = vmatpush.bf16.msra.mxu0 %v5668
        %6366 = vmatpush.bf16.msra.mxu0 %v5666
        %6367 = vmatpush.bf16.msra.mxu0 %v5664
        %6368 = vmatpush.bf16.msra.mxu0 %v5662
        %6369 = vmatpush.bf16.msra.mxu0 %v5660
        %6370 = vmatmul.bf16.gmra.mxu0 %v5288
        %v6371 = vpop.f32.mrf.mxu0
        %v6372 = vadd.f32 %v6283, %v6371
        %v6373 = vpop.f32.mrf.mxu0
        %v6374 = vadd.f32 %v6285, %v6373
        %6375 = vmatmul.bf16.gmra.mxu0 %v5292
        %v6376 = vpop.f32.mrf.mxu0
        %v6377 = vadd.f32 %v6288, %v6376
        %v6378 = vpop.f32.mrf.mxu0
        %v6379 = vadd.f32 %v6290, %v6378
        %6380 = vmatmul.bf16.gmra.mxu0 %v5296
        %v6381 = vpop.f32.mrf.mxu0
        %v6382 = vadd.f32 %v6293, %v6381
        %v6383 = vpop.f32.mrf.mxu0
        %v6384 = vadd.f32 %v6295, %v6383
        %6385 = vmatmul.bf16.gmra.mxu0 %v5300
        %v6386 = vpop.f32.mrf.mxu0
        %v6387 = vadd.f32 %v6298, %v6386
        %v6388 = vpop.f32.mrf.mxu0
        %v6389 = vadd.f32 %v6300, %v6388
        %6390 = vmatmul.bf16.gmra.mxu0 %v5304
        %v6391 = vpop.f32.mrf.mxu0
        %v6392 = vadd.f32 %v6303, %v6391
        %v6393 = vpop.f32.mrf.mxu0
        %v6394 = vadd.f32 %v6305, %v6393
        %6395 = vmatmul.bf16.gmra.mxu0 %v5308
        %v6396 = vpop.f32.mrf.mxu0
        %v6397 = vadd.f32 %v6308, %v6396
        %v6398 = vpop.f32.mrf.mxu0
        %v6399 = vadd.f32 %v6310, %v6398
        %6400 = vmatmul.bf16.gmra.mxu0 %v5312
        %v6401 = vpop.f32.mrf.mxu0
        %v6402 = vadd.f32 %v6313, %v6401
        %v6403 = vpop.f32.mrf.mxu0
        %v6404 = vadd.f32 %v6315, %v6403
        %6405 = vmatmul.bf16.gmra.mxu0 %v5316
        %v6406 = vpop.f32.mrf.mxu0
        %v6407 = vadd.f32 %v6318, %v6406
        %v6408 = vpop.f32.mrf.mxu0
        %v6409 = vadd.f32 %v6320, %v6408
        %6410 = vmatmul.bf16.gmra.mxu0 %v5320
        %v6411 = vpop.f32.mrf.mxu0
        %v6412 = vadd.f32 %v6323, %v6411
        %v6413 = vpop.f32.mrf.mxu0
        %v6414 = vadd.f32 %v6325, %v6413
        %6415 = vmatmul.bf16.gmra.mxu0 %v5324
        %v6416 = vpop.f32.mrf.mxu0
        %v6417 = vadd.f32 %v6328, %v6416
        %v6418 = vpop.f32.mrf.mxu0
        %v6419 = vadd.f32 %v6330, %v6418
        %6420 = vmatmul.bf16.gmra.mxu0 %v5328
        %v6421 = vpop.f32.mrf.mxu0
        %v6422 = vadd.f32 %v6333, %v6421
        %v6423 = vpop.f32.mrf.mxu0
        %v6424 = vadd.f32 %v6335, %v6423
        %6425 = vmatmul.bf16.gmra.mxu0 %v5332
        %v6426 = vpop.f32.mrf.mxu0
        %v6427 = vadd.f32 %v6338, %v6426
        %v6428 = vpop.f32.mrf.mxu0
        %v6429 = vadd.f32 %v6340, %v6428
        %6430 = vmatmul.bf16.gmra.mxu0 %v5336
        %v6431 = vpop.f32.mrf.mxu0
        %v6432 = vadd.f32 %v6343, %v6431
        %v6433 = vpop.f32.mrf.mxu0
        %v6434 = vadd.f32 %v6345, %v6433
        %6435 = vmatmul.bf16.gmra.mxu0 %v5340
        %v6436 = vpop.f32.mrf.mxu0
        %v6437 = vadd.f32 %v6348, %v6436
        %v6438 = vpop.f32.mrf.mxu0
        %v6439 = vadd.f32 %v6350, %v6438
        %6440 = vmatmul.bf16.gmra.mxu0 %v5344
        %v6441 = vpop.f32.mrf.mxu0
        %v6442 = vadd.f32 %v6353, %v6441
        %v6443 = vpop.f32.mrf.mxu0
        %v6444 = vadd.f32 %v6355, %v6443
        %6445 = vmatmul.bf16.gmra.mxu0 %v5348
        %v6446 = vpop.f32.mrf.mxu0
        %v6447 = vadd.f32 %v6358, %v6446
        %v6448 = vpop.f32.mrf.mxu0
        %v6449 = vadd.f32 %v6360, %v6448
        %6450 = vdwg.mxu0
        %vm6451 = vcmp.gt.f32.partialorder %v6016, 0.0
        %vm6452 = vcmp.gt.f32.partialorder %v6372, 0.0
        %vm6453 = vcmp.gt.f32.partialorder %v6018, 0.0
        %vm6454 = vcmp.gt.f32.partialorder %v6374, 0.0
        %vm6455 = vcmp.gt.f32.partialorder %v6021, 0.0
        %vm6456 = vcmp.gt.f32.partialorder %v6377, 0.0
        %vm6457 = vcmp.gt.f32.partialorder %v6023, 0.0
        %vm6458 = vcmp.gt.f32.partialorder %v6379, 0.0
        %vm6459 = vcmp.gt.f32.partialorder %v6026, 0.0
        %vm6460 = vcmp.gt.f32.partialorder %v6382, 0.0
        %vm6461 = vcmp.gt.f32.partialorder %v6028, 0.0
        %vm6462 = vcmp.gt.f32.partialorder %v6384, 0.0
        %vm6463 = vcmp.gt.f32.partialorder %v6031, 0.0
        %vm6464 = vcmp.gt.f32.partialorder %v6387, 0.0
        %vm6465 = vcmp.gt.f32.partialorder %v6033, 0.0
        %vm6466 = vcmp.gt.f32.partialorder %v6389, 0.0
        %vm6467 = vcmp.gt.f32.partialorder %v6036, 0.0
        %vm6468 = vcmp.gt.f32.partialorder %v6392, 0.0
        %vm6469 = vcmp.gt.f32.partialorder %v6038, 0.0
        %vm6470 = vcmp.gt.f32.partialorder %v6394, 0.0
        %vm6471 = vcmp.gt.f32.partialorder %v6041, 0.0
        %vm6472 = vcmp.gt.f32.partialorder %v6397, 0.0
        %vm6473 = vcmp.gt.f32.partialorder %v6043, 0.0
        %vm6474 = vcmp.gt.f32.partialorder %v6399, 0.0
        %vm6475 = vcmp.gt.f32.partialorder %v6046, 0.0
        %vm6476 = vcmp.gt.f32.partialorder %v6402, 0.0
        %vm6477 = vcmp.gt.f32.partialorder %v6048, 0.0
        %vm6478 = vcmp.gt.f32.partialorder %v6404, 0.0
        %vm6479 = vcmp.gt.f32.partialorder %v6051, 0.0
        %vm6480 = vcmp.gt.f32.partialorder %v6407, 0.0
        %vm6481 = vcmp.gt.f32.partialorder %v6053, 0.0
        %vm6482 = vcmp.gt.f32.partialorder %v6409, 0.0
        %vm6483 = vcmp.gt.f32.partialorder %v6056, 0.0
        %vm6484 = vcmp.gt.f32.partialorder %v6412, 0.0
        %vm6485 = vcmp.gt.f32.partialorder %v6058, 0.0
        %vm6486 = vcmp.gt.f32.partialorder %v6414, 0.0
        %vm6487 = vcmp.gt.f32.partialorder %v6061, 0.0
        %vm6488 = vcmp.gt.f32.partialorder %v6417, 0.0
        %vm6489 = vcmp.gt.f32.partialorder %v6063, 0.0
        %vm6490 = vcmp.gt.f32.partialorder %v6419, 0.0
        %vm6491 = vcmp.gt.f32.partialorder %v6066, 0.0
        %vm6492 = vcmp.gt.f32.partialorder %v6422, 0.0
        %vm6493 = vcmp.gt.f32.partialorder %v6068, 0.0
        %vm6494 = vcmp.gt.f32.partialorder %v6424, 0.0
        %vm6495 = vcmp.gt.f32.partialorder %v6071, 0.0
        %vm6496 = vcmp.gt.f32.partialorder %v6427, 0.0
        %vm6497 = vcmp.gt.f32.partialorder %v6073, 0.0
        %vm6498 = vcmp.gt.f32.partialorder %v6429, 0.0
        %vm6499 = vcmp.gt.f32.partialorder %v6076, 0.0
        %vm6500 = vcmp.gt.f32.partialorder %v6432, 0.0
        %vm6501 = vcmp.gt.f32.partialorder %v6078, 0.0
        %vm6502 = vcmp.gt.f32.partialorder %v6434, 0.0
        %vm6503 = vcmp.gt.f32.partialorder %v6081, 0.0
        %vm6504 = vcmp.gt.f32.partialorder %v6437, 0.0
        %vm6505 = vcmp.gt.f32.partialorder %v6083, 0.0
        %vm6506 = vcmp.gt.f32.partialorder %v6439, 0.0
        %vm6507 = vcmp.gt.f32.partialorder %v6086, 0.0
        %vm6508 = vcmp.gt.f32.partialorder %v6442, 0.0
        %vm6509 = vcmp.gt.f32.partialorder %v6088, 0.0
        %vm6510 = vcmp.gt.f32.partialorder %v6444, 0.0
        %vm6511 = vcmp.gt.f32.partialorder %v6091, 0.0
        %vm6512 = vcmp.gt.f32.partialorder %v6447, 0.0
        %vm6513 = vcmp.gt.f32.partialorder %v6093, 0.0
        %vm6514 = vcmp.gt.f32.partialorder %v6449, 0.0
        %v6515 = vmul.f32 %v6016, 0.2
        %v6516 = vmul.f32 %v6372, 0.2
        %v6517 = vmul.f32 %v6018, 0.2
        %v6518 = vmul.f32 %v6374, 0.2
        %v6519 = vmul.f32 %v6021, 0.2
        %v6520 = vmul.f32 %v6377, 0.2
        %v6521 = vmul.f32 %v6023, 0.2
        %v6522 = vmul.f32 %v6379, 0.2
        %v6523 = vmul.f32 %v6026, 0.2
        %v6524 = vmul.f32 %v6382, 0.2
        %v6525 = vmul.f32 %v6028, 0.2
        %v6526 = vmul.f32 %v6384, 0.2
        %v6527 = vmul.f32 %v6031, 0.2
        %v6528 = vmul.f32 %v6387, 0.2
        %v6529 = vmul.f32 %v6033, 0.2
        %v6530 = vmul.f32 %v6389, 0.2
        %v6531 = vmul.f32 %v6036, 0.2
        %v6532 = vmul.f32 %v6392, 0.2
        %v6533 = vmul.f32 %v6038, 0.2
        %v6534 = vmul.f32 %v6394, 0.2
        %v6535 = vmul.f32 %v6041, 0.2
        %v6536 = vmul.f32 %v6397, 0.2
        %v6537 = vmul.f32 %v6043, 0.2
        %v6538 = vmul.f32 %v6399, 0.2
        %v6539 = vmul.f32 %v6046, 0.2
        %v6540 = vmul.f32 %v6402, 0.2
        %v6541 = vmul.f32 %v6048, 0.2
        %v6542 = vmul.f32 %v6404, 0.2
        %v6543 = vmul.f32 %v6051, 0.2
        %v6544 = vmul.f32 %v6407, 0.2
        %v6545 = vmul.f32 %v6053, 0.2
        %v6546 = vmul.f32 %v6409, 0.2
        %v6547 = vmul.f32 %v6056, 0.2
        %v6548 = vmul.f32 %v6412, 0.2
        %v6549 = vmul.f32 %v6058, 0.2
        %v6550 = vmul.f32 %v6414, 0.2
        %v6551 = vmul.f32 %v6061, 0.2
        %v6552 = vmul.f32 %v6417, 0.2
        %v6553 = vmul.f32 %v6063, 0.2
        %v6554 = vmul.f32 %v6419, 0.2
        %v6555 = vmul.f32 %v6066, 0.2
        %v6556 = vmul.f32 %v6422, 0.2
        %v6557 = vmul.f32 %v6068, 0.2
        %v6558 = vmul.f32 %v6424, 0.2
        %v6559 = vmul.f32 %v6071, 0.2
        %v6560 = vmul.f32 %v6427, 0.2
        %v6561 = vmul.f32 %v6073, 0.2
        %v6562 = vmul.f32 %v6429, 0.2
        %v6563 = vmul.f32 %v6076, 0.2
        %v6564 = vmul.f32 %v6432, 0.2
        %v6565 = vmul.f32 %v6078, 0.2
        %v6566 = vmul.f32 %v6434, 0.2
        %v6567 = vmul.f32 %v6081, 0.2
        %v6568 = vmul.f32 %v6437, 0.2
        %v6569 = vmul.f32 %v6083, 0.2
        %v6570 = vmul.f32 %v6439, 0.2
        %v6571 = vmul.f32 %v6086, 0.2
        %v6572 = vmul.f32 %v6442, 0.2
        %v6573 = vmul.f32 %v6088, 0.2
        %v6574 = vmul.f32 %v6444, 0.2
        %v6575 = vmul.f32 %v6091, 0.2
        %v6576 = vmul.f32 %v6447, 0.2
        %v6577 = vmul.f32 %v6093, 0.2
        %v6578 = vmul.f32 %v6449, 0.2
        %v6579 = vsel %vm6451, %v6016, %v6515
        %v6580 = vsel %vm6452, %v6372, %v6516
        %v6581 = vsel %vm6453, %v6018, %v6517
        %v6582 = vsel %vm6454, %v6374, %v6518
        %v6583 = vsel %vm6455, %v6021, %v6519
        %v6584 = vsel %vm6456, %v6377, %v6520
        %v6585 = vsel %vm6457, %v6023, %v6521
        %v6586 = vsel %vm6458, %v6379, %v6522
        %v6587 = vsel %vm6459, %v6026, %v6523
        %v6588 = vsel %vm6460, %v6382, %v6524
        %v6589 = vsel %vm6461, %v6028, %v6525
        %v6590 = vsel %vm6462, %v6384, %v6526
        %v6591 = vsel %vm6463, %v6031, %v6527
        %v6592 = vsel %vm6464, %v6387, %v6528
        %v6593 = vsel %vm6465, %v6033, %v6529
        %v6594 = vsel %vm6466, %v6389, %v6530
        %v6595 = vsel %vm6467, %v6036, %v6531
        %v6596 = vsel %vm6468, %v6392, %v6532
        %v6597 = vsel %vm6469, %v6038, %v6533
        %v6598 = vsel %vm6470, %v6394, %v6534
        %v6599 = vsel %vm6471, %v6041, %v6535
        %v6600 = vsel %vm6472, %v6397, %v6536
        %v6601 = vsel %vm6473, %v6043, %v6537
        %v6602 = vsel %vm6474, %v6399, %v6538
        %v6603 = vsel %vm6475, %v6046, %v6539
        %v6604 = vsel %vm6476, %v6402, %v6540
        %v6605 = vsel %vm6477, %v6048, %v6541
        %v6606 = vsel %vm6478, %v6404, %v6542
        %v6607 = vsel %vm6479, %v6051, %v6543
        %v6608 = vsel %vm6480, %v6407, %v6544
        %v6609 = vsel %vm6481, %v6053, %v6545
        %v6610 = vsel %vm6482, %v6409, %v6546
        %v6611 = vsel %vm6483, %v6056, %v6547
        %v6612 = vsel %vm6484, %v6412, %v6548
        %v6613 = vsel %vm6485, %v6058, %v6549
        %v6614 = vsel %vm6486, %v6414, %v6550
        %v6615 = vsel %vm6487, %v6061, %v6551
        %v6616 = vsel %vm6488, %v6417, %v6552
        %v6617 = vsel %vm6489, %v6063, %v6553
        %v6618 = vsel %vm6490, %v6419, %v6554
        %v6619 = vsel %vm6491, %v6066, %v6555
        %v6620 = vsel %vm6492, %v6422, %v6556
        %v6621 = vsel %vm6493, %v6068, %v6557
        %v6622 = vsel %vm6494, %v6424, %v6558
        %v6623 = vsel %vm6495, %v6071, %v6559
        %v6624 = vsel %vm6496, %v6427, %v6560
        %v6625 = vsel %vm6497, %v6073, %v6561
        %v6626 = vsel %vm6498, %v6429, %v6562
        %v6627 = vsel %vm6499, %v6076, %v6563
        %v6628 = vsel %vm6500, %v6432, %v6564
        %v6629 = vsel %vm6501, %v6078, %v6565
        %v6630 = vsel %vm6502, %v6434, %v6566
        %v6631 = vsel %vm6503, %v6081, %v6567
        %v6632 = vsel %vm6504, %v6437, %v6568
        %v6633 = vsel %vm6505, %v6083, %v6569
        %v6634 = vsel %vm6506, %v6439, %v6570
        %v6635 = vsel %vm6507, %v6086, %v6571
        %v6636 = vsel %vm6508, %v6442, %v6572
        %v6637 = vsel %vm6509, %v6088, %v6573
        %v6638 = vsel %vm6510, %v6444, %v6574
        %v6639 = vsel %vm6511, %v6091, %v6575
        %v6640 = vsel %vm6512, %v6447, %v6576
        %v6641 = vsel %vm6513, %v6093, %v6577
        %v6642 = vsel %vm6514, %v6449, %v6578
        %v6643 = vld [vmem:[%s5] sm:$0x3]
        %v6645 = vperm.slane %v6643, 0
        %v6646 = vperm.slane %v6643, 1
        %v6649 = vmul.f32 %v6579, %v6645
        %v6650 = vmul.f32 %v6580, %v6646
        %v6651 = vmul.f32 %v6581, %v6645
        %v6652 = vmul.f32 %v6582, %v6646
        %v6653 = vmul.f32 %v6583, %v6645
        %v6654 = vmul.f32 %v6584, %v6646
        %v6655 = vmul.f32 %v6585, %v6645
        %v6656 = vmul.f32 %v6586, %v6646
        %v6657 = vmul.f32 %v6587, %v6645
        %v6658 = vmul.f32 %v6588, %v6646
        %v6659 = vmul.f32 %v6589, %v6645
        %v6660 = vmul.f32 %v6590, %v6646
        %v6661 = vmul.f32 %v6591, %v6645
        %v6662 = vmul.f32 %v6592, %v6646
        %v6663 = vmul.f32 %v6593, %v6645
        %v6664 = vmul.f32 %v6594, %v6646
        %v6665 = vmul.f32 %v6595, %v6645
        %v6666 = vmul.f32 %v6596, %v6646
        %v6667 = vmul.f32 %v6597, %v6645
        %v6668 = vmul.f32 %v6598, %v6646
        %v6669 = vmul.f32 %v6599, %v6645
        %v6670 = vmul.f32 %v6600, %v6646
        %v6671 = vmul.f32 %v6601, %v6645
        %v6672 = vmul.f32 %v6602, %v6646
        %v6673 = vmul.f32 %v6603, %v6645
        %v6674 = vmul.f32 %v6604, %v6646
        %v6675 = vmul.f32 %v6605, %v6645
        %v6676 = vmul.f32 %v6606, %v6646
        %v6677 = vmul.f32 %v6607, %v6645
        %v6678 = vmul.f32 %v6608, %v6646
        %v6679 = vmul.f32 %v6609, %v6645
        %v6680 = vmul.f32 %v6610, %v6646
        %v6681 = vmul.f32 %v6611, %v6645
        %v6682 = vmul.f32 %v6612, %v6646
        %v6683 = vmul.f32 %v6613, %v6645
        %v6684 = vmul.f32 %v6614, %v6646
        %v6685 = vmul.f32 %v6615, %v6645
        %v6686 = vmul.f32 %v6616, %v6646
        %v6687 = vmul.f32 %v6617, %v6645
        %v6688 = vmul.f32 %v6618, %v6646
        %v6689 = vmul.f32 %v6619, %v6645
        %v6690 = vmul.f32 %v6620, %v6646
        %v6691 = vmul.f32 %v6621, %v6645
        %v6692 = vmul.f32 %v6622, %v6646
        %v6693 = vmul.f32 %v6623, %v6645
        %v6694 = vmul.f32 %v6624, %v6646
        %v6695 = vmul.f32 %v6625, %v6645
        %v6696 = vmul.f32 %v6626, %v6646
        %v6697 = vmul.f32 %v6627, %v6645
        %v6698 = vmul.f32 %v6628, %v6646
        %v6699 = vmul.f32 %v6629, %v6645
        %v6700 = vmul.f32 %v6630, %v6646
        %v6701 = vmul.f32 %v6631, %v6645
        %v6702 = vmul.f32 %v6632, %v6646
        %v6703 = vmul.f32 %v6633, %v6645
        %v6704 = vmul.f32 %v6634, %v6646
        %v6705 = vmul.f32 %v6635, %v6645
        %v6706 = vmul.f32 %v6636, %v6646
        %v6707 = vmul.f32 %v6637, %v6645
        %v6708 = vmul.f32 %v6638, %v6646
        %v6709 = vmul.f32 %v6639, %v6645
        %v6710 = vmul.f32 %v6640, %v6646
        %v6711 = vmul.f32 %v6641, %v6645
        %v6712 = vmul.f32 %v6642, %v6646
        %v6713 = vadd.f32 %v6649, %v6650
        %6714 = vadd.xlane.f32.xlu0 %v6713
        %v6715 = vpop.xlane.xlu0 %6714
        %v6716 = vadd.f32 %v6651, %v6652
        %6717 = vadd.xlane.f32.xlu0 %v6716
        %v6718 = vpop.xlane.xlu0 %6717
        %v6719 = vadd.f32 %v6653, %v6654
        %6720 = vadd.xlane.f32.xlu0 %v6719
        %v6721 = vpop.xlane.xlu0 %6720
        %v6722 = vadd.f32 %v6655, %v6656
        %6723 = vadd.xlane.f32.xlu0 %v6722
        %v6724 = vpop.xlane.xlu0 %6723
        %v6725 = vadd.f32 %v6657, %v6658
        %6726 = vadd.xlane.f32.xlu0 %v6725
        %v6727 = vpop.xlane.xlu0 %6726
        %v6728 = vadd.f32 %v6659, %v6660
        %6729 = vadd.xlane.f32.xlu0 %v6728
        %v6730 = vpop.xlane.xlu0 %6729
        %v6731 = vadd.f32 %v6661, %v6662
        %6732 = vadd.xlane.f32.xlu0 %v6731
        %v6733 = vpop.xlane.xlu0 %6732
        %v6734 = vadd.f32 %v6663, %v6664
        %6735 = vadd.xlane.f32.xlu0 %v6734
        %v6736 = vpop.xlane.xlu0 %6735
        %v6737 = vadd.f32 %v6665, %v6666
        %6738 = vadd.xlane.f32.xlu0 %v6737
        %v6739 = vpop.xlane.xlu0 %6738
        %v6740 = vadd.f32 %v6667, %v6668
        %6741 = vadd.xlane.f32.xlu0 %v6740
        %v6742 = vpop.xlane.xlu0 %6741
        %v6743 = vadd.f32 %v6669, %v6670
        %6744 = vadd.xlane.f32.xlu0 %v6743
        %v6745 = vpop.xlane.xlu0 %6744
        %v6746 = vadd.f32 %v6671, %v6672
        %6747 = vadd.xlane.f32.xlu0 %v6746
        %v6748 = vpop.xlane.xlu0 %6747
        %v6749 = vadd.f32 %v6673, %v6674
        %6750 = vadd.xlane.f32.xlu0 %v6749
        %v6751 = vpop.xlane.xlu0 %6750
        %v6752 = vadd.f32 %v6675, %v6676
        %6753 = vadd.xlane.f32.xlu0 %v6752
        %v6754 = vpop.xlane.xlu0 %6753
        %v6755 = vadd.f32 %v6677, %v6678
        %6756 = vadd.xlane.f32.xlu0 %v6755
        %v6757 = vpop.xlane.xlu0 %6756
        %v6758 = vadd.f32 %v6679, %v6680
        %6759 = vadd.xlane.f32.xlu0 %v6758
        %v6760 = vpop.xlane.xlu0 %6759
        %v6761 = vadd.f32 %v6681, %v6682
        %6762 = vadd.xlane.f32.xlu0 %v6761
        %v6763 = vpop.xlane.xlu0 %6762
        %v6764 = vadd.f32 %v6683, %v6684
        %6765 = vadd.xlane.f32.xlu0 %v6764
        %v6766 = vpop.xlane.xlu0 %6765
        %v6767 = vadd.f32 %v6685, %v6686
        %6768 = vadd.xlane.f32.xlu0 %v6767
        %v6769 = vpop.xlane.xlu0 %6768
        %v6770 = vadd.f32 %v6687, %v6688
        %6771 = vadd.xlane.f32.xlu0 %v6770
        %v6772 = vpop.xlane.xlu0 %6771
        %v6773 = vadd.f32 %v6689, %v6690
        %6774 = vadd.xlane.f32.xlu0 %v6773
        %v6775 = vpop.xlane.xlu0 %6774
        %v6776 = vadd.f32 %v6691, %v6692
        %6777 = vadd.xlane.f32.xlu0 %v6776
        %v6778 = vpop.xlane.xlu0 %6777
        %v6779 = vadd.f32 %v6693, %v6694
        %6780 = vadd.xlane.f32.xlu0 %v6779
        %v6781 = vpop.xlane.xlu0 %6780
        %v6782 = vadd.f32 %v6695, %v6696
        %6783 = vadd.xlane.f32.xlu0 %v6782
        %v6784 = vpop.xlane.xlu0 %6783
        %v6785 = vadd.f32 %v6697, %v6698
        %6786 = vadd.xlane.f32.xlu0 %v6785
        %v6787 = vpop.xlane.xlu0 %6786
        %v6788 = vadd.f32 %v6699, %v6700
        %6789 = vadd.xlane.f32.xlu0 %v6788
        %v6790 = vpop.xlane.xlu0 %6789
        %v6791 = vadd.f32 %v6701, %v6702
        %6792 = vadd.xlane.f32.xlu0 %v6791
        %v6793 = vpop.xlane.xlu0 %6792
        %v6794 = vadd.f32 %v6703, %v6704
        %6795 = vadd.xlane.f32.xlu0 %v6794
        %v6796 = vpop.xlane.xlu0 %6795
        %v6797 = vadd.f32 %v6705, %v6706
        %6798 = vadd.xlane.f32.xlu0 %v6797
        %v6799 = vpop.xlane.xlu0 %6798
        %v6800 = vadd.f32 %v6707, %v6708
        %6801 = vadd.xlane.f32.xlu0 %v6800
        %v6802 = vpop.xlane.xlu0 %6801
        %v6803 = vadd.f32 %v6709, %v6710
        %6804 = vadd.xlane.f32.xlu0 %v6803
        %v6805 = vpop.xlane.xlu0 %6804
        %v6806 = vadd.f32 %v6711, %v6712
        %6807 = vadd.xlane.f32.xlu0 %v6806
        %v6808 = vpop.xlane.xlu0 %6807
        %v6809 = vld [vmem:[#allocation2] sm:$0x1]
        %6811 = vset.pattern.permute.xlu0 0
        %6812 = vperm.xlu0 %6811, %v6809
        %v6813 = vpop.permute.xlu0 %6812
        %v6815 = vperm.slane %v6813, 0
        %v6816 = vadd.f32 %v6715, %v6815
        %v6817 = vadd.f32 %v6718, %v6815
        %v6818 = vadd.f32 %v6721, %v6815
        %v6819 = vadd.f32 %v6724, %v6815
        %v6820 = vadd.f32 %v6727, %v6815
        %v6821 = vadd.f32 %v6730, %v6815
        %v6822 = vadd.f32 %v6733, %v6815
        %v6823 = vadd.f32 %v6736, %v6815
        %v6824 = vadd.f32 %v6739, %v6815
        %v6825 = vadd.f32 %v6742, %v6815
        %v6826 = vadd.f32 %v6745, %v6815
        %v6827 = vadd.f32 %v6748, %v6815
        %v6828 = vadd.f32 %v6751, %v6815
        %v6829 = vadd.f32 %v6754, %v6815
        %v6830 = vadd.f32 %v6757, %v6815
        %v6831 = vadd.f32 %v6760, %v6815
        %v6832 = vadd.f32 %v6763, %v6815
        %v6833 = vadd.f32 %v6766, %v6815
        %v6834 = vadd.f32 %v6769, %v6815
        %v6835 = vadd.f32 %v6772, %v6815
        %v6836 = vadd.f32 %v6775, %v6815
        %v6837 = vadd.f32 %v6778, %v6815
        %v6838 = vadd.f32 %v6781, %v6815
        %v6839 = vadd.f32 %v6784, %v6815
        %v6840 = vadd.f32 %v6787, %v6815
        %v6841 = vadd.f32 %v6790, %v6815
        %v6842 = vadd.f32 %v6793, %v6815
        %v6843 = vadd.f32 %v6796, %v6815
        %v6844 = vadd.f32 %v6799, %v6815
        %v6845 = vadd.f32 %v6802, %v6815
        %v6846 = vadd.f32 %v6805, %v6815
        %v6847 = vadd.f32 %v6808, %v6815
        %v6848 = vxor.u32 %v6816, 2147483648
        %v6849 = vxor.u32 %v6817, 2147483648
        %v6850 = vxor.u32 %v6818, 2147483648
        %v6851 = vxor.u32 %v6819, 2147483648
        %v6852 = vxor.u32 %v6820, 2147483648
        %v6853 = vxor.u32 %v6821, 2147483648
        %v6854 = vxor.u32 %v6822, 2147483648
        %v6855 = vxor.u32 %v6823, 2147483648
        %v6856 = vxor.u32 %v6824, 2147483648
        %v6857 = vxor.u32 %v6825, 2147483648
        %v6858 = vxor.u32 %v6826, 2147483648
        %v6859 = vxor.u32 %v6827, 2147483648
        %v6860 = vxor.u32 %v6828, 2147483648
        %v6861 = vxor.u32 %v6829, 2147483648
        %v6862 = vxor.u32 %v6830, 2147483648
        %v6863 = vxor.u32 %v6831, 2147483648
        %v6864 = vxor.u32 %v6832, 2147483648
        %v6865 = vxor.u32 %v6833, 2147483648
        %v6866 = vxor.u32 %v6834, 2147483648
        %v6867 = vxor.u32 %v6835, 2147483648
        %v6868 = vxor.u32 %v6836, 2147483648
        %v6869 = vxor.u32 %v6837, 2147483648
        %v6870 = vxor.u32 %v6838, 2147483648
        %v6871 = vxor.u32 %v6839, 2147483648
        %v6872 = vxor.u32 %v6840, 2147483648
        %v6873 = vxor.u32 %v6841, 2147483648
        %v6874 = vxor.u32 %v6842, 2147483648
        %v6875 = vxor.u32 %v6843, 2147483648
        %v6876 = vxor.u32 %v6844, 2147483648
        %v6877 = vxor.u32 %v6845, 2147483648
        %v6878 = vxor.u32 %v6846, 2147483648
        %v6879 = vxor.u32 %v6847, 2147483648
        %v6880 = vmul.f32 %v6848, 1.442695
        %v6881 = vpow.pop %v6880
        %v6882 = vmul.f32 %v6849, 1.442695
        %v6883 = vpow.pop %v6882
        %v6884 = vmul.f32 %v6850, 1.442695
        %v6885 = vpow.pop %v6884
        %v6886 = vmul.f32 %v6851, 1.442695
        %v6887 = vpow.pop %v6886
        %v6888 = vmul.f32 %v6852, 1.442695
        %v6889 = vpow.pop %v6888
        %v6890 = vmul.f32 %v6853, 1.442695
        %v6891 = vpow.pop %v6890
        %v6892 = vmul.f32 %v6854, 1.442695
        %v6893 = vpow.pop %v6892
        %v6894 = vmul.f32 %v6855, 1.442695
        %v6895 = vpow.pop %v6894
        %v6896 = vmul.f32 %v6856, 1.442695
        %v6897 = vpow.pop %v6896
        %v6898 = vmul.f32 %v6857, 1.442695
        %v6899 = vpow.pop %v6898
        %v6900 = vmul.f32 %v6858, 1.442695
        %v6901 = vpow.pop %v6900
        %v6902 = vmul.f32 %v6859, 1.442695
        %v6903 = vpow.pop %v6902
        %v6904 = vmul.f32 %v6860, 1.442695
        %v6905 = vpow.pop %v6904
        %v6906 = vmul.f32 %v6861, 1.442695
        %v6907 = vpow.pop %v6906
        %v6908 = vmul.f32 %v6862, 1.442695
        %v6909 = vpow.pop %v6908
        %v6910 = vmul.f32 %v6863, 1.442695
        %v6911 = vpow.pop %v6910
        %v6912 = vmul.f32 %v6864, 1.442695
        %v6913 = vpow.pop %v6912
        %v6914 = vmul.f32 %v6865, 1.442695
        %v6915 = vpow.pop %v6914
        %v6916 = vmul.f32 %v6866, 1.442695
        %v6917 = vpow.pop %v6916
        %v6918 = vmul.f32 %v6867, 1.442695
        %v6919 = vpow.pop %v6918
        %v6920 = vmul.f32 %v6868, 1.442695
        %v6921 = vpow.pop %v6920
        %v6922 = vmul.f32 %v6869, 1.442695
        %v6923 = vpow.pop %v6922
        %v6924 = vmul.f32 %v6870, 1.442695
        %v6925 = vpow.pop %v6924
        %v6926 = vmul.f32 %v6871, 1.442695
        %v6927 = vpow.pop %v6926
        %v6928 = vmul.f32 %v6872, 1.442695
        %v6929 = vpow.pop %v6928
        %v6930 = vmul.f32 %v6873, 1.442695
        %v6931 = vpow.pop %v6930
        %v6932 = vmul.f32 %v6874, 1.442695
        %v6933 = vpow.pop %v6932
        %v6934 = vmul.f32 %v6875, 1.442695
        %v6935 = vpow.pop %v6934
        %v6936 = vmul.f32 %v6876, 1.442695
        %v6937 = vpow.pop %v6936
        %v6938 = vmul.f32 %v6877, 1.442695
        %v6939 = vpow.pop %v6938
        %v6940 = vmul.f32 %v6878, 1.442695
        %v6941 = vpow.pop %v6940
        %v6942 = vmul.f32 %v6879, 1.442695
        %v6943 = vpow.pop %v6942
        %v6944 = vadd.f32 %v6881, 1.0
        %v6945 = vadd.f32 %v6883, 1.0
        %v6946 = vadd.f32 %v6885, 1.0
        %v6947 = vadd.f32 %v6887, 1.0
        %v6948 = vadd.f32 %v6889, 1.0
        %v6949 = vadd.f32 %v6891, 1.0
        %v6950 = vadd.f32 %v6893, 1.0
        %v6951 = vadd.f32 %v6895, 1.0
        %v6952 = vadd.f32 %v6897, 1.0
        %v6953 = vadd.f32 %v6899, 1.0
        %v6954 = vadd.f32 %v6901, 1.0
        %v6955 = vadd.f32 %v6903, 1.0
        %v6956 = vadd.f32 %v6905, 1.0
        %v6957 = vadd.f32 %v6907, 1.0
        %v6958 = vadd.f32 %v6909, 1.0
        %v6959 = vadd.f32 %v6911, 1.0
        %v6960 = vadd.f32 %v6913, 1.0
        %v6961 = vadd.f32 %v6915, 1.0
        %v6962 = vadd.f32 %v6917, 1.0
        %v6963 = vadd.f32 %v6919, 1.0
        %v6964 = vadd.f32 %v6921, 1.0
        %v6965 = vadd.f32 %v6923, 1.0
        %v6966 = vadd.f32 %v6925, 1.0
        %v6967 = vadd.f32 %v6927, 1.0
        %v6968 = vadd.f32 %v6929, 1.0
        %v6969 = vadd.f32 %v6931, 1.0
        %v6970 = vadd.f32 %v6933, 1.0
        %v6971 = vadd.f32 %v6935, 1.0
        %v6972 = vadd.f32 %v6937, 1.0
        %v6973 = vadd.f32 %v6939, 1.0
        %v6974 = vadd.f32 %v6941, 1.0
        %v6975 = vadd.f32 %v6943, 1.0
        %v6976 = vrcp.pop %v6944
        %v6977 = vmul.f32 %v6944, %v6976
        %v6978 = vsub.f32 1.0, %v6977
        %v6979 = vmul.f32 %v6976, %v6978
        %v6980 = vadd.f32 %v6976, %v6979
        %vm6981 = vweird.f32 %v6944
        %vm6982 = vweird.f32 %v6976
        %vm6983 = vmor %vm6981, %vm6982
        %v6984 = vsel %vm6983, %v6976, %v6980
        %v6985 = vand.u32 2147483647, %v6944
        %vm6986 = vcmp.eq.f32.partialorder %v6985, 8.507059e+37
        %v6987 = vand.u32 %v6944, 2147483648
        %v6988 = vor.u32 1.1754944e-38, %v6987
        %v6989 = vsel %vm6986, %v6988, %v6984
        %v6990 = vmul.f32 1.0, %v6989
        %v6991 = vrcp.pop %v6945
        %v6992 = vmul.f32 %v6945, %v6991
        %v6993 = vsub.f32 1.0, %v6992
        %v6994 = vmul.f32 %v6991, %v6993
        %v6995 = vadd.f32 %v6991, %v6994
        %vm6996 = vweird.f32 %v6945
        %vm6997 = vweird.f32 %v6991
        %vm6998 = vmor %vm6996, %vm6997
        %v6999 = vsel %vm6998, %v6991, %v6995
        %v7000 = vand.u32 2147483647, %v6945
        %vm7001 = vcmp.eq.f32.partialorder %v7000, 8.507059e+37
        %v7002 = vand.u32 %v6945, 2147483648
        %v7003 = vor.u32 1.1754944e-38, %v7002
        %v7004 = vsel %vm7001, %v7003, %v6999
        %v7005 = vmul.f32 1.0, %v7004
        %v7006 = vrcp.pop %v6946
        %v7007 = vmul.f32 %v6946, %v7006
        %v7008 = vsub.f32 1.0, %v7007
        %v7009 = vmul.f32 %v7006, %v7008
        %v7010 = vadd.f32 %v7006, %v7009
        %vm7011 = vweird.f32 %v6946
        %vm7012 = vweird.f32 %v7006
        %vm7013 = vmor %vm7011, %vm7012
        %v7014 = vsel %vm7013, %v7006, %v7010
        %v7015 = vand.u32 2147483647, %v6946
        %vm7016 = vcmp.eq.f32.partialorder %v7015, 8.507059e+37
        %v7017 = vand.u32 %v6946, 2147483648
        %v7018 = vor.u32 1.1754944e-38, %v7017
        %v7019 = vsel %vm7016, %v7018, %v7014
        %v7020 = vmul.f32 1.0, %v7019
        %v7021 = vrcp.pop %v6947
        %v7022 = vmul.f32 %v6947, %v7021
        %v7023 = vsub.f32 1.0, %v7022
        %v7024 = vmul.f32 %v7021, %v7023
        %v7025 = vadd.f32 %v7021, %v7024
        %vm7026 = vweird.f32 %v6947
        %vm7027 = vweird.f32 %v7021
        %vm7028 = vmor %vm7026, %vm7027
        %v7029 = vsel %vm7028, %v7021, %v7025
        %v7030 = vand.u32 2147483647, %v6947
        %vm7031 = vcmp.eq.f32.partialorder %v7030, 8.507059e+37
        %v7032 = vand.u32 %v6947, 2147483648
        %v7033 = vor.u32 1.1754944e-38, %v7032
        %v7034 = vsel %vm7031, %v7033, %v7029
        %v7035 = vmul.f32 1.0, %v7034
        %v7036 = vrcp.pop %v6948
        %v7037 = vmul.f32 %v6948, %v7036
        %v7038 = vsub.f32 1.0, %v7037
        %v7039 = vmul.f32 %v7036, %v7038
        %v7040 = vadd.f32 %v7036, %v7039
        %vm7041 = vweird.f32 %v6948
        %vm7042 = vweird.f32 %v7036
        %vm7043 = vmor %vm7041, %vm7042
        %v7044 = vsel %vm7043, %v7036, %v7040
        %v7045 = vand.u32 2147483647, %v6948
        %vm7046 = vcmp.eq.f32.partialorder %v7045, 8.507059e+37
        %v7047 = vand.u32 %v6948, 2147483648
        %v7048 = vor.u32 1.1754944e-38, %v7047
        %v7049 = vsel %vm7046, %v7048, %v7044
        %v7050 = vmul.f32 1.0, %v7049
        %v7051 = vrcp.pop %v6949
        %v7052 = vmul.f32 %v6949, %v7051
        %v7053 = vsub.f32 1.0, %v7052
        %v7054 = vmul.f32 %v7051, %v7053
        %v7055 = vadd.f32 %v7051, %v7054
        %vm7056 = vweird.f32 %v6949
        %vm7057 = vweird.f32 %v7051
        %vm7058 = vmor %vm7056, %vm7057
        %v7059 = vsel %vm7058, %v7051, %v7055
        %v7060 = vand.u32 2147483647, %v6949
        %vm7061 = vcmp.eq.f32.partialorder %v7060, 8.507059e+37
        %v7062 = vand.u32 %v6949, 2147483648
        %v7063 = vor.u32 1.1754944e-38, %v7062
        %v7064 = vsel %vm7061, %v7063, %v7059
        %v7065 = vmul.f32 1.0, %v7064
        %v7066 = vrcp.pop %v6950
        %v7067 = vmul.f32 %v6950, %v7066
        %v7068 = vsub.f32 1.0, %v7067
        %v7069 = vmul.f32 %v7066, %v7068
        %v7070 = vadd.f32 %v7066, %v7069
        %vm7071 = vweird.f32 %v6950
        %vm7072 = vweird.f32 %v7066
        %vm7073 = vmor %vm7071, %vm7072
        %v7074 = vsel %vm7073, %v7066, %v7070
        %v7075 = vand.u32 2147483647, %v6950
        %vm7076 = vcmp.eq.f32.partialorder %v7075, 8.507059e+37
        %v7077 = vand.u32 %v6950, 2147483648
        %v7078 = vor.u32 1.1754944e-38, %v7077
        %v7079 = vsel %vm7076, %v7078, %v7074
        %v7080 = vmul.f32 1.0, %v7079
        %v7081 = vrcp.pop %v6951
        %v7082 = vmul.f32 %v6951, %v7081
        %v7083 = vsub.f32 1.0, %v7082
        %v7084 = vmul.f32 %v7081, %v7083
        %v7085 = vadd.f32 %v7081, %v7084
        %vm7086 = vweird.f32 %v6951
        %vm7087 = vweird.f32 %v7081
        %vm7088 = vmor %vm7086, %vm7087
        %v7089 = vsel %vm7088, %v7081, %v7085
        %v7090 = vand.u32 2147483647, %v6951
        %vm7091 = vcmp.eq.f32.partialorder %v7090, 8.507059e+37
        %v7092 = vand.u32 %v6951, 2147483648
        %v7093 = vor.u32 1.1754944e-38, %v7092
        %v7094 = vsel %vm7091, %v7093, %v7089
        %v7095 = vmul.f32 1.0, %v7094
        %v7096 = vrcp.pop %v6952
        %v7097 = vmul.f32 %v6952, %v7096
        %v7098 = vsub.f32 1.0, %v7097
        %v7099 = vmul.f32 %v7096, %v7098
        %v7100 = vadd.f32 %v7096, %v7099
        %vm7101 = vweird.f32 %v6952
        %vm7102 = vweird.f32 %v7096
        %vm7103 = vmor %vm7101, %vm7102
        %v7104 = vsel %vm7103, %v7096, %v7100
        %v7105 = vand.u32 2147483647, %v6952
        %vm7106 = vcmp.eq.f32.partialorder %v7105, 8.507059e+37
        %v7107 = vand.u32 %v6952, 2147483648
        %v7108 = vor.u32 1.1754944e-38, %v7107
        %v7109 = vsel %vm7106, %v7108, %v7104
        %v7110 = vmul.f32 1.0, %v7109
        %v7111 = vrcp.pop %v6953
        %v7112 = vmul.f32 %v6953, %v7111
        %v7113 = vsub.f32 1.0, %v7112
        %v7114 = vmul.f32 %v7111, %v7113
        %v7115 = vadd.f32 %v7111, %v7114
        %vm7116 = vweird.f32 %v6953
        %vm7117 = vweird.f32 %v7111
        %vm7118 = vmor %vm7116, %vm7117
        %v7119 = vsel %vm7118, %v7111, %v7115
        %v7120 = vand.u32 2147483647, %v6953
        %vm7121 = vcmp.eq.f32.partialorder %v7120, 8.507059e+37
        %v7122 = vand.u32 %v6953, 2147483648
        %v7123 = vor.u32 1.1754944e-38, %v7122
        %v7124 = vsel %vm7121, %v7123, %v7119
        %v7125 = vmul.f32 1.0, %v7124
        %v7126 = vrcp.pop %v6954
        %v7127 = vmul.f32 %v6954, %v7126
        %v7128 = vsub.f32 1.0, %v7127
        %v7129 = vmul.f32 %v7126, %v7128
        %v7130 = vadd.f32 %v7126, %v7129
        %vm7131 = vweird.f32 %v6954
        %vm7132 = vweird.f32 %v7126
        %vm7133 = vmor %vm7131, %vm7132
        %v7134 = vsel %vm7133, %v7126, %v7130
        %v7135 = vand.u32 2147483647, %v6954
        %vm7136 = vcmp.eq.f32.partialorder %v7135, 8.507059e+37
        %v7137 = vand.u32 %v6954, 2147483648
        %v7138 = vor.u32 1.1754944e-38, %v7137
        %v7139 = vsel %vm7136, %v7138, %v7134
        %v7140 = vmul.f32 1.0, %v7139
        %v7141 = vrcp.pop %v6955
        %v7142 = vmul.f32 %v6955, %v7141
        %v7143 = vsub.f32 1.0, %v7142
        %v7144 = vmul.f32 %v7141, %v7143
        %v7145 = vadd.f32 %v7141, %v7144
        %vm7146 = vweird.f32 %v6955
        %vm7147 = vweird.f32 %v7141
        %vm7148 = vmor %vm7146, %vm7147
        %v7149 = vsel %vm7148, %v7141, %v7145
        %v7150 = vand.u32 2147483647, %v6955
        %vm7151 = vcmp.eq.f32.partialorder %v7150, 8.507059e+37
        %v7152 = vand.u32 %v6955, 2147483648
        %v7153 = vor.u32 1.1754944e-38, %v7152
        %v7154 = vsel %vm7151, %v7153, %v7149
        %v7155 = vmul.f32 1.0, %v7154
        %v7156 = vrcp.pop %v6956
        %v7157 = vmul.f32 %v6956, %v7156
        %v7158 = vsub.f32 1.0, %v7157
        %v7159 = vmul.f32 %v7156, %v7158
        %v7160 = vadd.f32 %v7156, %v7159
        %vm7161 = vweird.f32 %v6956
        %vm7162 = vweird.f32 %v7156
        %vm7163 = vmor %vm7161, %vm7162
        %v7164 = vsel %vm7163, %v7156, %v7160
        %v7165 = vand.u32 2147483647, %v6956
        %vm7166 = vcmp.eq.f32.partialorder %v7165, 8.507059e+37
        %v7167 = vand.u32 %v6956, 2147483648
        %v7168 = vor.u32 1.1754944e-38, %v7167
        %v7169 = vsel %vm7166, %v7168, %v7164
        %v7170 = vmul.f32 1.0, %v7169
        %v7171 = vrcp.pop %v6957
        %v7172 = vmul.f32 %v6957, %v7171
        %v7173 = vsub.f32 1.0, %v7172
        %v7174 = vmul.f32 %v7171, %v7173
        %v7175 = vadd.f32 %v7171, %v7174
        %vm7176 = vweird.f32 %v6957
        %vm7177 = vweird.f32 %v7171
        %vm7178 = vmor %vm7176, %vm7177
        %v7179 = vsel %vm7178, %v7171, %v7175
        %v7180 = vand.u32 2147483647, %v6957
        %vm7181 = vcmp.eq.f32.partialorder %v7180, 8.507059e+37
        %v7182 = vand.u32 %v6957, 2147483648
        %v7183 = vor.u32 1.1754944e-38, %v7182
        %v7184 = vsel %vm7181, %v7183, %v7179
        %v7185 = vmul.f32 1.0, %v7184
        %v7186 = vrcp.pop %v6958
        %v7187 = vmul.f32 %v6958, %v7186
        %v7188 = vsub.f32 1.0, %v7187
        %v7189 = vmul.f32 %v7186, %v7188
        %v7190 = vadd.f32 %v7186, %v7189
        %vm7191 = vweird.f32 %v6958
        %vm7192 = vweird.f32 %v7186
        %vm7193 = vmor %vm7191, %vm7192
        %v7194 = vsel %vm7193, %v7186, %v7190
        %v7195 = vand.u32 2147483647, %v6958
        %vm7196 = vcmp.eq.f32.partialorder %v7195, 8.507059e+37
        %v7197 = vand.u32 %v6958, 2147483648
        %v7198 = vor.u32 1.1754944e-38, %v7197
        %v7199 = vsel %vm7196, %v7198, %v7194
        %v7200 = vmul.f32 1.0, %v7199
        %v7201 = vrcp.pop %v6959
        %v7202 = vmul.f32 %v6959, %v7201
        %v7203 = vsub.f32 1.0, %v7202
        %v7204 = vmul.f32 %v7201, %v7203
        %v7205 = vadd.f32 %v7201, %v7204
        %vm7206 = vweird.f32 %v6959
        %vm7207 = vweird.f32 %v7201
        %vm7208 = vmor %vm7206, %vm7207
        %v7209 = vsel %vm7208, %v7201, %v7205
        %v7210 = vand.u32 2147483647, %v6959
        %vm7211 = vcmp.eq.f32.partialorder %v7210, 8.507059e+37
        %v7212 = vand.u32 %v6959, 2147483648
        %v7213 = vor.u32 1.1754944e-38, %v7212
        %v7214 = vsel %vm7211, %v7213, %v7209
        %v7215 = vmul.f32 1.0, %v7214
        %v7216 = vrcp.pop %v6960
        %v7217 = vmul.f32 %v6960, %v7216
        %v7218 = vsub.f32 1.0, %v7217
        %v7219 = vmul.f32 %v7216, %v7218
        %v7220 = vadd.f32 %v7216, %v7219
        %vm7221 = vweird.f32 %v6960
        %vm7222 = vweird.f32 %v7216
        %vm7223 = vmor %vm7221, %vm7222
        %v7224 = vsel %vm7223, %v7216, %v7220
        %v7225 = vand.u32 2147483647, %v6960
        %vm7226 = vcmp.eq.f32.partialorder %v7225, 8.507059e+37
        %v7227 = vand.u32 %v6960, 2147483648
        %v7228 = vor.u32 1.1754944e-38, %v7227
        %v7229 = vsel %vm7226, %v7228, %v7224
        %v7230 = vmul.f32 1.0, %v7229
        %v7231 = vrcp.pop %v6961
        %v7232 = vmul.f32 %v6961, %v7231
        %v7233 = vsub.f32 1.0, %v7232
        %v7234 = vmul.f32 %v7231, %v7233
        %v7235 = vadd.f32 %v7231, %v7234
        %vm7236 = vweird.f32 %v6961
        %vm7237 = vweird.f32 %v7231
        %vm7238 = vmor %vm7236, %vm7237
        %v7239 = vsel %vm7238, %v7231, %v7235
        %v7240 = vand.u32 2147483647, %v6961
        %vm7241 = vcmp.eq.f32.partialorder %v7240, 8.507059e+37
        %v7242 = vand.u32 %v6961, 2147483648
        %v7243 = vor.u32 1.1754944e-38, %v7242
        %v7244 = vsel %vm7241, %v7243, %v7239
        %v7245 = vmul.f32 1.0, %v7244
        %v7246 = vrcp.pop %v6962
        %v7247 = vmul.f32 %v6962, %v7246
        %v7248 = vsub.f32 1.0, %v7247
        %v7249 = vmul.f32 %v7246, %v7248
        %v7250 = vadd.f32 %v7246, %v7249
        %vm7251 = vweird.f32 %v6962
        %vm7252 = vweird.f32 %v7246
        %vm7253 = vmor %vm7251, %vm7252
        %v7254 = vsel %vm7253, %v7246, %v7250
        %v7255 = vand.u32 2147483647, %v6962
        %vm7256 = vcmp.eq.f32.partialorder %v7255, 8.507059e+37
        %v7257 = vand.u32 %v6962, 2147483648
        %v7258 = vor.u32 1.1754944e-38, %v7257
        %v7259 = vsel %vm7256, %v7258, %v7254
        %v7260 = vmul.f32 1.0, %v7259
        %v7261 = vrcp.pop %v6963
        %v7262 = vmul.f32 %v6963, %v7261
        %v7263 = vsub.f32 1.0, %v7262
        %v7264 = vmul.f32 %v7261, %v7263
        %v7265 = vadd.f32 %v7261, %v7264
        %vm7266 = vweird.f32 %v6963
        %vm7267 = vweird.f32 %v7261
        %vm7268 = vmor %vm7266, %vm7267
        %v7269 = vsel %vm7268, %v7261, %v7265
        %v7270 = vand.u32 2147483647, %v6963
        %vm7271 = vcmp.eq.f32.partialorder %v7270, 8.507059e+37
        %v7272 = vand.u32 %v6963, 2147483648
        %v7273 = vor.u32 1.1754944e-38, %v7272
        %v7274 = vsel %vm7271, %v7273, %v7269
        %v7275 = vmul.f32 1.0, %v7274
        %v7276 = vrcp.pop %v6964
        %v7277 = vmul.f32 %v6964, %v7276
        %v7278 = vsub.f32 1.0, %v7277
        %v7279 = vmul.f32 %v7276, %v7278
        %v7280 = vadd.f32 %v7276, %v7279
        %vm7281 = vweird.f32 %v6964
        %vm7282 = vweird.f32 %v7276
        %vm7283 = vmor %vm7281, %vm7282
        %v7284 = vsel %vm7283, %v7276, %v7280
        %v7285 = vand.u32 2147483647, %v6964
        %vm7286 = vcmp.eq.f32.partialorder %v7285, 8.507059e+37
        %v7287 = vand.u32 %v6964, 2147483648
        %v7288 = vor.u32 1.1754944e-38, %v7287
        %v7289 = vsel %vm7286, %v7288, %v7284
        %v7290 = vmul.f32 1.0, %v7289
        %v7291 = vrcp.pop %v6965
        %v7292 = vmul.f32 %v6965, %v7291
        %v7293 = vsub.f32 1.0, %v7292
        %v7294 = vmul.f32 %v7291, %v7293
        %v7295 = vadd.f32 %v7291, %v7294
        %vm7296 = vweird.f32 %v6965
        %vm7297 = vweird.f32 %v7291
        %vm7298 = vmor %vm7296, %vm7297
        %v7299 = vsel %vm7298, %v7291, %v7295
        %v7300 = vand.u32 2147483647, %v6965
        %vm7301 = vcmp.eq.f32.partialorder %v7300, 8.507059e+37
        %v7302 = vand.u32 %v6965, 2147483648
        %v7303 = vor.u32 1.1754944e-38, %v7302
        %v7304 = vsel %vm7301, %v7303, %v7299
        %v7305 = vmul.f32 1.0, %v7304
        %v7306 = vrcp.pop %v6966
        %v7307 = vmul.f32 %v6966, %v7306
        %v7308 = vsub.f32 1.0, %v7307
        %v7309 = vmul.f32 %v7306, %v7308
        %v7310 = vadd.f32 %v7306, %v7309
        %vm7311 = vweird.f32 %v6966
        %vm7312 = vweird.f32 %v7306
        %vm7313 = vmor %vm7311, %vm7312
        %v7314 = vsel %vm7313, %v7306, %v7310
        %v7315 = vand.u32 2147483647, %v6966
        %vm7316 = vcmp.eq.f32.partialorder %v7315, 8.507059e+37
        %v7317 = vand.u32 %v6966, 2147483648
        %v7318 = vor.u32 1.1754944e-38, %v7317
        %v7319 = vsel %vm7316, %v7318, %v7314
        %v7320 = vmul.f32 1.0, %v7319
        %v7321 = vrcp.pop %v6967
        %v7322 = vmul.f32 %v6967, %v7321
        %v7323 = vsub.f32 1.0, %v7322
        %v7324 = vmul.f32 %v7321, %v7323
        %v7325 = vadd.f32 %v7321, %v7324
        %vm7326 = vweird.f32 %v6967
        %vm7327 = vweird.f32 %v7321
        %vm7328 = vmor %vm7326, %vm7327
        %v7329 = vsel %vm7328, %v7321, %v7325
        %v7330 = vand.u32 2147483647, %v6967
        %vm7331 = vcmp.eq.f32.partialorder %v7330, 8.507059e+37
        %v7332 = vand.u32 %v6967, 2147483648
        %v7333 = vor.u32 1.1754944e-38, %v7332
        %v7334 = vsel %vm7331, %v7333, %v7329
        %v7335 = vmul.f32 1.0, %v7334
        %v7336 = vrcp.pop %v6968
        %v7337 = vmul.f32 %v6968, %v7336
        %v7338 = vsub.f32 1.0, %v7337
        %v7339 = vmul.f32 %v7336, %v7338
        %v7340 = vadd.f32 %v7336, %v7339
        %vm7341 = vweird.f32 %v6968
        %vm7342 = vweird.f32 %v7336
        %vm7343 = vmor %vm7341, %vm7342
        %v7344 = vsel %vm7343, %v7336, %v7340
        %v7345 = vand.u32 2147483647, %v6968
        %vm7346 = vcmp.eq.f32.partialorder %v7345, 8.507059e+37
        %v7347 = vand.u32 %v6968, 2147483648
        %v7348 = vor.u32 1.1754944e-38, %v7347
        %v7349 = vsel %vm7346, %v7348, %v7344
        %v7350 = vmul.f32 1.0, %v7349
        %v7351 = vrcp.pop %v6969
        %v7352 = vmul.f32 %v6969, %v7351
        %v7353 = vsub.f32 1.0, %v7352
        %v7354 = vmul.f32 %v7351, %v7353
        %v7355 = vadd.f32 %v7351, %v7354
        %vm7356 = vweird.f32 %v6969
        %vm7357 = vweird.f32 %v7351
        %vm7358 = vmor %vm7356, %vm7357
        %v7359 = vsel %vm7358, %v7351, %v7355
        %v7360 = vand.u32 2147483647, %v6969
        %vm7361 = vcmp.eq.f32.partialorder %v7360, 8.507059e+37
        %v7362 = vand.u32 %v6969, 2147483648
        %v7363 = vor.u32 1.1754944e-38, %v7362
        %v7364 = vsel %vm7361, %v7363, %v7359
        %v7365 = vmul.f32 1.0, %v7364
        %v7366 = vrcp.pop %v6970
        %v7367 = vmul.f32 %v6970, %v7366
        %v7368 = vsub.f32 1.0, %v7367
        %v7369 = vmul.f32 %v7366, %v7368
        %v7370 = vadd.f32 %v7366, %v7369
        %vm7371 = vweird.f32 %v6970
        %vm7372 = vweird.f32 %v7366
        %vm7373 = vmor %vm7371, %vm7372
        %v7374 = vsel %vm7373, %v7366, %v7370
        %v7375 = vand.u32 2147483647, %v6970
        %vm7376 = vcmp.eq.f32.partialorder %v7375, 8.507059e+37
        %v7377 = vand.u32 %v6970, 2147483648
        %v7378 = vor.u32 1.1754944e-38, %v7377
        %v7379 = vsel %vm7376, %v7378, %v7374
        %v7380 = vmul.f32 1.0, %v7379
        %v7381 = vrcp.pop %v6971
        %v7382 = vmul.f32 %v6971, %v7381
        %v7383 = vsub.f32 1.0, %v7382
        %v7384 = vmul.f32 %v7381, %v7383
        %v7385 = vadd.f32 %v7381, %v7384
        %vm7386 = vweird.f32 %v6971
        %vm7387 = vweird.f32 %v7381
        %vm7388 = vmor %vm7386, %vm7387
        %v7389 = vsel %vm7388, %v7381, %v7385
        %v7390 = vand.u32 2147483647, %v6971
        %vm7391 = vcmp.eq.f32.partialorder %v7390, 8.507059e+37
        %v7392 = vand.u32 %v6971, 2147483648
        %v7393 = vor.u32 1.1754944e-38, %v7392
        %v7394 = vsel %vm7391, %v7393, %v7389
        %v7395 = vmul.f32 1.0, %v7394
        %v7396 = vrcp.pop %v6972
        %v7397 = vmul.f32 %v6972, %v7396
        %v7398 = vsub.f32 1.0, %v7397
        %v7399 = vmul.f32 %v7396, %v7398
        %v7400 = vadd.f32 %v7396, %v7399
        %vm7401 = vweird.f32 %v6972
        %vm7402 = vweird.f32 %v7396
        %vm7403 = vmor %vm7401, %vm7402
        %v7404 = vsel %vm7403, %v7396, %v7400
        %v7405 = vand.u32 2147483647, %v6972
        %vm7406 = vcmp.eq.f32.partialorder %v7405, 8.507059e+37
        %v7407 = vand.u32 %v6972, 2147483648
        %v7408 = vor.u32 1.1754944e-38, %v7407
        %v7409 = vsel %vm7406, %v7408, %v7404
        %v7410 = vmul.f32 1.0, %v7409
        %v7411 = vrcp.pop %v6973
        %v7412 = vmul.f32 %v6973, %v7411
        %v7413 = vsub.f32 1.0, %v7412
        %v7414 = vmul.f32 %v7411, %v7413
        %v7415 = vadd.f32 %v7411, %v7414
        %vm7416 = vweird.f32 %v6973
        %vm7417 = vweird.f32 %v7411
        %vm7418 = vmor %vm7416, %vm7417
        %v7419 = vsel %vm7418, %v7411, %v7415
        %v7420 = vand.u32 2147483647, %v6973
        %vm7421 = vcmp.eq.f32.partialorder %v7420, 8.507059e+37
        %v7422 = vand.u32 %v6973, 2147483648
        %v7423 = vor.u32 1.1754944e-38, %v7422
        %v7424 = vsel %vm7421, %v7423, %v7419
        %v7425 = vmul.f32 1.0, %v7424
        %v7426 = vrcp.pop %v6974
        %v7427 = vmul.f32 %v6974, %v7426
        %v7428 = vsub.f32 1.0, %v7427
        %v7429 = vmul.f32 %v7426, %v7428
        %v7430 = vadd.f32 %v7426, %v7429
        %vm7431 = vweird.f32 %v6974
        %vm7432 = vweird.f32 %v7426
        %vm7433 = vmor %vm7431, %vm7432
        %v7434 = vsel %vm7433, %v7426, %v7430
        %v7435 = vand.u32 2147483647, %v6974
        %vm7436 = vcmp.eq.f32.partialorder %v7435, 8.507059e+37
        %v7437 = vand.u32 %v6974, 2147483648
        %v7438 = vor.u32 1.1754944e-38, %v7437
        %v7439 = vsel %vm7436, %v7438, %v7434
        %v7440 = vmul.f32 1.0, %v7439
        %v7441 = vrcp.pop %v6975
        %v7442 = vmul.f32 %v6975, %v7441
        %v7443 = vsub.f32 1.0, %v7442
        %v7444 = vmul.f32 %v7441, %v7443
        %v7445 = vadd.f32 %v7441, %v7444
        %vm7446 = vweird.f32 %v6975
        %vm7447 = vweird.f32 %v7441
        %vm7448 = vmor %vm7446, %vm7447
        %v7449 = vsel %vm7448, %v7441, %v7445
        %v7450 = vand.u32 2147483647, %v6975
        %vm7451 = vcmp.eq.f32.partialorder %v7450, 8.507059e+37
        %v7452 = vand.u32 %v6975, 2147483648
        %v7453 = vor.u32 1.1754944e-38, %v7452
        %v7454 = vsel %vm7451, %v7453, %v7449
        %v7455 = vmul.f32 1.0, %v7454
        %v7488 = vperm.slane %v6990, 0
        %v7489 = vperm.slane %v6990, 1
        %v7490 = vperm.slane %v6990, 2
        %v7491 = vperm.slane %v6990, 3
        %v7492 = vperm.slane %v6990, 4
        %v7493 = vperm.slane %v6990, 5
        %v7494 = vperm.slane %v6990, 6
        %v7495 = vperm.slane %v6990, 7
        %v7496 = vperm.slane %v7005, 0
        %v7497 = vperm.slane %v7005, 1
        %v7498 = vperm.slane %v7005, 2
        %v7499 = vperm.slane %v7005, 3
        %v7500 = vperm.slane %v7005, 4
        %v7501 = vperm.slane %v7005, 5
        %v7502 = vperm.slane %v7005, 6
        %v7503 = vperm.slane %v7005, 7
        %v7504 = vperm.slane %v7020, 0
        %v7505 = vperm.slane %v7020, 1
        %v7506 = vperm.slane %v7020, 2
        %v7507 = vperm.slane %v7020, 3
        %v7508 = vperm.slane %v7020, 4
        %v7509 = vperm.slane %v7020, 5
        %v7510 = vperm.slane %v7020, 6
        %v7511 = vperm.slane %v7020, 7
        %v7512 = vperm.slane %v7035, 0
        %v7513 = vperm.slane %v7035, 1
        %v7514 = vperm.slane %v7035, 2
        %v7515 = vperm.slane %v7035, 3
        %v7516 = vperm.slane %v7035, 4
        %v7517 = vperm.slane %v7035, 5
        %v7518 = vperm.slane %v7035, 6
        %v7519 = vperm.slane %v7035, 7
        %v7520 = vperm.slane %v7050, 0
        %v7521 = vperm.slane %v7050, 1
        %v7522 = vperm.slane %v7050, 2
        %v7523 = vperm.slane %v7050, 3
        %v7524 = vperm.slane %v7050, 4
        %v7525 = vperm.slane %v7050, 5
        %v7526 = vperm.slane %v7050, 6
        %v7527 = vperm.slane %v7050, 7
        %v7528 = vperm.slane %v7065, 0
        %v7529 = vperm.slane %v7065, 1
        %v7530 = vperm.slane %v7065, 2
        %v7531 = vperm.slane %v7065, 3
        %v7532 = vperm.slane %v7065, 4
        %v7533 = vperm.slane %v7065, 5
        %v7534 = vperm.slane %v7065, 6
        %v7535 = vperm.slane %v7065, 7
        %v7536 = vperm.slane %v7080, 0
        %v7537 = vperm.slane %v7080, 1
        %v7538 = vperm.slane %v7080, 2
        %v7539 = vperm.slane %v7080, 3
        %v7540 = vperm.slane %v7080, 4
        %v7541 = vperm.slane %v7080, 5
        %v7542 = vperm.slane %v7080, 6
        %v7543 = vperm.slane %v7080, 7
        %v7544 = vperm.slane %v7095, 0
        %v7545 = vperm.slane %v7095, 1
        %v7546 = vperm.slane %v7095, 2
        %v7547 = vperm.slane %v7095, 3
        %v7548 = vperm.slane %v7095, 4
        %v7549 = vperm.slane %v7095, 5
        %v7550 = vperm.slane %v7095, 6
        %v7551 = vperm.slane %v7095, 7
        %v7552 = vperm.slane %v7110, 0
        %v7553 = vperm.slane %v7110, 1
        %v7554 = vperm.slane %v7110, 2
        %v7555 = vperm.slane %v7110, 3
        %v7556 = vperm.slane %v7110, 4
        %v7557 = vperm.slane %v7110, 5
        %v7558 = vperm.slane %v7110, 6
        %v7559 = vperm.slane %v7110, 7
        %v7560 = vperm.slane %v7125, 0
        %v7561 = vperm.slane %v7125, 1
        %v7562 = vperm.slane %v7125, 2
        %v7563 = vperm.slane %v7125, 3
        %v7564 = vperm.slane %v7125, 4
        %v7565 = vperm.slane %v7125, 5
        %v7566 = vperm.slane %v7125, 6
        %v7567 = vperm.slane %v7125, 7
        %v7568 = vperm.slane %v7140, 0
        %v7569 = vperm.slane %v7140, 1
        %v7570 = vperm.slane %v7140, 2
        %v7571 = vperm.slane %v7140, 3
        %v7572 = vperm.slane %v7140, 4
        %v7573 = vperm.slane %v7140, 5
        %v7574 = vperm.slane %v7140, 6
        %v7575 = vperm.slane %v7140, 7
        %v7576 = vperm.slane %v7155, 0
        %v7577 = vperm.slane %v7155, 1
        %v7578 = vperm.slane %v7155, 2
        %v7579 = vperm.slane %v7155, 3
        %v7580 = vperm.slane %v7155, 4
        %v7581 = vperm.slane %v7155, 5
        %v7582 = vperm.slane %v7155, 6
        %v7583 = vperm.slane %v7155, 7
        %v7584 = vperm.slane %v7170, 0
        %v7585 = vperm.slane %v7170, 1
        %v7586 = vperm.slane %v7170, 2
        %v7587 = vperm.slane %v7170, 3
        %v7588 = vperm.slane %v7170, 4
        %v7589 = vperm.slane %v7170, 5
        %v7590 = vperm.slane %v7170, 6
        %v7591 = vperm.slane %v7170, 7
        %v7592 = vperm.slane %v7185, 0
        %v7593 = vperm.slane %v7185, 1
        %v7594 = vperm.slane %v7185, 2
        %v7595 = vperm.slane %v7185, 3
        %v7596 = vperm.slane %v7185, 4
        %v7597 = vperm.slane %v7185, 5
        %v7598 = vperm.slane %v7185, 6
        %v7599 = vperm.slane %v7185, 7
        %v7600 = vperm.slane %v7200, 0
        %v7601 = vperm.slane %v7200, 1
        %v7602 = vperm.slane %v7200, 2
        %v7603 = vperm.slane %v7200, 3
        %v7604 = vperm.slane %v7200, 4
        %v7605 = vperm.slane %v7200, 5
        %v7606 = vperm.slane %v7200, 6
        %v7607 = vperm.slane %v7200, 7
        %v7608 = vperm.slane %v7215, 0
        %v7609 = vperm.slane %v7215, 1
        %v7610 = vperm.slane %v7215, 2
        %v7611 = vperm.slane %v7215, 3
        %v7612 = vperm.slane %v7215, 4
        %v7613 = vperm.slane %v7215, 5
        %v7614 = vperm.slane %v7215, 6
        %v7615 = vperm.slane %v7215, 7
        %v7616 = vperm.slane %v7230, 0
        %v7617 = vperm.slane %v7230, 1
        %v7618 = vperm.slane %v7230, 2
        %v7619 = vperm.slane %v7230, 3
        %v7620 = vperm.slane %v7230, 4
        %v7621 = vperm.slane %v7230, 5
        %v7622 = vperm.slane %v7230, 6
        %v7623 = vperm.slane %v7230, 7
        %v7624 = vperm.slane %v7245, 0
        %v7625 = vperm.slane %v7245, 1
        %v7626 = vperm.slane %v7245, 2
        %v7627 = vperm.slane %v7245, 3
        %v7628 = vperm.slane %v7245, 4
        %v7629 = vperm.slane %v7245, 5
        %v7630 = vperm.slane %v7245, 6
        %v7631 = vperm.slane %v7245, 7
        %v7632 = vperm.slane %v7260, 0
        %v7633 = vperm.slane %v7260, 1
        %v7634 = vperm.slane %v7260, 2
        %v7635 = vperm.slane %v7260, 3
        %v7636 = vperm.slane %v7260, 4
        %v7637 = vperm.slane %v7260, 5
        %v7638 = vperm.slane %v7260, 6
        %v7639 = vperm.slane %v7260, 7
        %v7640 = vperm.slane %v7275, 0
        %v7641 = vperm.slane %v7275, 1
        %v7642 = vperm.slane %v7275, 2
        %v7643 = vperm.slane %v7275, 3
        %v7644 = vperm.slane %v7275, 4
        %v7645 = vperm.slane %v7275, 5
        %v7646 = vperm.slane %v7275, 6
        %v7647 = vperm.slane %v7275, 7
        %v7648 = vperm.slane %v7290, 0
        %v7649 = vperm.slane %v7290, 1
        %v7650 = vperm.slane %v7290, 2
        %v7651 = vperm.slane %v7290, 3
        %v7652 = vperm.slane %v7290, 4
        %v7653 = vperm.slane %v7290, 5
        %v7654 = vperm.slane %v7290, 6
        %v7655 = vperm.slane %v7290, 7
        %v7656 = vperm.slane %v7305, 0
        %v7657 = vperm.slane %v7305, 1
        %v7658 = vperm.slane %v7305, 2
        %v7659 = vperm.slane %v7305, 3
        %v7660 = vperm.slane %v7305, 4
        %v7661 = vperm.slane %v7305, 5
        %v7662 = vperm.slane %v7305, 6
        %v7663 = vperm.slane %v7305, 7
        %v7664 = vperm.slane %v7320, 0
        %v7665 = vperm.slane %v7320, 1
        %v7666 = vperm.slane %v7320, 2
        %v7667 = vperm.slane %v7320, 3
        %v7668 = vperm.slane %v7320, 4
        %v7669 = vperm.slane %v7320, 5
        %v7670 = vperm.slane %v7320, 6
        %v7671 = vperm.slane %v7320, 7
        %v7672 = vperm.slane %v7335, 0
        %v7673 = vperm.slane %v7335, 1
        %v7674 = vperm.slane %v7335, 2
        %v7675 = vperm.slane %v7335, 3
        %v7676 = vperm.slane %v7335, 4
        %v7677 = vperm.slane %v7335, 5
        %v7678 = vperm.slane %v7335, 6
        %v7679 = vperm.slane %v7335, 7
        %v7680 = vperm.slane %v7350, 0
        %v7681 = vperm.slane %v7350, 1
        %v7682 = vperm.slane %v7350, 2
        %v7683 = vperm.slane %v7350, 3
        %v7684 = vperm.slane %v7350, 4
        %v7685 = vperm.slane %v7350, 5
        %v7686 = vperm.slane %v7350, 6
        %v7687 = vperm.slane %v7350, 7
        %v7688 = vperm.slane %v7365, 0
        %v7689 = vperm.slane %v7365, 1
        %v7690 = vperm.slane %v7365, 2
        %v7691 = vperm.slane %v7365, 3
        %v7692 = vperm.slane %v7365, 4
        %v7693 = vperm.slane %v7365, 5
        %v7694 = vperm.slane %v7365, 6
        %v7695 = vperm.slane %v7365, 7
        %v7696 = vperm.slane %v7380, 0
        %v7697 = vperm.slane %v7380, 1
        %v7698 = vperm.slane %v7380, 2
        %v7699 = vperm.slane %v7380, 3
        %v7700 = vperm.slane %v7380, 4
        %v7701 = vperm.slane %v7380, 5
        %v7702 = vperm.slane %v7380, 6
        %v7703 = vperm.slane %v7380, 7
        %v7704 = vperm.slane %v7395, 0
        %v7705 = vperm.slane %v7395, 1
        %v7706 = vperm.slane %v7395, 2
        %v7707 = vperm.slane %v7395, 3
        %v7708 = vperm.slane %v7395, 4
        %v7709 = vperm.slane %v7395, 5
        %v7710 = vperm.slane %v7395, 6
        %v7711 = vperm.slane %v7395, 7
        %v7712 = vperm.slane %v7410, 0
        %v7713 = vperm.slane %v7410, 1
        %v7714 = vperm.slane %v7410, 2
        %v7715 = vperm.slane %v7410, 3
        %v7716 = vperm.slane %v7410, 4
        %v7717 = vperm.slane %v7410, 5
        %v7718 = vperm.slane %v7410, 6
        %v7719 = vperm.slane %v7410, 7
        %v7720 = vperm.slane %v7425, 0
        %v7721 = vperm.slane %v7425, 1
        %v7722 = vperm.slane %v7425, 2
        %v7723 = vperm.slane %v7425, 3
        %v7724 = vperm.slane %v7425, 4
        %v7725 = vperm.slane %v7425, 5
        %v7726 = vperm.slane %v7425, 6
        %v7727 = vperm.slane %v7425, 7
        %v7728 = vperm.slane %v7440, 0
        %v7729 = vperm.slane %v7440, 1
        %v7730 = vperm.slane %v7440, 2
        %v7731 = vperm.slane %v7440, 3
        %v7732 = vperm.slane %v7440, 4
        %v7733 = vperm.slane %v7440, 5
        %v7734 = vperm.slane %v7440, 6
        %v7735 = vperm.slane %v7440, 7
        %v7736 = vperm.slane %v7455, 0
        %v7737 = vperm.slane %v7455, 1
        %v7738 = vperm.slane %v7455, 2
        %v7739 = vperm.slane %v7455, 3
        %v7740 = vperm.slane %v7455, 4
        %v7741 = vperm.slane %v7455, 5
        %v7742 = vperm.slane %v7455, 6
        %v7743 = vperm.slane %v7455, 7
        %7744 = vst [vmem:[#allocation1] ss:$9 sm:$0xff] %v7488
        %s7745 = scalar_lea.vmem [#allocation1], 1
        %7746 = vst [vmem:[%s7745] ss:$9 sm:$0xff] %v7489
        %s7747 = scalar_lea.vmem [#allocation1], 2
        %7748 = vst [vmem:[%s7747] ss:$9 sm:$0xff] %v7490
        %s7749 = scalar_lea.vmem [#allocation1], 3
        %7750 = vst [vmem:[%s7749] ss:$9 sm:$0xff] %v7491
        %s7751 = scalar_lea.vmem [#allocation1], 4
        %7752 = vst [vmem:[%s7751] ss:$9 sm:$0xff] %v7492
        %s7753 = scalar_lea.vmem [#allocation1], 5
        %7754 = vst [vmem:[%s7753] ss:$9 sm:$0xff] %v7493
        %s7755 = scalar_lea.vmem [#allocation1], 6
        %7756 = vst [vmem:[%s7755] ss:$9 sm:$0xff] %v7494
        %s7757 = scalar_lea.vmem [#allocation1], 7
        %7758 = vst [vmem:[%s7757] ss:$9 sm:$0xff] %v7495
        %v7759 = vld [vmem:[#allocation1] sm:$0xff]
        %7760 = vst [vmem:[#allocation1] ss:$9 sm:$0xff] %v7496
        %7761 = vst [vmem:[%s7745] ss:$9 sm:$0xff] %v7497
        %7762 = vst [vmem:[%s7747] ss:$9 sm:$0xff] %v7498
        %7763 = vst [vmem:[%s7749] ss:$9 sm:$0xff] %v7499
        %7764 = vst [vmem:[%s7751] ss:$9 sm:$0xff] %v7500
        %7765 = vst [vmem:[%s7753] ss:$9 sm:$0xff] %v7501
        %7766 = vst [vmem:[%s7755] ss:$9 sm:$0xff] %v7502
        %7767 = vst [vmem:[%s7757] ss:$9 sm:$0xff] %v7503
        %v7768 = vld [vmem:[#allocation1] sm:$0xff]
        %7769 = vst [vmem:[#allocation1] ss:$9 sm:$0xff] %v7504
        %7770 = vst [vmem:[%s7745] ss:$9 sm:$0xff] %v7505
        %7771 = vst [vmem:[%s7747] ss:$9 sm:$0xff] %v7506
        %7772 = vst [vmem:[%s7749] ss:$9 sm:$0xff] %v7507
        %7773 = vst [vmem:[%s7751] ss:$9 sm:$0xff] %v7508
        %7774 = vst [vmem:[%s7753] ss:$9 sm:$0xff] %v7509
        %7775 = vst [vmem:[%s7755] ss:$9 sm:$0xff] %v7510
        %7776 = vst [vmem:[%s7757] ss:$9 sm:$0xff] %v7511
        %v7777 = vld [vmem:[#allocation1] sm:$0xff]
        %7778 = vst [vmem:[#allocation1] ss:$9 sm:$0xff] %v7512
        %7779 = vst [vmem:[%s7745] ss:$9 sm:$0xff] %v7513
        %7780 = vst [vmem:[%s7747] ss:$9 sm:$0xff] %v7514
        %7781 = vst [vmem:[%s7749] ss:$9 sm:$0xff] %v7515
        %7782 = vst [vmem:[%s7751] ss:$9 sm:$0xff] %v7516
        %7783 = vst [vmem:[%s7753] ss:$9 sm:$0xff] %v7517
        %7784 = vst [vmem:[%s7755] ss:$9 sm:$0xff] %v7518
        %7785 = vst [vmem:[%s7757] ss:$9 sm:$0xff] %v7519
        %v7786 = vld [vmem:[#allocation1] sm:$0xff]
        %7787 = vst [vmem:[#allocation1] ss:$9 sm:$0xff] %v7520
        %7788 = vst [vmem:[%s7745] ss:$9 sm:$0xff] %v7521
        %7789 = vst [vmem:[%s7747] ss:$9 sm:$0xff] %v7522
        %7790 = vst [vmem:[%s7749] ss:$9 sm:$0xff] %v7523
        %7791 = vst [vmem:[%s7751] ss:$9 sm:$0xff] %v7524
        %7792 = vst [vmem:[%s7753] ss:$9 sm:$0xff] %v7525
        %7793 = vst [vmem:[%s7755] ss:$9 sm:$0xff] %v7526
        %7794 = vst [vmem:[%s7757] ss:$9 sm:$0xff] %v7527
        %v7795 = vld [vmem:[#allocation1] sm:$0xff]
        %7796 = vst [vmem:[#allocation1] ss:$9 sm:$0xff] %v7528
        %7797 = vst [vmem:[%s7745] ss:$9 sm:$0xff] %v7529
        %7798 = vst [vmem:[%s7747] ss:$9 sm:$0xff] %v7530
        %7799 = vst [vmem:[%s7749] ss:$9 sm:$0xff] %v7531
        %7800 = vst [vmem:[%s7751] ss:$9 sm:$0xff] %v7532
        %7801 = vst [vmem:[%s7753] ss:$9 sm:$0xff] %v7533
        %7802 = vst [vmem:[%s7755] ss:$9 sm:$0xff] %v7534
        %7803 = vst [vmem:[%s7757] ss:$9 sm:$0xff] %v7535
        %v7804 = vld [vmem:[#allocation1] sm:$0xff]
        %7805 = vst [vmem:[#allocation1] ss:$9 sm:$0xff] %v7536
        %7806 = vst [vmem:[%s7745] ss:$9 sm:$0xff] %v7537
        %7807 = vst [vmem:[%s7747] ss:$9 sm:$0xff] %v7538
        %7808 = vst [vmem:[%s7749] ss:$9 sm:$0xff] %v7539
        %7809 = vst [vmem:[%s7751] ss:$9 sm:$0xff] %v7540
        %7810 = vst [vmem:[%s7753] ss:$9 sm:$0xff] %v7541
        %7811 = vst [vmem:[%s7755] ss:$9 sm:$0xff] %v7542
        %7812 = vst [vmem:[%s7757] ss:$9 sm:$0xff] %v7543
        %v7813 = vld [vmem:[#allocation1] sm:$0xff]
        %7814 = vst [vmem:[#allocation1] ss:$9 sm:$0xff] %v7544
        %7815 = vst [vmem:[%s7745] ss:$9 sm:$0xff] %v7545
        %7816 = vst [vmem:[%s7747] ss:$9 sm:$0xff] %v7546
        %7817 = vst [vmem:[%s7749] ss:$9 sm:$0xff] %v7547
        %7818 = vst [vmem:[%s7751] ss:$9 sm:$0xff] %v7548
        %7819 = vst [vmem:[%s7753] ss:$9 sm:$0xff] %v7549
        %7820 = vst [vmem:[%s7755] ss:$9 sm:$0xff] %v7550
        %7821 = vst [vmem:[%s7757] ss:$9 sm:$0xff] %v7551
        %v7822 = vld [vmem:[#allocation1] sm:$0xff]
        %7823 = vst [vmem:[#allocation1] ss:$9 sm:$0xff] %v7552
        %7824 = vst [vmem:[%s7745] ss:$9 sm:$0xff] %v7553
        %7825 = vst [vmem:[%s7747] ss:$9 sm:$0xff] %v7554
        %7826 = vst [vmem:[%s7749] ss:$9 sm:$0xff] %v7555
        %7827 = vst [vmem:[%s7751] ss:$9 sm:$0xff] %v7556
        %7828 = vst [vmem:[%s7753] ss:$9 sm:$0xff] %v7557
        %7829 = vst [vmem:[%s7755] ss:$9 sm:$0xff] %v7558
        %7830 = vst [vmem:[%s7757] ss:$9 sm:$0xff] %v7559
        %v7831 = vld [vmem:[#allocation1] sm:$0xff]
        %7832 = vst [vmem:[#allocation1] ss:$9 sm:$0xff] %v7560
        %7833 = vst [vmem:[%s7745] ss:$9 sm:$0xff] %v7561
        %7834 = vst [vmem:[%s7747] ss:$9 sm:$0xff] %v7562
        %7835 = vst [vmem:[%s7749] ss:$9 sm:$0xff] %v7563
        %7836 = vst [vmem:[%s7751] ss:$9 sm:$0xff] %v7564
        %7837 = vst [vmem:[%s7753] ss:$9 sm:$0xff] %v7565
        %7838 = vst [vmem:[%s7755] ss:$9 sm:$0xff] %v7566
        %7839 = vst [vmem:[%s7757] ss:$9 sm:$0xff] %v7567
        %v7840 = vld [vmem:[#allocation1] sm:$0xff]
        %7841 = vst [vmem:[#allocation1] ss:$9 sm:$0xff] %v7568
        %7842 = vst [vmem:[%s7745] ss:$9 sm:$0xff] %v7569
        %7843 = vst [vmem:[%s7747] ss:$9 sm:$0xff] %v7570
        %7844 = vst [vmem:[%s7749] ss:$9 sm:$0xff] %v7571
        %7845 = vst [vmem:[%s7751] ss:$9 sm:$0xff] %v7572
        %7846 = vst [vmem:[%s7753] ss:$9 sm:$0xff] %v7573
        %7847 = vst [vmem:[%s7755] ss:$9 sm:$0xff] %v7574
        %7848 = vst [vmem:[%s7757] ss:$9 sm:$0xff] %v7575
        %v7849 = vld [vmem:[#allocation1] sm:$0xff]
        %7850 = vst [vmem:[#allocation1] ss:$9 sm:$0xff] %v7576
        %7851 = vst [vmem:[%s7745] ss:$9 sm:$0xff] %v7577
        %7852 = vst [vmem:[%s7747] ss:$9 sm:$0xff] %v7578
        %7853 = vst [vmem:[%s7749] ss:$9 sm:$0xff] %v7579
        %7854 = vst [vmem:[%s7751] ss:$9 sm:$0xff] %v7580
        %7855 = vst [vmem:[%s7753] ss:$9 sm:$0xff] %v7581
        %7856 = vst [vmem:[%s7755] ss:$9 sm:$0xff] %v7582
        %7857 = vst [vmem:[%s7757] ss:$9 sm:$0xff] %v7583
        %v7858 = vld [vmem:[#allocation1] sm:$0xff]
        %7859 = vst [vmem:[#allocation1] ss:$9 sm:$0xff] %v7584
        %7860 = vst [vmem:[%s7745] ss:$9 sm:$0xff] %v7585
        %7861 = vst [vmem:[%s7747] ss:$9 sm:$0xff] %v7586
        %7862 = vst [vmem:[%s7749] ss:$9 sm:$0xff] %v7587
        %7863 = vst [vmem:[%s7751] ss:$9 sm:$0xff] %v7588
        %7864 = vst [vmem:[%s7753] ss:$9 sm:$0xff] %v7589
        %7865 = vst [vmem:[%s7755] ss:$9 sm:$0xff] %v7590
        %7866 = vst [vmem:[%s7757] ss:$9 sm:$0xff] %v7591
        %v7867 = vld [vmem:[#allocation1] sm:$0xff]
        %7868 = vst [vmem:[#allocation1] ss:$9 sm:$0xff] %v7592
        %7869 = vst [vmem:[%s7745] ss:$9 sm:$0xff] %v7593
        %7870 = vst [vmem:[%s7747] ss:$9 sm:$0xff] %v7594
        %7871 = vst [vmem:[%s7749] ss:$9 sm:$0xff] %v7595
        %7872 = vst [vmem:[%s7751] ss:$9 sm:$0xff] %v7596
        %7873 = vst [vmem:[%s7753] ss:$9 sm:$0xff] %v7597
        %7874 = vst [vmem:[%s7755] ss:$9 sm:$0xff] %v7598
        %7875 = vst [vmem:[%s7757] ss:$9 sm:$0xff] %v7599
        %v7876 = vld [vmem:[#allocation1] sm:$0xff]
        %7877 = vst [vmem:[#allocation1] ss:$9 sm:$0xff] %v7600
        %7878 = vst [vmem:[%s7745] ss:$9 sm:$0xff] %v7601
        %7879 = vst [vmem:[%s7747] ss:$9 sm:$0xff] %v7602
        %7880 = vst [vmem:[%s7749] ss:$9 sm:$0xff] %v7603
        %7881 = vst [vmem:[%s7751] ss:$9 sm:$0xff] %v7604
        %7882 = vst [vmem:[%s7753] ss:$9 sm:$0xff] %v7605
        %7883 = vst [vmem:[%s7755] ss:$9 sm:$0xff] %v7606
        %7884 = vst [vmem:[%s7757] ss:$9 sm:$0xff] %v7607
        %v7885 = vld [vmem:[#allocation1] sm:$0xff]
        %7886 = vst [vmem:[#allocation1] ss:$9 sm:$0xff] %v7608
        %7887 = vst [vmem:[%s7745] ss:$9 sm:$0xff] %v7609
        %7888 = vst [vmem:[%s7747] ss:$9 sm:$0xff] %v7610
        %7889 = vst [vmem:[%s7749] ss:$9 sm:$0xff] %v7611
        %7890 = vst [vmem:[%s7751] ss:$9 sm:$0xff] %v7612
        %7891 = vst [vmem:[%s7753] ss:$9 sm:$0xff] %v7613
        %7892 = vst [vmem:[%s7755] ss:$9 sm:$0xff] %v7614
        %7893 = vst [vmem:[%s7757] ss:$9 sm:$0xff] %v7615
        %v7894 = vld [vmem:[#allocation1] sm:$0xff]
        %7895 = vst [vmem:[#allocation1] ss:$9 sm:$0xff] %v7616
        %7896 = vst [vmem:[%s7745] ss:$9 sm:$0xff] %v7617
        %7897 = vst [vmem:[%s7747] ss:$9 sm:$0xff] %v7618
        %7898 = vst [vmem:[%s7749] ss:$9 sm:$0xff] %v7619
        %7899 = vst [vmem:[%s7751] ss:$9 sm:$0xff] %v7620
        %7900 = vst [vmem:[%s7753] ss:$9 sm:$0xff] %v7621
        %7901 = vst [vmem:[%s7755] ss:$9 sm:$0xff] %v7622
        %7902 = vst [vmem:[%s7757] ss:$9 sm:$0xff] %v7623
        %v7903 = vld [vmem:[#allocation1] sm:$0xff]
        %7904 = vst [vmem:[#allocation1] ss:$9 sm:$0xff] %v7624
        %7905 = vst [vmem:[%s7745] ss:$9 sm:$0xff] %v7625
        %7906 = vst [vmem:[%s7747] ss:$9 sm:$0xff] %v7626
        %7907 = vst [vmem:[%s7749] ss:$9 sm:$0xff] %v7627
        %7908 = vst [vmem:[%s7751] ss:$9 sm:$0xff] %v7628
        %7909 = vst [vmem:[%s7753] ss:$9 sm:$0xff] %v7629
        %7910 = vst [vmem:[%s7755] ss:$9 sm:$0xff] %v7630
        %7911 = vst [vmem:[%s7757] ss:$9 sm:$0xff] %v7631
        %v7912 = vld [vmem:[#allocation1] sm:$0xff]
        %7913 = vst [vmem:[#allocation1] ss:$9 sm:$0xff] %v7632
        %7914 = vst [vmem:[%s7745] ss:$9 sm:$0xff] %v7633
        %7915 = vst [vmem:[%s7747] ss:$9 sm:$0xff] %v7634
        %7916 = vst [vmem:[%s7749] ss:$9 sm:$0xff] %v7635
        %7917 = vst [vmem:[%s7751] ss:$9 sm:$0xff] %v7636
        %7918 = vst [vmem:[%s7753] ss:$9 sm:$0xff] %v7637
        %7919 = vst [vmem:[%s7755] ss:$9 sm:$0xff] %v7638
        %7920 = vst [vmem:[%s7757] ss:$9 sm:$0xff] %v7639
        %v7921 = vld [vmem:[#allocation1] sm:$0xff]
        %7922 = vst [vmem:[#allocation1] ss:$9 sm:$0xff] %v7640
        %7923 = vst [vmem:[%s7745] ss:$9 sm:$0xff] %v7641
        %7924 = vst [vmem:[%s7747] ss:$9 sm:$0xff] %v7642
        %7925 = vst [vmem:[%s7749] ss:$9 sm:$0xff] %v7643
        %7926 = vst [vmem:[%s7751] ss:$9 sm:$0xff] %v7644
        %7927 = vst [vmem:[%s7753] ss:$9 sm:$0xff] %v7645
        %7928 = vst [vmem:[%s7755] ss:$9 sm:$0xff] %v7646
        %7929 = vst [vmem:[%s7757] ss:$9 sm:$0xff] %v7647
        %v7930 = vld [vmem:[#allocation1] sm:$0xff]
        %7931 = vst [vmem:[#allocation1] ss:$9 sm:$0xff] %v7648
        %7932 = vst [vmem:[%s7745] ss:$9 sm:$0xff] %v7649
        %7933 = vst [vmem:[%s7747] ss:$9 sm:$0xff] %v7650
        %7934 = vst [vmem:[%s7749] ss:$9 sm:$0xff] %v7651
        %7935 = vst [vmem:[%s7751] ss:$9 sm:$0xff] %v7652
        %7936 = vst [vmem:[%s7753] ss:$9 sm:$0xff] %v7653
        %7937 = vst [vmem:[%s7755] ss:$9 sm:$0xff] %v7654
        %7938 = vst [vmem:[%s7757] ss:$9 sm:$0xff] %v7655
        %v7939 = vld [vmem:[#allocation1] sm:$0xff]
        %7940 = vst [vmem:[#allocation1] ss:$9 sm:$0xff] %v7656
        %7941 = vst [vmem:[%s7745] ss:$9 sm:$0xff] %v7657
        %7942 = vst [vmem:[%s7747] ss:$9 sm:$0xff] %v7658
        %7943 = vst [vmem:[%s7749] ss:$9 sm:$0xff] %v7659
        %7944 = vst [vmem:[%s7751] ss:$9 sm:$0xff] %v7660
        %7945 = vst [vmem:[%s7753] ss:$9 sm:$0xff] %v7661
        %7946 = vst [vmem:[%s7755] ss:$9 sm:$0xff] %v7662
        %7947 = vst [vmem:[%s7757] ss:$9 sm:$0xff] %v7663
        %v7948 = vld [vmem:[#allocation1] sm:$0xff]
        %7949 = vst [vmem:[#allocation1] ss:$9 sm:$0xff] %v7664
        %7950 = vst [vmem:[%s7745] ss:$9 sm:$0xff] %v7665
        %7951 = vst [vmem:[%s7747] ss:$9 sm:$0xff] %v7666
        %7952 = vst [vmem:[%s7749] ss:$9 sm:$0xff] %v7667
        %7953 = vst [vmem:[%s7751] ss:$9 sm:$0xff] %v7668
        %7954 = vst [vmem:[%s7753] ss:$9 sm:$0xff] %v7669
        %7955 = vst [vmem:[%s7755] ss:$9 sm:$0xff] %v7670
        %7956 = vst [vmem:[%s7757] ss:$9 sm:$0xff] %v7671
        %v7957 = vld [vmem:[#allocation1] sm:$0xff]
        %7958 = vst [vmem:[#allocation1] ss:$9 sm:$0xff] %v7672
        %7959 = vst [vmem:[%s7745] ss:$9 sm:$0xff] %v7673
        %7960 = vst [vmem:[%s7747] ss:$9 sm:$0xff] %v7674
        %7961 = vst [vmem:[%s7749] ss:$9 sm:$0xff] %v7675
        %7962 = vst [vmem:[%s7751] ss:$9 sm:$0xff] %v7676
        %7963 = vst [vmem:[%s7753] ss:$9 sm:$0xff] %v7677
        %7964 = vst [vmem:[%s7755] ss:$9 sm:$0xff] %v7678
        %7965 = vst [vmem:[%s7757] ss:$9 sm:$0xff] %v7679
        %v7966 = vld [vmem:[#allocation1] sm:$0xff]
        %7967 = vst [vmem:[#allocation1] ss:$9 sm:$0xff] %v7680
        %7968 = vst [vmem:[%s7745] ss:$9 sm:$0xff] %v7681
        %7969 = vst [vmem:[%s7747] ss:$9 sm:$0xff] %v7682
        %7970 = vst [vmem:[%s7749] ss:$9 sm:$0xff] %v7683
        %7971 = vst [vmem:[%s7751] ss:$9 sm:$0xff] %v7684
        %7972 = vst [vmem:[%s7753] ss:$9 sm:$0xff] %v7685
        %7973 = vst [vmem:[%s7755] ss:$9 sm:$0xff] %v7686
        %7974 = vst [vmem:[%s7757] ss:$9 sm:$0xff] %v7687
        %v7975 = vld [vmem:[#allocation1] sm:$0xff]
        %7976 = vst [vmem:[#allocation1] ss:$9 sm:$0xff] %v7688
        %7977 = vst [vmem:[%s7745] ss:$9 sm:$0xff] %v7689
        %7978 = vst [vmem:[%s7747] ss:$9 sm:$0xff] %v7690
        %7979 = vst [vmem:[%s7749] ss:$9 sm:$0xff] %v7691
        %7980 = vst [vmem:[%s7751] ss:$9 sm:$0xff] %v7692
        %7981 = vst [vmem:[%s7753] ss:$9 sm:$0xff] %v7693
        %7982 = vst [vmem:[%s7755] ss:$9 sm:$0xff] %v7694
        %7983 = vst [vmem:[%s7757] ss:$9 sm:$0xff] %v7695
        %v7984 = vld [vmem:[#allocation1] sm:$0xff]
        %7985 = vst [vmem:[#allocation1] ss:$9 sm:$0xff] %v7696
        %7986 = vst [vmem:[%s7745] ss:$9 sm:$0xff] %v7697
        %7987 = vst [vmem:[%s7747] ss:$9 sm:$0xff] %v7698
        %7988 = vst [vmem:[%s7749] ss:$9 sm:$0xff] %v7699
        %7989 = vst [vmem:[%s7751] ss:$9 sm:$0xff] %v7700
        %7990 = vst [vmem:[%s7753] ss:$9 sm:$0xff] %v7701
        %7991 = vst [vmem:[%s7755] ss:$9 sm:$0xff] %v7702
        %7992 = vst [vmem:[%s7757] ss:$9 sm:$0xff] %v7703
        %v7993 = vld [vmem:[#allocation1] sm:$0xff]
        %7994 = vst [vmem:[#allocation1] ss:$9 sm:$0xff] %v7704
        %7995 = vst [vmem:[%s7745] ss:$9 sm:$0xff] %v7705
        %7996 = vst [vmem:[%s7747] ss:$9 sm:$0xff] %v7706
        %7997 = vst [vmem:[%s7749] ss:$9 sm:$0xff] %v7707
        %7998 = vst [vmem:[%s7751] ss:$9 sm:$0xff] %v7708
        %7999 = vst [vmem:[%s7753] ss:$9 sm:$0xff] %v7709
        %8000 = vst [vmem:[%s7755] ss:$9 sm:$0xff] %v7710
        %8001 = vst [vmem:[%s7757] ss:$9 sm:$0xff] %v7711
        %v8002 = vld [vmem:[#allocation1] sm:$0xff]
        %8003 = vst [vmem:[#allocation1] ss:$9 sm:$0xff] %v7712
        %8004 = vst [vmem:[%s7745] ss:$9 sm:$0xff] %v7713
        %8005 = vst [vmem:[%s7747] ss:$9 sm:$0xff] %v7714
        %8006 = vst [vmem:[%s7749] ss:$9 sm:$0xff] %v7715
        %8007 = vst [vmem:[%s7751] ss:$9 sm:$0xff] %v7716
        %8008 = vst [vmem:[%s7753] ss:$9 sm:$0xff] %v7717
        %8009 = vst [vmem:[%s7755] ss:$9 sm:$0xff] %v7718
        %8010 = vst [vmem:[%s7757] ss:$9 sm:$0xff] %v7719
        %v8011 = vld [vmem:[#allocation1] sm:$0xff]
        %8012 = vst [vmem:[#allocation1] ss:$9 sm:$0xff] %v7720
        %8013 = vst [vmem:[%s7745] ss:$9 sm:$0xff] %v7721
        %8014 = vst [vmem:[%s7747] ss:$9 sm:$0xff] %v7722
        %8015 = vst [vmem:[%s7749] ss:$9 sm:$0xff] %v7723
        %8016 = vst [vmem:[%s7751] ss:$9 sm:$0xff] %v7724
        %8017 = vst [vmem:[%s7753] ss:$9 sm:$0xff] %v7725
        %8018 = vst [vmem:[%s7755] ss:$9 sm:$0xff] %v7726
        %8019 = vst [vmem:[%s7757] ss:$9 sm:$0xff] %v7727
        %v8020 = vld [vmem:[#allocation1] sm:$0xff]
        %8021 = vst [vmem:[#allocation1] ss:$9 sm:$0xff] %v7728
        %8022 = vst [vmem:[%s7745] ss:$9 sm:$0xff] %v7729
        %8023 = vst [vmem:[%s7747] ss:$9 sm:$0xff] %v7730
        %8024 = vst [vmem:[%s7749] ss:$9 sm:$0xff] %v7731
        %8025 = vst [vmem:[%s7751] ss:$9 sm:$0xff] %v7732
        %8026 = vst [vmem:[%s7753] ss:$9 sm:$0xff] %v7733
        %8027 = vst [vmem:[%s7755] ss:$9 sm:$0xff] %v7734
        %8028 = vst [vmem:[%s7757] ss:$9 sm:$0xff] %v7735
        %v8029 = vld [vmem:[#allocation1] sm:$0xff]
        %8030 = vst [vmem:[#allocation1] ss:$9 sm:$0xff] %v7736
        %8031 = vst [vmem:[%s7745] ss:$9 sm:$0xff] %v7737
        %8032 = vst [vmem:[%s7747] ss:$9 sm:$0xff] %v7738
        %8033 = vst [vmem:[%s7749] ss:$9 sm:$0xff] %v7739
        %8034 = vst [vmem:[%s7751] ss:$9 sm:$0xff] %v7740
        %8035 = vst [vmem:[%s7753] ss:$9 sm:$0xff] %v7741
        %8036 = vst [vmem:[%s7755] ss:$9 sm:$0xff] %v7742
        %8037 = vst [vmem:[%s7757] ss:$9 sm:$0xff] %v7743
        %v8038 = vld [vmem:[#allocation1] sm:$0xff]
        %8039 = vset.pattern.permute.xlu0 0
        %8040 = vperm.xlu0 %8039, %v7759
        %v8041 = vpop.permute.xlu0 %8040
        %8042 = vset.pattern.permute.xlu0 0
        %8043 = vperm.xlu0 %8042, %v7768
        %v8044 = vpop.permute.xlu0 %8043
        %8045 = vset.pattern.permute.xlu0 0
        %8046 = vperm.xlu0 %8045, %v7777
        %v8047 = vpop.permute.xlu0 %8046
        %8048 = vset.pattern.permute.xlu0 0
        %8049 = vperm.xlu0 %8048, %v7786
        %v8050 = vpop.permute.xlu0 %8049
        %8051 = vset.pattern.permute.xlu0 0
        %8052 = vperm.xlu0 %8051, %v7795
        %v8053 = vpop.permute.xlu0 %8052
        %8054 = vset.pattern.permute.xlu0 0
        %8055 = vperm.xlu0 %8054, %v7804
        %v8056 = vpop.permute.xlu0 %8055
        %8057 = vset.pattern.permute.xlu0 0
        %8058 = vperm.xlu0 %8057, %v7813
        %v8059 = vpop.permute.xlu0 %8058
        %8060 = vset.pattern.permute.xlu0 0
        %8061 = vperm.xlu0 %8060, %v7822
        %v8062 = vpop.permute.xlu0 %8061
        %8063 = vset.pattern.permute.xlu0 0
        %8064 = vperm.xlu0 %8063, %v7831
        %v8065 = vpop.permute.xlu0 %8064
        %8066 = vset.pattern.permute.xlu0 0
        %8067 = vperm.xlu0 %8066, %v7840
        %v8068 = vpop.permute.xlu0 %8067
        %8069 = vset.pattern.permute.xlu0 0
        %8070 = vperm.xlu0 %8069, %v7849
        %v8071 = vpop.permute.xlu0 %8070
        %8072 = vset.pattern.permute.xlu0 0
        %8073 = vperm.xlu0 %8072, %v7858
        %v8074 = vpop.permute.xlu0 %8073
        %8075 = vset.pattern.permute.xlu0 0
        %8076 = vperm.xlu0 %8075, %v7867
        %v8077 = vpop.permute.xlu0 %8076
        %8078 = vset.pattern.permute.xlu0 0
        %8079 = vperm.xlu0 %8078, %v7876
        %v8080 = vpop.permute.xlu0 %8079
        %8081 = vset.pattern.permute.xlu0 0
        %8082 = vperm.xlu0 %8081, %v7885
        %v8083 = vpop.permute.xlu0 %8082
        %8084 = vset.pattern.permute.xlu0 0
        %8085 = vperm.xlu0 %8084, %v7894
        %v8086 = vpop.permute.xlu0 %8085
        %8087 = vset.pattern.permute.xlu0 0
        %8088 = vperm.xlu0 %8087, %v7903
        %v8089 = vpop.permute.xlu0 %8088
        %8090 = vset.pattern.permute.xlu0 0
        %8091 = vperm.xlu0 %8090, %v7912
        %v8092 = vpop.permute.xlu0 %8091
        %8093 = vset.pattern.permute.xlu0 0
        %8094 = vperm.xlu0 %8093, %v7921
        %v8095 = vpop.permute.xlu0 %8094
        %8096 = vset.pattern.permute.xlu0 0
        %8097 = vperm.xlu0 %8096, %v7930
        %v8098 = vpop.permute.xlu0 %8097
        %8099 = vset.pattern.permute.xlu0 0
        %8100 = vperm.xlu0 %8099, %v7939
        %v8101 = vpop.permute.xlu0 %8100
        %8102 = vset.pattern.permute.xlu0 0
        %8103 = vperm.xlu0 %8102, %v7948
        %v8104 = vpop.permute.xlu0 %8103
        %8105 = vset.pattern.permute.xlu0 0
        %8106 = vperm.xlu0 %8105, %v7957
        %v8107 = vpop.permute.xlu0 %8106
        %8108 = vset.pattern.permute.xlu0 0
        %8109 = vperm.xlu0 %8108, %v7966
        %v8110 = vpop.permute.xlu0 %8109
        %8111 = vset.pattern.permute.xlu0 0
        %8112 = vperm.xlu0 %8111, %v7975
        %v8113 = vpop.permute.xlu0 %8112
        %8114 = vset.pattern.permute.xlu0 0
        %8115 = vperm.xlu0 %8114, %v7984
        %v8116 = vpop.permute.xlu0 %8115
        %8117 = vset.pattern.permute.xlu0 0
        %8118 = vperm.xlu0 %8117, %v7993
        %v8119 = vpop.permute.xlu0 %8118
        %8120 = vset.pattern.permute.xlu0 0
        %8121 = vperm.xlu0 %8120, %v8002
        %v8122 = vpop.permute.xlu0 %8121
        %8123 = vset.pattern.permute.xlu0 0
        %8124 = vperm.xlu0 %8123, %v8011
        %v8125 = vpop.permute.xlu0 %8124
        %8126 = vset.pattern.permute.xlu0 0
        %8127 = vperm.xlu0 %8126, %v8020
        %v8128 = vpop.permute.xlu0 %8127
        %8129 = vset.pattern.permute.xlu0 0
        %8130 = vperm.xlu0 %8129, %v8029
        %v8131 = vpop.permute.xlu0 %8130
        %8132 = vset.pattern.permute.xlu0 0
        %8133 = vperm.xlu0 %8132, %v8038
        %v8134 = vpop.permute.xlu0 %8133
        %v8135 = vlaneseq
        %v8136 = vand.u32 %v8135, 127
        %v8137 = vperm.slane %v8041, %v8136
        %v8138 = vadd.s32 %v8136, 4294967288
        %v8139 = vperm.slane %v8044, %v8138
        %vm8140 = vcmask 130112
        %v8141 = vsel %vm8140, %v8139, %v8137
        %v8142 = vadd.s32 %v8136, 4294967280
        %v8143 = vperm.slane %v8047, %v8142
        %vm8144 = vcmask 195712
        %v8145 = vsel %vm8144, %v8143, %v8141
        %v8146 = vadd.s32 %v8136, 4294967272
        %v8147 = vperm.slane %v8050, %v8146
        %vm8148 = vcmask 261312
        %v8149 = vsel %vm8148, %v8147, %v8145
        %v8150 = vadd.s32 %v8136, 4294967264
        %v8151 = vperm.slane %v8053, %v8150
        %vm8152 = vcmask 326912
        %v8153 = vsel %vm8152, %v8151, %v8149
        %v8154 = vadd.s32 %v8136, 4294967256
        %v8155 = vperm.slane %v8056, %v8154
        %vm8156 = vcmask 392512
        %v8157 = vsel %vm8156, %v8155, %v8153
        %v8158 = vadd.s32 %v8136, 4294967248
        %v8159 = vperm.slane %v8059, %v8158
        %vm8160 = vcmask 458112
        %v8161 = vsel %vm8160, %v8159, %v8157
        %v8162 = vadd.s32 %v8136, 4294967240
        %v8163 = vperm.slane %v8062, %v8162
        %vm8164 = vcmask 523712
        %v8165 = vsel %vm8164, %v8163, %v8161
        %v8166 = vadd.s32 %v8136, 4294967232
        %v8167 = vperm.slane %v8065, %v8166
        %vm8168 = vcmask 589312
        %v8169 = vsel %vm8168, %v8167, %v8165
        %v8170 = vadd.s32 %v8136, 4294967224
        %v8171 = vperm.slane %v8068, %v8170
        %vm8172 = vcmask 654912
        %v8173 = vsel %vm8172, %v8171, %v8169
        %v8174 = vadd.s32 %v8136, 4294967216
        %v8175 = vperm.slane %v8071, %v8174
        %vm8176 = vcmask 720512
        %v8177 = vsel %vm8176, %v8175, %v8173
        %v8178 = vadd.s32 %v8136, 4294967208
        %v8179 = vperm.slane %v8074, %v8178
        %vm8180 = vcmask 786112
        %v8181 = vsel %vm8180, %v8179, %v8177
        %v8182 = vadd.s32 %v8136, 4294967200
        %v8183 = vperm.slane %v8077, %v8182
        %vm8184 = vcmask 851712
        %v8185 = vsel %vm8184, %v8183, %v8181
        %v8186 = vadd.s32 %v8136, 4294967192
        %v8187 = vperm.slane %v8080, %v8186
        %vm8188 = vcmask 917312
        %v8189 = vsel %vm8188, %v8187, %v8185
        %v8190 = vadd.s32 %v8136, 4294967184
        %v8191 = vperm.slane %v8083, %v8190
        %vm8192 = vcmask 982912
        %v8193 = vsel %vm8192, %v8191, %v8189
        %v8194 = vadd.s32 %v8136, 4294967176
        %v8195 = vperm.slane %v8086, %v8194
        %vm8196 = vcmask 1048512
        %v8197 = vsel %vm8196, %v8195, %v8193
        %v8198 = vperm.slane %v8089, %v8136
        %v8199 = vperm.slane %v8092, %v8138
        %v8200 = vsel %vm8140, %v8199, %v8198
        %v8201 = vperm.slane %v8095, %v8142
        %v8202 = vsel %vm8144, %v8201, %v8200
        %v8203 = vperm.slane %v8098, %v8146
        %v8204 = vsel %vm8148, %v8203, %v8202
        %v8205 = vperm.slane %v8101, %v8150
        %v8206 = vsel %vm8152, %v8205, %v8204
        %v8207 = vperm.slane %v8104, %v8154
        %v8208 = vsel %vm8156, %v8207, %v8206
        %v8209 = vperm.slane %v8107, %v8158
        %v8210 = vsel %vm8160, %v8209, %v8208
        %v8211 = vperm.slane %v8110, %v8162
        %v8212 = vsel %vm8164, %v8211, %v8210
        %v8213 = vperm.slane %v8113, %v8166
        %v8214 = vsel %vm8168, %v8213, %v8212
        %v8215 = vperm.slane %v8116, %v8170
        %v8216 = vsel %vm8172, %v8215, %v8214
        %v8217 = vperm.slane %v8119, %v8174
        %v8218 = vsel %vm8176, %v8217, %v8216
        %v8219 = vperm.slane %v8122, %v8178
        %v8220 = vsel %vm8180, %v8219, %v8218
        %v8221 = vperm.slane %v8125, %v8182
        %v8222 = vsel %vm8184, %v8221, %v8220
        %v8223 = vperm.slane %v8128, %v8186
        %v8224 = vsel %vm8188, %v8223, %v8222
        %v8225 = vperm.slane %v8131, %v8190
        %v8226 = vsel %vm8192, %v8225, %v8224
        %v8227 = vperm.slane %v8134, %v8194
        %v8228 = vsel %vm8196, %v8227, %v8226
        %v8229 = vrot.slane %v8228, 7
        %vm8230 = vcmask 1040384
        %v8231 = vsel %vm8230, %v8197, %v8229
        %v8233 = vlaneseq
        %vm8234 = vcmp.ge.s32.totalorder %v8233, 0
        %vm8235 = vcmp.lt.s32.totalorder %v8233, 256
        %vm8236 = vmand %vm8234, %vm8235
        %8237 = vst.msk [vmem:[%s349] sm:$0x3] %vm8236, %v8231
        %s8238 = sand.u32 %s188, 1
        %s8239 = scalar_lea.sflag [#allocation5], %s8238
        %s8240 = sand.u32 %s188, 1
        %s8241 = smul.addr %s8240, 2
        %s8242 = scalar_lea.vmem [#allocation11], %s8241
        // Predicated region
        $region65: #{tpu_custom_call.1} parent=47 // pred_check
          %p8243 = pneg %p198
        $region66: #{tpu_custom_call.1} parent=47 // pred_check_branch
          %8245 = sbr.rel (%p8243) target = $region68
        $region67: #{tpu_custom_call.1} parent=47 // pred_region
          %8247 = vsyncadd %s8239, 0
          %s8248 = smul.addr %s28, 2
          %s8249 = scalar_lea.hbm %s7, %s8248
          %s8251 = sshll.u32 %s8242, 4
          %s8252 = int_to_ptr.vmem [resolvable:$true] %s8251
          %s8253 = sshll.u32 %s8249, 4
          %s8254 = int_to_ptr.hbm [resolvable:$true] %s8253
          %8256 = dma.vmem_to_hbm [thread:$0]  %s8252, 32, %s8254, %s8239
        $region68: #{tpu_custom_call.1} parent=47 // pred_fallthru
          _
      $region48: #{tpu_custom_call.1} parent=5 // pred_fallthru
        _
      %p8257 = scmp.le.s32.totalorder 2, %s23
      // Predicated region
      $region69: #{tpu_custom_call.1} parent=5 // pred_check
        %p8258 = pneg %p8257
      $region70: #{tpu_custom_call.1} parent=5 // pred_check_branch
        %8260 = sbr.rel (%p8258) target = $region72
      $region71: #{tpu_custom_call.1} parent=5 // pred_region
        %s8261 = ssub.s32 %s23, 2
        // Predicated region
        $region73: #{tpu_custom_call.1} parent=71 // pred_check
          %p8262 = pneg %p204
        $region74: #{tpu_custom_call.1} parent=71 // pred_check_branch
          %8264 = sbr.rel (%p8262) target = $region76
        $region75: #{tpu_custom_call.1} parent=71 // pred_region
          %s8265 = sand.u32 %s189, 1
          %s8266 = scalar_lea.sflag [#allocation5], %s8265
          %s8267 = sand.u32 %s189, 1
          %s8268 = smul.addr %s8267, 2
          %s8269 = scalar_lea.vmem [#allocation11], %s8268
          %8271 = dma.done %s8266, 32
        $region76: #{tpu_custom_call.1} parent=71 // pred_fallthru
          _
      $region72: #{tpu_custom_call.1} parent=5 // pred_fallthru
        _
    $region6: #{tpu_custom_call.1} parent=1 // loop_footer
      %s27 = sadd.s32 1, %s23
    $region7: #{tpu_custom_call.1} parent=1 // loop_footer_branch
      %22 = sbr.rel target = $region3
    $region8: #{tpu_custom_call.1} parent=1 // loop_exit
      _
    %8272 = vsyncpa [#allocation4], 1
    %s8273 = scalar_lea.sflag [#allocation4], 1
    %8274 = vsyncpa %s8273, 1
    %8275 = vsyncpa [#allocation7], 1
    %8276 = vsyncpa [#allocation10], 1
    %8277 = vsyncpa [#allocation5], 1
    %s8278 = scalar_lea.sflag [#allocation5], 1
    %8279 = vsyncpa %s8278, 1

</llo_original>
